<compile_context>
chip_gen: v5e
topology: v5e:2x2
jax: 0.10.0
libtpu: 0.0.40
codegen_flags: <defaults>
</compile_context>

<pallas_src>
import functools

import jax
import jax.numpy as jnp
from jax.experimental import pallas as pl
from jax.experimental.pallas import tpu as pltpu


# ----------------------------------------------------------------------------
# Fused Pallas kernel
# ----------------------------------------------------------------------------

def _instance_norm(y, eps):
    # y: (P, C) f32. InstanceNorm2d(affine=False, track_running_stats=False):
    # per-channel stats over the spatial axis, biased variance, eps inside rsqrt.
    # One-pass form: both reductions are independent and can issue concurrently.
    inv_n = 1.0 / y.shape[0]
    m = jnp.sum(y, axis=0, keepdims=True) * inv_n
    m2 = jnp.sum(y * y, axis=0, keepdims=True) * inv_n
    v = m2 - m * m
    return (y - m) * jax.lax.rsqrt(v + eps)


def _conv3x3_reflect(x3, w, H, W, C, d):
    """3x3 conv with dilation d and reflection pad d, as ONE K=9*C MXU matmul.

    x3 : (H, W, C) bf16 value.
    w  : (9*C, C)  bf16 value; row blocks ordered (kh, kw), each block is [Cin, Cout].

    The reflection halo and the im2col patches are built as on-chip values:
      - H-axis pad = concat along the (untiled) leading dim: tile placement only.
      - the 3 column-tap slabs fold the W-axis pad in; these are the only sublane repacks.
      - per-row-tap slices are leading-dim slices (free) and the (H,W,C)->(H*W,C) reshape
        is layout-preserving (W is a multiple of the sublane tile).
      - the 9 taps are concatenated along lanes (lane-tile aligned -> cheap) and fed to a
        single long-K matmul, so accumulation happens inside the MXU, not on the VPU.
    """
    # --- reflection pad along H ---
    top = [x3[d - k:d - k + 1] for k in range(d)]            # rows d, d-1, ..., 1
    bot = [x3[H - 2 - k:H - 1 - k] for k in range(d)]        # rows H-2, ..., H-1-d
    xh = jnp.concatenate(top + [x3] + bot, axis=0)           # (H+2d, W, C)

    # --- the three column-tap slabs (W-axis reflection pad folded in) ---
    left = [xh[:, d - k:d - k + 1] for k in range(d)]        # cols d, ..., 1
    right = [xh[:, W - 2 - k:W - 1 - k] for k in range(d)]   # cols W-2, ..., W-1-d
    slabs = (
        jnp.concatenate(left + [xh[:, :W - d]], axis=1),     # kw = 0: padded cols [0, W)
        xh,                                                   # kw = 1: padded cols [d, W+d)
        jnp.concatenate([xh[:, d:]] + right, axis=1),         # kw = 2: padded cols [2d, W+2d)
    )

    # --- im2col patches: (H*W, 9*C) bf16, taps ordered (kh, kw) to match the weights ---
    taps = []
    for ki in range(3):
        for kj in range(3):
            taps.append(slabs[kj][ki * d:ki * d + H].reshape(H * W, C))
    patches = jnp.concatenate(taps, axis=1)

    return jnp.dot(patches, w, preferred_element_type=jnp.float32)   # (H*W, C) f32


def _resnet_block_kernel(x_ref, wA_ref, wB_ref, o_ref, *, H, W, C, dilation, eps):
    x_bf = x_ref[0]                                           # (H, W, C) bf16

    # Conv biases are intentionally absent: a per-channel constant is exactly cancelled
    # by the following InstanceNorm2d(affine=False), so dropping them is a no-op.

    # ---- conv A (3x3, dilation=d, reflection pad d) -> InstanceNorm -> ReLU ----
    accA = _conv3x3_reflect(x_bf, wA_ref[...], H, W, C, dilation)       # f32 (H*W, C)
    y_bf = jnp.maximum(_instance_norm(accA, eps), 0.0).astype(jnp.bfloat16)

    # ---- conv B (3x3, dilation=1, reflection pad 1) -> InstanceNorm -> residual ----
    accB = _conv3x3_reflect(y_bf.reshape(H, W, C), wB_ref[...], H, W, C, 1)
    out = _instance_norm(accB, eps) + x_bf.astype(jnp.float32).reshape(H * W, C)
    o_ref[...] = out.reshape(1, H, W, C)


# ----------------------------------------------------------------------------
# Wrappers
# ----------------------------------------------------------------------------

def resnet_block_nhwc(x_nhwc, wA, wB, *, dilation, eps=1e-5):
    N, H, W, C = x_nhwc.shape
    assert wA.shape == (C, C, 3, 3) and wB.shape == (C, C, 3, 3)
    assert H > dilation + 1 and W > dilation + 1

    # Weights as a single (9*Cin, Cout) bf16 matrix, row blocks in (kh, kw) order.
    wA_t = jnp.transpose(wA, (2, 3, 1, 0)).reshape(9 * C, C).astype(jnp.bfloat16)
    wB_t = jnp.transpose(wB, (2, 3, 1, 0)).reshape(9 * C, C).astype(jnp.bfloat16)

    kernel = functools.partial(_resnet_block_kernel,
                               H=H, W=W, C=C, dilation=dilation, eps=eps)
    return pl.pallas_call(
        kernel,
        out_shape=jax.ShapeDtypeStruct((N, H, W, C), jnp.float32),
        grid=(N,),
        in_specs=[
            pl.BlockSpec((1, H, W, C), lambda n: (n, 0, 0, 0)),   # bf16 input, per sample
            pl.BlockSpec((9 * C, C), lambda n: (0, 0)),           # conv A weights (resident)
            pl.BlockSpec((9 * C, C), lambda n: (0, 0)),           # conv B weights (resident)
        ],
        out_specs=pl.BlockSpec((1, H, W, C), lambda n: (n, 0, 0, 0)),
        compiler_params=pltpu.CompilerParams(dimension_semantics=("parallel",)),
    )(x_nhwc.astype(jnp.bfloat16), wA_t, wB_t)


def resnet_block_forward(x_nchw, params, *, dilation, eps=1e-5):
    """PyTorch-facing interface: NCHW in, NCHW out.

    params['b1']/['b2'] (if any) are NOT passed to the kernel: biases before
    InstanceNorm(affine=False) cancel exactly, so the output is unchanged.
    """
    x = jnp.transpose(x_nchw, (0, 2, 3, 1))
    y = resnet_block_nhwc(x, params["w1"], params["w2"], dilation=dilation, eps=eps)
    return jnp.transpose(y, (0, 3, 1, 2))


# ----------------------------------------------------------------------------
# Parameters (synthetic, deterministic) + spectral-norm preprocessing
# ----------------------------------------------------------------------------

def spectral_normalize(w, key, n_iter=1, eps=1e-12):
    # Mirrors nn.utils.spectral_norm on a Conv2d weight (dim=0 rows), one power iteration.
    wm = w.reshape(w.shape[0], -1)
    u = jax.random.normal(key, (wm.shape[0],), jnp.float32)
    u = u / (jnp.linalg.norm(u) + eps)
    v = None
    for _ in range(n_iter):
        v = wm.T @ u
        v = v / (jnp.linalg.norm(v) + eps)
        u = wm @ v
        u = u / (jnp.linalg.norm(u) + eps)
    sigma = u @ (wm @ v)
    return w / sigma


def make_params(key, dim, use_spectral_norm):
    kw1, kw2, kb1, kb2, ku1, ku2 = jax.random.split(key, 6)
    w1 = 0.02 * jax.random.normal(kw1, (dim, dim, 3, 3), jnp.float32)
    w2 = 0.02 * jax.random.normal(kw2, (dim, dim, 3, 3), jnp.float32)
    if use_spectral_norm:  # conv bias=False in this case (bias = not use_spectral_norm)
        return {"w1": spectral_normalize(w1, ku1),
                "w2": spectral_normalize(w2, ku2),
                "b1": None, "b2": None}
    bound = 1.0 / float(jnp.sqrt(dim * 9.0))
    b1 = jax.random.uniform(kb1, (dim,), jnp.float32, -bound, bound)
    b2 = jax.random.uniform(kb2, (dim,), jnp.float32, -bound, bound)
    return {"w1": w1, "w2": w2, "b1": b1, "b2": b2}


# ----------------------------------------------------------------------------
# Pure-JAX reference (bf16 conv operands, biases applied, f32 residual)
# ----------------------------------------------------------------------------

def resnet_block_reference(x_nhwc, wA, wB, bA, bB, *, dilation, eps=1e-5):
    def conv(x, w_oihw, b, dil):
        xp = jnp.pad(x, ((0, 0), (dil, dil), (dil, dil), (0, 0)), mode="reflect")
        w_hwio = jnp.transpose(w_oihw, (2, 3, 1, 0)).astype(jnp.bfloat16)
        y = jax.lax.conv_general_dilated(
            xp.astype(jnp.bfloat16), w_hwio,
            window_strides=(1, 1), padding="VALID", rhs_dilation=(dil, dil),
            dimension_numbers=("NHWC", "HWIO", "NHWC"),
            preferred_element_type=jnp.float32)
        return y if b is None else y + b.reshape(1, 1, 1, -1)

    def inorm(y):
        m = jnp.mean(y, axis=(1, 2), keepdims=True)
        c = y - m
        v = jnp.mean(c * c, axis=(1, 2), keepdims=True)
        return c * jax.lax.rsqrt(v + eps)

    y = jnp.maximum(inorm(conv(x_nhwc, wA, bA, dilation)), 0.0)
    y = inorm(conv(y, wB, bB, 1))
    return x_nhwc + y


# ----------------------------------------------------------------------------
# Main
# ----------------------------------------------------------------------------

if __name__ == "__main__":
    N, C, H, W = 2, 256, 16, 16   # dim=256, as used by the EdgeGenerator middle blocks
    x_nchw = jax.random.normal(jax.random.PRNGKey(0), (N, C, H, W), jnp.float32)

    configs = [
        dict(dilation=2, use_spectral_norm=True),   # EdgeGenerator usage (no conv bias)
        dict(dilation=1, use_spectral_norm=False),  # module defaults (convs with bias)
    ]
    for i, cfg in enumerate(configs):
        params = make_params(jax.random.PRNGKey(1 + i), C, cfg["use_spectral_norm"])
        fwd = jax.jit(functools.partial(resnet_block_forward, dilation=cfg["dilation"]))
        out = jax.block_until_ready(fwd(x_nchw, params))

        assert out.shape == (N, C, H, W), out.shape
        assert bool(jnp.all(jnp.isfinite(out)))

        x_nhwc = jnp.transpose(x_nchw, (0, 2, 3, 1))
        ref = resnet_block_reference(x_nhwc, params["w1"], params["w2"],
                                     params["b1"], params["b2"],
                                     dilation=cfg["dilation"])
        ref = jnp.transpose(ref, (0, 3, 1, 2))
        err = float(jnp.max(jnp.abs(out - ref)))
        assert err < 5e-2, f"config {cfg}: max abs err {err}"

    print("KERNEL_OK")
</pallas_src>

<mosaic_0001>
module attributes {stable_mosaic.version = 11 : i64} {
  func.func @_resnet_block_kernel(%arg0: i32, %arg1: memref<1x16x16x256xbf16, #tpu.memory_space<vmem>>, %arg2: memref<2304x256xbf16, #tpu.memory_space<vmem>>, %arg3: memref<2304x256xbf16, #tpu.memory_space<vmem>>, %arg4: memref<1x16x16x256xf32, #tpu.memory_space<vmem>>) attributes {dimension_semantics = [#tpu.dimension_semantics<parallel>], iteration_bounds = array<i64: 2>, scalar_prefetch = 0 : i64, scratch_operands = 0 : i64, tpu.core_type = #tpu.core_type<tc>, window_params = [{transform_indices = @transform_0, window_bounds = array<i64: 1, 16, 16, 256>}, {pipeline_mode = #tpu.pipeline_mode<synchronous>, transform_indices = @transform_1, window_bounds = array<i64: 2304, 256>}, {pipeline_mode = #tpu.pipeline_mode<synchronous>, transform_indices = @transform_2, window_bounds = array<i64: 2304, 256>}, {transform_indices = @transform_3, window_bounds = array<i64: 1, 16, 16, 256>}]} {
    %c0 = arith.constant 0 : index
    %c0_0 = arith.constant 0 : index
    %c0_1 = arith.constant 0 : index
    %c0_2 = arith.constant 0 : index
    %0 = vector.load %arg1[%c0, %c0_0, %c0_1, %c0_2] : memref<1x16x16x256xbf16, #tpu.memory_space<vmem>>, vector<1x16x16x256xbf16>
    %1 = vector.shape_cast %0 : vector<1x16x16x256xbf16> to vector<16x16x256xbf16>
    %c0_3 = arith.constant 0 : index
    %c0_4 = arith.constant 0 : index
    %2 = vector.load %arg2[%c0_3, %c0_4] : memref<2304x256xbf16, #tpu.memory_space<vmem>>, vector<2304x256xbf16>
    %3 = vector.extract_strided_slice %1 {offsets = [2, 0, 0], sizes = [1, 16, 256], strides = [1, 1, 1]} : vector<16x16x256xbf16> to vector<1x16x256xbf16>
    %4 = vector.extract_strided_slice %1 {offsets = [1, 0, 0], sizes = [1, 16, 256], strides = [1, 1, 1]} : vector<16x16x256xbf16> to vector<1x16x256xbf16>
    %5 = vector.extract_strided_slice %1 {offsets = [14, 0, 0], sizes = [1, 16, 256], strides = [1, 1, 1]} : vector<16x16x256xbf16> to vector<1x16x256xbf16>
    %6 = vector.extract_strided_slice %1 {offsets = [13, 0, 0], sizes = [1, 16, 256], strides = [1, 1, 1]} : vector<16x16x256xbf16> to vector<1x16x256xbf16>
    %7 = tpu.concatenate %3, %4, %1, %5, %6 in 0 : vector<1x16x256xbf16>, vector<1x16x256xbf16>, vector<16x16x256xbf16>, vector<1x16x256xbf16>, vector<1x16x256xbf16> -> vector<20x16x256xbf16>
    %8 = vector.extract_strided_slice %7 {offsets = [0, 2, 0], sizes = [20, 1, 256], strides = [1, 1, 1]} : vector<20x16x256xbf16> to vector<20x1x256xbf16>
    %9 = vector.extract_strided_slice %7 {offsets = [0, 1, 0], sizes = [20, 1, 256], strides = [1, 1, 1]} : vector<20x16x256xbf16> to vector<20x1x256xbf16>
    %10 = vector.extract_strided_slice %7 {offsets = [0, 14, 0], sizes = [20, 1, 256], strides = [1, 1, 1]} : vector<20x16x256xbf16> to vector<20x1x256xbf16>
    %11 = vector.extract_strided_slice %7 {offsets = [0, 13, 0], sizes = [20, 1, 256], strides = [1, 1, 1]} : vector<20x16x256xbf16> to vector<20x1x256xbf16>
    %12 = vector.extract_strided_slice %7 {offsets = [0, 0, 0], sizes = [20, 14, 256], strides = [1, 1, 1]} : vector<20x16x256xbf16> to vector<20x14x256xbf16>
    %13 = tpu.concatenate %8, %9, %12 in 1 : vector<20x1x256xbf16>, vector<20x1x256xbf16>, vector<20x14x256xbf16> -> vector<20x16x256xbf16>
    %14 = vector.extract_strided_slice %7 {offsets = [0, 2, 0], sizes = [20, 14, 256], strides = [1, 1, 1]} : vector<20x16x256xbf16> to vector<20x14x256xbf16>
    %15 = tpu.concatenate %14, %10, %11 in 1 : vector<20x14x256xbf16>, vector<20x1x256xbf16>, vector<20x1x256xbf16> -> vector<20x16x256xbf16>
    %16 = vector.extract_strided_slice %13 {offsets = [0, 0, 0], sizes = [16, 16, 256], strides = [1, 1, 1]} : vector<20x16x256xbf16> to vector<16x16x256xbf16>
    %17 = vector.shape_cast %16 : vector<16x16x256xbf16> to vector<256x256xbf16>
    %18 = vector.extract_strided_slice %7 {offsets = [0, 0, 0], sizes = [16, 16, 256], strides = [1, 1, 1]} : vector<20x16x256xbf16> to vector<16x16x256xbf16>
    %19 = vector.shape_cast %18 : vector<16x16x256xbf16> to vector<256x256xbf16>
    %20 = vector.extract_strided_slice %15 {offsets = [0, 0, 0], sizes = [16, 16, 256], strides = [1, 1, 1]} : vector<20x16x256xbf16> to vector<16x16x256xbf16>
    %21 = vector.shape_cast %20 : vector<16x16x256xbf16> to vector<256x256xbf16>
    %22 = vector.extract_strided_slice %13 {offsets = [2, 0, 0], sizes = [16, 16, 256], strides = [1, 1, 1]} : vector<20x16x256xbf16> to vector<16x16x256xbf16>
    %23 = vector.shape_cast %22 : vector<16x16x256xbf16> to vector<256x256xbf16>
    %24 = vector.extract_strided_slice %7 {offsets = [2, 0, 0], sizes = [16, 16, 256], strides = [1, 1, 1]} : vector<20x16x256xbf16> to vector<16x16x256xbf16>
    %25 = vector.shape_cast %24 : vector<16x16x256xbf16> to vector<256x256xbf16>
    %26 = vector.extract_strided_slice %15 {offsets = [2, 0, 0], sizes = [16, 16, 256], strides = [1, 1, 1]} : vector<20x16x256xbf16> to vector<16x16x256xbf16>
    %27 = vector.shape_cast %26 : vector<16x16x256xbf16> to vector<256x256xbf16>
    %28 = vector.extract_strided_slice %13 {offsets = [4, 0, 0], sizes = [16, 16, 256], strides = [1, 1, 1]} : vector<20x16x256xbf16> to vector<16x16x256xbf16>
    %29 = vector.shape_cast %28 : vector<16x16x256xbf16> to vector<256x256xbf16>
    %30 = vector.extract_strided_slice %7 {offsets = [4, 0, 0], sizes = [16, 16, 256], strides = [1, 1, 1]} : vector<20x16x256xbf16> to vector<16x16x256xbf16>
    %31 = vector.shape_cast %30 : vector<16x16x256xbf16> to vector<256x256xbf16>
    %32 = vector.extract_strided_slice %15 {offsets = [4, 0, 0], sizes = [16, 16, 256], strides = [1, 1, 1]} : vector<20x16x256xbf16> to vector<16x16x256xbf16>
    %33 = vector.shape_cast %32 : vector<16x16x256xbf16> to vector<256x256xbf16>
    %34 = tpu.concatenate %17, %19, %21, %23, %25, %27, %29, %31, %33 in 1 : vector<256x256xbf16>, vector<256x256xbf16>, vector<256x256xbf16>, vector<256x256xbf16>, vector<256x256xbf16>, vector<256x256xbf16>, vector<256x256xbf16>, vector<256x256xbf16>, vector<256x256xbf16> -> vector<256x2304xbf16>
    %cst = arith.constant dense<0.000000e+00> : vector<256x256xf32>
    %35 = tpu.matmul %34, %2, %cst {dimension_numbers = #tpu.dot_dimension_numbers<[1], [0], [0], [1], [0, 0, 1, 1], [], []>} : vector<256x2304xbf16>, vector<2304x256xbf16>, vector<256x256xf32> -> vector<256x256xf32>
    %cst_5 = arith.constant dense<0.000000e+00> : vector<256xf32>
    %36 = vector.multi_reduction <add>, %35, %cst_5 [0] : vector<256x256xf32> to vector<256xf32>
    %37 = vector.shape_cast %36 : vector<256xf32> to vector<1x256xf32>
    %cst_6 = arith.constant 3.906250e-03 : f32
    %38 = vector.broadcast %cst_6 : f32 to vector<1x256xf32>
    %39 = arith.mulf %37, %38 : vector<1x256xf32>
    %40 = arith.mulf %35, %35 : vector<256x256xf32>
    %cst_7 = arith.constant dense<0.000000e+00> : vector<256xf32>
    %41 = vector.multi_reduction <add>, %40, %cst_7 [0] : vector<256x256xf32> to vector<256xf32>
    %42 = vector.shape_cast %41 : vector<256xf32> to vector<1x256xf32>
    %cst_8 = arith.constant 3.906250e-03 : f32
    %43 = vector.broadcast %cst_8 : f32 to vector<1x256xf32>
    %44 = arith.mulf %42, %43 : vector<1x256xf32>
    %45 = arith.mulf %39, %39 : vector<1x256xf32>
    %46 = arith.subf %44, %45 : vector<1x256xf32>
    %47 = vector.broadcast %39 : vector<1x256xf32> to vector<256x256xf32>
    %48 = arith.subf %35, %47 : vector<256x256xf32>
    %cst_9 = arith.constant 9.99999974E-6 : f32
    %49 = vector.broadcast %cst_9 : f32 to vector<1x256xf32>
    %50 = arith.addf %46, %49 : vector<1x256xf32>
    %51 = math.rsqrt %50 : vector<1x256xf32>
    %52 = vector.broadcast %51 : vector<1x256xf32> to vector<256x256xf32>
    %53 = arith.mulf %48, %52 : vector<256x256xf32>
    %cst_10 = arith.constant 0.000000e+00 : f32
    %54 = vector.broadcast %cst_10 : f32 to vector<256x256xf32>
    %55 = arith.maximumf %53, %54 : vector<256x256xf32>
    %56 = arith.truncf %55 : vector<256x256xf32> to vector<256x256xbf16>
    %57 = vector.shape_cast %56 : vector<256x256xbf16> to vector<16x16x256xbf16>
    %c0_11 = arith.constant 0 : index
    %c0_12 = arith.constant 0 : index
    %58 = vector.load %arg3[%c0_11, %c0_12] : memref<2304x256xbf16, #tpu.memory_space<vmem>>, vector<2304x256xbf16>
    %59 = vector.extract_strided_slice %57 {offsets = [1, 0, 0], sizes = [1, 16, 256], strides = [1, 1, 1]} : vector<16x16x256xbf16> to vector<1x16x256xbf16>
    %60 = vector.extract_strided_slice %57 {offsets = [14, 0, 0], sizes = [1, 16, 256], strides = [1, 1, 1]} : vector<16x16x256xbf16> to vector<1x16x256xbf16>
    %61 = tpu.concatenate %59, %57, %60 in 0 : vector<1x16x256xbf16>, vector<16x16x256xbf16>, vector<1x16x256xbf16> -> vector<18x16x256xbf16>
    %62 = vector.extract_strided_slice %61 {offsets = [0, 1, 0], sizes = [18, 1, 256], strides = [1, 1, 1]} : vector<18x16x256xbf16> to vector<18x1x256xbf16>
    %63 = vector.extract_strided_slice %61 {offsets = [0, 14, 0], sizes = [18, 1, 256], strides = [1, 1, 1]} : vector<18x16x256xbf16> to vector<18x1x256xbf16>
    %64 = vector.extract_strided_slice %61 {offsets = [0, 0, 0], sizes = [18, 15, 256], strides = [1, 1, 1]} : vector<18x16x256xbf16> to vector<18x15x256xbf16>
    %65 = tpu.concatenate %62, %64 in 1 : vector<18x1x256xbf16>, vector<18x15x256xbf16> -> vector<18x16x256xbf16>
    %66 = vector.extract_strided_slice %61 {offsets = [0, 1, 0], sizes = [18, 15, 256], strides = [1, 1, 1]} : vector<18x16x256xbf16> to vector<18x15x256xbf16>
    %67 = tpu.concatenate %66, %63 in 1 : vector<18x15x256xbf16>, vector<18x1x256xbf16> -> vector<18x16x256xbf16>
    %68 = vector.extract_strided_slice %65 {offsets = [0, 0, 0], sizes = [16, 16, 256], strides = [1, 1, 1]} : vector<18x16x256xbf16> to vector<16x16x256xbf16>
    %69 = vector.shape_cast %68 : vector<16x16x256xbf16> to vector<256x256xbf16>
    %70 = vector.extract_strided_slice %61 {offsets = [0, 0, 0], sizes = [16, 16, 256], strides = [1, 1, 1]} : vector<18x16x256xbf16> to vector<16x16x256xbf16>
    %71 = vector.shape_cast %70 : vector<16x16x256xbf16> to vector<256x256xbf16>
    %72 = vector.extract_strided_slice %67 {offsets = [0, 0, 0], sizes = [16, 16, 256], strides = [1, 1, 1]} : vector<18x16x256xbf16> to vector<16x16x256xbf16>
    %73 = vector.shape_cast %72 : vector<16x16x256xbf16> to vector<256x256xbf16>
    %74 = vector.extract_strided_slice %65 {offsets = [1, 0, 0], sizes = [16, 16, 256], strides = [1, 1, 1]} : vector<18x16x256xbf16> to vector<16x16x256xbf16>
    %75 = vector.shape_cast %74 : vector<16x16x256xbf16> to vector<256x256xbf16>
    %76 = vector.extract_strided_slice %61 {offsets = [1, 0, 0], sizes = [16, 16, 256], strides = [1, 1, 1]} : vector<18x16x256xbf16> to vector<16x16x256xbf16>
    %77 = vector.shape_cast %76 : vector<16x16x256xbf16> to vector<256x256xbf16>
    %78 = vector.extract_strided_slice %67 {offsets = [1, 0, 0], sizes = [16, 16, 256], strides = [1, 1, 1]} : vector<18x16x256xbf16> to vector<16x16x256xbf16>
    %79 = vector.shape_cast %78 : vector<16x16x256xbf16> to vector<256x256xbf16>
    %80 = vector.extract_strided_slice %65 {offsets = [2, 0, 0], sizes = [16, 16, 256], strides = [1, 1, 1]} : vector<18x16x256xbf16> to vector<16x16x256xbf16>
    %81 = vector.shape_cast %80 : vector<16x16x256xbf16> to vector<256x256xbf16>
    %82 = vector.extract_strided_slice %61 {offsets = [2, 0, 0], sizes = [16, 16, 256], strides = [1, 1, 1]} : vector<18x16x256xbf16> to vector<16x16x256xbf16>
    %83 = vector.shape_cast %82 : vector<16x16x256xbf16> to vector<256x256xbf16>
    %84 = vector.extract_strided_slice %67 {offsets = [2, 0, 0], sizes = [16, 16, 256], strides = [1, 1, 1]} : vector<18x16x256xbf16> to vector<16x16x256xbf16>
    %85 = vector.shape_cast %84 : vector<16x16x256xbf16> to vector<256x256xbf16>
    %86 = tpu.concatenate %69, %71, %73, %75, %77, %79, %81, %83, %85 in 1 : vector<256x256xbf16>, vector<256x256xbf16>, vector<256x256xbf16>, vector<256x256xbf16>, vector<256x256xbf16>, vector<256x256xbf16>, vector<256x256xbf16>, vector<256x256xbf16>, vector<256x256xbf16> -> vector<256x2304xbf16>
    %cst_13 = arith.constant dense<0.000000e+00> : vector<256x256xf32>
    %87 = tpu.matmul %86, %58, %cst_13 {dimension_numbers = #tpu.dot_dimension_numbers<[1], [0], [0], [1], [0, 0, 1, 1], [], []>} : vector<256x2304xbf16>, vector<2304x256xbf16>, vector<256x256xf32> -> vector<256x256xf32>
    %cst_14 = arith.constant dense<0.000000e+00> : vector<256xf32>
    %88 = vector.multi_reduction <add>, %87, %cst_14 [0] : vector<256x256xf32> to vector<256xf32>
    %89 = vector.shape_cast %88 : vector<256xf32> to vector<1x256xf32>
    %cst_15 = arith.constant 3.906250e-03 : f32
    %90 = vector.broadcast %cst_15 : f32 to vector<1x256xf32>
    %91 = arith.mulf %89, %90 : vector<1x256xf32>
    %92 = arith.mulf %87, %87 : vector<256x256xf32>
    %cst_16 = arith.constant dense<0.000000e+00> : vector<256xf32>
    %93 = vector.multi_reduction <add>, %92, %cst_16 [0] : vector<256x256xf32> to vector<256xf32>
    %94 = vector.shape_cast %93 : vector<256xf32> to vector<1x256xf32>
    %cst_17 = arith.constant 3.906250e-03 : f32
    %95 = vector.broadcast %cst_17 : f32 to vector<1x256xf32>
    %96 = arith.mulf %94, %95 : vector<1x256xf32>
    %97 = arith.mulf %91, %91 : vector<1x256xf32>
    %98 = arith.subf %96, %97 : vector<1x256xf32>
    %99 = vector.broadcast %91 : vector<1x256xf32> to vector<256x256xf32>
    %100 = arith.subf %87, %99 : vector<256x256xf32>
    %cst_18 = arith.constant 9.99999974E-6 : f32
    %101 = vector.broadcast %cst_18 : f32 to vector<1x256xf32>
    %102 = arith.addf %98, %101 : vector<1x256xf32>
    %103 = math.rsqrt %102 : vector<1x256xf32>
    %104 = vector.broadcast %103 : vector<1x256xf32> to vector<256x256xf32>
    %105 = arith.mulf %100, %104 : vector<256x256xf32>
    %106 = arith.extf %1 : vector<16x16x256xbf16> to vector<16x16x256xf32>
    %107 = vector.shape_cast %106 : vector<16x16x256xf32> to vector<256x256xf32>
    %108 = arith.addf %105, %107 : vector<256x256xf32>
    %109 = vector.shape_cast %108 : vector<256x256xf32> to vector<1x16x16x256xf32>
    %c0_19 = arith.constant 0 : index
    %c0_20 = arith.constant 0 : index
    %c0_21 = arith.constant 0 : index
    %c0_22 = arith.constant 0 : index
    %110 = vector.load %arg4[%c0_19, %c0_20, %c0_21, %c0_22] : memref<1x16x16x256xf32, #tpu.memory_space<vmem>>, vector<1x16x16x256xf32>
    tpu.vector_store %arg4[%c0_19, %c0_20, %c0_21, %c0_22], %109 {strides = array<i32>} : memref<1x16x16x256xf32, #tpu.memory_space<vmem>>, vector<1x16x16x256xf32>,
    return
  }
  func.func @transform_0(%arg0: i32) -> (i32, i32, i32, i32) {
    %c0_i32 = arith.constant 0 : i32
    %c0_i32_0 = arith.constant 0 : i32
    %c0_i32_1 = arith.constant 0 : i32
    %c0_i32_2 = arith.constant 0 : i32
    return %arg0, %c0_i32, %c0_i32_0, %c0_i32_1 : i32, i32, i32, i32
  }
  func.func @transform_1(%arg0: i32) -> (i32, i32) {
    %c0_i32 = arith.constant 0 : i32
    %c0_i32_0 = arith.constant 0 : i32
    %c0_i32_1 = arith.constant 0 : i32
    return %c0_i32, %c0_i32_0 : i32, i32
  }
  func.func @transform_2(%arg0: i32) -> (i32, i32) {
    %c0_i32 = arith.constant 0 : i32
    %c0_i32_0 = arith.constant 0 : i32
    %c0_i32_1 = arith.constant 0 : i32
    return %c0_i32, %c0_i32_0 : i32, i32
  }
  func.func @transform_3(%arg0: i32) -> (i32, i32, i32, i32) {
    %c0_i32 = arith.constant 0 : i32
    %c0_i32_0 = arith.constant 0 : i32
    %c0_i32_1 = arith.constant 0 : i32
    %c0_i32_2 = arith.constant 0 : i32
    return %arg0, %c0_i32, %c0_i32_0, %c0_i32_1 : i32, i32, i32, i32
  }
}

</mosaic_0001>

<llo_original>
// kernel: resnet_block_forward.1
$region0: #{resnet_block_forward.1}
  #allocation0 [shape = 'u32[]', space=smem, size = 0x4, offset = 0x4, fixed_abs, tag = 'smem constant byte address 0x4 - core index']
  #allocation1 [shape = 'u32[72,128]{1,0:T(1,128)}', space=vmem, size = 0x9000, scoped, tag = 'internal scratch']
  %s0 = inlined_call_operand.vmem [shape: bf16[2,16,16,256], index: 0, kind: input, shape index: {}]
  %s1 = inlined_call_operand.vmem [shape: bf16[2304,256], index: 1, kind: input, shape index: {}]
  %s2 = inlined_call_operand.vmem [shape: bf16[2304,256], index: 2, kind: input, shape index: {}]
  %s3 = inlined_call_operand.hbm [shape: f32[2,16,16,256], index: 3, kind: output, shape index: {}]
  %s4 = sld [smem:[#allocation0]]
  $region45: #{resnet_block_forward.1} parent=0
    _
  %s6 = ssub.s32 1, %s4
  %s7 = scalar_select 0, %s6, %s4
  $region1: #{resnet_block_forward.1} parent=0
    #allocation2 [shape = 'u8[524288]{0}', space=vmem, size = 0x80000, scoped, tag = 'output window, operand 0']
    #allocation3 [shape = 's32[2]{0}', space=sflag, size = 0x8, scoped, tag = 'scoped memory for resnet_block_forward.1']
    %8 = vsyncpa [#allocation3], 0
    %s9 = scalar_lea.sflag [#allocation3], 1
    %10 = vsyncpa %s9, 0
    loop: start=0, step=1, limit=4
    $region2: #{resnet_block_forward.1} parent=1 // loop_pre_header
      _
    $region3: #{resnet_block_forward.1} parent=1 // loop_header
      %s12 = sphi 0, %s16
      %p13 = scmp.ge.s32.totalorder %s12, 4
      %s22 = sphi 0, %s24
      %s25 = sphi 0, %s22
      %s26 = sphi 0, %s25
      %s42 = sphi 0, %s26
      %s46 = sphi 0, %s46
      %s48 = sphi 0, %s46
      %s49 = sphi 0, %s48
      %s63 = sphi 0, %s49
      %s67 = sphi 0, %s67
      %s69 = sphi 0, %s67
      %s70 = sphi 0, %s69
      %s84 = sphi 0, %s70
      %s90 = sphi 0, %s92
      %s93 = sphi 0, %s90
      %s94 = sphi 0, %s93
      %s110 = sphi 0, %s94
    $region4: #{resnet_block_forward.1} parent=1 // loop_header_branch
      %15 = sbr.rel (%p13) target = $region8
    $region5: #{resnet_block_forward.1} parent=1 // loop_body
      %s17 = ssub.s32 %s12, 1
      %s18 = ssub.s32 %s12, 2
      %s19 = sadd.s32 %s12, 1
      %s20 = ssub.s32 %s12, %s19
      %p21 = scmp.eq.s32.totalorder %s20, 0
      %s23 = sadd.s32 %s22, 1
      %s24 = scalar_select %p21, %s22, %s23
      %p27 = pneg %p21
      %p28 = scmp.eq.s32.totalorder %s12, 1
      %p29 = por %p27, %p28
      %p30 = scmp.ne.s32.totalorder %s22, %s25
      %p31 = scmp.eq.s32.totalorder %s12, 0
      %p32 = por %p30, %p31
      %p33 = scmp.ne.s32.totalorder %s22, %s25
      %p34 = scmp.eq.s32.totalorder %s17, 1
      %p35 = por %p33, %p34
      %p36 = scmp.ne.s32.totalorder %s25, %s26
      %p37 = scmp.eq.s32.totalorder %s17, 0
      %p38 = por %p36, %p37
      %p39 = scmp.ne.s32.totalorder %s25, %s26
      %p40 = scmp.eq.s32.totalorder %s18, 1
      %p41 = por %p39, %p40
      %p43 = scmp.ne.s32.totalorder %s26, %s42
      %p44 = scmp.eq.s32.totalorder %s18, 0
      %p45 = por %p43, %p44
      %s47 = sadd.s32 %s46, 1
      %p50 = scmp.eq.s32.totalorder %s12, 1
      %p51 = scmp.ne.s32.totalorder %s46, %s48
      %p52 = scmp.eq.s32.totalorder %s12, 0
      %p53 = por %p51, %p52
      %p54 = scmp.ne.s32.totalorder %s46, %s48
      %p55 = scmp.eq.s32.totalorder %s17, 1
      %p56 = por %p54, %p55
      %p57 = scmp.ne.s32.totalorder %s48, %s49
      %p58 = scmp.eq.s32.totalorder %s17, 0
      %p59 = por %p57, %p58
      %p60 = scmp.ne.s32.totalorder %s48, %s49
      %p61 = scmp.eq.s32.totalorder %s18, 1
      %p62 = por %p60, %p61
      %p64 = scmp.ne.s32.totalorder %s49, %s63
      %p65 = scmp.eq.s32.totalorder %s18, 0
      %p66 = por %p64, %p65
      %s68 = sadd.s32 %s67, 1
      %p71 = scmp.eq.s32.totalorder %s12, 1
      %p72 = scmp.ne.s32.totalorder %s67, %s69
      %p73 = scmp.eq.s32.totalorder %s12, 0
      %p74 = por %p72, %p73
      %p75 = scmp.ne.s32.totalorder %s67, %s69
      %p76 = scmp.eq.s32.totalorder %s17, 1
      %p77 = por %p75, %p76
      %p78 = scmp.ne.s32.totalorder %s69, %s70
      %p79 = scmp.eq.s32.totalorder %s17, 0
      %p80 = por %p78, %p79
      %p81 = scmp.ne.s32.totalorder %s69, %s70
      %p82 = scmp.eq.s32.totalorder %s18, 1
      %p83 = por %p81, %p82
      %p85 = scmp.ne.s32.totalorder %s70, %s84
      %p86 = scmp.eq.s32.totalorder %s18, 0
      %p87 = por %p85, %p86
      %s88 = ssub.s32 %s12, %s19
      %p89 = scmp.eq.s32.totalorder %s88, 0
      %s91 = sadd.s32 %s90, 1
      %s92 = scalar_select %p89, %s90, %s91
      %p95 = pneg %p89
      %p96 = scmp.eq.s32.totalorder %s12, 1
      %p97 = por %p95, %p96
      %p98 = scmp.ne.s32.totalorder %s90, %s93
      %p99 = scmp.eq.s32.totalorder %s12, 0
      %p100 = por %p98, %p99
      %p101 = scmp.ne.s32.totalorder %s90, %s93
      %p102 = scmp.eq.s32.totalorder %s17, 1
      %p103 = por %p101, %p102
      %p104 = scmp.ne.s32.totalorder %s93, %s94
      %p105 = scmp.eq.s32.totalorder %s17, 0
      %p106 = por %p104, %p105
      %p107 = scmp.ne.s32.totalorder %s93, %s94
      %p108 = scmp.eq.s32.totalorder %s18, 1
      %p109 = por %p107, %p108
      %p111 = scmp.ne.s32.totalorder %s94, %s110
      %p112 = scmp.eq.s32.totalorder %s18, 0
      %p113 = por %p111, %p112
      %p114 = scmp.le.s32.totalorder 1, %s12
      %p115 = scmp.lt.s32.totalorder %s12, 3
      %p116 = pnand %p114, %p115
      %p117 = pneg %p116
      // Predicated region
      $region9: #{resnet_block_forward.1} parent=5 // pred_check
        _
      $region10: #{resnet_block_forward.1} parent=5 // pred_check_branch
        %119 = sbr.rel (%p116) target = $region12
      $region11: #{resnet_block_forward.1} parent=5 // pred_region
        %s120 = ssub.s32 %s12, 1
        // Predicated region
        $region13: #{resnet_block_forward.1} parent=11 // pred_check
          %p121 = pneg %p59
        $region14: #{resnet_block_forward.1} parent=11 // pred_check_branch
          %123 = sbr.rel (%p121) target = $region16
        $region15: #{resnet_block_forward.1} parent=11 // pred_region
          _
        $region16: #{resnet_block_forward.1} parent=11 // pred_fallthru
          _
        // Predicated region
        $region17: #{resnet_block_forward.1} parent=11 // pred_check
          %p124 = pneg %p80
        $region18: #{resnet_block_forward.1} parent=11 // pred_check_branch
          %126 = sbr.rel (%p124) target = $region20
        $region19: #{resnet_block_forward.1} parent=11 // pred_region
          _
        $region20: #{resnet_block_forward.1} parent=11 // pred_fallthru
          _
      $region12: #{resnet_block_forward.1} parent=5 // pred_fallthru
        _
      %p127 = scmp.lt.s32.totalorder %s12, 2
      // Predicated region
      $region21: #{resnet_block_forward.1} parent=5 // pred_check
        %p128 = pneg %p127
      $region22: #{resnet_block_forward.1} parent=5 // pred_check_branch
        %130 = sbr.rel (%p128) target = $region24
      $region23: #{resnet_block_forward.1} parent=5 // pred_region
        // Predicated region
        $region25: #{resnet_block_forward.1} parent=23 // pred_check
          %p131 = pneg %p32
        $region26: #{resnet_block_forward.1} parent=23 // pred_check_branch
          %133 = sbr.rel (%p131) target = $region28
        $region27: #{resnet_block_forward.1} parent=23 // pred_region
          %p134 = scmp.lt.s32.totalorder %s12, 1
          %s135 = scalar_select %p134, %s12, 1
          %s136 = smul.addr %s135, 64
          %s137 = smul.addr %s136, 4
          %s138 = scalar_lea.vmem %s0, %s137
        $region28: #{resnet_block_forward.1} parent=23 // pred_fallthru
          _
      $region24: #{resnet_block_forward.1} parent=5 // pred_fallthru
        _
      %p139 = scmp.le.s32.totalorder 1, %s12
      %p140 = scmp.lt.s32.totalorder %s12, 3
      %p141 = pnand %p139, %p140
      %p142 = pneg %p141
      // Predicated region
      $region29: #{resnet_block_forward.1} parent=5 // pred_check
        _
      $region30: #{resnet_block_forward.1} parent=5 // pred_check_branch
        %144 = sbr.rel (%p141) target = $region32
      $region31: #{resnet_block_forward.1} parent=5 // pred_region
        %s145 = ssub.s32 %s12, 1
        %p146 = scmp.lt.s32.totalorder %s17, 1
        %s147 = scalar_select %p146, %s17, 1
        %s148 = smul.addr %s147, 64
        %s149 = smul.addr %s148, 4
        %s150 = scalar_lea.vmem %s0, %s149
        %p151 = pneg %p38
        %p152 = pneg %p35
        %p153 = pneg %p59
        %p154 = pneg %p56
        %p155 = pneg %p80
        %p156 = pneg %p77
        %p157 = pneg %p106
        %p158 = pneg %p103
        %s159 = sand.u32 %s93, 1
        %s160 = scalar_lea.sflag [#allocation3], %s159
        %s161 = sand.u32 %s93, 1
        %s162 = smul.addr %s161, 512
        %s163 = scalar_lea.vmem [#allocation2], %s162
        %p164 = scmp.lt.s32.totalorder %s17, 1
        %s165 = scalar_select %p164, %s17, 1
        %s166 = smul.addr %s165, 64
        %s167 = smul.addr %s166, 4
        %s168 = scalar_lea.vmem %s0, %s167
        %v169 = vld [vmem:[%s168] sm:$0xff]
        %v170 = vld [vmem:[%s168 + $0x8] sm:$0xff]
        %v171 = vld [vmem:[%s168 + $0x10] sm:$0xff]
        %v172 = vld [vmem:[%s168 + $0x18] sm:$0xff]
        %v173 = vld [vmem:[%s168 + $0x20] sm:$0xff]
        %v174 = vld [vmem:[%s168 + $0x28] sm:$0xff]
        %v175 = vld [vmem:[%s168 + $0x30] sm:$0xff]
        %v176 = vld [vmem:[%s168 + $0x38] sm:$0xff]
        %v177 = vld [vmem:[%s168 + $0x40] sm:$0xff]
        %v178 = vld [vmem:[%s168 + $0x48] sm:$0xff]
        %v179 = vld [vmem:[%s168 + $0x50] sm:$0xff]
        %v180 = vld [vmem:[%s168 + $0x58] sm:$0xff]
        %v181 = vld [vmem:[%s168 + $0x60] sm:$0xff]
        %v182 = vld [vmem:[%s168 + $0x68] sm:$0xff]
        %v183 = vld [vmem:[%s168 + $0x70] sm:$0xff]
        %v184 = vld [vmem:[%s168 + $0x78] sm:$0xff]
        %v185 = vld [vmem:[%s168 + $0x80] sm:$0xff]
        %v186 = vld [vmem:[%s168 + $0x88] sm:$0xff]
        %v187 = vld [vmem:[%s168 + $0x90] sm:$0xff]
        %v188 = vld [vmem:[%s168 + $0x98] sm:$0xff]
        %v189 = vld [vmem:[%s168 + $0xa0] sm:$0xff]
        %v190 = vld [vmem:[%s168 + $0xa8] sm:$0xff]
        %v191 = vld [vmem:[%s168 + $0xb0] sm:$0xff]
        %v192 = vld [vmem:[%s168 + $0xb8] sm:$0xff]
        %v193 = vld [vmem:[%s168 + $0xc0] sm:$0xff]
        %v194 = vld [vmem:[%s168 + $0xc8] sm:$0xff]
        %v195 = vld [vmem:[%s168 + $0xd0] sm:$0xff]
        %v196 = vld [vmem:[%s168 + $0xd8] sm:$0xff]
        %v197 = vld [vmem:[%s168 + $0xe0] sm:$0xff]
        %v198 = vld [vmem:[%s168 + $0xe8] sm:$0xff]
        %v199 = vld [vmem:[%s168 + $0xf0] sm:$0xff]
        %v200 = vld [vmem:[%s168 + $0xf8] sm:$0xff]
        %v201 = vld [vmem:[%s1] sm:$0xff]
        %v202 = vld [vmem:[%s1 + $0x8] sm:$0xff]
        %v203 = vld [vmem:[%s1 + $0x10] sm:$0xff]
        %v204 = vld [vmem:[%s1 + $0x18] sm:$0xff]
        %v205 = vld [vmem:[%s1 + $0x20] sm:$0xff]
        %v206 = vld [vmem:[%s1 + $0x28] sm:$0xff]
        %v207 = vld [vmem:[%s1 + $0x30] sm:$0xff]
        %v208 = vld [vmem:[%s1 + $0x38] sm:$0xff]
        %v209 = vld [vmem:[%s1 + $0x40] sm:$0xff]
        %v210 = vld [vmem:[%s1 + $0x48] sm:$0xff]
        %v211 = vld [vmem:[%s1 + $0x50] sm:$0xff]
        %v212 = vld [vmem:[%s1 + $0x58] sm:$0xff]
        %v213 = vld [vmem:[%s1 + $0x60] sm:$0xff]
        %v214 = vld [vmem:[%s1 + $0x68] sm:$0xff]
        %v215 = vld [vmem:[%s1 + $0x70] sm:$0xff]
        %v216 = vld [vmem:[%s1 + $0x78] sm:$0xff]
        %v217 = vld [vmem:[%s1 + $0x80] sm:$0xff]
        %v218 = vld [vmem:[%s1 + $0x88] sm:$0xff]
        %v219 = vld [vmem:[%s1 + $0x90] sm:$0xff]
        %v220 = vld [vmem:[%s1 + $0x98] sm:$0xff]
        %v221 = vld [vmem:[%s1 + $0xa0] sm:$0xff]
        %v222 = vld [vmem:[%s1 + $0xa8] sm:$0xff]
        %v223 = vld [vmem:[%s1 + $0xb0] sm:$0xff]
        %v224 = vld [vmem:[%s1 + $0xb8] sm:$0xff]
        %v225 = vld [vmem:[%s1 + $0xc0] sm:$0xff]
        %v226 = vld [vmem:[%s1 + $0xc8] sm:$0xff]
        %v227 = vld [vmem:[%s1 + $0xd0] sm:$0xff]
        %v228 = vld [vmem:[%s1 + $0xd8] sm:$0xff]
        %v229 = vld [vmem:[%s1 + $0xe0] sm:$0xff]
        %v230 = vld [vmem:[%s1 + $0xe8] sm:$0xff]
        %v231 = vld [vmem:[%s1 + $0xf0] sm:$0xff]
        %v232 = vld [vmem:[%s1 + $0xf8] sm:$0xff]
        %v233 = vld [vmem:[%s1 + $0x100] sm:$0xff]
        %v234 = vld [vmem:[%s1 + $0x108] sm:$0xff]
        %v235 = vld [vmem:[%s1 + $0x110] sm:$0xff]
        %v236 = vld [vmem:[%s1 + $0x118] sm:$0xff]
        %v237 = vld [vmem:[%s1 + $0x120] sm:$0xff]
        %v238 = vld [vmem:[%s1 + $0x128] sm:$0xff]
        %v239 = vld [vmem:[%s1 + $0x130] sm:$0xff]
        %v240 = vld [vmem:[%s1 + $0x138] sm:$0xff]
        %v241 = vld [vmem:[%s1 + $0x140] sm:$0xff]
        %v242 = vld [vmem:[%s1 + $0x148] sm:$0xff]
        %v243 = vld [vmem:[%s1 + $0x150] sm:$0xff]
        %v244 = vld [vmem:[%s1 + $0x158] sm:$0xff]
        %v245 = vld [vmem:[%s1 + $0x160] sm:$0xff]
        %v246 = vld [vmem:[%s1 + $0x168] sm:$0xff]
        %v247 = vld [vmem:[%s1 + $0x170] sm:$0xff]
        %v248 = vld [vmem:[%s1 + $0x178] sm:$0xff]
        %v249 = vld [vmem:[%s1 + $0x180] sm:$0xff]
        %v250 = vld [vmem:[%s1 + $0x188] sm:$0xff]
        %v251 = vld [vmem:[%s1 + $0x190] sm:$0xff]
        %v252 = vld [vmem:[%s1 + $0x198] sm:$0xff]
        %v253 = vld [vmem:[%s1 + $0x1a0] sm:$0xff]
        %v254 = vld [vmem:[%s1 + $0x1a8] sm:$0xff]
        %v255 = vld [vmem:[%s1 + $0x1b0] sm:$0xff]
        %v256 = vld [vmem:[%s1 + $0x1b8] sm:$0xff]
        %v257 = vld [vmem:[%s1 + $0x1c0] sm:$0xff]
        %v258 = vld [vmem:[%s1 + $0x1c8] sm:$0xff]
        %v259 = vld [vmem:[%s1 + $0x1d0] sm:$0xff]
        %v260 = vld [vmem:[%s1 + $0x1d8] sm:$0xff]
        %v261 = vld [vmem:[%s1 + $0x1e0] sm:$0xff]
        %v262 = vld [vmem:[%s1 + $0x1e8] sm:$0xff]
        %v263 = vld [vmem:[%s1 + $0x1f0] sm:$0xff]
        %v264 = vld [vmem:[%s1 + $0x1f8] sm:$0xff]
        %v265 = vld [vmem:[%s1 + $0x200] sm:$0xff]
        %v266 = vld [vmem:[%s1 + $0x208] sm:$0xff]
        %v267 = vld [vmem:[%s1 + $0x210] sm:$0xff]
        %v268 = vld [vmem:[%s1 + $0x218] sm:$0xff]
        %v269 = vld [vmem:[%s1 + $0x220] sm:$0xff]
        %v270 = vld [vmem:[%s1 + $0x228] sm:$0xff]
        %v271 = vld [vmem:[%s1 + $0x230] sm:$0xff]
        %v272 = vld [vmem:[%s1 + $0x238] sm:$0xff]
        %v273 = vld [vmem:[%s1 + $0x240] sm:$0xff]
        %v274 = vld [vmem:[%s1 + $0x248] sm:$0xff]
        %v275 = vld [vmem:[%s1 + $0x250] sm:$0xff]
        %v276 = vld [vmem:[%s1 + $0x258] sm:$0xff]
        %v277 = vld [vmem:[%s1 + $0x260] sm:$0xff]
        %v278 = vld [vmem:[%s1 + $0x268] sm:$0xff]
        %v279 = vld [vmem:[%s1 + $0x270] sm:$0xff]
        %v280 = vld [vmem:[%s1 + $0x278] sm:$0xff]
        %v281 = vld [vmem:[%s1 + $0x280] sm:$0xff]
        %v282 = vld [vmem:[%s1 + $0x288] sm:$0xff]
        %v283 = vld [vmem:[%s1 + $0x290] sm:$0xff]
        %v284 = vld [vmem:[%s1 + $0x298] sm:$0xff]
        %v285 = vld [vmem:[%s1 + $0x2a0] sm:$0xff]
        %v286 = vld [vmem:[%s1 + $0x2a8] sm:$0xff]
        %v287 = vld [vmem:[%s1 + $0x2b0] sm:$0xff]
        %v288 = vld [vmem:[%s1 + $0x2b8] sm:$0xff]
        %v289 = vld [vmem:[%s1 + $0x2c0] sm:$0xff]
        %v290 = vld [vmem:[%s1 + $0x2c8] sm:$0xff]
        %v291 = vld [vmem:[%s1 + $0x2d0] sm:$0xff]
        %v292 = vld [vmem:[%s1 + $0x2d8] sm:$0xff]
        %v293 = vld [vmem:[%s1 + $0x2e0] sm:$0xff]
        %v294 = vld [vmem:[%s1 + $0x2e8] sm:$0xff]
        %v295 = vld [vmem:[%s1 + $0x2f0] sm:$0xff]
        %v296 = vld [vmem:[%s1 + $0x2f8] sm:$0xff]
        %v297 = vld [vmem:[%s1 + $0x300] sm:$0xff]
        %v298 = vld [vmem:[%s1 + $0x308] sm:$0xff]
        %v299 = vld [vmem:[%s1 + $0x310] sm:$0xff]
        %v300 = vld [vmem:[%s1 + $0x318] sm:$0xff]
        %v301 = vld [vmem:[%s1 + $0x320] sm:$0xff]
        %v302 = vld [vmem:[%s1 + $0x328] sm:$0xff]
        %v303 = vld [vmem:[%s1 + $0x330] sm:$0xff]
        %v304 = vld [vmem:[%s1 + $0x338] sm:$0xff]
        %v305 = vld [vmem:[%s1 + $0x340] sm:$0xff]
        %v306 = vld [vmem:[%s1 + $0x348] sm:$0xff]
        %v307 = vld [vmem:[%s1 + $0x350] sm:$0xff]
        %v308 = vld [vmem:[%s1 + $0x358] sm:$0xff]
        %v309 = vld [vmem:[%s1 + $0x360] sm:$0xff]
        %v310 = vld [vmem:[%s1 + $0x368] sm:$0xff]
        %v311 = vld [vmem:[%s1 + $0x370] sm:$0xff]
        %v312 = vld [vmem:[%s1 + $0x378] sm:$0xff]
        %v313 = vld [vmem:[%s1 + $0x380] sm:$0xff]
        %v314 = vld [vmem:[%s1 + $0x388] sm:$0xff]
        %v315 = vld [vmem:[%s1 + $0x390] sm:$0xff]
        %v316 = vld [vmem:[%s1 + $0x398] sm:$0xff]
        %v317 = vld [vmem:[%s1 + $0x3a0] sm:$0xff]
        %v318 = vld [vmem:[%s1 + $0x3a8] sm:$0xff]
        %v319 = vld [vmem:[%s1 + $0x3b0] sm:$0xff]
        %v320 = vld [vmem:[%s1 + $0x3b8] sm:$0xff]
        %v321 = vld [vmem:[%s1 + $0x3c0] sm:$0xff]
        %v322 = vld [vmem:[%s1 + $0x3c8] sm:$0xff]
        %v323 = vld [vmem:[%s1 + $0x3d0] sm:$0xff]
        %v324 = vld [vmem:[%s1 + $0x3d8] sm:$0xff]
        %v325 = vld [vmem:[%s1 + $0x3e0] sm:$0xff]
        %v326 = vld [vmem:[%s1 + $0x3e8] sm:$0xff]
        %v327 = vld [vmem:[%s1 + $0x3f0] sm:$0xff]
        %v328 = vld [vmem:[%s1 + $0x3f8] sm:$0xff]
        %v329 = vld [vmem:[%s1 + $0x400] sm:$0xff]
        %v330 = vld [vmem:[%s1 + $0x408] sm:$0xff]
        %v331 = vld [vmem:[%s1 + $0x410] sm:$0xff]
        %v332 = vld [vmem:[%s1 + $0x418] sm:$0xff]
        %v333 = vld [vmem:[%s1 + $0x420] sm:$0xff]
        %v334 = vld [vmem:[%s1 + $0x428] sm:$0xff]
        %v335 = vld [vmem:[%s1 + $0x430] sm:$0xff]
        %v336 = vld [vmem:[%s1 + $0x438] sm:$0xff]
        %v337 = vld [vmem:[%s1 + $0x440] sm:$0xff]
        %v338 = vld [vmem:[%s1 + $0x448] sm:$0xff]
        %v339 = vld [vmem:[%s1 + $0x450] sm:$0xff]
        %v340 = vld [vmem:[%s1 + $0x458] sm:$0xff]
        %v341 = vld [vmem:[%s1 + $0x460] sm:$0xff]
        %v342 = vld [vmem:[%s1 + $0x468] sm:$0xff]
        %v343 = vld [vmem:[%s1 + $0x470] sm:$0xff]
        %v344 = vld [vmem:[%s1 + $0x478] sm:$0xff]
        %v345 = vld [vmem:[%s1 + $0x480] sm:$0xff]
        %v346 = vld [vmem:[%s1 + $0x488] sm:$0xff]
        %v347 = vld [vmem:[%s1 + $0x490] sm:$0xff]
        %v348 = vld [vmem:[%s1 + $0x498] sm:$0xff]
        %v349 = vld [vmem:[%s1 + $0x4a0] sm:$0xff]
        %v350 = vld [vmem:[%s1 + $0x4a8] sm:$0xff]
        %v351 = vld [vmem:[%s1 + $0x4b0] sm:$0xff]
        %v352 = vld [vmem:[%s1 + $0x4b8] sm:$0xff]
        %v353 = vld [vmem:[%s1 + $0x4c0] sm:$0xff]
        %v354 = vld [vmem:[%s1 + $0x4c8] sm:$0xff]
        %v355 = vld [vmem:[%s1 + $0x4d0] sm:$0xff]
        %v356 = vld [vmem:[%s1 + $0x4d8] sm:$0xff]
        %v357 = vld [vmem:[%s1 + $0x4e0] sm:$0xff]
        %v358 = vld [vmem:[%s1 + $0x4e8] sm:$0xff]
        %v359 = vld [vmem:[%s1 + $0x4f0] sm:$0xff]
        %v360 = vld [vmem:[%s1 + $0x4f8] sm:$0xff]
        %v361 = vld [vmem:[%s1 + $0x500] sm:$0xff]
        %v362 = vld [vmem:[%s1 + $0x508] sm:$0xff]
        %v363 = vld [vmem:[%s1 + $0x510] sm:$0xff]
        %v364 = vld [vmem:[%s1 + $0x518] sm:$0xff]
        %v365 = vld [vmem:[%s1 + $0x520] sm:$0xff]
        %v366 = vld [vmem:[%s1 + $0x528] sm:$0xff]
        %v367 = vld [vmem:[%s1 + $0x530] sm:$0xff]
        %v368 = vld [vmem:[%s1 + $0x538] sm:$0xff]
        %v369 = vld [vmem:[%s1 + $0x540] sm:$0xff]
        %v370 = vld [vmem:[%s1 + $0x548] sm:$0xff]
        %v371 = vld [vmem:[%s1 + $0x550] sm:$0xff]
        %v372 = vld [vmem:[%s1 + $0x558] sm:$0xff]
        %v373 = vld [vmem:[%s1 + $0x560] sm:$0xff]
        %v374 = vld [vmem:[%s1 + $0x568] sm:$0xff]
        %v375 = vld [vmem:[%s1 + $0x570] sm:$0xff]
        %v376 = vld [vmem:[%s1 + $0x578] sm:$0xff]
        %v377 = vld [vmem:[%s1 + $0x580] sm:$0xff]
        %v378 = vld [vmem:[%s1 + $0x588] sm:$0xff]
        %v379 = vld [vmem:[%s1 + $0x590] sm:$0xff]
        %v380 = vld [vmem:[%s1 + $0x598] sm:$0xff]
        %v381 = vld [vmem:[%s1 + $0x5a0] sm:$0xff]
        %v382 = vld [vmem:[%s1 + $0x5a8] sm:$0xff]
        %v383 = vld [vmem:[%s1 + $0x5b0] sm:$0xff]
        %v384 = vld [vmem:[%s1 + $0x5b8] sm:$0xff]
        %v385 = vld [vmem:[%s1 + $0x5c0] sm:$0xff]
        %v386 = vld [vmem:[%s1 + $0x5c8] sm:$0xff]
        %v387 = vld [vmem:[%s1 + $0x5d0] sm:$0xff]
        %v388 = vld [vmem:[%s1 + $0x5d8] sm:$0xff]
        %v389 = vld [vmem:[%s1 + $0x5e0] sm:$0xff]
        %v390 = vld [vmem:[%s1 + $0x5e8] sm:$0xff]
        %v391 = vld [vmem:[%s1 + $0x5f0] sm:$0xff]
        %v392 = vld [vmem:[%s1 + $0x5f8] sm:$0xff]
        %v393 = vld [vmem:[%s1 + $0x600] sm:$0xff]
        %v394 = vld [vmem:[%s1 + $0x608] sm:$0xff]
        %v395 = vld [vmem:[%s1 + $0x610] sm:$0xff]
        %v396 = vld [vmem:[%s1 + $0x618] sm:$0xff]
        %v397 = vld [vmem:[%s1 + $0x620] sm:$0xff]
        %v398 = vld [vmem:[%s1 + $0x628] sm:$0xff]
        %v399 = vld [vmem:[%s1 + $0x630] sm:$0xff]
        %v400 = vld [vmem:[%s1 + $0x638] sm:$0xff]
        %v401 = vld [vmem:[%s1 + $0x640] sm:$0xff]
        %v402 = vld [vmem:[%s1 + $0x648] sm:$0xff]
        %v403 = vld [vmem:[%s1 + $0x650] sm:$0xff]
        %v404 = vld [vmem:[%s1 + $0x658] sm:$0xff]
        %v405 = vld [vmem:[%s1 + $0x660] sm:$0xff]
        %v406 = vld [vmem:[%s1 + $0x668] sm:$0xff]
        %v407 = vld [vmem:[%s1 + $0x670] sm:$0xff]
        %v408 = vld [vmem:[%s1 + $0x678] sm:$0xff]
        %v409 = vld [vmem:[%s1 + $0x680] sm:$0xff]
        %v410 = vld [vmem:[%s1 + $0x688] sm:$0xff]
        %v411 = vld [vmem:[%s1 + $0x690] sm:$0xff]
        %v412 = vld [vmem:[%s1 + $0x698] sm:$0xff]
        %v413 = vld [vmem:[%s1 + $0x6a0] sm:$0xff]
        %v414 = vld [vmem:[%s1 + $0x6a8] sm:$0xff]
        %v415 = vld [vmem:[%s1 + $0x6b0] sm:$0xff]
        %v416 = vld [vmem:[%s1 + $0x6b8] sm:$0xff]
        %v417 = vld [vmem:[%s1 + $0x6c0] sm:$0xff]
        %v418 = vld [vmem:[%s1 + $0x6c8] sm:$0xff]
        %v419 = vld [vmem:[%s1 + $0x6d0] sm:$0xff]
        %v420 = vld [vmem:[%s1 + $0x6d8] sm:$0xff]
        %v421 = vld [vmem:[%s1 + $0x6e0] sm:$0xff]
        %v422 = vld [vmem:[%s1 + $0x6e8] sm:$0xff]
        %v423 = vld [vmem:[%s1 + $0x6f0] sm:$0xff]
        %v424 = vld [vmem:[%s1 + $0x6f8] sm:$0xff]
        %v425 = vld [vmem:[%s1 + $0x700] sm:$0xff]
        %v426 = vld [vmem:[%s1 + $0x708] sm:$0xff]
        %v427 = vld [vmem:[%s1 + $0x710] sm:$0xff]
        %v428 = vld [vmem:[%s1 + $0x718] sm:$0xff]
        %v429 = vld [vmem:[%s1 + $0x720] sm:$0xff]
        %v430 = vld [vmem:[%s1 + $0x728] sm:$0xff]
        %v431 = vld [vmem:[%s1 + $0x730] sm:$0xff]
        %v432 = vld [vmem:[%s1 + $0x738] sm:$0xff]
        %v433 = vld [vmem:[%s1 + $0x740] sm:$0xff]
        %v434 = vld [vmem:[%s1 + $0x748] sm:$0xff]
        %v435 = vld [vmem:[%s1 + $0x750] sm:$0xff]
        %v436 = vld [vmem:[%s1 + $0x758] sm:$0xff]
        %v437 = vld [vmem:[%s1 + $0x760] sm:$0xff]
        %v438 = vld [vmem:[%s1 + $0x768] sm:$0xff]
        %v439 = vld [vmem:[%s1 + $0x770] sm:$0xff]
        %v440 = vld [vmem:[%s1 + $0x778] sm:$0xff]
        %v441 = vld [vmem:[%s1 + $0x780] sm:$0xff]
        %v442 = vld [vmem:[%s1 + $0x788] sm:$0xff]
        %v443 = vld [vmem:[%s1 + $0x790] sm:$0xff]
        %v444 = vld [vmem:[%s1 + $0x798] sm:$0xff]
        %v445 = vld [vmem:[%s1 + $0x7a0] sm:$0xff]
        %v446 = vld [vmem:[%s1 + $0x7a8] sm:$0xff]
        %v447 = vld [vmem:[%s1 + $0x7b0] sm:$0xff]
        %v448 = vld [vmem:[%s1 + $0x7b8] sm:$0xff]
        %v449 = vld [vmem:[%s1 + $0x7c0] sm:$0xff]
        %v450 = vld [vmem:[%s1 + $0x7c8] sm:$0xff]
        %v451 = vld [vmem:[%s1 + $0x7d0] sm:$0xff]
        %v452 = vld [vmem:[%s1 + $0x7d8] sm:$0xff]
        %v453 = vld [vmem:[%s1 + $0x7e0] sm:$0xff]
        %v454 = vld [vmem:[%s1 + $0x7e8] sm:$0xff]
        %v455 = vld [vmem:[%s1 + $0x7f0] sm:$0xff]
        %v456 = vld [vmem:[%s1 + $0x7f8] sm:$0xff]
        %v457 = vld [vmem:[%s1 + $0x800] sm:$0xff]
        %v458 = vld [vmem:[%s1 + $0x808] sm:$0xff]
        %v459 = vld [vmem:[%s1 + $0x810] sm:$0xff]
        %v460 = vld [vmem:[%s1 + $0x818] sm:$0xff]
        %v461 = vld [vmem:[%s1 + $0x820] sm:$0xff]
        %v462 = vld [vmem:[%s1 + $0x828] sm:$0xff]
        %v463 = vld [vmem:[%s1 + $0x830] sm:$0xff]
        %v464 = vld [vmem:[%s1 + $0x838] sm:$0xff]
        %v465 = vld [vmem:[%s1 + $0x840] sm:$0xff]
        %v466 = vld [vmem:[%s1 + $0x848] sm:$0xff]
        %v467 = vld [vmem:[%s1 + $0x850] sm:$0xff]
        %v468 = vld [vmem:[%s1 + $0x858] sm:$0xff]
        %v469 = vld [vmem:[%s1 + $0x860] sm:$0xff]
        %v470 = vld [vmem:[%s1 + $0x868] sm:$0xff]
        %v471 = vld [vmem:[%s1 + $0x870] sm:$0xff]
        %v472 = vld [vmem:[%s1 + $0x878] sm:$0xff]
        %v473 = vld [vmem:[%s1 + $0x880] sm:$0xff]
        %v474 = vld [vmem:[%s1 + $0x888] sm:$0xff]
        %v475 = vld [vmem:[%s1 + $0x890] sm:$0xff]
        %v476 = vld [vmem:[%s1 + $0x898] sm:$0xff]
        %v477 = vld [vmem:[%s1 + $0x8a0] sm:$0xff]
        %v478 = vld [vmem:[%s1 + $0x8a8] sm:$0xff]
        %v479 = vld [vmem:[%s1 + $0x8b0] sm:$0xff]
        %v480 = vld [vmem:[%s1 + $0x8b8] sm:$0xff]
        %v481 = vld [vmem:[%s1 + $0x8c0] sm:$0xff]
        %v482 = vld [vmem:[%s1 + $0x8c8] sm:$0xff]
        %v483 = vld [vmem:[%s1 + $0x8d0] sm:$0xff]
        %v484 = vld [vmem:[%s1 + $0x8d8] sm:$0xff]
        %v485 = vld [vmem:[%s1 + $0x8e0] sm:$0xff]
        %v486 = vld [vmem:[%s1 + $0x8e8] sm:$0xff]
        %v487 = vld [vmem:[%s1 + $0x8f0] sm:$0xff]
        %v488 = vld [vmem:[%s1 + $0x8f8] sm:$0xff]
        %v505 = vunpack.c.l.b16 %v173
        %v506 = vunpack.c.h.b16 %v173
        %v507 = vunpack.c.l.b16 %v171
        %v508 = vunpack.c.h.b16 %v171
        %v509 = vunpack.c.l.b16 %v169
        %v510 = vunpack.c.h.b16 %v169
        %v511 = vunpack.c.l.b16 %v175
        %v512 = vunpack.c.h.b16 %v175
        %v513 = vunpack.c.l.b16 %v177
        %v514 = vunpack.c.h.b16 %v177
        %v515 = vunpack.c.l.b16 %v179
        %v516 = vunpack.c.h.b16 %v179
        %v517 = vunpack.c.l.b16 %v181
        %v518 = vunpack.c.h.b16 %v181
        %v519 = vunpack.c.l.b16 %v183
        %v520 = vunpack.c.h.b16 %v183
        %v521 = vunpack.c.l.b16 %v185
        %v522 = vunpack.c.h.b16 %v185
        %v523 = vunpack.c.l.b16 %v187
        %v524 = vunpack.c.h.b16 %v187
        %v525 = vunpack.c.l.b16 %v189
        %v526 = vunpack.c.h.b16 %v189
        %v527 = vunpack.c.l.b16 %v191
        %v528 = vunpack.c.h.b16 %v191
        %v529 = vunpack.c.l.b16 %v193
        %v530 = vunpack.c.h.b16 %v193
        %v531 = vunpack.c.l.b16 %v195
        %v532 = vunpack.c.h.b16 %v195
        %v533 = vunpack.c.l.b16 %v197
        %v534 = vunpack.c.h.b16 %v197
        %v535 = vunpack.c.l.b16 %v199
        %v536 = vunpack.c.h.b16 %v199
        %v537 = vpack.c.b16 %v505, %v505
        %v538 = vpack.c.b16 %v506, %v506
        %v539 = vpack.c.b16 %v507, %v507
        %v540 = vpack.c.b16 %v508, %v508
        %v541 = vpack.c.b16 %v509, %v509
        %v542 = vpack.c.b16 %v510, %v510
        %v543 = vpack.c.b16 %v511, %v511
        %v544 = vpack.c.b16 %v512, %v512
        %v545 = vpack.c.b16 %v513, %v513
        %v546 = vpack.c.b16 %v514, %v514
        %v547 = vpack.c.b16 %v515, %v515
        %v548 = vpack.c.b16 %v516, %v516
        %v549 = vpack.c.b16 %v517, %v517
        %v550 = vpack.c.b16 %v518, %v518
        %v551 = vpack.c.b16 %v519, %v519
        %v552 = vpack.c.b16 %v520, %v520
        %v553 = vpack.c.b16 %v521, %v521
        %v554 = vpack.c.b16 %v522, %v522
        %v555 = vpack.c.b16 %v523, %v523
        %v556 = vpack.c.b16 %v524, %v524
        %v557 = vpack.c.b16 %v525, %v525
        %v558 = vpack.c.b16 %v526, %v526
        %v559 = vpack.c.b16 %v527, %v527
        %v560 = vpack.c.b16 %v528, %v528
        %v561 = vpack.c.b16 %v529, %v529
        %v562 = vpack.c.b16 %v530, %v530
        %v563 = vpack.c.b16 %v531, %v531
        %v564 = vpack.c.b16 %v532, %v532
        %v565 = vpack.c.b16 %v533, %v533
        %v566 = vpack.c.b16 %v534, %v534
        %v567 = vpack.c.b16 %v535, %v535
        %v568 = vpack.c.b16 %v536, %v536
        %v569 = vrot.slane %v537, 1
        %v570 = vrot.slane %v538, 1
        %v571 = vrot.slane %v539, 1
        %v572 = vrot.slane %v540, 1
        %v573 = vrot.slane %v541, 1
        %v574 = vrot.slane %v542, 1
        %v575 = vrot.slane %v543, 1
        %v576 = vrot.slane %v544, 1
        %v577 = vrot.slane %v545, 1
        %v578 = vrot.slane %v546, 1
        %v579 = vrot.slane %v547, 1
        %v580 = vrot.slane %v548, 1
        %v581 = vrot.slane %v549, 1
        %v582 = vrot.slane %v550, 1
        %v583 = vrot.slane %v551, 1
        %v584 = vrot.slane %v552, 1
        %v585 = vrot.slane %v553, 1
        %v586 = vrot.slane %v554, 1
        %v587 = vrot.slane %v555, 1
        %v588 = vrot.slane %v556, 1
        %v589 = vrot.slane %v557, 1
        %v590 = vrot.slane %v558, 1
        %v591 = vrot.slane %v559, 1
        %v592 = vrot.slane %v560, 1
        %v593 = vrot.slane %v561, 1
        %v594 = vrot.slane %v562, 1
        %v595 = vrot.slane %v563, 1
        %v596 = vrot.slane %v564, 1
        %v597 = vrot.slane %v565, 1
        %v598 = vrot.slane %v566, 1
        %v599 = vrot.slane %v567, 1
        %v600 = vrot.slane %v568, 1
        %v681 = vunpack.c.l.b16 %v174
        %v682 = vunpack.c.h.b16 %v174
        %v683 = vunpack.c.l.b16 %v172
        %v684 = vunpack.c.h.b16 %v172
        %v685 = vunpack.c.l.b16 %v170
        %v686 = vunpack.c.h.b16 %v170
        %v687 = vunpack.c.l.b16 %v176
        %v688 = vunpack.c.h.b16 %v176
        %v689 = vunpack.c.l.b16 %v178
        %v690 = vunpack.c.h.b16 %v178
        %v691 = vunpack.c.l.b16 %v180
        %v692 = vunpack.c.h.b16 %v180
        %v693 = vunpack.c.l.b16 %v182
        %v694 = vunpack.c.h.b16 %v182
        %v695 = vunpack.c.l.b16 %v184
        %v696 = vunpack.c.h.b16 %v184
        %v697 = vunpack.c.l.b16 %v186
        %v698 = vunpack.c.h.b16 %v186
        %v699 = vunpack.c.l.b16 %v188
        %v700 = vunpack.c.h.b16 %v188
        %v701 = vunpack.c.l.b16 %v190
        %v702 = vunpack.c.h.b16 %v190
        %v703 = vunpack.c.l.b16 %v192
        %v704 = vunpack.c.h.b16 %v192
        %v705 = vunpack.c.l.b16 %v194
        %v706 = vunpack.c.h.b16 %v194
        %v707 = vunpack.c.l.b16 %v196
        %v708 = vunpack.c.h.b16 %v196
        %v709 = vunpack.c.l.b16 %v198
        %v710 = vunpack.c.h.b16 %v198
        %v711 = vunpack.c.l.b16 %v200
        %v712 = vunpack.c.h.b16 %v200
        %v713 = vpack.c.b16 %v681, %v505
        %v714 = vpack.c.b16 %v682, %v506
        %v715 = vpack.c.b16 %v683, %v507
        %v716 = vpack.c.b16 %v684, %v508
        %v717 = vpack.c.b16 %v685, %v509
        %v718 = vpack.c.b16 %v686, %v510
        %v719 = vpack.c.b16 %v687, %v511
        %v720 = vpack.c.b16 %v688, %v512
        %v721 = vpack.c.b16 %v689, %v513
        %v722 = vpack.c.b16 %v690, %v514
        %v723 = vpack.c.b16 %v691, %v515
        %v724 = vpack.c.b16 %v692, %v516
        %v725 = vpack.c.b16 %v693, %v517
        %v726 = vpack.c.b16 %v694, %v518
        %v727 = vpack.c.b16 %v695, %v519
        %v728 = vpack.c.b16 %v696, %v520
        %v729 = vpack.c.b16 %v697, %v521
        %v730 = vpack.c.b16 %v698, %v522
        %v731 = vpack.c.b16 %v699, %v523
        %v732 = vpack.c.b16 %v700, %v524
        %v733 = vpack.c.b16 %v701, %v525
        %v734 = vpack.c.b16 %v702, %v526
        %v735 = vpack.c.b16 %v703, %v527
        %v736 = vpack.c.b16 %v704, %v528
        %v737 = vpack.c.b16 %v705, %v529
        %v738 = vpack.c.b16 %v706, %v530
        %v739 = vpack.c.b16 %v707, %v531
        %v740 = vpack.c.b16 %v708, %v532
        %v741 = vpack.c.b16 %v709, %v533
        %v742 = vpack.c.b16 %v710, %v534
        %v743 = vpack.c.b16 %v711, %v535
        %v744 = vpack.c.b16 %v712, %v536
        %v745 = vrot.slane %v713, 7
        %v746 = vrot.slane %v714, 7
        %v747 = vrot.slane %v715, 7
        %v748 = vrot.slane %v716, 7
        %v749 = vrot.slane %v717, 7
        %v750 = vrot.slane %v718, 7
        %v751 = vrot.slane %v719, 7
        %v752 = vrot.slane %v720, 7
        %v753 = vrot.slane %v721, 7
        %v754 = vrot.slane %v722, 7
        %v755 = vrot.slane %v723, 7
        %v756 = vrot.slane %v724, 7
        %v757 = vrot.slane %v725, 7
        %v758 = vrot.slane %v726, 7
        %v759 = vrot.slane %v727, 7
        %v760 = vrot.slane %v728, 7
        %v761 = vrot.slane %v729, 7
        %v762 = vrot.slane %v730, 7
        %v763 = vrot.slane %v731, 7
        %v764 = vrot.slane %v732, 7
        %v765 = vrot.slane %v733, 7
        %v766 = vrot.slane %v734, 7
        %v767 = vrot.slane %v735, 7
        %v768 = vrot.slane %v736, 7
        %v769 = vrot.slane %v737, 7
        %v770 = vrot.slane %v738, 7
        %v771 = vrot.slane %v739, 7
        %v772 = vrot.slane %v740, 7
        %v773 = vrot.slane %v741, 7
        %v774 = vrot.slane %v742, 7
        %v775 = vrot.slane %v743, 7
        %v776 = vrot.slane %v744, 7
        %vm777 = vcmask 1040384
        %vm778 = vsmask.f32 256
        %vm779 = vmand %vm777, %vm778
        %v780 = vsel %vm779, %v569, %v537
        %v781 = vsel %vm779, %v570, %v538
        %v782 = vsel %vm779, %v571, %v539
        %v783 = vsel %vm779, %v572, %v540
        %v784 = vsel %vm779, %v573, %v541
        %v785 = vsel %vm779, %v574, %v542
        %v786 = vsel %vm779, %v575, %v543
        %v787 = vsel %vm779, %v576, %v544
        %v788 = vsel %vm779, %v577, %v545
        %v789 = vsel %vm779, %v578, %v546
        %v790 = vsel %vm779, %v579, %v547
        %v791 = vsel %vm779, %v580, %v548
        %v792 = vsel %vm779, %v581, %v549
        %v793 = vsel %vm779, %v582, %v550
        %v794 = vsel %vm779, %v583, %v551
        %v795 = vsel %vm779, %v584, %v552
        %v796 = vsel %vm779, %v585, %v553
        %v797 = vsel %vm779, %v586, %v554
        %v798 = vsel %vm779, %v587, %v555
        %v799 = vsel %vm779, %v588, %v556
        %v800 = vsel %vm779, %v589, %v557
        %v801 = vsel %vm779, %v590, %v558
        %v802 = vsel %vm779, %v591, %v559
        %v803 = vsel %vm779, %v592, %v560
        %v804 = vsel %vm779, %v593, %v561
        %v805 = vsel %vm779, %v594, %v562
        %v806 = vsel %vm779, %v595, %v563
        %v807 = vsel %vm779, %v596, %v564
        %v808 = vsel %vm779, %v597, %v565
        %v809 = vsel %vm779, %v598, %v566
        %v810 = vsel %vm779, %v599, %v567
        %v811 = vsel %vm779, %v600, %v568
        %vm812 = vcmask 1040384
        %v815 = vsel %vm812, %v780, %v745
        %v819 = vsel %vm812, %v781, %v746
        %v823 = vsel %vm812, %v782, %v747
        %v827 = vsel %vm812, %v783, %v748
        %v831 = vsel %vm812, %v784, %v749
        %v835 = vsel %vm812, %v785, %v750
        %v839 = vsel %vm812, %v786, %v751
        %v843 = vsel %vm812, %v787, %v752
        %v847 = vsel %vm812, %v788, %v753
        %v851 = vsel %vm812, %v789, %v754
        %v855 = vsel %vm812, %v790, %v755
        %v859 = vsel %vm812, %v791, %v756
        %v863 = vsel %vm812, %v792, %v757
        %v867 = vsel %vm812, %v793, %v758
        %v871 = vsel %vm812, %v794, %v759
        %v875 = vsel %vm812, %v795, %v760
        %v879 = vsel %vm812, %v796, %v761
        %v883 = vsel %vm812, %v797, %v762
        %v887 = vsel %vm812, %v798, %v763
        %v891 = vsel %vm812, %v799, %v764
        %v895 = vsel %vm812, %v800, %v765
        %v899 = vsel %vm812, %v801, %v766
        %v903 = vsel %vm812, %v802, %v767
        %v907 = vsel %vm812, %v803, %v768
        %v911 = vsel %vm812, %v804, %v769
        %v915 = vsel %vm812, %v805, %v770
        %v919 = vsel %vm812, %v806, %v771
        %v923 = vsel %vm812, %v807, %v772
        %v927 = vsel %vm812, %v808, %v773
        %v931 = vsel %vm812, %v809, %v774
        %v935 = vsel %vm812, %v810, %v775
        %v939 = vsel %vm812, %v811, %v776
        %v941 = vrot.slane %v713, 1
        %v942 = vrot.slane %v714, 1
        %v943 = vrot.slane %v715, 1
        %v944 = vrot.slane %v716, 1
        %v945 = vrot.slane %v717, 1
        %v946 = vrot.slane %v718, 1
        %v947 = vrot.slane %v719, 1
        %v948 = vrot.slane %v720, 1
        %v949 = vrot.slane %v721, 1
        %v950 = vrot.slane %v722, 1
        %v951 = vrot.slane %v723, 1
        %v952 = vrot.slane %v724, 1
        %v953 = vrot.slane %v725, 1
        %v954 = vrot.slane %v726, 1
        %v955 = vrot.slane %v727, 1
        %v956 = vrot.slane %v728, 1
        %v957 = vrot.slane %v729, 1
        %v958 = vrot.slane %v730, 1
        %v959 = vrot.slane %v731, 1
        %v960 = vrot.slane %v732, 1
        %v961 = vrot.slane %v733, 1
        %v962 = vrot.slane %v734, 1
        %v963 = vrot.slane %v735, 1
        %v964 = vrot.slane %v736, 1
        %v965 = vrot.slane %v737, 1
        %v966 = vrot.slane %v738, 1
        %v967 = vrot.slane %v739, 1
        %v968 = vrot.slane %v740, 1
        %v969 = vrot.slane %v741, 1
        %v970 = vrot.slane %v742, 1
        %v971 = vrot.slane %v743, 1
        %v972 = vrot.slane %v744, 1
        %v973 = vpack.c.b16 %v681, %v681
        %v974 = vpack.c.b16 %v682, %v682
        %v975 = vpack.c.b16 %v683, %v683
        %v976 = vpack.c.b16 %v684, %v684
        %v977 = vpack.c.b16 %v685, %v685
        %v978 = vpack.c.b16 %v686, %v686
        %v979 = vpack.c.b16 %v687, %v687
        %v980 = vpack.c.b16 %v688, %v688
        %v981 = vpack.c.b16 %v689, %v689
        %v982 = vpack.c.b16 %v690, %v690
        %v983 = vpack.c.b16 %v691, %v691
        %v984 = vpack.c.b16 %v692, %v692
        %v985 = vpack.c.b16 %v693, %v693
        %v986 = vpack.c.b16 %v694, %v694
        %v987 = vpack.c.b16 %v695, %v695
        %v988 = vpack.c.b16 %v696, %v696
        %v989 = vpack.c.b16 %v697, %v697
        %v990 = vpack.c.b16 %v698, %v698
        %v991 = vpack.c.b16 %v699, %v699
        %v992 = vpack.c.b16 %v700, %v700
        %v993 = vpack.c.b16 %v701, %v701
        %v994 = vpack.c.b16 %v702, %v702
        %v995 = vpack.c.b16 %v703, %v703
        %v996 = vpack.c.b16 %v704, %v704
        %v997 = vpack.c.b16 %v705, %v705
        %v998 = vpack.c.b16 %v706, %v706
        %v999 = vpack.c.b16 %v707, %v707
        %v1000 = vpack.c.b16 %v708, %v708
        %v1001 = vpack.c.b16 %v709, %v709
        %v1002 = vpack.c.b16 %v710, %v710
        %v1003 = vpack.c.b16 %v711, %v711
        %v1004 = vpack.c.b16 %v712, %v712
        %v1005 = vrot.slane %v973, 3
        %v1006 = vrot.slane %v974, 3
        %v1007 = vrot.slane %v975, 3
        %v1008 = vrot.slane %v976, 3
        %v1009 = vrot.slane %v977, 3
        %v1010 = vrot.slane %v978, 3
        %v1011 = vrot.slane %v979, 3
        %v1012 = vrot.slane %v980, 3
        %v1013 = vrot.slane %v981, 3
        %v1014 = vrot.slane %v982, 3
        %v1015 = vrot.slane %v983, 3
        %v1016 = vrot.slane %v984, 3
        %v1017 = vrot.slane %v985, 3
        %v1018 = vrot.slane %v986, 3
        %v1019 = vrot.slane %v987, 3
        %v1020 = vrot.slane %v988, 3
        %v1021 = vrot.slane %v989, 3
        %v1022 = vrot.slane %v990, 3
        %v1023 = vrot.slane %v991, 3
        %v1024 = vrot.slane %v992, 3
        %v1025 = vrot.slane %v993, 3
        %v1026 = vrot.slane %v994, 3
        %v1027 = vrot.slane %v995, 3
        %v1028 = vrot.slane %v996, 3
        %v1029 = vrot.slane %v997, 3
        %v1030 = vrot.slane %v998, 3
        %v1031 = vrot.slane %v999, 3
        %v1032 = vrot.slane %v1000, 3
        %v1033 = vrot.slane %v1001, 3
        %v1034 = vrot.slane %v1002, 3
        %v1035 = vrot.slane %v1003, 3
        %v1036 = vrot.slane %v1004, 3
        %vm1069 = vcmask 1046528
        %v1072 = vsel %vm1069, %v941, %v973
        %v1076 = vsel %vm1069, %v942, %v974
        %v1080 = vsel %vm1069, %v943, %v975
        %v1084 = vsel %vm1069, %v944, %v976
        %v1088 = vsel %vm1069, %v945, %v977
        %v1092 = vsel %vm1069, %v946, %v978
        %v1096 = vsel %vm1069, %v947, %v979
        %v1100 = vsel %vm1069, %v948, %v980
        %v1104 = vsel %vm1069, %v949, %v981
        %v1108 = vsel %vm1069, %v950, %v982
        %v1112 = vsel %vm1069, %v951, %v983
        %v1116 = vsel %vm1069, %v952, %v984
        %v1120 = vsel %vm1069, %v953, %v985
        %v1124 = vsel %vm1069, %v954, %v986
        %v1128 = vsel %vm1069, %v955, %v987
        %v1132 = vsel %vm1069, %v956, %v988
        %v1136 = vsel %vm1069, %v957, %v989
        %v1140 = vsel %vm1069, %v958, %v990
        %v1144 = vsel %vm1069, %v959, %v991
        %v1148 = vsel %vm1069, %v960, %v992
        %v1152 = vsel %vm1069, %v961, %v993
        %v1156 = vsel %vm1069, %v962, %v994
        %v1160 = vsel %vm1069, %v963, %v995
        %v1164 = vsel %vm1069, %v964, %v996
        %v1168 = vsel %vm1069, %v965, %v997
        %v1172 = vsel %vm1069, %v966, %v998
        %v1176 = vsel %vm1069, %v967, %v999
        %v1180 = vsel %vm1069, %v968, %v1000
        %v1184 = vsel %vm1069, %v969, %v1001
        %v1188 = vsel %vm1069, %v970, %v1002
        %v1192 = vsel %vm1069, %v971, %v1003
        %v1196 = vsel %vm1069, %v972, %v1004
        %vm1198 = vcmask 1047552
        %vm1199 = vsmask.f32 7424
        %vm1200 = vmand %vm1198, %vm1199
        %v1201 = vsel %vm1200, %v1072, %v1005
        %v1202 = vsel %vm1200, %v1076, %v1006
        %v1203 = vsel %vm1200, %v1080, %v1007
        %v1204 = vsel %vm1200, %v1084, %v1008
        %v1205 = vsel %vm1200, %v1088, %v1009
        %v1206 = vsel %vm1200, %v1092, %v1010
        %v1207 = vsel %vm1200, %v1096, %v1011
        %v1208 = vsel %vm1200, %v1100, %v1012
        %v1209 = vsel %vm1200, %v1104, %v1013
        %v1210 = vsel %vm1200, %v1108, %v1014
        %v1211 = vsel %vm1200, %v1112, %v1015
        %v1212 = vsel %vm1200, %v1116, %v1016
        %v1213 = vsel %vm1200, %v1120, %v1017
        %v1214 = vsel %vm1200, %v1124, %v1018
        %v1215 = vsel %vm1200, %v1128, %v1019
        %v1216 = vsel %vm1200, %v1132, %v1020
        %v1217 = vsel %vm1200, %v1136, %v1021
        %v1218 = vsel %vm1200, %v1140, %v1022
        %v1219 = vsel %vm1200, %v1144, %v1023
        %v1220 = vsel %vm1200, %v1148, %v1024
        %v1221 = vsel %vm1200, %v1152, %v1025
        %v1222 = vsel %vm1200, %v1156, %v1026
        %v1223 = vsel %vm1200, %v1160, %v1027
        %v1224 = vsel %vm1200, %v1164, %v1028
        %v1225 = vsel %vm1200, %v1168, %v1029
        %v1226 = vsel %vm1200, %v1172, %v1030
        %v1227 = vsel %vm1200, %v1176, %v1031
        %v1228 = vsel %vm1200, %v1180, %v1032
        %v1229 = vsel %vm1200, %v1184, %v1033
        %v1230 = vsel %vm1200, %v1188, %v1034
        %v1231 = vsel %vm1200, %v1192, %v1035
        %v1232 = vsel %vm1200, %v1196, %v1036
        %v1553 = vunpack.c.l.b16 %v201
        %v1554 = vunpack.c.h.b16 %v201
        %v1555 = vunpack.c.l.b16 %v202
        %v1556 = vunpack.c.h.b16 %v202
        %v1557 = vunpack.c.l.b16 %v203
        %v1558 = vunpack.c.h.b16 %v203
        %v1559 = vunpack.c.l.b16 %v204
        %v1560 = vunpack.c.h.b16 %v204
        %v1561 = vunpack.c.l.b16 %v205
        %v1562 = vunpack.c.h.b16 %v205
        %v1563 = vunpack.c.l.b16 %v206
        %v1564 = vunpack.c.h.b16 %v206
        %v1565 = vunpack.c.l.b16 %v207
        %v1566 = vunpack.c.h.b16 %v207
        %v1567 = vunpack.c.l.b16 %v208
        %v1568 = vunpack.c.h.b16 %v208
        %v1569 = vunpack.c.l.b16 %v209
        %v1570 = vunpack.c.h.b16 %v209
        %v1571 = vunpack.c.l.b16 %v210
        %v1572 = vunpack.c.h.b16 %v210
        %v1573 = vunpack.c.l.b16 %v211
        %v1574 = vunpack.c.h.b16 %v211
        %v1575 = vunpack.c.l.b16 %v212
        %v1576 = vunpack.c.h.b16 %v212
        %v1577 = vunpack.c.l.b16 %v213
        %v1578 = vunpack.c.h.b16 %v213
        %v1579 = vunpack.c.l.b16 %v214
        %v1580 = vunpack.c.h.b16 %v214
        %v1581 = vunpack.c.l.b16 %v215
        %v1582 = vunpack.c.h.b16 %v215
        %v1583 = vunpack.c.l.b16 %v216
        %v1584 = vunpack.c.h.b16 %v216
        %v1585 = vunpack.c.l.b16 %v217
        %v1586 = vunpack.c.h.b16 %v217
        %v1587 = vunpack.c.l.b16 %v218
        %v1588 = vunpack.c.h.b16 %v218
        %v1589 = vunpack.c.l.b16 %v219
        %v1590 = vunpack.c.h.b16 %v219
        %v1591 = vunpack.c.l.b16 %v220
        %v1592 = vunpack.c.h.b16 %v220
        %v1593 = vunpack.c.l.b16 %v221
        %v1594 = vunpack.c.h.b16 %v221
        %v1595 = vunpack.c.l.b16 %v222
        %v1596 = vunpack.c.h.b16 %v222
        %v1597 = vunpack.c.l.b16 %v223
        %v1598 = vunpack.c.h.b16 %v223
        %v1599 = vunpack.c.l.b16 %v224
        %v1600 = vunpack.c.h.b16 %v224
        %v1601 = vunpack.c.l.b16 %v225
        %v1602 = vunpack.c.h.b16 %v225
        %v1603 = vunpack.c.l.b16 %v226
        %v1604 = vunpack.c.h.b16 %v226
        %v1605 = vunpack.c.l.b16 %v227
        %v1606 = vunpack.c.h.b16 %v227
        %v1607 = vunpack.c.l.b16 %v228
        %v1608 = vunpack.c.h.b16 %v228
        %v1609 = vunpack.c.l.b16 %v229
        %v1610 = vunpack.c.h.b16 %v229
        %v1611 = vunpack.c.l.b16 %v230
        %v1612 = vunpack.c.h.b16 %v230
        %v1613 = vunpack.c.l.b16 %v231
        %v1614 = vunpack.c.h.b16 %v231
        %v1615 = vunpack.c.l.b16 %v232
        %v1616 = vunpack.c.h.b16 %v232
        %v1617 = vunpack.c.l.b16 %v233
        %v1618 = vunpack.c.h.b16 %v233
        %v1619 = vunpack.c.l.b16 %v234
        %v1620 = vunpack.c.h.b16 %v234
        %v1621 = vunpack.c.l.b16 %v235
        %v1622 = vunpack.c.h.b16 %v235
        %v1623 = vunpack.c.l.b16 %v236
        %v1624 = vunpack.c.h.b16 %v236
        %v1625 = vunpack.c.l.b16 %v237
        %v1626 = vunpack.c.h.b16 %v237
        %v1627 = vunpack.c.l.b16 %v238
        %v1628 = vunpack.c.h.b16 %v238
        %v1629 = vunpack.c.l.b16 %v239
        %v1630 = vunpack.c.h.b16 %v239
        %v1631 = vunpack.c.l.b16 %v240
        %v1632 = vunpack.c.h.b16 %v240
        %v1633 = vunpack.c.l.b16 %v241
        %v1634 = vunpack.c.h.b16 %v241
        %v1635 = vunpack.c.l.b16 %v242
        %v1636 = vunpack.c.h.b16 %v242
        %v1637 = vunpack.c.l.b16 %v243
        %v1638 = vunpack.c.h.b16 %v243
        %v1639 = vunpack.c.l.b16 %v244
        %v1640 = vunpack.c.h.b16 %v244
        %v1641 = vunpack.c.l.b16 %v245
        %v1642 = vunpack.c.h.b16 %v245
        %v1643 = vunpack.c.l.b16 %v246
        %v1644 = vunpack.c.h.b16 %v246
        %v1645 = vunpack.c.l.b16 %v247
        %v1646 = vunpack.c.h.b16 %v247
        %v1647 = vunpack.c.l.b16 %v248
        %v1648 = vunpack.c.h.b16 %v248
        %v1649 = vunpack.c.l.b16 %v249
        %v1650 = vunpack.c.h.b16 %v249
        %v1651 = vunpack.c.l.b16 %v250
        %v1652 = vunpack.c.h.b16 %v250
        %v1653 = vunpack.c.l.b16 %v251
        %v1654 = vunpack.c.h.b16 %v251
        %v1655 = vunpack.c.l.b16 %v252
        %v1656 = vunpack.c.h.b16 %v252
        %v1657 = vunpack.c.l.b16 %v253
        %v1658 = vunpack.c.h.b16 %v253
        %v1659 = vunpack.c.l.b16 %v254
        %v1660 = vunpack.c.h.b16 %v254
        %v1661 = vunpack.c.l.b16 %v255
        %v1662 = vunpack.c.h.b16 %v255
        %v1663 = vunpack.c.l.b16 %v256
        %v1664 = vunpack.c.h.b16 %v256
        %v1665 = vunpack.c.l.b16 %v257
        %v1666 = vunpack.c.h.b16 %v257
        %v1667 = vunpack.c.l.b16 %v258
        %v1668 = vunpack.c.h.b16 %v258
        %v1669 = vunpack.c.l.b16 %v259
        %v1670 = vunpack.c.h.b16 %v259
        %v1671 = vunpack.c.l.b16 %v260
        %v1672 = vunpack.c.h.b16 %v260
        %v1673 = vunpack.c.l.b16 %v261
        %v1674 = vunpack.c.h.b16 %v261
        %v1675 = vunpack.c.l.b16 %v262
        %v1676 = vunpack.c.h.b16 %v262
        %v1677 = vunpack.c.l.b16 %v263
        %v1678 = vunpack.c.h.b16 %v263
        %v1679 = vunpack.c.l.b16 %v264
        %v1680 = vunpack.c.h.b16 %v264
        %v1681 = vunpack.c.l.b16 %v265
        %v1682 = vunpack.c.h.b16 %v265
        %v1683 = vunpack.c.l.b16 %v266
        %v1684 = vunpack.c.h.b16 %v266
        %v1685 = vunpack.c.l.b16 %v267
        %v1686 = vunpack.c.h.b16 %v267
        %v1687 = vunpack.c.l.b16 %v268
        %v1688 = vunpack.c.h.b16 %v268
        %v1689 = vunpack.c.l.b16 %v269
        %v1690 = vunpack.c.h.b16 %v269
        %v1691 = vunpack.c.l.b16 %v270
        %v1692 = vunpack.c.h.b16 %v270
        %v1693 = vunpack.c.l.b16 %v271
        %v1694 = vunpack.c.h.b16 %v271
        %v1695 = vunpack.c.l.b16 %v272
        %v1696 = vunpack.c.h.b16 %v272
        %v1697 = vunpack.c.l.b16 %v273
        %v1698 = vunpack.c.h.b16 %v273
        %v1699 = vunpack.c.l.b16 %v274
        %v1700 = vunpack.c.h.b16 %v274
        %v1701 = vunpack.c.l.b16 %v275
        %v1702 = vunpack.c.h.b16 %v275
        %v1703 = vunpack.c.l.b16 %v276
        %v1704 = vunpack.c.h.b16 %v276
        %v1705 = vunpack.c.l.b16 %v277
        %v1706 = vunpack.c.h.b16 %v277
        %v1707 = vunpack.c.l.b16 %v278
        %v1708 = vunpack.c.h.b16 %v278
        %v1709 = vunpack.c.l.b16 %v279
        %v1710 = vunpack.c.h.b16 %v279
        %v1711 = vunpack.c.l.b16 %v280
        %v1712 = vunpack.c.h.b16 %v280
        %v1713 = vunpack.c.l.b16 %v281
        %v1714 = vunpack.c.h.b16 %v281
        %v1715 = vunpack.c.l.b16 %v282
        %v1716 = vunpack.c.h.b16 %v282
        %v1717 = vunpack.c.l.b16 %v283
        %v1718 = vunpack.c.h.b16 %v283
        %v1719 = vunpack.c.l.b16 %v284
        %v1720 = vunpack.c.h.b16 %v284
        %v1721 = vunpack.c.l.b16 %v285
        %v1722 = vunpack.c.h.b16 %v285
        %v1723 = vunpack.c.l.b16 %v286
        %v1724 = vunpack.c.h.b16 %v286
        %v1725 = vunpack.c.l.b16 %v287
        %v1726 = vunpack.c.h.b16 %v287
        %v1727 = vunpack.c.l.b16 %v288
        %v1728 = vunpack.c.h.b16 %v288
        %v1729 = vunpack.c.l.b16 %v289
        %v1730 = vunpack.c.h.b16 %v289
        %v1731 = vunpack.c.l.b16 %v290
        %v1732 = vunpack.c.h.b16 %v290
        %v1733 = vunpack.c.l.b16 %v291
        %v1734 = vunpack.c.h.b16 %v291
        %v1735 = vunpack.c.l.b16 %v292
        %v1736 = vunpack.c.h.b16 %v292
        %v1737 = vunpack.c.l.b16 %v293
        %v1738 = vunpack.c.h.b16 %v293
        %v1739 = vunpack.c.l.b16 %v294
        %v1740 = vunpack.c.h.b16 %v294
        %v1741 = vunpack.c.l.b16 %v295
        %v1742 = vunpack.c.h.b16 %v295
        %v1743 = vunpack.c.l.b16 %v296
        %v1744 = vunpack.c.h.b16 %v296
        %v1745 = vunpack.c.l.b16 %v297
        %v1746 = vunpack.c.h.b16 %v297
        %v1747 = vunpack.c.l.b16 %v298
        %v1748 = vunpack.c.h.b16 %v298
        %v1749 = vunpack.c.l.b16 %v299
        %v1750 = vunpack.c.h.b16 %v299
        %v1751 = vunpack.c.l.b16 %v300
        %v1752 = vunpack.c.h.b16 %v300
        %v1753 = vunpack.c.l.b16 %v301
        %v1754 = vunpack.c.h.b16 %v301
        %v1755 = vunpack.c.l.b16 %v302
        %v1756 = vunpack.c.h.b16 %v302
        %v1757 = vunpack.c.l.b16 %v303
        %v1758 = vunpack.c.h.b16 %v303
        %v1759 = vunpack.c.l.b16 %v304
        %v1760 = vunpack.c.h.b16 %v304
        %v1761 = vunpack.c.l.b16 %v305
        %v1762 = vunpack.c.h.b16 %v305
        %v1763 = vunpack.c.l.b16 %v306
        %v1764 = vunpack.c.h.b16 %v306
        %v1765 = vunpack.c.l.b16 %v307
        %v1766 = vunpack.c.h.b16 %v307
        %v1767 = vunpack.c.l.b16 %v308
        %v1768 = vunpack.c.h.b16 %v308
        %v1769 = vunpack.c.l.b16 %v309
        %v1770 = vunpack.c.h.b16 %v309
        %v1771 = vunpack.c.l.b16 %v310
        %v1772 = vunpack.c.h.b16 %v310
        %v1773 = vunpack.c.l.b16 %v311
        %v1774 = vunpack.c.h.b16 %v311
        %v1775 = vunpack.c.l.b16 %v312
        %v1776 = vunpack.c.h.b16 %v312
        %v1777 = vunpack.c.l.b16 %v313
        %v1778 = vunpack.c.h.b16 %v313
        %v1779 = vunpack.c.l.b16 %v314
        %v1780 = vunpack.c.h.b16 %v314
        %v1781 = vunpack.c.l.b16 %v315
        %v1782 = vunpack.c.h.b16 %v315
        %v1783 = vunpack.c.l.b16 %v316
        %v1784 = vunpack.c.h.b16 %v316
        %v1785 = vunpack.c.l.b16 %v317
        %v1786 = vunpack.c.h.b16 %v317
        %v1787 = vunpack.c.l.b16 %v318
        %v1788 = vunpack.c.h.b16 %v318
        %v1789 = vunpack.c.l.b16 %v319
        %v1790 = vunpack.c.h.b16 %v319
        %v1791 = vunpack.c.l.b16 %v320
        %v1792 = vunpack.c.h.b16 %v320
        %v1793 = vunpack.c.l.b16 %v321
        %v1794 = vunpack.c.h.b16 %v321
        %v1795 = vunpack.c.l.b16 %v322
        %v1796 = vunpack.c.h.b16 %v322
        %v1797 = vunpack.c.l.b16 %v323
        %v1798 = vunpack.c.h.b16 %v323
        %v1799 = vunpack.c.l.b16 %v324
        %v1800 = vunpack.c.h.b16 %v324
        %v1801 = vunpack.c.l.b16 %v325
        %v1802 = vunpack.c.h.b16 %v325
        %v1803 = vunpack.c.l.b16 %v326
        %v1804 = vunpack.c.h.b16 %v326
        %v1805 = vunpack.c.l.b16 %v327
        %v1806 = vunpack.c.h.b16 %v327
        %v1807 = vunpack.c.l.b16 %v328
        %v1808 = vunpack.c.h.b16 %v328
        %v1809 = vunpack.c.l.b16 %v329
        %v1810 = vunpack.c.h.b16 %v329
        %v1811 = vunpack.c.l.b16 %v330
        %v1812 = vunpack.c.h.b16 %v330
        %v1813 = vunpack.c.l.b16 %v331
        %v1814 = vunpack.c.h.b16 %v331
        %v1815 = vunpack.c.l.b16 %v332
        %v1816 = vunpack.c.h.b16 %v332
        %v1817 = vunpack.c.l.b16 %v333
        %v1818 = vunpack.c.h.b16 %v333
        %v1819 = vunpack.c.l.b16 %v334
        %v1820 = vunpack.c.h.b16 %v334
        %v1821 = vunpack.c.l.b16 %v335
        %v1822 = vunpack.c.h.b16 %v335
        %v1823 = vunpack.c.l.b16 %v336
        %v1824 = vunpack.c.h.b16 %v336
        %v1825 = vunpack.c.l.b16 %v337
        %v1826 = vunpack.c.h.b16 %v337
        %v1827 = vunpack.c.l.b16 %v338
        %v1828 = vunpack.c.h.b16 %v338
        %v1829 = vunpack.c.l.b16 %v339
        %v1830 = vunpack.c.h.b16 %v339
        %v1831 = vunpack.c.l.b16 %v340
        %v1832 = vunpack.c.h.b16 %v340
        %v1833 = vunpack.c.l.b16 %v341
        %v1834 = vunpack.c.h.b16 %v341
        %v1835 = vunpack.c.l.b16 %v342
        %v1836 = vunpack.c.h.b16 %v342
        %v1837 = vunpack.c.l.b16 %v343
        %v1838 = vunpack.c.h.b16 %v343
        %v1839 = vunpack.c.l.b16 %v344
        %v1840 = vunpack.c.h.b16 %v344
        %v1841 = vunpack.c.l.b16 %v345
        %v1842 = vunpack.c.h.b16 %v345
        %v1843 = vunpack.c.l.b16 %v346
        %v1844 = vunpack.c.h.b16 %v346
        %v1845 = vunpack.c.l.b16 %v347
        %v1846 = vunpack.c.h.b16 %v347
        %v1847 = vunpack.c.l.b16 %v348
        %v1848 = vunpack.c.h.b16 %v348
        %v1849 = vunpack.c.l.b16 %v349
        %v1850 = vunpack.c.h.b16 %v349
        %v1851 = vunpack.c.l.b16 %v350
        %v1852 = vunpack.c.h.b16 %v350
        %v1853 = vunpack.c.l.b16 %v351
        %v1854 = vunpack.c.h.b16 %v351
        %v1855 = vunpack.c.l.b16 %v352
        %v1856 = vunpack.c.h.b16 %v352
        %v1857 = vunpack.c.l.b16 %v353
        %v1858 = vunpack.c.h.b16 %v353
        %v1859 = vunpack.c.l.b16 %v354
        %v1860 = vunpack.c.h.b16 %v354
        %v1861 = vunpack.c.l.b16 %v355
        %v1862 = vunpack.c.h.b16 %v355
        %v1863 = vunpack.c.l.b16 %v356
        %v1864 = vunpack.c.h.b16 %v356
        %v1865 = vunpack.c.l.b16 %v357
        %v1866 = vunpack.c.h.b16 %v357
        %v1867 = vunpack.c.l.b16 %v358
        %v1868 = vunpack.c.h.b16 %v358
        %v1869 = vunpack.c.l.b16 %v359
        %v1870 = vunpack.c.h.b16 %v359
        %v1871 = vunpack.c.l.b16 %v360
        %v1872 = vunpack.c.h.b16 %v360
        %v1873 = vunpack.c.l.b16 %v361
        %v1874 = vunpack.c.h.b16 %v361
        %v1875 = vunpack.c.l.b16 %v362
        %v1876 = vunpack.c.h.b16 %v362
        %v1877 = vunpack.c.l.b16 %v363
        %v1878 = vunpack.c.h.b16 %v363
        %v1879 = vunpack.c.l.b16 %v364
        %v1880 = vunpack.c.h.b16 %v364
        %v1881 = vunpack.c.l.b16 %v365
        %v1882 = vunpack.c.h.b16 %v365
        %v1883 = vunpack.c.l.b16 %v366
        %v1884 = vunpack.c.h.b16 %v366
        %v1885 = vunpack.c.l.b16 %v367
        %v1886 = vunpack.c.h.b16 %v367
        %v1887 = vunpack.c.l.b16 %v368
        %v1888 = vunpack.c.h.b16 %v368
        %v1889 = vunpack.c.l.b16 %v369
        %v1890 = vunpack.c.h.b16 %v369
        %v1891 = vunpack.c.l.b16 %v370
        %v1892 = vunpack.c.h.b16 %v370
        %v1893 = vunpack.c.l.b16 %v371
        %v1894 = vunpack.c.h.b16 %v371
        %v1895 = vunpack.c.l.b16 %v372
        %v1896 = vunpack.c.h.b16 %v372
        %v1897 = vunpack.c.l.b16 %v373
        %v1898 = vunpack.c.h.b16 %v373
        %v1899 = vunpack.c.l.b16 %v374
        %v1900 = vunpack.c.h.b16 %v374
        %v1901 = vunpack.c.l.b16 %v375
        %v1902 = vunpack.c.h.b16 %v375
        %v1903 = vunpack.c.l.b16 %v376
        %v1904 = vunpack.c.h.b16 %v376
        %v1905 = vunpack.c.l.b16 %v377
        %v1906 = vunpack.c.h.b16 %v377
        %v1907 = vunpack.c.l.b16 %v378
        %v1908 = vunpack.c.h.b16 %v378
        %v1909 = vunpack.c.l.b16 %v379
        %v1910 = vunpack.c.h.b16 %v379
        %v1911 = vunpack.c.l.b16 %v380
        %v1912 = vunpack.c.h.b16 %v380
        %v1913 = vunpack.c.l.b16 %v381
        %v1914 = vunpack.c.h.b16 %v381
        %v1915 = vunpack.c.l.b16 %v382
        %v1916 = vunpack.c.h.b16 %v382
        %v1917 = vunpack.c.l.b16 %v383
        %v1918 = vunpack.c.h.b16 %v383
        %v1919 = vunpack.c.l.b16 %v384
        %v1920 = vunpack.c.h.b16 %v384
        %v1921 = vunpack.c.l.b16 %v385
        %v1922 = vunpack.c.h.b16 %v385
        %v1923 = vunpack.c.l.b16 %v386
        %v1924 = vunpack.c.h.b16 %v386
        %v1925 = vunpack.c.l.b16 %v387
        %v1926 = vunpack.c.h.b16 %v387
        %v1927 = vunpack.c.l.b16 %v388
        %v1928 = vunpack.c.h.b16 %v388
        %v1929 = vunpack.c.l.b16 %v389
        %v1930 = vunpack.c.h.b16 %v389
        %v1931 = vunpack.c.l.b16 %v390
        %v1932 = vunpack.c.h.b16 %v390
        %v1933 = vunpack.c.l.b16 %v391
        %v1934 = vunpack.c.h.b16 %v391
        %v1935 = vunpack.c.l.b16 %v392
        %v1936 = vunpack.c.h.b16 %v392
        %v1937 = vunpack.c.l.b16 %v393
        %v1938 = vunpack.c.h.b16 %v393
        %v1939 = vunpack.c.l.b16 %v394
        %v1940 = vunpack.c.h.b16 %v394
        %v1941 = vunpack.c.l.b16 %v395
        %v1942 = vunpack.c.h.b16 %v395
        %v1943 = vunpack.c.l.b16 %v396
        %v1944 = vunpack.c.h.b16 %v396
        %v1945 = vunpack.c.l.b16 %v397
        %v1946 = vunpack.c.h.b16 %v397
        %v1947 = vunpack.c.l.b16 %v398
        %v1948 = vunpack.c.h.b16 %v398
        %v1949 = vunpack.c.l.b16 %v399
        %v1950 = vunpack.c.h.b16 %v399
        %v1951 = vunpack.c.l.b16 %v400
        %v1952 = vunpack.c.h.b16 %v400
        %v1953 = vunpack.c.l.b16 %v401
        %v1954 = vunpack.c.h.b16 %v401
        %v1955 = vunpack.c.l.b16 %v402
        %v1956 = vunpack.c.h.b16 %v402
        %v1957 = vunpack.c.l.b16 %v403
        %v1958 = vunpack.c.h.b16 %v403
        %v1959 = vunpack.c.l.b16 %v404
        %v1960 = vunpack.c.h.b16 %v404
        %v1961 = vunpack.c.l.b16 %v405
        %v1962 = vunpack.c.h.b16 %v405
        %v1963 = vunpack.c.l.b16 %v406
        %v1964 = vunpack.c.h.b16 %v406
        %v1965 = vunpack.c.l.b16 %v407
        %v1966 = vunpack.c.h.b16 %v407
        %v1967 = vunpack.c.l.b16 %v408
        %v1968 = vunpack.c.h.b16 %v408
        %v1969 = vunpack.c.l.b16 %v409
        %v1970 = vunpack.c.h.b16 %v409
        %v1971 = vunpack.c.l.b16 %v410
        %v1972 = vunpack.c.h.b16 %v410
        %v1973 = vunpack.c.l.b16 %v411
        %v1974 = vunpack.c.h.b16 %v411
        %v1975 = vunpack.c.l.b16 %v412
        %v1976 = vunpack.c.h.b16 %v412
        %v1977 = vunpack.c.l.b16 %v413
        %v1978 = vunpack.c.h.b16 %v413
        %v1979 = vunpack.c.l.b16 %v414
        %v1980 = vunpack.c.h.b16 %v414
        %v1981 = vunpack.c.l.b16 %v415
        %v1982 = vunpack.c.h.b16 %v415
        %v1983 = vunpack.c.l.b16 %v416
        %v1984 = vunpack.c.h.b16 %v416
        %v1985 = vunpack.c.l.b16 %v417
        %v1986 = vunpack.c.h.b16 %v417
        %v1987 = vunpack.c.l.b16 %v418
        %v1988 = vunpack.c.h.b16 %v418
        %v1989 = vunpack.c.l.b16 %v419
        %v1990 = vunpack.c.h.b16 %v419
        %v1991 = vunpack.c.l.b16 %v420
        %v1992 = vunpack.c.h.b16 %v420
        %v1993 = vunpack.c.l.b16 %v421
        %v1994 = vunpack.c.h.b16 %v421
        %v1995 = vunpack.c.l.b16 %v422
        %v1996 = vunpack.c.h.b16 %v422
        %v1997 = vunpack.c.l.b16 %v423
        %v1998 = vunpack.c.h.b16 %v423
        %v1999 = vunpack.c.l.b16 %v424
        %v2000 = vunpack.c.h.b16 %v424
        %v2001 = vunpack.c.l.b16 %v425
        %v2002 = vunpack.c.h.b16 %v425
        %v2003 = vunpack.c.l.b16 %v426
        %v2004 = vunpack.c.h.b16 %v426
        %v2005 = vunpack.c.l.b16 %v427
        %v2006 = vunpack.c.h.b16 %v427
        %v2007 = vunpack.c.l.b16 %v428
        %v2008 = vunpack.c.h.b16 %v428
        %v2009 = vunpack.c.l.b16 %v429
        %v2010 = vunpack.c.h.b16 %v429
        %v2011 = vunpack.c.l.b16 %v430
        %v2012 = vunpack.c.h.b16 %v430
        %v2013 = vunpack.c.l.b16 %v431
        %v2014 = vunpack.c.h.b16 %v431
        %v2015 = vunpack.c.l.b16 %v432
        %v2016 = vunpack.c.h.b16 %v432
        %v2017 = vunpack.c.l.b16 %v433
        %v2018 = vunpack.c.h.b16 %v433
        %v2019 = vunpack.c.l.b16 %v434
        %v2020 = vunpack.c.h.b16 %v434
        %v2021 = vunpack.c.l.b16 %v435
        %v2022 = vunpack.c.h.b16 %v435
        %v2023 = vunpack.c.l.b16 %v436
        %v2024 = vunpack.c.h.b16 %v436
        %v2025 = vunpack.c.l.b16 %v437
        %v2026 = vunpack.c.h.b16 %v437
        %v2027 = vunpack.c.l.b16 %v438
        %v2028 = vunpack.c.h.b16 %v438
        %v2029 = vunpack.c.l.b16 %v439
        %v2030 = vunpack.c.h.b16 %v439
        %v2031 = vunpack.c.l.b16 %v440
        %v2032 = vunpack.c.h.b16 %v440
        %v2033 = vunpack.c.l.b16 %v441
        %v2034 = vunpack.c.h.b16 %v441
        %v2035 = vunpack.c.l.b16 %v442
        %v2036 = vunpack.c.h.b16 %v442
        %v2037 = vunpack.c.l.b16 %v443
        %v2038 = vunpack.c.h.b16 %v443
        %v2039 = vunpack.c.l.b16 %v444
        %v2040 = vunpack.c.h.b16 %v444
        %v2041 = vunpack.c.l.b16 %v445
        %v2042 = vunpack.c.h.b16 %v445
        %v2043 = vunpack.c.l.b16 %v446
        %v2044 = vunpack.c.h.b16 %v446
        %v2045 = vunpack.c.l.b16 %v447
        %v2046 = vunpack.c.h.b16 %v447
        %v2047 = vunpack.c.l.b16 %v448
        %v2048 = vunpack.c.h.b16 %v448
        %v2049 = vunpack.c.l.b16 %v449
        %v2050 = vunpack.c.h.b16 %v449
        %v2051 = vunpack.c.l.b16 %v450
        %v2052 = vunpack.c.h.b16 %v450
        %v2053 = vunpack.c.l.b16 %v451
        %v2054 = vunpack.c.h.b16 %v451
        %v2055 = vunpack.c.l.b16 %v452
        %v2056 = vunpack.c.h.b16 %v452
        %v2057 = vunpack.c.l.b16 %v453
        %v2058 = vunpack.c.h.b16 %v453
        %v2059 = vunpack.c.l.b16 %v454
        %v2060 = vunpack.c.h.b16 %v454
        %v2061 = vunpack.c.l.b16 %v455
        %v2062 = vunpack.c.h.b16 %v455
        %v2063 = vunpack.c.l.b16 %v456
        %v2064 = vunpack.c.h.b16 %v456
        %v2065 = vunpack.c.l.b16 %v457
        %v2066 = vunpack.c.h.b16 %v457
        %v2067 = vunpack.c.l.b16 %v458
        %v2068 = vunpack.c.h.b16 %v458
        %v2069 = vunpack.c.l.b16 %v459
        %v2070 = vunpack.c.h.b16 %v459
        %v2071 = vunpack.c.l.b16 %v460
        %v2072 = vunpack.c.h.b16 %v460
        %v2073 = vunpack.c.l.b16 %v461
        %v2074 = vunpack.c.h.b16 %v461
        %v2075 = vunpack.c.l.b16 %v462
        %v2076 = vunpack.c.h.b16 %v462
        %v2077 = vunpack.c.l.b16 %v463
        %v2078 = vunpack.c.h.b16 %v463
        %v2079 = vunpack.c.l.b16 %v464
        %v2080 = vunpack.c.h.b16 %v464
        %v2081 = vunpack.c.l.b16 %v465
        %v2082 = vunpack.c.h.b16 %v465
        %v2083 = vunpack.c.l.b16 %v466
        %v2084 = vunpack.c.h.b16 %v466
        %v2085 = vunpack.c.l.b16 %v467
        %v2086 = vunpack.c.h.b16 %v467
        %v2087 = vunpack.c.l.b16 %v468
        %v2088 = vunpack.c.h.b16 %v468
        %v2089 = vunpack.c.l.b16 %v469
        %v2090 = vunpack.c.h.b16 %v469
        %v2091 = vunpack.c.l.b16 %v470
        %v2092 = vunpack.c.h.b16 %v470
        %v2093 = vunpack.c.l.b16 %v471
        %v2094 = vunpack.c.h.b16 %v471
        %v2095 = vunpack.c.l.b16 %v472
        %v2096 = vunpack.c.h.b16 %v472
        %v2097 = vunpack.c.l.b16 %v473
        %v2098 = vunpack.c.h.b16 %v473
        %v2099 = vunpack.c.l.b16 %v474
        %v2100 = vunpack.c.h.b16 %v474
        %v2101 = vunpack.c.l.b16 %v475
        %v2102 = vunpack.c.h.b16 %v475
        %v2103 = vunpack.c.l.b16 %v476
        %v2104 = vunpack.c.h.b16 %v476
        %v2105 = vunpack.c.l.b16 %v477
        %v2106 = vunpack.c.h.b16 %v477
        %v2107 = vunpack.c.l.b16 %v478
        %v2108 = vunpack.c.h.b16 %v478
        %v2109 = vunpack.c.l.b16 %v479
        %v2110 = vunpack.c.h.b16 %v479
        %v2111 = vunpack.c.l.b16 %v480
        %v2112 = vunpack.c.h.b16 %v480
        %v2113 = vunpack.c.l.b16 %v481
        %v2114 = vunpack.c.h.b16 %v481
        %v2115 = vunpack.c.l.b16 %v482
        %v2116 = vunpack.c.h.b16 %v482
        %v2117 = vunpack.c.l.b16 %v483
        %v2118 = vunpack.c.h.b16 %v483
        %v2119 = vunpack.c.l.b16 %v484
        %v2120 = vunpack.c.h.b16 %v484
        %v2121 = vunpack.c.l.b16 %v485
        %v2122 = vunpack.c.h.b16 %v485
        %v2123 = vunpack.c.l.b16 %v486
        %v2124 = vunpack.c.h.b16 %v486
        %v2125 = vunpack.c.l.b16 %v487
        %v2126 = vunpack.c.h.b16 %v487
        %v2127 = vunpack.c.l.b16 %v488
        %v2128 = vunpack.c.h.b16 %v488
        %v2129 = vpack.c.b16 %v1555, %v1553
        %v2130 = vpack.c.b16 %v1556, %v1554
        %v2131 = vpack.c.b16 %v1559, %v1557
        %v2132 = vpack.c.b16 %v1560, %v1558
        %v2133 = vpack.c.b16 %v1563, %v1561
        %v2134 = vpack.c.b16 %v1564, %v1562
        %v2135 = vpack.c.b16 %v1567, %v1565
        %v2136 = vpack.c.b16 %v1568, %v1566
        %v2137 = vpack.c.b16 %v1571, %v1569
        %v2138 = vpack.c.b16 %v1572, %v1570
        %v2139 = vpack.c.b16 %v1575, %v1573
        %v2140 = vpack.c.b16 %v1576, %v1574
        %v2141 = vpack.c.b16 %v1579, %v1577
        %v2142 = vpack.c.b16 %v1580, %v1578
        %v2143 = vpack.c.b16 %v1583, %v1581
        %v2144 = vpack.c.b16 %v1584, %v1582
        %v2145 = vpack.c.b16 %v1587, %v1585
        %v2146 = vpack.c.b16 %v1588, %v1586
        %v2147 = vpack.c.b16 %v1591, %v1589
        %v2148 = vpack.c.b16 %v1592, %v1590
        %v2149 = vpack.c.b16 %v1595, %v1593
        %v2150 = vpack.c.b16 %v1596, %v1594
        %v2151 = vpack.c.b16 %v1599, %v1597
        %v2152 = vpack.c.b16 %v1600, %v1598
        %v2153 = vpack.c.b16 %v1603, %v1601
        %v2154 = vpack.c.b16 %v1604, %v1602
        %v2155 = vpack.c.b16 %v1607, %v1605
        %v2156 = vpack.c.b16 %v1608, %v1606
        %v2157 = vpack.c.b16 %v1611, %v1609
        %v2158 = vpack.c.b16 %v1612, %v1610
        %v2159 = vpack.c.b16 %v1615, %v1613
        %v2160 = vpack.c.b16 %v1616, %v1614
        %v2161 = vpack.c.b16 %v1619, %v1617
        %v2162 = vpack.c.b16 %v1620, %v1618
        %v2163 = vpack.c.b16 %v1623, %v1621
        %v2164 = vpack.c.b16 %v1624, %v1622
        %v2165 = vpack.c.b16 %v1627, %v1625
        %v2166 = vpack.c.b16 %v1628, %v1626
        %v2167 = vpack.c.b16 %v1631, %v1629
        %v2168 = vpack.c.b16 %v1632, %v1630
        %v2169 = vpack.c.b16 %v1635, %v1633
        %v2170 = vpack.c.b16 %v1636, %v1634
        %v2171 = vpack.c.b16 %v1639, %v1637
        %v2172 = vpack.c.b16 %v1640, %v1638
        %v2173 = vpack.c.b16 %v1643, %v1641
        %v2174 = vpack.c.b16 %v1644, %v1642
        %v2175 = vpack.c.b16 %v1647, %v1645
        %v2176 = vpack.c.b16 %v1648, %v1646
        %v2177 = vpack.c.b16 %v1651, %v1649
        %v2178 = vpack.c.b16 %v1652, %v1650
        %v2179 = vpack.c.b16 %v1655, %v1653
        %v2180 = vpack.c.b16 %v1656, %v1654
        %v2181 = vpack.c.b16 %v1659, %v1657
        %v2182 = vpack.c.b16 %v1660, %v1658
        %v2183 = vpack.c.b16 %v1663, %v1661
        %v2184 = vpack.c.b16 %v1664, %v1662
        %v2185 = vpack.c.b16 %v1667, %v1665
        %v2186 = vpack.c.b16 %v1668, %v1666
        %v2187 = vpack.c.b16 %v1671, %v1669
        %v2188 = vpack.c.b16 %v1672, %v1670
        %v2189 = vpack.c.b16 %v1675, %v1673
        %v2190 = vpack.c.b16 %v1676, %v1674
        %v2191 = vpack.c.b16 %v1679, %v1677
        %v2192 = vpack.c.b16 %v1680, %v1678
        %v2193 = vpack.c.b16 %v1683, %v1681
        %v2194 = vpack.c.b16 %v1684, %v1682
        %v2195 = vpack.c.b16 %v1687, %v1685
        %v2196 = vpack.c.b16 %v1688, %v1686
        %v2197 = vpack.c.b16 %v1691, %v1689
        %v2198 = vpack.c.b16 %v1692, %v1690
        %v2199 = vpack.c.b16 %v1695, %v1693
        %v2200 = vpack.c.b16 %v1696, %v1694
        %v2201 = vpack.c.b16 %v1699, %v1697
        %v2202 = vpack.c.b16 %v1700, %v1698
        %v2203 = vpack.c.b16 %v1703, %v1701
        %v2204 = vpack.c.b16 %v1704, %v1702
        %v2205 = vpack.c.b16 %v1707, %v1705
        %v2206 = vpack.c.b16 %v1708, %v1706
        %v2207 = vpack.c.b16 %v1711, %v1709
        %v2208 = vpack.c.b16 %v1712, %v1710
        %v2209 = vpack.c.b16 %v1715, %v1713
        %v2210 = vpack.c.b16 %v1716, %v1714
        %v2211 = vpack.c.b16 %v1719, %v1717
        %v2212 = vpack.c.b16 %v1720, %v1718
        %v2213 = vpack.c.b16 %v1723, %v1721
        %v2214 = vpack.c.b16 %v1724, %v1722
        %v2215 = vpack.c.b16 %v1727, %v1725
        %v2216 = vpack.c.b16 %v1728, %v1726
        %v2217 = vpack.c.b16 %v1731, %v1729
        %v2218 = vpack.c.b16 %v1732, %v1730
        %v2219 = vpack.c.b16 %v1735, %v1733
        %v2220 = vpack.c.b16 %v1736, %v1734
        %v2221 = vpack.c.b16 %v1739, %v1737
        %v2222 = vpack.c.b16 %v1740, %v1738
        %v2223 = vpack.c.b16 %v1743, %v1741
        %v2224 = vpack.c.b16 %v1744, %v1742
        %v2225 = vpack.c.b16 %v1747, %v1745
        %v2226 = vpack.c.b16 %v1748, %v1746
        %v2227 = vpack.c.b16 %v1751, %v1749
        %v2228 = vpack.c.b16 %v1752, %v1750
        %v2229 = vpack.c.b16 %v1755, %v1753
        %v2230 = vpack.c.b16 %v1756, %v1754
        %v2231 = vpack.c.b16 %v1759, %v1757
        %v2232 = vpack.c.b16 %v1760, %v1758
        %v2233 = vpack.c.b16 %v1763, %v1761
        %v2234 = vpack.c.b16 %v1764, %v1762
        %v2235 = vpack.c.b16 %v1767, %v1765
        %v2236 = vpack.c.b16 %v1768, %v1766
        %v2237 = vpack.c.b16 %v1771, %v1769
        %v2238 = vpack.c.b16 %v1772, %v1770
        %v2239 = vpack.c.b16 %v1775, %v1773
        %v2240 = vpack.c.b16 %v1776, %v1774
        %v2241 = vpack.c.b16 %v1779, %v1777
        %v2242 = vpack.c.b16 %v1780, %v1778
        %v2243 = vpack.c.b16 %v1783, %v1781
        %v2244 = vpack.c.b16 %v1784, %v1782
        %v2245 = vpack.c.b16 %v1787, %v1785
        %v2246 = vpack.c.b16 %v1788, %v1786
        %v2247 = vpack.c.b16 %v1791, %v1789
        %v2248 = vpack.c.b16 %v1792, %v1790
        %v2249 = vpack.c.b16 %v1795, %v1793
        %v2250 = vpack.c.b16 %v1796, %v1794
        %v2251 = vpack.c.b16 %v1799, %v1797
        %v2252 = vpack.c.b16 %v1800, %v1798
        %v2253 = vpack.c.b16 %v1803, %v1801
        %v2254 = vpack.c.b16 %v1804, %v1802
        %v2255 = vpack.c.b16 %v1807, %v1805
        %v2256 = vpack.c.b16 %v1808, %v1806
        %v2257 = vpack.c.b16 %v1811, %v1809
        %v2258 = vpack.c.b16 %v1812, %v1810
        %v2259 = vpack.c.b16 %v1815, %v1813
        %v2260 = vpack.c.b16 %v1816, %v1814
        %v2261 = vpack.c.b16 %v1819, %v1817
        %v2262 = vpack.c.b16 %v1820, %v1818
        %v2263 = vpack.c.b16 %v1823, %v1821
        %v2264 = vpack.c.b16 %v1824, %v1822
        %v2265 = vpack.c.b16 %v1827, %v1825
        %v2266 = vpack.c.b16 %v1828, %v1826
        %v2267 = vpack.c.b16 %v1831, %v1829
        %v2268 = vpack.c.b16 %v1832, %v1830
        %v2269 = vpack.c.b16 %v1835, %v1833
        %v2270 = vpack.c.b16 %v1836, %v1834
        %v2271 = vpack.c.b16 %v1839, %v1837
        %v2272 = vpack.c.b16 %v1840, %v1838
        %v2273 = vpack.c.b16 %v1843, %v1841
        %v2274 = vpack.c.b16 %v1844, %v1842
        %v2275 = vpack.c.b16 %v1847, %v1845
        %v2276 = vpack.c.b16 %v1848, %v1846
        %v2277 = vpack.c.b16 %v1851, %v1849
        %v2278 = vpack.c.b16 %v1852, %v1850
        %v2279 = vpack.c.b16 %v1855, %v1853
        %v2280 = vpack.c.b16 %v1856, %v1854
        %v2281 = vpack.c.b16 %v1859, %v1857
        %v2282 = vpack.c.b16 %v1860, %v1858
        %v2283 = vpack.c.b16 %v1863, %v1861
        %v2284 = vpack.c.b16 %v1864, %v1862
        %v2285 = vpack.c.b16 %v1867, %v1865
        %v2286 = vpack.c.b16 %v1868, %v1866
        %v2287 = vpack.c.b16 %v1871, %v1869
        %v2288 = vpack.c.b16 %v1872, %v1870
        %v2289 = vpack.c.b16 %v1875, %v1873
        %v2290 = vpack.c.b16 %v1876, %v1874
        %v2291 = vpack.c.b16 %v1879, %v1877
        %v2292 = vpack.c.b16 %v1880, %v1878
        %v2293 = vpack.c.b16 %v1883, %v1881
        %v2294 = vpack.c.b16 %v1884, %v1882
        %v2295 = vpack.c.b16 %v1887, %v1885
        %v2296 = vpack.c.b16 %v1888, %v1886
        %v2297 = vpack.c.b16 %v1891, %v1889
        %v2298 = vpack.c.b16 %v1892, %v1890
        %v2299 = vpack.c.b16 %v1895, %v1893
        %v2300 = vpack.c.b16 %v1896, %v1894
        %v2301 = vpack.c.b16 %v1899, %v1897
        %v2302 = vpack.c.b16 %v1900, %v1898
        %v2303 = vpack.c.b16 %v1903, %v1901
        %v2304 = vpack.c.b16 %v1904, %v1902
        %v2305 = vpack.c.b16 %v1907, %v1905
        %v2306 = vpack.c.b16 %v1908, %v1906
        %v2307 = vpack.c.b16 %v1911, %v1909
        %v2308 = vpack.c.b16 %v1912, %v1910
        %v2309 = vpack.c.b16 %v1915, %v1913
        %v2310 = vpack.c.b16 %v1916, %v1914
        %v2311 = vpack.c.b16 %v1919, %v1917
        %v2312 = vpack.c.b16 %v1920, %v1918
        %v2313 = vpack.c.b16 %v1923, %v1921
        %v2314 = vpack.c.b16 %v1924, %v1922
        %v2315 = vpack.c.b16 %v1927, %v1925
        %v2316 = vpack.c.b16 %v1928, %v1926
        %v2317 = vpack.c.b16 %v1931, %v1929
        %v2318 = vpack.c.b16 %v1932, %v1930
        %v2319 = vpack.c.b16 %v1935, %v1933
        %v2320 = vpack.c.b16 %v1936, %v1934
        %v2321 = vpack.c.b16 %v1939, %v1937
        %v2322 = vpack.c.b16 %v1940, %v1938
        %v2323 = vpack.c.b16 %v1943, %v1941
        %v2324 = vpack.c.b16 %v1944, %v1942
        %v2325 = vpack.c.b16 %v1947, %v1945
        %v2326 = vpack.c.b16 %v1948, %v1946
        %v2327 = vpack.c.b16 %v1951, %v1949
        %v2328 = vpack.c.b16 %v1952, %v1950
        %v2329 = vpack.c.b16 %v1955, %v1953
        %v2330 = vpack.c.b16 %v1956, %v1954
        %v2331 = vpack.c.b16 %v1959, %v1957
        %v2332 = vpack.c.b16 %v1960, %v1958
        %v2333 = vpack.c.b16 %v1963, %v1961
        %v2334 = vpack.c.b16 %v1964, %v1962
        %v2335 = vpack.c.b16 %v1967, %v1965
        %v2336 = vpack.c.b16 %v1968, %v1966
        %v2337 = vpack.c.b16 %v1971, %v1969
        %v2338 = vpack.c.b16 %v1972, %v1970
        %v2339 = vpack.c.b16 %v1975, %v1973
        %v2340 = vpack.c.b16 %v1976, %v1974
        %v2341 = vpack.c.b16 %v1979, %v1977
        %v2342 = vpack.c.b16 %v1980, %v1978
        %v2343 = vpack.c.b16 %v1983, %v1981
        %v2344 = vpack.c.b16 %v1984, %v1982
        %v2345 = vpack.c.b16 %v1987, %v1985
        %v2346 = vpack.c.b16 %v1988, %v1986
        %v2347 = vpack.c.b16 %v1991, %v1989
        %v2348 = vpack.c.b16 %v1992, %v1990
        %v2349 = vpack.c.b16 %v1995, %v1993
        %v2350 = vpack.c.b16 %v1996, %v1994
        %v2351 = vpack.c.b16 %v1999, %v1997
        %v2352 = vpack.c.b16 %v2000, %v1998
        %v2353 = vpack.c.b16 %v2003, %v2001
        %v2354 = vpack.c.b16 %v2004, %v2002
        %v2355 = vpack.c.b16 %v2007, %v2005
        %v2356 = vpack.c.b16 %v2008, %v2006
        %v2357 = vpack.c.b16 %v2011, %v2009
        %v2358 = vpack.c.b16 %v2012, %v2010
        %v2359 = vpack.c.b16 %v2015, %v2013
        %v2360 = vpack.c.b16 %v2016, %v2014
        %v2361 = vpack.c.b16 %v2019, %v2017
        %v2362 = vpack.c.b16 %v2020, %v2018
        %v2363 = vpack.c.b16 %v2023, %v2021
        %v2364 = vpack.c.b16 %v2024, %v2022
        %v2365 = vpack.c.b16 %v2027, %v2025
        %v2366 = vpack.c.b16 %v2028, %v2026
        %v2367 = vpack.c.b16 %v2031, %v2029
        %v2368 = vpack.c.b16 %v2032, %v2030
        %v2369 = vpack.c.b16 %v2035, %v2033
        %v2370 = vpack.c.b16 %v2036, %v2034
        %v2371 = vpack.c.b16 %v2039, %v2037
        %v2372 = vpack.c.b16 %v2040, %v2038
        %v2373 = vpack.c.b16 %v2043, %v2041
        %v2374 = vpack.c.b16 %v2044, %v2042
        %v2375 = vpack.c.b16 %v2047, %v2045
        %v2376 = vpack.c.b16 %v2048, %v2046
        %v2377 = vpack.c.b16 %v2051, %v2049
        %v2378 = vpack.c.b16 %v2052, %v2050
        %v2379 = vpack.c.b16 %v2055, %v2053
        %v2380 = vpack.c.b16 %v2056, %v2054
        %v2381 = vpack.c.b16 %v2059, %v2057
        %v2382 = vpack.c.b16 %v2060, %v2058
        %v2383 = vpack.c.b16 %v2063, %v2061
        %v2384 = vpack.c.b16 %v2064, %v2062
        %v2385 = vpack.c.b16 %v2067, %v2065
        %v2386 = vpack.c.b16 %v2068, %v2066
        %v2387 = vpack.c.b16 %v2071, %v2069
        %v2388 = vpack.c.b16 %v2072, %v2070
        %v2389 = vpack.c.b16 %v2075, %v2073
        %v2390 = vpack.c.b16 %v2076, %v2074
        %v2391 = vpack.c.b16 %v2079, %v2077
        %v2392 = vpack.c.b16 %v2080, %v2078
        %v2393 = vpack.c.b16 %v2083, %v2081
        %v2394 = vpack.c.b16 %v2084, %v2082
        %v2395 = vpack.c.b16 %v2087, %v2085
        %v2396 = vpack.c.b16 %v2088, %v2086
        %v2397 = vpack.c.b16 %v2091, %v2089
        %v2398 = vpack.c.b16 %v2092, %v2090
        %v2399 = vpack.c.b16 %v2095, %v2093
        %v2400 = vpack.c.b16 %v2096, %v2094
        %v2401 = vpack.c.b16 %v2099, %v2097
        %v2402 = vpack.c.b16 %v2100, %v2098
        %v2403 = vpack.c.b16 %v2103, %v2101
        %v2404 = vpack.c.b16 %v2104, %v2102
        %v2405 = vpack.c.b16 %v2107, %v2105
        %v2406 = vpack.c.b16 %v2108, %v2106
        %v2407 = vpack.c.b16 %v2111, %v2109
        %v2408 = vpack.c.b16 %v2112, %v2110
        %v2409 = vpack.c.b16 %v2115, %v2113
        %v2410 = vpack.c.b16 %v2116, %v2114
        %v2411 = vpack.c.b16 %v2119, %v2117
        %v2412 = vpack.c.b16 %v2120, %v2118
        %v2413 = vpack.c.b16 %v2123, %v2121
        %v2414 = vpack.c.b16 %v2124, %v2122
        %v2415 = vpack.c.b16 %v2127, %v2125
        %v2416 = vpack.c.b16 %v2128, %v2126
        %2705 = vmatpush.bf16.msra.mxu0 %v2143
        %2706 = vmatpush.bf16.msra.mxu0 %v2141
        %2707 = vmatpush.bf16.msra.mxu0 %v2139
        %2708 = vmatpush.bf16.msra.mxu0 %v2137
        %2709 = vmatpush.bf16.msra.mxu0 %v2135
        %2710 = vmatpush.bf16.msra.mxu0 %v2133
        %2711 = vmatpush.bf16.msra.mxu0 %v2131
        %2712 = vmatpush.bf16.msra.mxu0 %v2129
        %2713 = vmatmul.bf16.gmra.mxu0 %v815
        %v2714 = vpop.f32.mrf.mxu0
        %v2715 = vadd.f32 0.0, %v2714
        %v2716 = vpop.f32.mrf.mxu0
        %v2717 = vadd.f32 0.0, %v2716
        %2718 = vmatmul.bf16.gmra.mxu0 %v823
        %v2719 = vpop.f32.mrf.mxu0
        %v2720 = vadd.f32 0.0, %v2719
        %v2721 = vpop.f32.mrf.mxu0
        %v2722 = vadd.f32 0.0, %v2721
        %2723 = vmatmul.bf16.gmra.mxu0 %v831
        %v2724 = vpop.f32.mrf.mxu0
        %v2725 = vadd.f32 0.0, %v2724
        %v2726 = vpop.f32.mrf.mxu0
        %v2727 = vadd.f32 0.0, %v2726
        %2728 = vmatmul.bf16.gmra.mxu0 %v823
        %v2729 = vpop.f32.mrf.mxu0
        %v2730 = vadd.f32 0.0, %v2729
        %v2731 = vpop.f32.mrf.mxu0
        %v2732 = vadd.f32 0.0, %v2731
        %2733 = vmatmul.bf16.gmra.mxu0 %v815
        %v2734 = vpop.f32.mrf.mxu0
        %v2735 = vadd.f32 0.0, %v2734
        %v2736 = vpop.f32.mrf.mxu0
        %v2737 = vadd.f32 0.0, %v2736
        %2738 = vmatmul.bf16.gmra.mxu0 %v839
        %v2739 = vpop.f32.mrf.mxu0
        %v2740 = vadd.f32 0.0, %v2739
        %v2741 = vpop.f32.mrf.mxu0
        %v2742 = vadd.f32 0.0, %v2741
        %2743 = vmatmul.bf16.gmra.mxu0 %v847
        %v2744 = vpop.f32.mrf.mxu0
        %v2745 = vadd.f32 0.0, %v2744
        %v2746 = vpop.f32.mrf.mxu0
        %v2747 = vadd.f32 0.0, %v2746
        %2748 = vmatmul.bf16.gmra.mxu0 %v855
        %v2749 = vpop.f32.mrf.mxu0
        %v2750 = vadd.f32 0.0, %v2749
        %v2751 = vpop.f32.mrf.mxu0
        %v2752 = vadd.f32 0.0, %v2751
        %2753 = vmatmul.bf16.gmra.mxu0 %v863
        %v2754 = vpop.f32.mrf.mxu0
        %v2755 = vadd.f32 0.0, %v2754
        %v2756 = vpop.f32.mrf.mxu0
        %v2757 = vadd.f32 0.0, %v2756
        %2758 = vmatmul.bf16.gmra.mxu0 %v871
        %v2759 = vpop.f32.mrf.mxu0
        %v2760 = vadd.f32 0.0, %v2759
        %v2761 = vpop.f32.mrf.mxu0
        %v2762 = vadd.f32 0.0, %v2761
        %2763 = vmatmul.bf16.gmra.mxu0 %v879
        %v2764 = vpop.f32.mrf.mxu0
        %v2765 = vadd.f32 0.0, %v2764
        %v2766 = vpop.f32.mrf.mxu0
        %v2767 = vadd.f32 0.0, %v2766
        %2768 = vmatmul.bf16.gmra.mxu0 %v887
        %v2769 = vpop.f32.mrf.mxu0
        %v2770 = vadd.f32 0.0, %v2769
        %v2771 = vpop.f32.mrf.mxu0
        %v2772 = vadd.f32 0.0, %v2771
        %2773 = vmatmul.bf16.gmra.mxu0 %v895
        %v2774 = vpop.f32.mrf.mxu0
        %v2775 = vadd.f32 0.0, %v2774
        %v2776 = vpop.f32.mrf.mxu0
        %v2777 = vadd.f32 0.0, %v2776
        %2778 = vmatmul.bf16.gmra.mxu0 %v903
        %v2779 = vpop.f32.mrf.mxu0
        %v2780 = vadd.f32 0.0, %v2779
        %v2781 = vpop.f32.mrf.mxu0
        %v2782 = vadd.f32 0.0, %v2781
        %2783 = vmatmul.bf16.gmra.mxu0 %v911
        %v2784 = vpop.f32.mrf.mxu0
        %v2785 = vadd.f32 0.0, %v2784
        %v2786 = vpop.f32.mrf.mxu0
        %v2787 = vadd.f32 0.0, %v2786
        %2788 = vmatmul.bf16.gmra.mxu0 %v919
        %v2789 = vpop.f32.mrf.mxu0
        %v2790 = vadd.f32 0.0, %v2789
        %v2791 = vpop.f32.mrf.mxu0
        %v2792 = vadd.f32 0.0, %v2791
        %2793 = vdwg.mxu0
        %2794 = vmatpush.bf16.msra.mxu0 %v2159
        %2795 = vmatpush.bf16.msra.mxu0 %v2157
        %2796 = vmatpush.bf16.msra.mxu0 %v2155
        %2797 = vmatpush.bf16.msra.mxu0 %v2153
        %2798 = vmatpush.bf16.msra.mxu0 %v2151
        %2799 = vmatpush.bf16.msra.mxu0 %v2149
        %2800 = vmatpush.bf16.msra.mxu0 %v2147
        %2801 = vmatpush.bf16.msra.mxu0 %v2145
        %2802 = vmatmul.bf16.gmra.mxu0 %v819
        %v2803 = vpop.f32.mrf.mxu0
        %v2804 = vadd.f32 %v2715, %v2803
        %v2805 = vpop.f32.mrf.mxu0
        %v2806 = vadd.f32 %v2717, %v2805
        %2807 = vmatmul.bf16.gmra.mxu0 %v827
        %v2808 = vpop.f32.mrf.mxu0
        %v2809 = vadd.f32 %v2720, %v2808
        %v2810 = vpop.f32.mrf.mxu0
        %v2811 = vadd.f32 %v2722, %v2810
        %2812 = vmatmul.bf16.gmra.mxu0 %v835
        %v2813 = vpop.f32.mrf.mxu0
        %v2814 = vadd.f32 %v2725, %v2813
        %v2815 = vpop.f32.mrf.mxu0
        %v2816 = vadd.f32 %v2727, %v2815
        %2817 = vmatmul.bf16.gmra.mxu0 %v827
        %v2818 = vpop.f32.mrf.mxu0
        %v2819 = vadd.f32 %v2730, %v2818
        %v2820 = vpop.f32.mrf.mxu0
        %v2821 = vadd.f32 %v2732, %v2820
        %2822 = vmatmul.bf16.gmra.mxu0 %v819
        %v2823 = vpop.f32.mrf.mxu0
        %v2824 = vadd.f32 %v2735, %v2823
        %v2825 = vpop.f32.mrf.mxu0
        %v2826 = vadd.f32 %v2737, %v2825
        %2827 = vmatmul.bf16.gmra.mxu0 %v843
        %v2828 = vpop.f32.mrf.mxu0
        %v2829 = vadd.f32 %v2740, %v2828
        %v2830 = vpop.f32.mrf.mxu0
        %v2831 = vadd.f32 %v2742, %v2830
        %2832 = vmatmul.bf16.gmra.mxu0 %v851
        %v2833 = vpop.f32.mrf.mxu0
        %v2834 = vadd.f32 %v2745, %v2833
        %v2835 = vpop.f32.mrf.mxu0
        %v2836 = vadd.f32 %v2747, %v2835
        %2837 = vmatmul.bf16.gmra.mxu0 %v859
        %v2838 = vpop.f32.mrf.mxu0
        %v2839 = vadd.f32 %v2750, %v2838
        %v2840 = vpop.f32.mrf.mxu0
        %v2841 = vadd.f32 %v2752, %v2840
        %2842 = vmatmul.bf16.gmra.mxu0 %v867
        %v2843 = vpop.f32.mrf.mxu0
        %v2844 = vadd.f32 %v2755, %v2843
        %v2845 = vpop.f32.mrf.mxu0
        %v2846 = vadd.f32 %v2757, %v2845
        %2847 = vmatmul.bf16.gmra.mxu0 %v875
        %v2848 = vpop.f32.mrf.mxu0
        %v2849 = vadd.f32 %v2760, %v2848
        %v2850 = vpop.f32.mrf.mxu0
        %v2851 = vadd.f32 %v2762, %v2850
        %2852 = vmatmul.bf16.gmra.mxu0 %v883
        %v2853 = vpop.f32.mrf.mxu0
        %v2854 = vadd.f32 %v2765, %v2853
        %v2855 = vpop.f32.mrf.mxu0
        %v2856 = vadd.f32 %v2767, %v2855
        %2857 = vmatmul.bf16.gmra.mxu0 %v891
        %v2858 = vpop.f32.mrf.mxu0
        %v2859 = vadd.f32 %v2770, %v2858
        %v2860 = vpop.f32.mrf.mxu0
        %v2861 = vadd.f32 %v2772, %v2860
        %2862 = vmatmul.bf16.gmra.mxu0 %v899
        %v2863 = vpop.f32.mrf.mxu0
        %v2864 = vadd.f32 %v2775, %v2863
        %v2865 = vpop.f32.mrf.mxu0
        %v2866 = vadd.f32 %v2777, %v2865
        %2867 = vmatmul.bf16.gmra.mxu0 %v907
        %v2868 = vpop.f32.mrf.mxu0
        %v2869 = vadd.f32 %v2780, %v2868
        %v2870 = vpop.f32.mrf.mxu0
        %v2871 = vadd.f32 %v2782, %v2870
        %2872 = vmatmul.bf16.gmra.mxu0 %v915
        %v2873 = vpop.f32.mrf.mxu0
        %v2874 = vadd.f32 %v2785, %v2873
        %v2875 = vpop.f32.mrf.mxu0
        %v2876 = vadd.f32 %v2787, %v2875
        %2877 = vmatmul.bf16.gmra.mxu0 %v923
        %v2878 = vpop.f32.mrf.mxu0
        %v2879 = vadd.f32 %v2790, %v2878
        %v2880 = vpop.f32.mrf.mxu0
        %v2881 = vadd.f32 %v2792, %v2880
        %2882 = vdwg.mxu0
        %2883 = vmatpush.bf16.msra.mxu0 %v2175
        %2884 = vmatpush.bf16.msra.mxu0 %v2173
        %2885 = vmatpush.bf16.msra.mxu0 %v2171
        %2886 = vmatpush.bf16.msra.mxu0 %v2169
        %2887 = vmatpush.bf16.msra.mxu0 %v2167
        %2888 = vmatpush.bf16.msra.mxu0 %v2165
        %2889 = vmatpush.bf16.msra.mxu0 %v2163
        %2890 = vmatpush.bf16.msra.mxu0 %v2161
        %2891 = vmatmul.bf16.gmra.mxu0 %v713
        %v2892 = vpop.f32.mrf.mxu0
        %v2893 = vadd.f32 %v2804, %v2892
        %v2894 = vpop.f32.mrf.mxu0
        %v2895 = vadd.f32 %v2806, %v2894
        %2896 = vmatmul.bf16.gmra.mxu0 %v715
        %v2897 = vpop.f32.mrf.mxu0
        %v2898 = vadd.f32 %v2809, %v2897
        %v2899 = vpop.f32.mrf.mxu0
        %v2900 = vadd.f32 %v2811, %v2899
        %2901 = vmatmul.bf16.gmra.mxu0 %v717
        %v2902 = vpop.f32.mrf.mxu0
        %v2903 = vadd.f32 %v2814, %v2902
        %v2904 = vpop.f32.mrf.mxu0
        %v2905 = vadd.f32 %v2816, %v2904
        %2906 = vmatmul.bf16.gmra.mxu0 %v715
        %v2907 = vpop.f32.mrf.mxu0
        %v2908 = vadd.f32 %v2819, %v2907
        %v2909 = vpop.f32.mrf.mxu0
        %v2910 = vadd.f32 %v2821, %v2909
        %2911 = vmatmul.bf16.gmra.mxu0 %v713
        %v2912 = vpop.f32.mrf.mxu0
        %v2913 = vadd.f32 %v2824, %v2912
        %v2914 = vpop.f32.mrf.mxu0
        %v2915 = vadd.f32 %v2826, %v2914
        %2916 = vmatmul.bf16.gmra.mxu0 %v719
        %v2917 = vpop.f32.mrf.mxu0
        %v2918 = vadd.f32 %v2829, %v2917
        %v2919 = vpop.f32.mrf.mxu0
        %v2920 = vadd.f32 %v2831, %v2919
        %2921 = vmatmul.bf16.gmra.mxu0 %v721
        %v2922 = vpop.f32.mrf.mxu0
        %v2923 = vadd.f32 %v2834, %v2922
        %v2924 = vpop.f32.mrf.mxu0
        %v2925 = vadd.f32 %v2836, %v2924
        %2926 = vmatmul.bf16.gmra.mxu0 %v723
        %v2927 = vpop.f32.mrf.mxu0
        %v2928 = vadd.f32 %v2839, %v2927
        %v2929 = vpop.f32.mrf.mxu0
        %v2930 = vadd.f32 %v2841, %v2929
        %2931 = vmatmul.bf16.gmra.mxu0 %v725
        %v2932 = vpop.f32.mrf.mxu0
        %v2933 = vadd.f32 %v2844, %v2932
        %v2934 = vpop.f32.mrf.mxu0
        %v2935 = vadd.f32 %v2846, %v2934
        %2936 = vmatmul.bf16.gmra.mxu0 %v727
        %v2937 = vpop.f32.mrf.mxu0
        %v2938 = vadd.f32 %v2849, %v2937
        %v2939 = vpop.f32.mrf.mxu0
        %v2940 = vadd.f32 %v2851, %v2939
        %2941 = vmatmul.bf16.gmra.mxu0 %v729
        %v2942 = vpop.f32.mrf.mxu0
        %v2943 = vadd.f32 %v2854, %v2942
        %v2944 = vpop.f32.mrf.mxu0
        %v2945 = vadd.f32 %v2856, %v2944
        %2946 = vmatmul.bf16.gmra.mxu0 %v731
        %v2947 = vpop.f32.mrf.mxu0
        %v2948 = vadd.f32 %v2859, %v2947
        %v2949 = vpop.f32.mrf.mxu0
        %v2950 = vadd.f32 %v2861, %v2949
        %2951 = vmatmul.bf16.gmra.mxu0 %v733
        %v2952 = vpop.f32.mrf.mxu0
        %v2953 = vadd.f32 %v2864, %v2952
        %v2954 = vpop.f32.mrf.mxu0
        %v2955 = vadd.f32 %v2866, %v2954
        %2956 = vmatmul.bf16.gmra.mxu0 %v735
        %v2957 = vpop.f32.mrf.mxu0
        %v2958 = vadd.f32 %v2869, %v2957
        %v2959 = vpop.f32.mrf.mxu0
        %v2960 = vadd.f32 %v2871, %v2959
        %2961 = vmatmul.bf16.gmra.mxu0 %v737
        %v2962 = vpop.f32.mrf.mxu0
        %v2963 = vadd.f32 %v2874, %v2962
        %v2964 = vpop.f32.mrf.mxu0
        %v2965 = vadd.f32 %v2876, %v2964
        %2966 = vmatmul.bf16.gmra.mxu0 %v739
        %v2967 = vpop.f32.mrf.mxu0
        %v2968 = vadd.f32 %v2879, %v2967
        %v2969 = vpop.f32.mrf.mxu0
        %v2970 = vadd.f32 %v2881, %v2969
        %2971 = vdwg.mxu0
        %2972 = vmatpush.bf16.msra.mxu0 %v2191
        %2973 = vmatpush.bf16.msra.mxu0 %v2189
        %2974 = vmatpush.bf16.msra.mxu0 %v2187
        %2975 = vmatpush.bf16.msra.mxu0 %v2185
        %2976 = vmatpush.bf16.msra.mxu0 %v2183
        %2977 = vmatpush.bf16.msra.mxu0 %v2181
        %2978 = vmatpush.bf16.msra.mxu0 %v2179
        %2979 = vmatpush.bf16.msra.mxu0 %v2177
        %2980 = vmatmul.bf16.gmra.mxu0 %v714
        %v2981 = vpop.f32.mrf.mxu0
        %v2982 = vadd.f32 %v2893, %v2981
        %v2983 = vpop.f32.mrf.mxu0
        %v2984 = vadd.f32 %v2895, %v2983
        %2985 = vmatmul.bf16.gmra.mxu0 %v716
        %v2986 = vpop.f32.mrf.mxu0
        %v2987 = vadd.f32 %v2898, %v2986
        %v2988 = vpop.f32.mrf.mxu0
        %v2989 = vadd.f32 %v2900, %v2988
        %2990 = vmatmul.bf16.gmra.mxu0 %v718
        %v2991 = vpop.f32.mrf.mxu0
        %v2992 = vadd.f32 %v2903, %v2991
        %v2993 = vpop.f32.mrf.mxu0
        %v2994 = vadd.f32 %v2905, %v2993
        %2995 = vmatmul.bf16.gmra.mxu0 %v716
        %v2996 = vpop.f32.mrf.mxu0
        %v2997 = vadd.f32 %v2908, %v2996
        %v2998 = vpop.f32.mrf.mxu0
        %v2999 = vadd.f32 %v2910, %v2998
        %3000 = vmatmul.bf16.gmra.mxu0 %v714
        %v3001 = vpop.f32.mrf.mxu0
        %v3002 = vadd.f32 %v2913, %v3001
        %v3003 = vpop.f32.mrf.mxu0
        %v3004 = vadd.f32 %v2915, %v3003
        %3005 = vmatmul.bf16.gmra.mxu0 %v720
        %v3006 = vpop.f32.mrf.mxu0
        %v3007 = vadd.f32 %v2918, %v3006
        %v3008 = vpop.f32.mrf.mxu0
        %v3009 = vadd.f32 %v2920, %v3008
        %3010 = vmatmul.bf16.gmra.mxu0 %v722
        %v3011 = vpop.f32.mrf.mxu0
        %v3012 = vadd.f32 %v2923, %v3011
        %v3013 = vpop.f32.mrf.mxu0
        %v3014 = vadd.f32 %v2925, %v3013
        %3015 = vmatmul.bf16.gmra.mxu0 %v724
        %v3016 = vpop.f32.mrf.mxu0
        %v3017 = vadd.f32 %v2928, %v3016
        %v3018 = vpop.f32.mrf.mxu0
        %v3019 = vadd.f32 %v2930, %v3018
        %3020 = vmatmul.bf16.gmra.mxu0 %v726
        %v3021 = vpop.f32.mrf.mxu0
        %v3022 = vadd.f32 %v2933, %v3021
        %v3023 = vpop.f32.mrf.mxu0
        %v3024 = vadd.f32 %v2935, %v3023
        %3025 = vmatmul.bf16.gmra.mxu0 %v728
        %v3026 = vpop.f32.mrf.mxu0
        %v3027 = vadd.f32 %v2938, %v3026
        %v3028 = vpop.f32.mrf.mxu0
        %v3029 = vadd.f32 %v2940, %v3028
        %3030 = vmatmul.bf16.gmra.mxu0 %v730
        %v3031 = vpop.f32.mrf.mxu0
        %v3032 = vadd.f32 %v2943, %v3031
        %v3033 = vpop.f32.mrf.mxu0
        %v3034 = vadd.f32 %v2945, %v3033
        %3035 = vmatmul.bf16.gmra.mxu0 %v732
        %v3036 = vpop.f32.mrf.mxu0
        %v3037 = vadd.f32 %v2948, %v3036
        %v3038 = vpop.f32.mrf.mxu0
        %v3039 = vadd.f32 %v2950, %v3038
        %3040 = vmatmul.bf16.gmra.mxu0 %v734
        %v3041 = vpop.f32.mrf.mxu0
        %v3042 = vadd.f32 %v2953, %v3041
        %v3043 = vpop.f32.mrf.mxu0
        %v3044 = vadd.f32 %v2955, %v3043
        %3045 = vmatmul.bf16.gmra.mxu0 %v736
        %v3046 = vpop.f32.mrf.mxu0
        %v3047 = vadd.f32 %v2958, %v3046
        %v3048 = vpop.f32.mrf.mxu0
        %v3049 = vadd.f32 %v2960, %v3048
        %3050 = vmatmul.bf16.gmra.mxu0 %v738
        %v3051 = vpop.f32.mrf.mxu0
        %v3052 = vadd.f32 %v2963, %v3051
        %v3053 = vpop.f32.mrf.mxu0
        %v3054 = vadd.f32 %v2965, %v3053
        %3055 = vmatmul.bf16.gmra.mxu0 %v740
        %v3056 = vpop.f32.mrf.mxu0
        %v3057 = vadd.f32 %v2968, %v3056
        %v3058 = vpop.f32.mrf.mxu0
        %v3059 = vadd.f32 %v2970, %v3058
        %3060 = vdwg.mxu0
        %3061 = vmatpush.bf16.msra.mxu0 %v2207
        %3062 = vmatpush.bf16.msra.mxu0 %v2205
        %3063 = vmatpush.bf16.msra.mxu0 %v2203
        %3064 = vmatpush.bf16.msra.mxu0 %v2201
        %3065 = vmatpush.bf16.msra.mxu0 %v2199
        %3066 = vmatpush.bf16.msra.mxu0 %v2197
        %3067 = vmatpush.bf16.msra.mxu0 %v2195
        %3068 = vmatpush.bf16.msra.mxu0 %v2193
        %3069 = vmatmul.bf16.gmra.mxu0 %v1201
        %v3070 = vpop.f32.mrf.mxu0
        %v3071 = vadd.f32 %v2982, %v3070
        %v3072 = vpop.f32.mrf.mxu0
        %v3073 = vadd.f32 %v2984, %v3072
        %3074 = vmatmul.bf16.gmra.mxu0 %v1203
        %v3075 = vpop.f32.mrf.mxu0
        %v3076 = vadd.f32 %v2987, %v3075
        %v3077 = vpop.f32.mrf.mxu0
        %v3078 = vadd.f32 %v2989, %v3077
        %3079 = vmatmul.bf16.gmra.mxu0 %v1205
        %v3080 = vpop.f32.mrf.mxu0
        %v3081 = vadd.f32 %v2992, %v3080
        %v3082 = vpop.f32.mrf.mxu0
        %v3083 = vadd.f32 %v2994, %v3082
        %3084 = vmatmul.bf16.gmra.mxu0 %v1203
        %v3085 = vpop.f32.mrf.mxu0
        %v3086 = vadd.f32 %v2997, %v3085
        %v3087 = vpop.f32.mrf.mxu0
        %v3088 = vadd.f32 %v2999, %v3087
        %3089 = vmatmul.bf16.gmra.mxu0 %v1201
        %v3090 = vpop.f32.mrf.mxu0
        %v3091 = vadd.f32 %v3002, %v3090
        %v3092 = vpop.f32.mrf.mxu0
        %v3093 = vadd.f32 %v3004, %v3092
        %3094 = vmatmul.bf16.gmra.mxu0 %v1207
        %v3095 = vpop.f32.mrf.mxu0
        %v3096 = vadd.f32 %v3007, %v3095
        %v3097 = vpop.f32.mrf.mxu0
        %v3098 = vadd.f32 %v3009, %v3097
        %3099 = vmatmul.bf16.gmra.mxu0 %v1209
        %v3100 = vpop.f32.mrf.mxu0
        %v3101 = vadd.f32 %v3012, %v3100
        %v3102 = vpop.f32.mrf.mxu0
        %v3103 = vadd.f32 %v3014, %v3102
        %3104 = vmatmul.bf16.gmra.mxu0 %v1211
        %v3105 = vpop.f32.mrf.mxu0
        %v3106 = vadd.f32 %v3017, %v3105
        %v3107 = vpop.f32.mrf.mxu0
        %v3108 = vadd.f32 %v3019, %v3107
        %3109 = vmatmul.bf16.gmra.mxu0 %v1213
        %v3110 = vpop.f32.mrf.mxu0
        %v3111 = vadd.f32 %v3022, %v3110
        %v3112 = vpop.f32.mrf.mxu0
        %v3113 = vadd.f32 %v3024, %v3112
        %3114 = vmatmul.bf16.gmra.mxu0 %v1215
        %v3115 = vpop.f32.mrf.mxu0
        %v3116 = vadd.f32 %v3027, %v3115
        %v3117 = vpop.f32.mrf.mxu0
        %v3118 = vadd.f32 %v3029, %v3117
        %3119 = vmatmul.bf16.gmra.mxu0 %v1217
        %v3120 = vpop.f32.mrf.mxu0
        %v3121 = vadd.f32 %v3032, %v3120
        %v3122 = vpop.f32.mrf.mxu0
        %v3123 = vadd.f32 %v3034, %v3122
        %3124 = vmatmul.bf16.gmra.mxu0 %v1219
        %v3125 = vpop.f32.mrf.mxu0
        %v3126 = vadd.f32 %v3037, %v3125
        %v3127 = vpop.f32.mrf.mxu0
        %v3128 = vadd.f32 %v3039, %v3127
        %3129 = vmatmul.bf16.gmra.mxu0 %v1221
        %v3130 = vpop.f32.mrf.mxu0
        %v3131 = vadd.f32 %v3042, %v3130
        %v3132 = vpop.f32.mrf.mxu0
        %v3133 = vadd.f32 %v3044, %v3132
        %3134 = vmatmul.bf16.gmra.mxu0 %v1223
        %v3135 = vpop.f32.mrf.mxu0
        %v3136 = vadd.f32 %v3047, %v3135
        %v3137 = vpop.f32.mrf.mxu0
        %v3138 = vadd.f32 %v3049, %v3137
        %3139 = vmatmul.bf16.gmra.mxu0 %v1225
        %v3140 = vpop.f32.mrf.mxu0
        %v3141 = vadd.f32 %v3052, %v3140
        %v3142 = vpop.f32.mrf.mxu0
        %v3143 = vadd.f32 %v3054, %v3142
        %3144 = vmatmul.bf16.gmra.mxu0 %v1227
        %v3145 = vpop.f32.mrf.mxu0
        %v3146 = vadd.f32 %v3057, %v3145
        %v3147 = vpop.f32.mrf.mxu0
        %v3148 = vadd.f32 %v3059, %v3147
        %3149 = vdwg.mxu0
        %3150 = vmatpush.bf16.msra.mxu0 %v2223
        %3151 = vmatpush.bf16.msra.mxu0 %v2221
        %3152 = vmatpush.bf16.msra.mxu0 %v2219
        %3153 = vmatpush.bf16.msra.mxu0 %v2217
        %3154 = vmatpush.bf16.msra.mxu0 %v2215
        %3155 = vmatpush.bf16.msra.mxu0 %v2213
        %3156 = vmatpush.bf16.msra.mxu0 %v2211
        %3157 = vmatpush.bf16.msra.mxu0 %v2209
        %3158 = vmatmul.bf16.gmra.mxu0 %v1202
        %v3159 = vpop.f32.mrf.mxu0
        %v3160 = vadd.f32 %v3071, %v3159
        %v3161 = vpop.f32.mrf.mxu0
        %v3162 = vadd.f32 %v3073, %v3161
        %3163 = vmatmul.bf16.gmra.mxu0 %v1204
        %v3164 = vpop.f32.mrf.mxu0
        %v3165 = vadd.f32 %v3076, %v3164
        %v3166 = vpop.f32.mrf.mxu0
        %v3167 = vadd.f32 %v3078, %v3166
        %3168 = vmatmul.bf16.gmra.mxu0 %v1206
        %v3169 = vpop.f32.mrf.mxu0
        %v3170 = vadd.f32 %v3081, %v3169
        %v3171 = vpop.f32.mrf.mxu0
        %v3172 = vadd.f32 %v3083, %v3171
        %3173 = vmatmul.bf16.gmra.mxu0 %v1204
        %v3174 = vpop.f32.mrf.mxu0
        %v3175 = vadd.f32 %v3086, %v3174
        %v3176 = vpop.f32.mrf.mxu0
        %v3177 = vadd.f32 %v3088, %v3176
        %3178 = vmatmul.bf16.gmra.mxu0 %v1202
        %v3179 = vpop.f32.mrf.mxu0
        %v3180 = vadd.f32 %v3091, %v3179
        %v3181 = vpop.f32.mrf.mxu0
        %v3182 = vadd.f32 %v3093, %v3181
        %3183 = vmatmul.bf16.gmra.mxu0 %v1208
        %v3184 = vpop.f32.mrf.mxu0
        %v3185 = vadd.f32 %v3096, %v3184
        %v3186 = vpop.f32.mrf.mxu0
        %v3187 = vadd.f32 %v3098, %v3186
        %3188 = vmatmul.bf16.gmra.mxu0 %v1210
        %v3189 = vpop.f32.mrf.mxu0
        %v3190 = vadd.f32 %v3101, %v3189
        %v3191 = vpop.f32.mrf.mxu0
        %v3192 = vadd.f32 %v3103, %v3191
        %3193 = vmatmul.bf16.gmra.mxu0 %v1212
        %v3194 = vpop.f32.mrf.mxu0
        %v3195 = vadd.f32 %v3106, %v3194
        %v3196 = vpop.f32.mrf.mxu0
        %v3197 = vadd.f32 %v3108, %v3196
        %3198 = vmatmul.bf16.gmra.mxu0 %v1214
        %v3199 = vpop.f32.mrf.mxu0
        %v3200 = vadd.f32 %v3111, %v3199
        %v3201 = vpop.f32.mrf.mxu0
        %v3202 = vadd.f32 %v3113, %v3201
        %3203 = vmatmul.bf16.gmra.mxu0 %v1216
        %v3204 = vpop.f32.mrf.mxu0
        %v3205 = vadd.f32 %v3116, %v3204
        %v3206 = vpop.f32.mrf.mxu0
        %v3207 = vadd.f32 %v3118, %v3206
        %3208 = vmatmul.bf16.gmra.mxu0 %v1218
        %v3209 = vpop.f32.mrf.mxu0
        %v3210 = vadd.f32 %v3121, %v3209
        %v3211 = vpop.f32.mrf.mxu0
        %v3212 = vadd.f32 %v3123, %v3211
        %3213 = vmatmul.bf16.gmra.mxu0 %v1220
        %v3214 = vpop.f32.mrf.mxu0
        %v3215 = vadd.f32 %v3126, %v3214
        %v3216 = vpop.f32.mrf.mxu0
        %v3217 = vadd.f32 %v3128, %v3216
        %3218 = vmatmul.bf16.gmra.mxu0 %v1222
        %v3219 = vpop.f32.mrf.mxu0
        %v3220 = vadd.f32 %v3131, %v3219
        %v3221 = vpop.f32.mrf.mxu0
        %v3222 = vadd.f32 %v3133, %v3221
        %3223 = vmatmul.bf16.gmra.mxu0 %v1224
        %v3224 = vpop.f32.mrf.mxu0
        %v3225 = vadd.f32 %v3136, %v3224
        %v3226 = vpop.f32.mrf.mxu0
        %v3227 = vadd.f32 %v3138, %v3226
        %3228 = vmatmul.bf16.gmra.mxu0 %v1226
        %v3229 = vpop.f32.mrf.mxu0
        %v3230 = vadd.f32 %v3141, %v3229
        %v3231 = vpop.f32.mrf.mxu0
        %v3232 = vadd.f32 %v3143, %v3231
        %3233 = vmatmul.bf16.gmra.mxu0 %v1228
        %v3234 = vpop.f32.mrf.mxu0
        %v3235 = vadd.f32 %v3146, %v3234
        %v3236 = vpop.f32.mrf.mxu0
        %v3237 = vadd.f32 %v3148, %v3236
        %3238 = vdwg.mxu0
        %3239 = vmatpush.bf16.msra.mxu0 %v2239
        %3240 = vmatpush.bf16.msra.mxu0 %v2237
        %3241 = vmatpush.bf16.msra.mxu0 %v2235
        %3242 = vmatpush.bf16.msra.mxu0 %v2233
        %3243 = vmatpush.bf16.msra.mxu0 %v2231
        %3244 = vmatpush.bf16.msra.mxu0 %v2229
        %3245 = vmatpush.bf16.msra.mxu0 %v2227
        %3246 = vmatpush.bf16.msra.mxu0 %v2225
        %3247 = vmatmul.bf16.gmra.mxu0 %v831
        %v3248 = vpop.f32.mrf.mxu0
        %v3249 = vadd.f32 %v3160, %v3248
        %v3250 = vpop.f32.mrf.mxu0
        %v3251 = vadd.f32 %v3162, %v3250
        %3252 = vmatmul.bf16.gmra.mxu0 %v823
        %v3253 = vpop.f32.mrf.mxu0
        %v3254 = vadd.f32 %v3165, %v3253
        %v3255 = vpop.f32.mrf.mxu0
        %v3256 = vadd.f32 %v3167, %v3255
        %3257 = vmatmul.bf16.gmra.mxu0 %v815
        %v3258 = vpop.f32.mrf.mxu0
        %v3259 = vadd.f32 %v3170, %v3258
        %v3260 = vpop.f32.mrf.mxu0
        %v3261 = vadd.f32 %v3172, %v3260
        %3262 = vmatmul.bf16.gmra.mxu0 %v839
        %v3263 = vpop.f32.mrf.mxu0
        %v3264 = vadd.f32 %v3175, %v3263
        %v3265 = vpop.f32.mrf.mxu0
        %v3266 = vadd.f32 %v3177, %v3265
        %3267 = vmatmul.bf16.gmra.mxu0 %v847
        %v3268 = vpop.f32.mrf.mxu0
        %v3269 = vadd.f32 %v3180, %v3268
        %v3270 = vpop.f32.mrf.mxu0
        %v3271 = vadd.f32 %v3182, %v3270
        %3272 = vmatmul.bf16.gmra.mxu0 %v855
        %v3273 = vpop.f32.mrf.mxu0
        %v3274 = vadd.f32 %v3185, %v3273
        %v3275 = vpop.f32.mrf.mxu0
        %v3276 = vadd.f32 %v3187, %v3275
        %3277 = vmatmul.bf16.gmra.mxu0 %v863
        %v3278 = vpop.f32.mrf.mxu0
        %v3279 = vadd.f32 %v3190, %v3278
        %v3280 = vpop.f32.mrf.mxu0
        %v3281 = vadd.f32 %v3192, %v3280
        %3282 = vmatmul.bf16.gmra.mxu0 %v871
        %v3283 = vpop.f32.mrf.mxu0
        %v3284 = vadd.f32 %v3195, %v3283
        %v3285 = vpop.f32.mrf.mxu0
        %v3286 = vadd.f32 %v3197, %v3285
        %3287 = vmatmul.bf16.gmra.mxu0 %v879
        %v3288 = vpop.f32.mrf.mxu0
        %v3289 = vadd.f32 %v3200, %v3288
        %v3290 = vpop.f32.mrf.mxu0
        %v3291 = vadd.f32 %v3202, %v3290
        %3292 = vmatmul.bf16.gmra.mxu0 %v887
        %v3293 = vpop.f32.mrf.mxu0
        %v3294 = vadd.f32 %v3205, %v3293
        %v3295 = vpop.f32.mrf.mxu0
        %v3296 = vadd.f32 %v3207, %v3295
        %3297 = vmatmul.bf16.gmra.mxu0 %v895
        %v3298 = vpop.f32.mrf.mxu0
        %v3299 = vadd.f32 %v3210, %v3298
        %v3300 = vpop.f32.mrf.mxu0
        %v3301 = vadd.f32 %v3212, %v3300
        %3302 = vmatmul.bf16.gmra.mxu0 %v903
        %v3303 = vpop.f32.mrf.mxu0
        %v3304 = vadd.f32 %v3215, %v3303
        %v3305 = vpop.f32.mrf.mxu0
        %v3306 = vadd.f32 %v3217, %v3305
        %3307 = vmatmul.bf16.gmra.mxu0 %v911
        %v3308 = vpop.f32.mrf.mxu0
        %v3309 = vadd.f32 %v3220, %v3308
        %v3310 = vpop.f32.mrf.mxu0
        %v3311 = vadd.f32 %v3222, %v3310
        %3312 = vmatmul.bf16.gmra.mxu0 %v919
        %v3313 = vpop.f32.mrf.mxu0
        %v3314 = vadd.f32 %v3225, %v3313
        %v3315 = vpop.f32.mrf.mxu0
        %v3316 = vadd.f32 %v3227, %v3315
        %3317 = vmatmul.bf16.gmra.mxu0 %v927
        %v3318 = vpop.f32.mrf.mxu0
        %v3319 = vadd.f32 %v3230, %v3318
        %v3320 = vpop.f32.mrf.mxu0
        %v3321 = vadd.f32 %v3232, %v3320
        %3322 = vmatmul.bf16.gmra.mxu0 %v935
        %v3323 = vpop.f32.mrf.mxu0
        %v3324 = vadd.f32 %v3235, %v3323
        %v3325 = vpop.f32.mrf.mxu0
        %v3326 = vadd.f32 %v3237, %v3325
        %3327 = vdwg.mxu0
        %3328 = vmatpush.bf16.msra.mxu0 %v2255
        %3329 = vmatpush.bf16.msra.mxu0 %v2253
        %3330 = vmatpush.bf16.msra.mxu0 %v2251
        %3331 = vmatpush.bf16.msra.mxu0 %v2249
        %3332 = vmatpush.bf16.msra.mxu0 %v2247
        %3333 = vmatpush.bf16.msra.mxu0 %v2245
        %3334 = vmatpush.bf16.msra.mxu0 %v2243
        %3335 = vmatpush.bf16.msra.mxu0 %v2241
        %3336 = vmatmul.bf16.gmra.mxu0 %v835
        %v3337 = vpop.f32.mrf.mxu0
        %v3338 = vadd.f32 %v3249, %v3337
        %v3339 = vpop.f32.mrf.mxu0
        %v3340 = vadd.f32 %v3251, %v3339
        %3341 = vmatmul.bf16.gmra.mxu0 %v827
        %v3342 = vpop.f32.mrf.mxu0
        %v3343 = vadd.f32 %v3254, %v3342
        %v3344 = vpop.f32.mrf.mxu0
        %v3345 = vadd.f32 %v3256, %v3344
        %3346 = vmatmul.bf16.gmra.mxu0 %v819
        %v3347 = vpop.f32.mrf.mxu0
        %v3348 = vadd.f32 %v3259, %v3347
        %v3349 = vpop.f32.mrf.mxu0
        %v3350 = vadd.f32 %v3261, %v3349
        %3351 = vmatmul.bf16.gmra.mxu0 %v843
        %v3352 = vpop.f32.mrf.mxu0
        %v3353 = vadd.f32 %v3264, %v3352
        %v3354 = vpop.f32.mrf.mxu0
        %v3355 = vadd.f32 %v3266, %v3354
        %3356 = vmatmul.bf16.gmra.mxu0 %v851
        %v3357 = vpop.f32.mrf.mxu0
        %v3358 = vadd.f32 %v3269, %v3357
        %v3359 = vpop.f32.mrf.mxu0
        %v3360 = vadd.f32 %v3271, %v3359
        %3361 = vmatmul.bf16.gmra.mxu0 %v859
        %v3362 = vpop.f32.mrf.mxu0
        %v3363 = vadd.f32 %v3274, %v3362
        %v3364 = vpop.f32.mrf.mxu0
        %v3365 = vadd.f32 %v3276, %v3364
        %3366 = vmatmul.bf16.gmra.mxu0 %v867
        %v3367 = vpop.f32.mrf.mxu0
        %v3368 = vadd.f32 %v3279, %v3367
        %v3369 = vpop.f32.mrf.mxu0
        %v3370 = vadd.f32 %v3281, %v3369
        %3371 = vmatmul.bf16.gmra.mxu0 %v875
        %v3372 = vpop.f32.mrf.mxu0
        %v3373 = vadd.f32 %v3284, %v3372
        %v3374 = vpop.f32.mrf.mxu0
        %v3375 = vadd.f32 %v3286, %v3374
        %3376 = vmatmul.bf16.gmra.mxu0 %v883
        %v3377 = vpop.f32.mrf.mxu0
        %v3378 = vadd.f32 %v3289, %v3377
        %v3379 = vpop.f32.mrf.mxu0
        %v3380 = vadd.f32 %v3291, %v3379
        %3381 = vmatmul.bf16.gmra.mxu0 %v891
        %v3382 = vpop.f32.mrf.mxu0
        %v3383 = vadd.f32 %v3294, %v3382
        %v3384 = vpop.f32.mrf.mxu0
        %v3385 = vadd.f32 %v3296, %v3384
        %3386 = vmatmul.bf16.gmra.mxu0 %v899
        %v3387 = vpop.f32.mrf.mxu0
        %v3388 = vadd.f32 %v3299, %v3387
        %v3389 = vpop.f32.mrf.mxu0
        %v3390 = vadd.f32 %v3301, %v3389
        %3391 = vmatmul.bf16.gmra.mxu0 %v907
        %v3392 = vpop.f32.mrf.mxu0
        %v3393 = vadd.f32 %v3304, %v3392
        %v3394 = vpop.f32.mrf.mxu0
        %v3395 = vadd.f32 %v3306, %v3394
        %3396 = vmatmul.bf16.gmra.mxu0 %v915
        %v3397 = vpop.f32.mrf.mxu0
        %v3398 = vadd.f32 %v3309, %v3397
        %v3399 = vpop.f32.mrf.mxu0
        %v3400 = vadd.f32 %v3311, %v3399
        %3401 = vmatmul.bf16.gmra.mxu0 %v923
        %v3402 = vpop.f32.mrf.mxu0
        %v3403 = vadd.f32 %v3314, %v3402
        %v3404 = vpop.f32.mrf.mxu0
        %v3405 = vadd.f32 %v3316, %v3404
        %3406 = vmatmul.bf16.gmra.mxu0 %v931
        %v3407 = vpop.f32.mrf.mxu0
        %v3408 = vadd.f32 %v3319, %v3407
        %v3409 = vpop.f32.mrf.mxu0
        %v3410 = vadd.f32 %v3321, %v3409
        %3411 = vmatmul.bf16.gmra.mxu0 %v939
        %v3412 = vpop.f32.mrf.mxu0
        %v3413 = vadd.f32 %v3324, %v3412
        %v3414 = vpop.f32.mrf.mxu0
        %v3415 = vadd.f32 %v3326, %v3414
        %3416 = vdwg.mxu0
        %3417 = vmatpush.bf16.msra.mxu0 %v2271
        %3418 = vmatpush.bf16.msra.mxu0 %v2269
        %3419 = vmatpush.bf16.msra.mxu0 %v2267
        %3420 = vmatpush.bf16.msra.mxu0 %v2265
        %3421 = vmatpush.bf16.msra.mxu0 %v2263
        %3422 = vmatpush.bf16.msra.mxu0 %v2261
        %3423 = vmatpush.bf16.msra.mxu0 %v2259
        %3424 = vmatpush.bf16.msra.mxu0 %v2257
        %3425 = vmatmul.bf16.gmra.mxu0 %v717
        %v3426 = vpop.f32.mrf.mxu0
        %v3427 = vadd.f32 %v3338, %v3426
        %v3428 = vpop.f32.mrf.mxu0
        %v3429 = vadd.f32 %v3340, %v3428
        %3430 = vmatmul.bf16.gmra.mxu0 %v715
        %v3431 = vpop.f32.mrf.mxu0
        %v3432 = vadd.f32 %v3343, %v3431
        %v3433 = vpop.f32.mrf.mxu0
        %v3434 = vadd.f32 %v3345, %v3433
        %3435 = vmatmul.bf16.gmra.mxu0 %v713
        %v3436 = vpop.f32.mrf.mxu0
        %v3437 = vadd.f32 %v3348, %v3436
        %v3438 = vpop.f32.mrf.mxu0
        %v3439 = vadd.f32 %v3350, %v3438
        %3440 = vmatmul.bf16.gmra.mxu0 %v719
        %v3441 = vpop.f32.mrf.mxu0
        %v3442 = vadd.f32 %v3353, %v3441
        %v3443 = vpop.f32.mrf.mxu0
        %v3444 = vadd.f32 %v3355, %v3443
        %3445 = vmatmul.bf16.gmra.mxu0 %v721
        %v3446 = vpop.f32.mrf.mxu0
        %v3447 = vadd.f32 %v3358, %v3446
        %v3448 = vpop.f32.mrf.mxu0
        %v3449 = vadd.f32 %v3360, %v3448
        %3450 = vmatmul.bf16.gmra.mxu0 %v723
        %v3451 = vpop.f32.mrf.mxu0
        %v3452 = vadd.f32 %v3363, %v3451
        %v3453 = vpop.f32.mrf.mxu0
        %v3454 = vadd.f32 %v3365, %v3453
        %3455 = vmatmul.bf16.gmra.mxu0 %v725
        %v3456 = vpop.f32.mrf.mxu0
        %v3457 = vadd.f32 %v3368, %v3456
        %v3458 = vpop.f32.mrf.mxu0
        %v3459 = vadd.f32 %v3370, %v3458
        %3460 = vmatmul.bf16.gmra.mxu0 %v727
        %v3461 = vpop.f32.mrf.mxu0
        %v3462 = vadd.f32 %v3373, %v3461
        %v3463 = vpop.f32.mrf.mxu0
        %v3464 = vadd.f32 %v3375, %v3463
        %3465 = vmatmul.bf16.gmra.mxu0 %v729
        %v3466 = vpop.f32.mrf.mxu0
        %v3467 = vadd.f32 %v3378, %v3466
        %v3468 = vpop.f32.mrf.mxu0
        %v3469 = vadd.f32 %v3380, %v3468
        %3470 = vmatmul.bf16.gmra.mxu0 %v731
        %v3471 = vpop.f32.mrf.mxu0
        %v3472 = vadd.f32 %v3383, %v3471
        %v3473 = vpop.f32.mrf.mxu0
        %v3474 = vadd.f32 %v3385, %v3473
        %3475 = vmatmul.bf16.gmra.mxu0 %v733
        %v3476 = vpop.f32.mrf.mxu0
        %v3477 = vadd.f32 %v3388, %v3476
        %v3478 = vpop.f32.mrf.mxu0
        %v3479 = vadd.f32 %v3390, %v3478
        %3480 = vmatmul.bf16.gmra.mxu0 %v735
        %v3481 = vpop.f32.mrf.mxu0
        %v3482 = vadd.f32 %v3393, %v3481
        %v3483 = vpop.f32.mrf.mxu0
        %v3484 = vadd.f32 %v3395, %v3483
        %3485 = vmatmul.bf16.gmra.mxu0 %v737
        %v3486 = vpop.f32.mrf.mxu0
        %v3487 = vadd.f32 %v3398, %v3486
        %v3488 = vpop.f32.mrf.mxu0
        %v3489 = vadd.f32 %v3400, %v3488
        %3490 = vmatmul.bf16.gmra.mxu0 %v739
        %v3491 = vpop.f32.mrf.mxu0
        %v3492 = vadd.f32 %v3403, %v3491
        %v3493 = vpop.f32.mrf.mxu0
        %v3494 = vadd.f32 %v3405, %v3493
        %3495 = vmatmul.bf16.gmra.mxu0 %v741
        %v3496 = vpop.f32.mrf.mxu0
        %v3497 = vadd.f32 %v3408, %v3496
        %v3498 = vpop.f32.mrf.mxu0
        %v3499 = vadd.f32 %v3410, %v3498
        %3500 = vmatmul.bf16.gmra.mxu0 %v743
        %v3501 = vpop.f32.mrf.mxu0
        %v3502 = vadd.f32 %v3413, %v3501
        %v3503 = vpop.f32.mrf.mxu0
        %v3504 = vadd.f32 %v3415, %v3503
        %3505 = vdwg.mxu0
        %3506 = vmatpush.bf16.msra.mxu0 %v2287
        %3507 = vmatpush.bf16.msra.mxu0 %v2285
        %3508 = vmatpush.bf16.msra.mxu0 %v2283
        %3509 = vmatpush.bf16.msra.mxu0 %v2281
        %3510 = vmatpush.bf16.msra.mxu0 %v2279
        %3511 = vmatpush.bf16.msra.mxu0 %v2277
        %3512 = vmatpush.bf16.msra.mxu0 %v2275
        %3513 = vmatpush.bf16.msra.mxu0 %v2273
        %3514 = vmatmul.bf16.gmra.mxu0 %v718
        %v3515 = vpop.f32.mrf.mxu0
        %v3516 = vadd.f32 %v3427, %v3515
        %v3517 = vpop.f32.mrf.mxu0
        %v3518 = vadd.f32 %v3429, %v3517
        %3519 = vmatmul.bf16.gmra.mxu0 %v716
        %v3520 = vpop.f32.mrf.mxu0
        %v3521 = vadd.f32 %v3432, %v3520
        %v3522 = vpop.f32.mrf.mxu0
        %v3523 = vadd.f32 %v3434, %v3522
        %3524 = vmatmul.bf16.gmra.mxu0 %v714
        %v3525 = vpop.f32.mrf.mxu0
        %v3526 = vadd.f32 %v3437, %v3525
        %v3527 = vpop.f32.mrf.mxu0
        %v3528 = vadd.f32 %v3439, %v3527
        %3529 = vmatmul.bf16.gmra.mxu0 %v720
        %v3530 = vpop.f32.mrf.mxu0
        %v3531 = vadd.f32 %v3442, %v3530
        %v3532 = vpop.f32.mrf.mxu0
        %v3533 = vadd.f32 %v3444, %v3532
        %3534 = vmatmul.bf16.gmra.mxu0 %v722
        %v3535 = vpop.f32.mrf.mxu0
        %v3536 = vadd.f32 %v3447, %v3535
        %v3537 = vpop.f32.mrf.mxu0
        %v3538 = vadd.f32 %v3449, %v3537
        %3539 = vmatmul.bf16.gmra.mxu0 %v724
        %v3540 = vpop.f32.mrf.mxu0
        %v3541 = vadd.f32 %v3452, %v3540
        %v3542 = vpop.f32.mrf.mxu0
        %v3543 = vadd.f32 %v3454, %v3542
        %3544 = vmatmul.bf16.gmra.mxu0 %v726
        %v3545 = vpop.f32.mrf.mxu0
        %v3546 = vadd.f32 %v3457, %v3545
        %v3547 = vpop.f32.mrf.mxu0
        %v3548 = vadd.f32 %v3459, %v3547
        %3549 = vmatmul.bf16.gmra.mxu0 %v728
        %v3550 = vpop.f32.mrf.mxu0
        %v3551 = vadd.f32 %v3462, %v3550
        %v3552 = vpop.f32.mrf.mxu0
        %v3553 = vadd.f32 %v3464, %v3552
        %3554 = vmatmul.bf16.gmra.mxu0 %v730
        %v3555 = vpop.f32.mrf.mxu0
        %v3556 = vadd.f32 %v3467, %v3555
        %v3557 = vpop.f32.mrf.mxu0
        %v3558 = vadd.f32 %v3469, %v3557
        %3559 = vmatmul.bf16.gmra.mxu0 %v732
        %v3560 = vpop.f32.mrf.mxu0
        %v3561 = vadd.f32 %v3472, %v3560
        %v3562 = vpop.f32.mrf.mxu0
        %v3563 = vadd.f32 %v3474, %v3562
        %3564 = vmatmul.bf16.gmra.mxu0 %v734
        %v3565 = vpop.f32.mrf.mxu0
        %v3566 = vadd.f32 %v3477, %v3565
        %v3567 = vpop.f32.mrf.mxu0
        %v3568 = vadd.f32 %v3479, %v3567
        %3569 = vmatmul.bf16.gmra.mxu0 %v736
        %v3570 = vpop.f32.mrf.mxu0
        %v3571 = vadd.f32 %v3482, %v3570
        %v3572 = vpop.f32.mrf.mxu0
        %v3573 = vadd.f32 %v3484, %v3572
        %3574 = vmatmul.bf16.gmra.mxu0 %v738
        %v3575 = vpop.f32.mrf.mxu0
        %v3576 = vadd.f32 %v3487, %v3575
        %v3577 = vpop.f32.mrf.mxu0
        %v3578 = vadd.f32 %v3489, %v3577
        %3579 = vmatmul.bf16.gmra.mxu0 %v740
        %v3580 = vpop.f32.mrf.mxu0
        %v3581 = vadd.f32 %v3492, %v3580
        %v3582 = vpop.f32.mrf.mxu0
        %v3583 = vadd.f32 %v3494, %v3582
        %3584 = vmatmul.bf16.gmra.mxu0 %v742
        %v3585 = vpop.f32.mrf.mxu0
        %v3586 = vadd.f32 %v3497, %v3585
        %v3587 = vpop.f32.mrf.mxu0
        %v3588 = vadd.f32 %v3499, %v3587
        %3589 = vmatmul.bf16.gmra.mxu0 %v744
        %v3590 = vpop.f32.mrf.mxu0
        %v3591 = vadd.f32 %v3502, %v3590
        %v3592 = vpop.f32.mrf.mxu0
        %v3593 = vadd.f32 %v3504, %v3592
        %3594 = vdwg.mxu0
        %3595 = vmatpush.bf16.msra.mxu0 %v2303
        %3596 = vmatpush.bf16.msra.mxu0 %v2301
        %3597 = vmatpush.bf16.msra.mxu0 %v2299
        %3598 = vmatpush.bf16.msra.mxu0 %v2297
        %3599 = vmatpush.bf16.msra.mxu0 %v2295
        %3600 = vmatpush.bf16.msra.mxu0 %v2293
        %3601 = vmatpush.bf16.msra.mxu0 %v2291
        %3602 = vmatpush.bf16.msra.mxu0 %v2289
        %3603 = vmatmul.bf16.gmra.mxu0 %v1205
        %v3604 = vpop.f32.mrf.mxu0
        %v3605 = vadd.f32 %v3516, %v3604
        %v3606 = vpop.f32.mrf.mxu0
        %v3607 = vadd.f32 %v3518, %v3606
        %3608 = vmatmul.bf16.gmra.mxu0 %v1203
        %v3609 = vpop.f32.mrf.mxu0
        %v3610 = vadd.f32 %v3521, %v3609
        %v3611 = vpop.f32.mrf.mxu0
        %v3612 = vadd.f32 %v3523, %v3611
        %3613 = vmatmul.bf16.gmra.mxu0 %v1201
        %v3614 = vpop.f32.mrf.mxu0
        %v3615 = vadd.f32 %v3526, %v3614
        %v3616 = vpop.f32.mrf.mxu0
        %v3617 = vadd.f32 %v3528, %v3616
        %3618 = vmatmul.bf16.gmra.mxu0 %v1207
        %v3619 = vpop.f32.mrf.mxu0
        %v3620 = vadd.f32 %v3531, %v3619
        %v3621 = vpop.f32.mrf.mxu0
        %v3622 = vadd.f32 %v3533, %v3621
        %3623 = vmatmul.bf16.gmra.mxu0 %v1209
        %v3624 = vpop.f32.mrf.mxu0
        %v3625 = vadd.f32 %v3536, %v3624
        %v3626 = vpop.f32.mrf.mxu0
        %v3627 = vadd.f32 %v3538, %v3626
        %3628 = vmatmul.bf16.gmra.mxu0 %v1211
        %v3629 = vpop.f32.mrf.mxu0
        %v3630 = vadd.f32 %v3541, %v3629
        %v3631 = vpop.f32.mrf.mxu0
        %v3632 = vadd.f32 %v3543, %v3631
        %3633 = vmatmul.bf16.gmra.mxu0 %v1213
        %v3634 = vpop.f32.mrf.mxu0
        %v3635 = vadd.f32 %v3546, %v3634
        %v3636 = vpop.f32.mrf.mxu0
        %v3637 = vadd.f32 %v3548, %v3636
        %3638 = vmatmul.bf16.gmra.mxu0 %v1215
        %v3639 = vpop.f32.mrf.mxu0
        %v3640 = vadd.f32 %v3551, %v3639
        %v3641 = vpop.f32.mrf.mxu0
        %v3642 = vadd.f32 %v3553, %v3641
        %3643 = vmatmul.bf16.gmra.mxu0 %v1217
        %v3644 = vpop.f32.mrf.mxu0
        %v3645 = vadd.f32 %v3556, %v3644
        %v3646 = vpop.f32.mrf.mxu0
        %v3647 = vadd.f32 %v3558, %v3646
        %3648 = vmatmul.bf16.gmra.mxu0 %v1219
        %v3649 = vpop.f32.mrf.mxu0
        %v3650 = vadd.f32 %v3561, %v3649
        %v3651 = vpop.f32.mrf.mxu0
        %v3652 = vadd.f32 %v3563, %v3651
        %3653 = vmatmul.bf16.gmra.mxu0 %v1221
        %v3654 = vpop.f32.mrf.mxu0
        %v3655 = vadd.f32 %v3566, %v3654
        %v3656 = vpop.f32.mrf.mxu0
        %v3657 = vadd.f32 %v3568, %v3656
        %3658 = vmatmul.bf16.gmra.mxu0 %v1223
        %v3659 = vpop.f32.mrf.mxu0
        %v3660 = vadd.f32 %v3571, %v3659
        %v3661 = vpop.f32.mrf.mxu0
        %v3662 = vadd.f32 %v3573, %v3661
        %3663 = vmatmul.bf16.gmra.mxu0 %v1225
        %v3664 = vpop.f32.mrf.mxu0
        %v3665 = vadd.f32 %v3576, %v3664
        %v3666 = vpop.f32.mrf.mxu0
        %v3667 = vadd.f32 %v3578, %v3666
        %3668 = vmatmul.bf16.gmra.mxu0 %v1227
        %v3669 = vpop.f32.mrf.mxu0
        %v3670 = vadd.f32 %v3581, %v3669
        %v3671 = vpop.f32.mrf.mxu0
        %v3672 = vadd.f32 %v3583, %v3671
        %3673 = vmatmul.bf16.gmra.mxu0 %v1229
        %v3674 = vpop.f32.mrf.mxu0
        %v3675 = vadd.f32 %v3586, %v3674
        %v3676 = vpop.f32.mrf.mxu0
        %v3677 = vadd.f32 %v3588, %v3676
        %3678 = vmatmul.bf16.gmra.mxu0 %v1231
        %v3679 = vpop.f32.mrf.mxu0
        %v3680 = vadd.f32 %v3591, %v3679
        %v3681 = vpop.f32.mrf.mxu0
        %v3682 = vadd.f32 %v3593, %v3681
        %3683 = vdwg.mxu0
        %3684 = vmatpush.bf16.msra.mxu0 %v2319
        %3685 = vmatpush.bf16.msra.mxu0 %v2317
        %3686 = vmatpush.bf16.msra.mxu0 %v2315
        %3687 = vmatpush.bf16.msra.mxu0 %v2313
        %3688 = vmatpush.bf16.msra.mxu0 %v2311
        %3689 = vmatpush.bf16.msra.mxu0 %v2309
        %3690 = vmatpush.bf16.msra.mxu0 %v2307
        %3691 = vmatpush.bf16.msra.mxu0 %v2305
        %3692 = vmatmul.bf16.gmra.mxu0 %v1206
        %v3693 = vpop.f32.mrf.mxu0
        %v3694 = vadd.f32 %v3605, %v3693
        %v3695 = vpop.f32.mrf.mxu0
        %v3696 = vadd.f32 %v3607, %v3695
        %3697 = vmatmul.bf16.gmra.mxu0 %v1204
        %v3698 = vpop.f32.mrf.mxu0
        %v3699 = vadd.f32 %v3610, %v3698
        %v3700 = vpop.f32.mrf.mxu0
        %v3701 = vadd.f32 %v3612, %v3700
        %3702 = vmatmul.bf16.gmra.mxu0 %v1202
        %v3703 = vpop.f32.mrf.mxu0
        %v3704 = vadd.f32 %v3615, %v3703
        %v3705 = vpop.f32.mrf.mxu0
        %v3706 = vadd.f32 %v3617, %v3705
        %3707 = vmatmul.bf16.gmra.mxu0 %v1208
        %v3708 = vpop.f32.mrf.mxu0
        %v3709 = vadd.f32 %v3620, %v3708
        %v3710 = vpop.f32.mrf.mxu0
        %v3711 = vadd.f32 %v3622, %v3710
        %3712 = vmatmul.bf16.gmra.mxu0 %v1210
        %v3713 = vpop.f32.mrf.mxu0
        %v3714 = vadd.f32 %v3625, %v3713
        %v3715 = vpop.f32.mrf.mxu0
        %v3716 = vadd.f32 %v3627, %v3715
        %3717 = vmatmul.bf16.gmra.mxu0 %v1212
        %v3718 = vpop.f32.mrf.mxu0
        %v3719 = vadd.f32 %v3630, %v3718
        %v3720 = vpop.f32.mrf.mxu0
        %v3721 = vadd.f32 %v3632, %v3720
        %3722 = vmatmul.bf16.gmra.mxu0 %v1214
        %v3723 = vpop.f32.mrf.mxu0
        %v3724 = vadd.f32 %v3635, %v3723
        %v3725 = vpop.f32.mrf.mxu0
        %v3726 = vadd.f32 %v3637, %v3725
        %3727 = vmatmul.bf16.gmra.mxu0 %v1216
        %v3728 = vpop.f32.mrf.mxu0
        %v3729 = vadd.f32 %v3640, %v3728
        %v3730 = vpop.f32.mrf.mxu0
        %v3731 = vadd.f32 %v3642, %v3730
        %3732 = vmatmul.bf16.gmra.mxu0 %v1218
        %v3733 = vpop.f32.mrf.mxu0
        %v3734 = vadd.f32 %v3645, %v3733
        %v3735 = vpop.f32.mrf.mxu0
        %v3736 = vadd.f32 %v3647, %v3735
        %3737 = vmatmul.bf16.gmra.mxu0 %v1220
        %v3738 = vpop.f32.mrf.mxu0
        %v3739 = vadd.f32 %v3650, %v3738
        %v3740 = vpop.f32.mrf.mxu0
        %v3741 = vadd.f32 %v3652, %v3740
        %3742 = vmatmul.bf16.gmra.mxu0 %v1222
        %v3743 = vpop.f32.mrf.mxu0
        %v3744 = vadd.f32 %v3655, %v3743
        %v3745 = vpop.f32.mrf.mxu0
        %v3746 = vadd.f32 %v3657, %v3745
        %3747 = vmatmul.bf16.gmra.mxu0 %v1224
        %v3748 = vpop.f32.mrf.mxu0
        %v3749 = vadd.f32 %v3660, %v3748
        %v3750 = vpop.f32.mrf.mxu0
        %v3751 = vadd.f32 %v3662, %v3750
        %3752 = vmatmul.bf16.gmra.mxu0 %v1226
        %v3753 = vpop.f32.mrf.mxu0
        %v3754 = vadd.f32 %v3665, %v3753
        %v3755 = vpop.f32.mrf.mxu0
        %v3756 = vadd.f32 %v3667, %v3755
        %3757 = vmatmul.bf16.gmra.mxu0 %v1228
        %v3758 = vpop.f32.mrf.mxu0
        %v3759 = vadd.f32 %v3670, %v3758
        %v3760 = vpop.f32.mrf.mxu0
        %v3761 = vadd.f32 %v3672, %v3760
        %3762 = vmatmul.bf16.gmra.mxu0 %v1230
        %v3763 = vpop.f32.mrf.mxu0
        %v3764 = vadd.f32 %v3675, %v3763
        %v3765 = vpop.f32.mrf.mxu0
        %v3766 = vadd.f32 %v3677, %v3765
        %3767 = vmatmul.bf16.gmra.mxu0 %v1232
        %v3768 = vpop.f32.mrf.mxu0
        %v3769 = vadd.f32 %v3680, %v3768
        %v3770 = vpop.f32.mrf.mxu0
        %v3771 = vadd.f32 %v3682, %v3770
        %3772 = vdwg.mxu0
        %3773 = vmatpush.bf16.msra.mxu0 %v2335
        %3774 = vmatpush.bf16.msra.mxu0 %v2333
        %3775 = vmatpush.bf16.msra.mxu0 %v2331
        %3776 = vmatpush.bf16.msra.mxu0 %v2329
        %3777 = vmatpush.bf16.msra.mxu0 %v2327
        %3778 = vmatpush.bf16.msra.mxu0 %v2325
        %3779 = vmatpush.bf16.msra.mxu0 %v2323
        %3780 = vmatpush.bf16.msra.mxu0 %v2321
        %3781 = vmatmul.bf16.gmra.mxu0 %v815
        %v3782 = vpop.f32.mrf.mxu0
        %v3783 = vadd.f32 %v3694, %v3782
        %v3784 = vpop.f32.mrf.mxu0
        %v3785 = vadd.f32 %v3696, %v3784
        %3786 = vmatmul.bf16.gmra.mxu0 %v839
        %v3787 = vpop.f32.mrf.mxu0
        %v3788 = vadd.f32 %v3699, %v3787
        %v3789 = vpop.f32.mrf.mxu0
        %v3790 = vadd.f32 %v3701, %v3789
        %3791 = vmatmul.bf16.gmra.mxu0 %v847
        %v3792 = vpop.f32.mrf.mxu0
        %v3793 = vadd.f32 %v3704, %v3792
        %v3794 = vpop.f32.mrf.mxu0
        %v3795 = vadd.f32 %v3706, %v3794
        %3796 = vmatmul.bf16.gmra.mxu0 %v855
        %v3797 = vpop.f32.mrf.mxu0
        %v3798 = vadd.f32 %v3709, %v3797
        %v3799 = vpop.f32.mrf.mxu0
        %v3800 = vadd.f32 %v3711, %v3799
        %3801 = vmatmul.bf16.gmra.mxu0 %v863
        %v3802 = vpop.f32.mrf.mxu0
        %v3803 = vadd.f32 %v3714, %v3802
        %v3804 = vpop.f32.mrf.mxu0
        %v3805 = vadd.f32 %v3716, %v3804
        %3806 = vmatmul.bf16.gmra.mxu0 %v871
        %v3807 = vpop.f32.mrf.mxu0
        %v3808 = vadd.f32 %v3719, %v3807
        %v3809 = vpop.f32.mrf.mxu0
        %v3810 = vadd.f32 %v3721, %v3809
        %3811 = vmatmul.bf16.gmra.mxu0 %v879
        %v3812 = vpop.f32.mrf.mxu0
        %v3813 = vadd.f32 %v3724, %v3812
        %v3814 = vpop.f32.mrf.mxu0
        %v3815 = vadd.f32 %v3726, %v3814
        %3816 = vmatmul.bf16.gmra.mxu0 %v887
        %v3817 = vpop.f32.mrf.mxu0
        %v3818 = vadd.f32 %v3729, %v3817
        %v3819 = vpop.f32.mrf.mxu0
        %v3820 = vadd.f32 %v3731, %v3819
        %3821 = vmatmul.bf16.gmra.mxu0 %v895
        %v3822 = vpop.f32.mrf.mxu0
        %v3823 = vadd.f32 %v3734, %v3822
        %v3824 = vpop.f32.mrf.mxu0
        %v3825 = vadd.f32 %v3736, %v3824
        %3826 = vmatmul.bf16.gmra.mxu0 %v903
        %v3827 = vpop.f32.mrf.mxu0
        %v3828 = vadd.f32 %v3739, %v3827
        %v3829 = vpop.f32.mrf.mxu0
        %v3830 = vadd.f32 %v3741, %v3829
        %3831 = vmatmul.bf16.gmra.mxu0 %v911
        %v3832 = vpop.f32.mrf.mxu0
        %v3833 = vadd.f32 %v3744, %v3832
        %v3834 = vpop.f32.mrf.mxu0
        %v3835 = vadd.f32 %v3746, %v3834
        %3836 = vmatmul.bf16.gmra.mxu0 %v919
        %v3837 = vpop.f32.mrf.mxu0
        %v3838 = vadd.f32 %v3749, %v3837
        %v3839 = vpop.f32.mrf.mxu0
        %v3840 = vadd.f32 %v3751, %v3839
        %3841 = vmatmul.bf16.gmra.mxu0 %v927
        %v3842 = vpop.f32.mrf.mxu0
        %v3843 = vadd.f32 %v3754, %v3842
        %v3844 = vpop.f32.mrf.mxu0
        %v3845 = vadd.f32 %v3756, %v3844
        %3846 = vmatmul.bf16.gmra.mxu0 %v935
        %v3847 = vpop.f32.mrf.mxu0
        %v3848 = vadd.f32 %v3759, %v3847
        %v3849 = vpop.f32.mrf.mxu0
        %v3850 = vadd.f32 %v3761, %v3849
        %3851 = vmatmul.bf16.gmra.mxu0 %v927
        %v3852 = vpop.f32.mrf.mxu0
        %v3853 = vadd.f32 %v3764, %v3852
        %v3854 = vpop.f32.mrf.mxu0
        %v3855 = vadd.f32 %v3766, %v3854
        %3856 = vmatmul.bf16.gmra.mxu0 %v919
        %v3857 = vpop.f32.mrf.mxu0
        %v3858 = vadd.f32 %v3769, %v3857
        %v3859 = vpop.f32.mrf.mxu0
        %v3860 = vadd.f32 %v3771, %v3859
        %3861 = vdwg.mxu0
        %3862 = vmatpush.bf16.msra.mxu0 %v2351
        %3863 = vmatpush.bf16.msra.mxu0 %v2349
        %3864 = vmatpush.bf16.msra.mxu0 %v2347
        %3865 = vmatpush.bf16.msra.mxu0 %v2345
        %3866 = vmatpush.bf16.msra.mxu0 %v2343
        %3867 = vmatpush.bf16.msra.mxu0 %v2341
        %3868 = vmatpush.bf16.msra.mxu0 %v2339
        %3869 = vmatpush.bf16.msra.mxu0 %v2337
        %3870 = vmatmul.bf16.gmra.mxu0 %v819
        %v3871 = vpop.f32.mrf.mxu0
        %v3872 = vadd.f32 %v3783, %v3871
        %v3873 = vpop.f32.mrf.mxu0
        %v3874 = vadd.f32 %v3785, %v3873
        %3875 = vmatmul.bf16.gmra.mxu0 %v843
        %v3876 = vpop.f32.mrf.mxu0
        %v3877 = vadd.f32 %v3788, %v3876
        %v3878 = vpop.f32.mrf.mxu0
        %v3879 = vadd.f32 %v3790, %v3878
        %3880 = vmatmul.bf16.gmra.mxu0 %v851
        %v3881 = vpop.f32.mrf.mxu0
        %v3882 = vadd.f32 %v3793, %v3881
        %v3883 = vpop.f32.mrf.mxu0
        %v3884 = vadd.f32 %v3795, %v3883
        %3885 = vmatmul.bf16.gmra.mxu0 %v859
        %v3886 = vpop.f32.mrf.mxu0
        %v3887 = vadd.f32 %v3798, %v3886
        %v3888 = vpop.f32.mrf.mxu0
        %v3889 = vadd.f32 %v3800, %v3888
        %3890 = vmatmul.bf16.gmra.mxu0 %v867
        %v3891 = vpop.f32.mrf.mxu0
        %v3892 = vadd.f32 %v3803, %v3891
        %v3893 = vpop.f32.mrf.mxu0
        %v3894 = vadd.f32 %v3805, %v3893
        %3895 = vmatmul.bf16.gmra.mxu0 %v875
        %v3896 = vpop.f32.mrf.mxu0
        %v3897 = vadd.f32 %v3808, %v3896
        %v3898 = vpop.f32.mrf.mxu0
        %v3899 = vadd.f32 %v3810, %v3898
        %3900 = vmatmul.bf16.gmra.mxu0 %v883
        %v3901 = vpop.f32.mrf.mxu0
        %v3902 = vadd.f32 %v3813, %v3901
        %v3903 = vpop.f32.mrf.mxu0
        %v3904 = vadd.f32 %v3815, %v3903
        %3905 = vmatmul.bf16.gmra.mxu0 %v891
        %v3906 = vpop.f32.mrf.mxu0
        %v3907 = vadd.f32 %v3818, %v3906
        %v3908 = vpop.f32.mrf.mxu0
        %v3909 = vadd.f32 %v3820, %v3908
        %3910 = vmatmul.bf16.gmra.mxu0 %v899
        %v3911 = vpop.f32.mrf.mxu0
        %v3912 = vadd.f32 %v3823, %v3911
        %v3913 = vpop.f32.mrf.mxu0
        %v3914 = vadd.f32 %v3825, %v3913
        %3915 = vmatmul.bf16.gmra.mxu0 %v907
        %v3916 = vpop.f32.mrf.mxu0
        %v3917 = vadd.f32 %v3828, %v3916
        %v3918 = vpop.f32.mrf.mxu0
        %v3919 = vadd.f32 %v3830, %v3918
        %3920 = vmatmul.bf16.gmra.mxu0 %v915
        %v3921 = vpop.f32.mrf.mxu0
        %v3922 = vadd.f32 %v3833, %v3921
        %v3923 = vpop.f32.mrf.mxu0
        %v3924 = vadd.f32 %v3835, %v3923
        %3925 = vmatmul.bf16.gmra.mxu0 %v923
        %v3926 = vpop.f32.mrf.mxu0
        %v3927 = vadd.f32 %v3838, %v3926
        %v3928 = vpop.f32.mrf.mxu0
        %v3929 = vadd.f32 %v3840, %v3928
        %3930 = vmatmul.bf16.gmra.mxu0 %v931
        %v3931 = vpop.f32.mrf.mxu0
        %v3932 = vadd.f32 %v3843, %v3931
        %v3933 = vpop.f32.mrf.mxu0
        %v3934 = vadd.f32 %v3845, %v3933
        %3935 = vmatmul.bf16.gmra.mxu0 %v939
        %v3936 = vpop.f32.mrf.mxu0
        %v3937 = vadd.f32 %v3848, %v3936
        %v3938 = vpop.f32.mrf.mxu0
        %v3939 = vadd.f32 %v3850, %v3938
        %3940 = vmatmul.bf16.gmra.mxu0 %v931
        %v3941 = vpop.f32.mrf.mxu0
        %v3942 = vadd.f32 %v3853, %v3941
        %v3943 = vpop.f32.mrf.mxu0
        %v3944 = vadd.f32 %v3855, %v3943
        %3945 = vmatmul.bf16.gmra.mxu0 %v923
        %v3946 = vpop.f32.mrf.mxu0
        %v3947 = vadd.f32 %v3858, %v3946
        %v3948 = vpop.f32.mrf.mxu0
        %v3949 = vadd.f32 %v3860, %v3948
        %3950 = vdwg.mxu0
        %3951 = vmatpush.bf16.msra.mxu0 %v2367
        %3952 = vmatpush.bf16.msra.mxu0 %v2365
        %3953 = vmatpush.bf16.msra.mxu0 %v2363
        %3954 = vmatpush.bf16.msra.mxu0 %v2361
        %3955 = vmatpush.bf16.msra.mxu0 %v2359
        %3956 = vmatpush.bf16.msra.mxu0 %v2357
        %3957 = vmatpush.bf16.msra.mxu0 %v2355
        %3958 = vmatpush.bf16.msra.mxu0 %v2353
        %3959 = vmatmul.bf16.gmra.mxu0 %v713
        %v3960 = vpop.f32.mrf.mxu0
        %v3961 = vadd.f32 %v3872, %v3960
        %v3962 = vpop.f32.mrf.mxu0
        %v3963 = vadd.f32 %v3874, %v3962
        %3964 = vmatmul.bf16.gmra.mxu0 %v719
        %v3965 = vpop.f32.mrf.mxu0
        %v3966 = vadd.f32 %v3877, %v3965
        %v3967 = vpop.f32.mrf.mxu0
        %v3968 = vadd.f32 %v3879, %v3967
        %3969 = vmatmul.bf16.gmra.mxu0 %v721
        %v3970 = vpop.f32.mrf.mxu0
        %v3971 = vadd.f32 %v3882, %v3970
        %v3972 = vpop.f32.mrf.mxu0
        %v3973 = vadd.f32 %v3884, %v3972
        %3974 = vmatmul.bf16.gmra.mxu0 %v723
        %v3975 = vpop.f32.mrf.mxu0
        %v3976 = vadd.f32 %v3887, %v3975
        %v3977 = vpop.f32.mrf.mxu0
        %v3978 = vadd.f32 %v3889, %v3977
        %3979 = vmatmul.bf16.gmra.mxu0 %v725
        %v3980 = vpop.f32.mrf.mxu0
        %v3981 = vadd.f32 %v3892, %v3980
        %v3982 = vpop.f32.mrf.mxu0
        %v3983 = vadd.f32 %v3894, %v3982
        %3984 = vmatmul.bf16.gmra.mxu0 %v727
        %v3985 = vpop.f32.mrf.mxu0
        %v3986 = vadd.f32 %v3897, %v3985
        %v3987 = vpop.f32.mrf.mxu0
        %v3988 = vadd.f32 %v3899, %v3987
        %3989 = vmatmul.bf16.gmra.mxu0 %v729
        %v3990 = vpop.f32.mrf.mxu0
        %v3991 = vadd.f32 %v3902, %v3990
        %v3992 = vpop.f32.mrf.mxu0
        %v3993 = vadd.f32 %v3904, %v3992
        %3994 = vmatmul.bf16.gmra.mxu0 %v731
        %v3995 = vpop.f32.mrf.mxu0
        %v3996 = vadd.f32 %v3907, %v3995
        %v3997 = vpop.f32.mrf.mxu0
        %v3998 = vadd.f32 %v3909, %v3997
        %3999 = vmatmul.bf16.gmra.mxu0 %v733
        %v4000 = vpop.f32.mrf.mxu0
        %v4001 = vadd.f32 %v3912, %v4000
        %v4002 = vpop.f32.mrf.mxu0
        %v4003 = vadd.f32 %v3914, %v4002
        %4004 = vmatmul.bf16.gmra.mxu0 %v735
        %v4005 = vpop.f32.mrf.mxu0
        %v4006 = vadd.f32 %v3917, %v4005
        %v4007 = vpop.f32.mrf.mxu0
        %v4008 = vadd.f32 %v3919, %v4007
        %4009 = vmatmul.bf16.gmra.mxu0 %v737
        %v4010 = vpop.f32.mrf.mxu0
        %v4011 = vadd.f32 %v3922, %v4010
        %v4012 = vpop.f32.mrf.mxu0
        %v4013 = vadd.f32 %v3924, %v4012
        %4014 = vmatmul.bf16.gmra.mxu0 %v739
        %v4015 = vpop.f32.mrf.mxu0
        %v4016 = vadd.f32 %v3927, %v4015
        %v4017 = vpop.f32.mrf.mxu0
        %v4018 = vadd.f32 %v3929, %v4017
        %4019 = vmatmul.bf16.gmra.mxu0 %v741
        %v4020 = vpop.f32.mrf.mxu0
        %v4021 = vadd.f32 %v3932, %v4020
        %v4022 = vpop.f32.mrf.mxu0
        %v4023 = vadd.f32 %v3934, %v4022
        %4024 = vmatmul.bf16.gmra.mxu0 %v743
        %v4025 = vpop.f32.mrf.mxu0
        %v4026 = vadd.f32 %v3937, %v4025
        %v4027 = vpop.f32.mrf.mxu0
        %v4028 = vadd.f32 %v3939, %v4027
        %4029 = vmatmul.bf16.gmra.mxu0 %v741
        %v4030 = vpop.f32.mrf.mxu0
        %v4031 = vadd.f32 %v3942, %v4030
        %v4032 = vpop.f32.mrf.mxu0
        %v4033 = vadd.f32 %v3944, %v4032
        %4034 = vmatmul.bf16.gmra.mxu0 %v739
        %v4035 = vpop.f32.mrf.mxu0
        %v4036 = vadd.f32 %v3947, %v4035
        %v4037 = vpop.f32.mrf.mxu0
        %v4038 = vadd.f32 %v3949, %v4037
        %4039 = vdwg.mxu0
        %4040 = vmatpush.bf16.msra.mxu0 %v2383
        %4041 = vmatpush.bf16.msra.mxu0 %v2381
        %4042 = vmatpush.bf16.msra.mxu0 %v2379
        %4043 = vmatpush.bf16.msra.mxu0 %v2377
        %4044 = vmatpush.bf16.msra.mxu0 %v2375
        %4045 = vmatpush.bf16.msra.mxu0 %v2373
        %4046 = vmatpush.bf16.msra.mxu0 %v2371
        %4047 = vmatpush.bf16.msra.mxu0 %v2369
        %4048 = vmatmul.bf16.gmra.mxu0 %v714
        %v4049 = vpop.f32.mrf.mxu0
        %v4050 = vadd.f32 %v3961, %v4049
        %v4051 = vpop.f32.mrf.mxu0
        %v4052 = vadd.f32 %v3963, %v4051
        %4053 = vmatmul.bf16.gmra.mxu0 %v720
        %v4054 = vpop.f32.mrf.mxu0
        %v4055 = vadd.f32 %v3966, %v4054
        %v4056 = vpop.f32.mrf.mxu0
        %v4057 = vadd.f32 %v3968, %v4056
        %4058 = vmatmul.bf16.gmra.mxu0 %v722
        %v4059 = vpop.f32.mrf.mxu0
        %v4060 = vadd.f32 %v3971, %v4059
        %v4061 = vpop.f32.mrf.mxu0
        %v4062 = vadd.f32 %v3973, %v4061
        %4063 = vmatmul.bf16.gmra.mxu0 %v724
        %v4064 = vpop.f32.mrf.mxu0
        %v4065 = vadd.f32 %v3976, %v4064
        %v4066 = vpop.f32.mrf.mxu0
        %v4067 = vadd.f32 %v3978, %v4066
        %4068 = vmatmul.bf16.gmra.mxu0 %v726
        %v4069 = vpop.f32.mrf.mxu0
        %v4070 = vadd.f32 %v3981, %v4069
        %v4071 = vpop.f32.mrf.mxu0
        %v4072 = vadd.f32 %v3983, %v4071
        %4073 = vmatmul.bf16.gmra.mxu0 %v728
        %v4074 = vpop.f32.mrf.mxu0
        %v4075 = vadd.f32 %v3986, %v4074
        %v4076 = vpop.f32.mrf.mxu0
        %v4077 = vadd.f32 %v3988, %v4076
        %4078 = vmatmul.bf16.gmra.mxu0 %v730
        %v4079 = vpop.f32.mrf.mxu0
        %v4080 = vadd.f32 %v3991, %v4079
        %v4081 = vpop.f32.mrf.mxu0
        %v4082 = vadd.f32 %v3993, %v4081
        %4083 = vmatmul.bf16.gmra.mxu0 %v732
        %v4084 = vpop.f32.mrf.mxu0
        %v4085 = vadd.f32 %v3996, %v4084
        %v4086 = vpop.f32.mrf.mxu0
        %v4087 = vadd.f32 %v3998, %v4086
        %4088 = vmatmul.bf16.gmra.mxu0 %v734
        %v4089 = vpop.f32.mrf.mxu0
        %v4090 = vadd.f32 %v4001, %v4089
        %v4091 = vpop.f32.mrf.mxu0
        %v4092 = vadd.f32 %v4003, %v4091
        %4093 = vmatmul.bf16.gmra.mxu0 %v736
        %v4094 = vpop.f32.mrf.mxu0
        %v4095 = vadd.f32 %v4006, %v4094
        %v4096 = vpop.f32.mrf.mxu0
        %v4097 = vadd.f32 %v4008, %v4096
        %4098 = vmatmul.bf16.gmra.mxu0 %v738
        %v4099 = vpop.f32.mrf.mxu0
        %v4100 = vadd.f32 %v4011, %v4099
        %v4101 = vpop.f32.mrf.mxu0
        %v4102 = vadd.f32 %v4013, %v4101
        %4103 = vmatmul.bf16.gmra.mxu0 %v740
        %v4104 = vpop.f32.mrf.mxu0
        %v4105 = vadd.f32 %v4016, %v4104
        %v4106 = vpop.f32.mrf.mxu0
        %v4107 = vadd.f32 %v4018, %v4106
        %4108 = vmatmul.bf16.gmra.mxu0 %v742
        %v4109 = vpop.f32.mrf.mxu0
        %v4110 = vadd.f32 %v4021, %v4109
        %v4111 = vpop.f32.mrf.mxu0
        %v4112 = vadd.f32 %v4023, %v4111
        %4113 = vmatmul.bf16.gmra.mxu0 %v744
        %v4114 = vpop.f32.mrf.mxu0
        %v4115 = vadd.f32 %v4026, %v4114
        %v4116 = vpop.f32.mrf.mxu0
        %v4117 = vadd.f32 %v4028, %v4116
        %4118 = vmatmul.bf16.gmra.mxu0 %v742
        %v4119 = vpop.f32.mrf.mxu0
        %v4120 = vadd.f32 %v4031, %v4119
        %v4121 = vpop.f32.mrf.mxu0
        %v4122 = vadd.f32 %v4033, %v4121
        %4123 = vmatmul.bf16.gmra.mxu0 %v740
        %v4124 = vpop.f32.mrf.mxu0
        %v4125 = vadd.f32 %v4036, %v4124
        %v4126 = vpop.f32.mrf.mxu0
        %v4127 = vadd.f32 %v4038, %v4126
        %4128 = vdwg.mxu0
        %4129 = vmatpush.bf16.msra.mxu0 %v2399
        %4130 = vmatpush.bf16.msra.mxu0 %v2397
        %4131 = vmatpush.bf16.msra.mxu0 %v2395
        %4132 = vmatpush.bf16.msra.mxu0 %v2393
        %4133 = vmatpush.bf16.msra.mxu0 %v2391
        %4134 = vmatpush.bf16.msra.mxu0 %v2389
        %4135 = vmatpush.bf16.msra.mxu0 %v2387
        %4136 = vmatpush.bf16.msra.mxu0 %v2385
        %4137 = vmatmul.bf16.gmra.mxu0 %v1201
        %v4138 = vpop.f32.mrf.mxu0
        %v4139 = vadd.f32 %v4050, %v4138
        %v4140 = vpop.f32.mrf.mxu0
        %v4141 = vadd.f32 %v4052, %v4140
        %4142 = vmatmul.bf16.gmra.mxu0 %v1207
        %v4143 = vpop.f32.mrf.mxu0
        %v4144 = vadd.f32 %v4055, %v4143
        %v4145 = vpop.f32.mrf.mxu0
        %v4146 = vadd.f32 %v4057, %v4145
        %4147 = vmatmul.bf16.gmra.mxu0 %v1209
        %v4148 = vpop.f32.mrf.mxu0
        %v4149 = vadd.f32 %v4060, %v4148
        %v4150 = vpop.f32.mrf.mxu0
        %v4151 = vadd.f32 %v4062, %v4150
        %4152 = vmatmul.bf16.gmra.mxu0 %v1211
        %v4153 = vpop.f32.mrf.mxu0
        %v4154 = vadd.f32 %v4065, %v4153
        %v4155 = vpop.f32.mrf.mxu0
        %v4156 = vadd.f32 %v4067, %v4155
        %4157 = vmatmul.bf16.gmra.mxu0 %v1213
        %v4158 = vpop.f32.mrf.mxu0
        %v4159 = vadd.f32 %v4070, %v4158
        %v4160 = vpop.f32.mrf.mxu0
        %v4161 = vadd.f32 %v4072, %v4160
        %4162 = vmatmul.bf16.gmra.mxu0 %v1215
        %v4163 = vpop.f32.mrf.mxu0
        %v4164 = vadd.f32 %v4075, %v4163
        %v4165 = vpop.f32.mrf.mxu0
        %v4166 = vadd.f32 %v4077, %v4165
        %4167 = vmatmul.bf16.gmra.mxu0 %v1217
        %v4168 = vpop.f32.mrf.mxu0
        %v4169 = vadd.f32 %v4080, %v4168
        %v4170 = vpop.f32.mrf.mxu0
        %v4171 = vadd.f32 %v4082, %v4170
        %4172 = vmatmul.bf16.gmra.mxu0 %v1219
        %v4173 = vpop.f32.mrf.mxu0
        %v4174 = vadd.f32 %v4085, %v4173
        %v4175 = vpop.f32.mrf.mxu0
        %v4176 = vadd.f32 %v4087, %v4175
        %4177 = vmatmul.bf16.gmra.mxu0 %v1221
        %v4178 = vpop.f32.mrf.mxu0
        %v4179 = vadd.f32 %v4090, %v4178
        %v4180 = vpop.f32.mrf.mxu0
        %v4181 = vadd.f32 %v4092, %v4180
        %4182 = vmatmul.bf16.gmra.mxu0 %v1223
        %v4183 = vpop.f32.mrf.mxu0
        %v4184 = vadd.f32 %v4095, %v4183
        %v4185 = vpop.f32.mrf.mxu0
        %v4186 = vadd.f32 %v4097, %v4185
        %4187 = vmatmul.bf16.gmra.mxu0 %v1225
        %v4188 = vpop.f32.mrf.mxu0
        %v4189 = vadd.f32 %v4100, %v4188
        %v4190 = vpop.f32.mrf.mxu0
        %v4191 = vadd.f32 %v4102, %v4190
        %4192 = vmatmul.bf16.gmra.mxu0 %v1227
        %v4193 = vpop.f32.mrf.mxu0
        %v4194 = vadd.f32 %v4105, %v4193
        %v4195 = vpop.f32.mrf.mxu0
        %v4196 = vadd.f32 %v4107, %v4195
        %4197 = vmatmul.bf16.gmra.mxu0 %v1229
        %v4198 = vpop.f32.mrf.mxu0
        %v4199 = vadd.f32 %v4110, %v4198
        %v4200 = vpop.f32.mrf.mxu0
        %v4201 = vadd.f32 %v4112, %v4200
        %4202 = vmatmul.bf16.gmra.mxu0 %v1231
        %v4203 = vpop.f32.mrf.mxu0
        %v4204 = vadd.f32 %v4115, %v4203
        %v4205 = vpop.f32.mrf.mxu0
        %v4206 = vadd.f32 %v4117, %v4205
        %4207 = vmatmul.bf16.gmra.mxu0 %v1229
        %v4208 = vpop.f32.mrf.mxu0
        %v4209 = vadd.f32 %v4120, %v4208
        %v4210 = vpop.f32.mrf.mxu0
        %v4211 = vadd.f32 %v4122, %v4210
        %4212 = vmatmul.bf16.gmra.mxu0 %v1227
        %v4213 = vpop.f32.mrf.mxu0
        %v4214 = vadd.f32 %v4125, %v4213
        %v4215 = vpop.f32.mrf.mxu0
        %v4216 = vadd.f32 %v4127, %v4215
        %4217 = vdwg.mxu0
        %4218 = vmatpush.bf16.msra.mxu0 %v2415
        %4219 = vmatpush.bf16.msra.mxu0 %v2413
        %4220 = vmatpush.bf16.msra.mxu0 %v2411
        %4221 = vmatpush.bf16.msra.mxu0 %v2409
        %4222 = vmatpush.bf16.msra.mxu0 %v2407
        %4223 = vmatpush.bf16.msra.mxu0 %v2405
        %4224 = vmatpush.bf16.msra.mxu0 %v2403
        %4225 = vmatpush.bf16.msra.mxu0 %v2401
        %4226 = vmatmul.bf16.gmra.mxu0 %v1202
        %v4227 = vpop.f32.mrf.mxu0
        %v4228 = vadd.f32 %v4139, %v4227
        %v4229 = vpop.f32.mrf.mxu0
        %v4230 = vadd.f32 %v4141, %v4229
        %4231 = vmatmul.bf16.gmra.mxu0 %v1208
        %v4232 = vpop.f32.mrf.mxu0
        %v4233 = vadd.f32 %v4144, %v4232
        %v4234 = vpop.f32.mrf.mxu0
        %v4235 = vadd.f32 %v4146, %v4234
        %4236 = vmatmul.bf16.gmra.mxu0 %v1210
        %v4237 = vpop.f32.mrf.mxu0
        %v4238 = vadd.f32 %v4149, %v4237
        %v4239 = vpop.f32.mrf.mxu0
        %v4240 = vadd.f32 %v4151, %v4239
        %4241 = vmatmul.bf16.gmra.mxu0 %v1212
        %v4242 = vpop.f32.mrf.mxu0
        %v4243 = vadd.f32 %v4154, %v4242
        %v4244 = vpop.f32.mrf.mxu0
        %v4245 = vadd.f32 %v4156, %v4244
        %4246 = vmatmul.bf16.gmra.mxu0 %v1214
        %v4247 = vpop.f32.mrf.mxu0
        %v4248 = vadd.f32 %v4159, %v4247
        %v4249 = vpop.f32.mrf.mxu0
        %v4250 = vadd.f32 %v4161, %v4249
        %4251 = vmatmul.bf16.gmra.mxu0 %v1216
        %v4252 = vpop.f32.mrf.mxu0
        %v4253 = vadd.f32 %v4164, %v4252
        %v4254 = vpop.f32.mrf.mxu0
        %v4255 = vadd.f32 %v4166, %v4254
        %4256 = vmatmul.bf16.gmra.mxu0 %v1218
        %v4257 = vpop.f32.mrf.mxu0
        %v4258 = vadd.f32 %v4169, %v4257
        %v4259 = vpop.f32.mrf.mxu0
        %v4260 = vadd.f32 %v4171, %v4259
        %4261 = vmatmul.bf16.gmra.mxu0 %v1220
        %v4262 = vpop.f32.mrf.mxu0
        %v4263 = vadd.f32 %v4174, %v4262
        %v4264 = vpop.f32.mrf.mxu0
        %v4265 = vadd.f32 %v4176, %v4264
        %4266 = vmatmul.bf16.gmra.mxu0 %v1222
        %v4267 = vpop.f32.mrf.mxu0
        %v4268 = vadd.f32 %v4179, %v4267
        %v4269 = vpop.f32.mrf.mxu0
        %v4270 = vadd.f32 %v4181, %v4269
        %4271 = vmatmul.bf16.gmra.mxu0 %v1224
        %v4272 = vpop.f32.mrf.mxu0
        %v4273 = vadd.f32 %v4184, %v4272
        %v4274 = vpop.f32.mrf.mxu0
        %v4275 = vadd.f32 %v4186, %v4274
        %4276 = vmatmul.bf16.gmra.mxu0 %v1226
        %v4277 = vpop.f32.mrf.mxu0
        %v4278 = vadd.f32 %v4189, %v4277
        %v4279 = vpop.f32.mrf.mxu0
        %v4280 = vadd.f32 %v4191, %v4279
        %4281 = vmatmul.bf16.gmra.mxu0 %v1228
        %v4282 = vpop.f32.mrf.mxu0
        %v4283 = vadd.f32 %v4194, %v4282
        %v4284 = vpop.f32.mrf.mxu0
        %v4285 = vadd.f32 %v4196, %v4284
        %4286 = vmatmul.bf16.gmra.mxu0 %v1230
        %v4287 = vpop.f32.mrf.mxu0
        %v4288 = vadd.f32 %v4199, %v4287
        %v4289 = vpop.f32.mrf.mxu0
        %v4290 = vadd.f32 %v4201, %v4289
        %4291 = vmatmul.bf16.gmra.mxu0 %v1232
        %v4292 = vpop.f32.mrf.mxu0
        %v4293 = vadd.f32 %v4204, %v4292
        %v4294 = vpop.f32.mrf.mxu0
        %v4295 = vadd.f32 %v4206, %v4294
        %4296 = vmatmul.bf16.gmra.mxu0 %v1230
        %v4297 = vpop.f32.mrf.mxu0
        %v4298 = vadd.f32 %v4209, %v4297
        %v4299 = vpop.f32.mrf.mxu0
        %v4300 = vadd.f32 %v4211, %v4299
        %4301 = vmatmul.bf16.gmra.mxu0 %v1228
        %v4302 = vpop.f32.mrf.mxu0
        %v4303 = vadd.f32 %v4214, %v4302
        %v4304 = vpop.f32.mrf.mxu0
        %v4305 = vadd.f32 %v4216, %v4304
        %4306 = vdwg.mxu0
        %4307 = vmatpush.bf16.msra.mxu0 %v2144
        %4308 = vmatpush.bf16.msra.mxu0 %v2142
        %4309 = vmatpush.bf16.msra.mxu0 %v2140
        %4310 = vmatpush.bf16.msra.mxu0 %v2138
        %4311 = vmatpush.bf16.msra.mxu0 %v2136
        %4312 = vmatpush.bf16.msra.mxu0 %v2134
        %4313 = vmatpush.bf16.msra.mxu0 %v2132
        %4314 = vmatpush.bf16.msra.mxu0 %v2130
        %4315 = vmatmul.bf16.gmra.mxu0 %v815
        %v4316 = vpop.f32.mrf.mxu0
        %v4317 = vadd.f32 0.0, %v4316
        %v4318 = vpop.f32.mrf.mxu0
        %v4319 = vadd.f32 0.0, %v4318
        %4320 = vmatmul.bf16.gmra.mxu0 %v823
        %v4321 = vpop.f32.mrf.mxu0
        %v4322 = vadd.f32 0.0, %v4321
        %v4323 = vpop.f32.mrf.mxu0
        %v4324 = vadd.f32 0.0, %v4323
        %4325 = vmatmul.bf16.gmra.mxu0 %v831
        %v4326 = vpop.f32.mrf.mxu0
        %v4327 = vadd.f32 0.0, %v4326
        %v4328 = vpop.f32.mrf.mxu0
        %v4329 = vadd.f32 0.0, %v4328
        %4330 = vmatmul.bf16.gmra.mxu0 %v823
        %v4331 = vpop.f32.mrf.mxu0
        %v4332 = vadd.f32 0.0, %v4331
        %v4333 = vpop.f32.mrf.mxu0
        %v4334 = vadd.f32 0.0, %v4333
        %4335 = vmatmul.bf16.gmra.mxu0 %v815
        %v4336 = vpop.f32.mrf.mxu0
        %v4337 = vadd.f32 0.0, %v4336
        %v4338 = vpop.f32.mrf.mxu0
        %v4339 = vadd.f32 0.0, %v4338
        %4340 = vmatmul.bf16.gmra.mxu0 %v839
        %v4341 = vpop.f32.mrf.mxu0
        %v4342 = vadd.f32 0.0, %v4341
        %v4343 = vpop.f32.mrf.mxu0
        %v4344 = vadd.f32 0.0, %v4343
        %4345 = vmatmul.bf16.gmra.mxu0 %v847
        %v4346 = vpop.f32.mrf.mxu0
        %v4347 = vadd.f32 0.0, %v4346
        %v4348 = vpop.f32.mrf.mxu0
        %v4349 = vadd.f32 0.0, %v4348
        %4350 = vmatmul.bf16.gmra.mxu0 %v855
        %v4351 = vpop.f32.mrf.mxu0
        %v4352 = vadd.f32 0.0, %v4351
        %v4353 = vpop.f32.mrf.mxu0
        %v4354 = vadd.f32 0.0, %v4353
        %4355 = vmatmul.bf16.gmra.mxu0 %v863
        %v4356 = vpop.f32.mrf.mxu0
        %v4357 = vadd.f32 0.0, %v4356
        %v4358 = vpop.f32.mrf.mxu0
        %v4359 = vadd.f32 0.0, %v4358
        %4360 = vmatmul.bf16.gmra.mxu0 %v871
        %v4361 = vpop.f32.mrf.mxu0
        %v4362 = vadd.f32 0.0, %v4361
        %v4363 = vpop.f32.mrf.mxu0
        %v4364 = vadd.f32 0.0, %v4363
        %4365 = vmatmul.bf16.gmra.mxu0 %v879
        %v4366 = vpop.f32.mrf.mxu0
        %v4367 = vadd.f32 0.0, %v4366
        %v4368 = vpop.f32.mrf.mxu0
        %v4369 = vadd.f32 0.0, %v4368
        %4370 = vmatmul.bf16.gmra.mxu0 %v887
        %v4371 = vpop.f32.mrf.mxu0
        %v4372 = vadd.f32 0.0, %v4371
        %v4373 = vpop.f32.mrf.mxu0
        %v4374 = vadd.f32 0.0, %v4373
        %4375 = vmatmul.bf16.gmra.mxu0 %v895
        %v4376 = vpop.f32.mrf.mxu0
        %v4377 = vadd.f32 0.0, %v4376
        %v4378 = vpop.f32.mrf.mxu0
        %v4379 = vadd.f32 0.0, %v4378
        %4380 = vmatmul.bf16.gmra.mxu0 %v903
        %v4381 = vpop.f32.mrf.mxu0
        %v4382 = vadd.f32 0.0, %v4381
        %v4383 = vpop.f32.mrf.mxu0
        %v4384 = vadd.f32 0.0, %v4383
        %4385 = vmatmul.bf16.gmra.mxu0 %v911
        %v4386 = vpop.f32.mrf.mxu0
        %v4387 = vadd.f32 0.0, %v4386
        %v4388 = vpop.f32.mrf.mxu0
        %v4389 = vadd.f32 0.0, %v4388
        %4390 = vmatmul.bf16.gmra.mxu0 %v919
        %v4391 = vpop.f32.mrf.mxu0
        %v4392 = vadd.f32 0.0, %v4391
        %v4393 = vpop.f32.mrf.mxu0
        %v4394 = vadd.f32 0.0, %v4393
        %4395 = vdwg.mxu0
        %4396 = vmatpush.bf16.msra.mxu0 %v2160
        %4397 = vmatpush.bf16.msra.mxu0 %v2158
        %4398 = vmatpush.bf16.msra.mxu0 %v2156
        %4399 = vmatpush.bf16.msra.mxu0 %v2154
        %4400 = vmatpush.bf16.msra.mxu0 %v2152
        %4401 = vmatpush.bf16.msra.mxu0 %v2150
        %4402 = vmatpush.bf16.msra.mxu0 %v2148
        %4403 = vmatpush.bf16.msra.mxu0 %v2146
        %4404 = vmatmul.bf16.gmra.mxu0 %v819
        %v4405 = vpop.f32.mrf.mxu0
        %v4406 = vadd.f32 %v4317, %v4405
        %v4407 = vpop.f32.mrf.mxu0
        %v4408 = vadd.f32 %v4319, %v4407
        %4409 = vmatmul.bf16.gmra.mxu0 %v827
        %v4410 = vpop.f32.mrf.mxu0
        %v4411 = vadd.f32 %v4322, %v4410
        %v4412 = vpop.f32.mrf.mxu0
        %v4413 = vadd.f32 %v4324, %v4412
        %4414 = vmatmul.bf16.gmra.mxu0 %v835
        %v4415 = vpop.f32.mrf.mxu0
        %v4416 = vadd.f32 %v4327, %v4415
        %v4417 = vpop.f32.mrf.mxu0
        %v4418 = vadd.f32 %v4329, %v4417
        %4419 = vmatmul.bf16.gmra.mxu0 %v827
        %v4420 = vpop.f32.mrf.mxu0
        %v4421 = vadd.f32 %v4332, %v4420
        %v4422 = vpop.f32.mrf.mxu0
        %v4423 = vadd.f32 %v4334, %v4422
        %4424 = vmatmul.bf16.gmra.mxu0 %v819
        %v4425 = vpop.f32.mrf.mxu0
        %v4426 = vadd.f32 %v4337, %v4425
        %v4427 = vpop.f32.mrf.mxu0
        %v4428 = vadd.f32 %v4339, %v4427
        %4429 = vmatmul.bf16.gmra.mxu0 %v843
        %v4430 = vpop.f32.mrf.mxu0
        %v4431 = vadd.f32 %v4342, %v4430
        %v4432 = vpop.f32.mrf.mxu0
        %v4433 = vadd.f32 %v4344, %v4432
        %4434 = vmatmul.bf16.gmra.mxu0 %v851
        %v4435 = vpop.f32.mrf.mxu0
        %v4436 = vadd.f32 %v4347, %v4435
        %v4437 = vpop.f32.mrf.mxu0
        %v4438 = vadd.f32 %v4349, %v4437
        %4439 = vmatmul.bf16.gmra.mxu0 %v859
        %v4440 = vpop.f32.mrf.mxu0
        %v4441 = vadd.f32 %v4352, %v4440
        %v4442 = vpop.f32.mrf.mxu0
        %v4443 = vadd.f32 %v4354, %v4442
        %4444 = vmatmul.bf16.gmra.mxu0 %v867
        %v4445 = vpop.f32.mrf.mxu0
        %v4446 = vadd.f32 %v4357, %v4445
        %v4447 = vpop.f32.mrf.mxu0
        %v4448 = vadd.f32 %v4359, %v4447
        %4449 = vmatmul.bf16.gmra.mxu0 %v875
        %v4450 = vpop.f32.mrf.mxu0
        %v4451 = vadd.f32 %v4362, %v4450
        %v4452 = vpop.f32.mrf.mxu0
        %v4453 = vadd.f32 %v4364, %v4452
        %4454 = vmatmul.bf16.gmra.mxu0 %v883
        %v4455 = vpop.f32.mrf.mxu0
        %v4456 = vadd.f32 %v4367, %v4455
        %v4457 = vpop.f32.mrf.mxu0
        %v4458 = vadd.f32 %v4369, %v4457
        %4459 = vmatmul.bf16.gmra.mxu0 %v891
        %v4460 = vpop.f32.mrf.mxu0
        %v4461 = vadd.f32 %v4372, %v4460
        %v4462 = vpop.f32.mrf.mxu0
        %v4463 = vadd.f32 %v4374, %v4462
        %4464 = vmatmul.bf16.gmra.mxu0 %v899
        %v4465 = vpop.f32.mrf.mxu0
        %v4466 = vadd.f32 %v4377, %v4465
        %v4467 = vpop.f32.mrf.mxu0
        %v4468 = vadd.f32 %v4379, %v4467
        %4469 = vmatmul.bf16.gmra.mxu0 %v907
        %v4470 = vpop.f32.mrf.mxu0
        %v4471 = vadd.f32 %v4382, %v4470
        %v4472 = vpop.f32.mrf.mxu0
        %v4473 = vadd.f32 %v4384, %v4472
        %4474 = vmatmul.bf16.gmra.mxu0 %v915
        %v4475 = vpop.f32.mrf.mxu0
        %v4476 = vadd.f32 %v4387, %v4475
        %v4477 = vpop.f32.mrf.mxu0
        %v4478 = vadd.f32 %v4389, %v4477
        %4479 = vmatmul.bf16.gmra.mxu0 %v923
        %v4480 = vpop.f32.mrf.mxu0
        %v4481 = vadd.f32 %v4392, %v4480
        %v4482 = vpop.f32.mrf.mxu0
        %v4483 = vadd.f32 %v4394, %v4482
        %4484 = vdwg.mxu0
        %4485 = vmatpush.bf16.msra.mxu0 %v2176
        %4486 = vmatpush.bf16.msra.mxu0 %v2174
        %4487 = vmatpush.bf16.msra.mxu0 %v2172
        %4488 = vmatpush.bf16.msra.mxu0 %v2170
        %4489 = vmatpush.bf16.msra.mxu0 %v2168
        %4490 = vmatpush.bf16.msra.mxu0 %v2166
        %4491 = vmatpush.bf16.msra.mxu0 %v2164
        %4492 = vmatpush.bf16.msra.mxu0 %v2162
        %4493 = vmatmul.bf16.gmra.mxu0 %v713
        %v4494 = vpop.f32.mrf.mxu0
        %v4495 = vadd.f32 %v4406, %v4494
        %v4496 = vpop.f32.mrf.mxu0
        %v4497 = vadd.f32 %v4408, %v4496
        %4498 = vmatmul.bf16.gmra.mxu0 %v715
        %v4499 = vpop.f32.mrf.mxu0
        %v4500 = vadd.f32 %v4411, %v4499
        %v4501 = vpop.f32.mrf.mxu0
        %v4502 = vadd.f32 %v4413, %v4501
        %4503 = vmatmul.bf16.gmra.mxu0 %v717
        %v4504 = vpop.f32.mrf.mxu0
        %v4505 = vadd.f32 %v4416, %v4504
        %v4506 = vpop.f32.mrf.mxu0
        %v4507 = vadd.f32 %v4418, %v4506
        %4508 = vmatmul.bf16.gmra.mxu0 %v715
        %v4509 = vpop.f32.mrf.mxu0
        %v4510 = vadd.f32 %v4421, %v4509
        %v4511 = vpop.f32.mrf.mxu0
        %v4512 = vadd.f32 %v4423, %v4511
        %4513 = vmatmul.bf16.gmra.mxu0 %v713
        %v4514 = vpop.f32.mrf.mxu0
        %v4515 = vadd.f32 %v4426, %v4514
        %v4516 = vpop.f32.mrf.mxu0
        %v4517 = vadd.f32 %v4428, %v4516
        %4518 = vmatmul.bf16.gmra.mxu0 %v719
        %v4519 = vpop.f32.mrf.mxu0
        %v4520 = vadd.f32 %v4431, %v4519
        %v4521 = vpop.f32.mrf.mxu0
        %v4522 = vadd.f32 %v4433, %v4521
        %4523 = vmatmul.bf16.gmra.mxu0 %v721
        %v4524 = vpop.f32.mrf.mxu0
        %v4525 = vadd.f32 %v4436, %v4524
        %v4526 = vpop.f32.mrf.mxu0
        %v4527 = vadd.f32 %v4438, %v4526
        %4528 = vmatmul.bf16.gmra.mxu0 %v723
        %v4529 = vpop.f32.mrf.mxu0
        %v4530 = vadd.f32 %v4441, %v4529
        %v4531 = vpop.f32.mrf.mxu0
        %v4532 = vadd.f32 %v4443, %v4531
        %4533 = vmatmul.bf16.gmra.mxu0 %v725
        %v4534 = vpop.f32.mrf.mxu0
        %v4535 = vadd.f32 %v4446, %v4534
        %v4536 = vpop.f32.mrf.mxu0
        %v4537 = vadd.f32 %v4448, %v4536
        %4538 = vmatmul.bf16.gmra.mxu0 %v727
        %v4539 = vpop.f32.mrf.mxu0
        %v4540 = vadd.f32 %v4451, %v4539
        %v4541 = vpop.f32.mrf.mxu0
        %v4542 = vadd.f32 %v4453, %v4541
        %4543 = vmatmul.bf16.gmra.mxu0 %v729
        %v4544 = vpop.f32.mrf.mxu0
        %v4545 = vadd.f32 %v4456, %v4544
        %v4546 = vpop.f32.mrf.mxu0
        %v4547 = vadd.f32 %v4458, %v4546
        %4548 = vmatmul.bf16.gmra.mxu0 %v731
        %v4549 = vpop.f32.mrf.mxu0
        %v4550 = vadd.f32 %v4461, %v4549
        %v4551 = vpop.f32.mrf.mxu0
        %v4552 = vadd.f32 %v4463, %v4551
        %4553 = vmatmul.bf16.gmra.mxu0 %v733
        %v4554 = vpop.f32.mrf.mxu0
        %v4555 = vadd.f32 %v4466, %v4554
        %v4556 = vpop.f32.mrf.mxu0
        %v4557 = vadd.f32 %v4468, %v4556
        %4558 = vmatmul.bf16.gmra.mxu0 %v735
        %v4559 = vpop.f32.mrf.mxu0
        %v4560 = vadd.f32 %v4471, %v4559
        %v4561 = vpop.f32.mrf.mxu0
        %v4562 = vadd.f32 %v4473, %v4561
        %4563 = vmatmul.bf16.gmra.mxu0 %v737
        %v4564 = vpop.f32.mrf.mxu0
        %v4565 = vadd.f32 %v4476, %v4564
        %v4566 = vpop.f32.mrf.mxu0
        %v4567 = vadd.f32 %v4478, %v4566
        %4568 = vmatmul.bf16.gmra.mxu0 %v739
        %v4569 = vpop.f32.mrf.mxu0
        %v4570 = vadd.f32 %v4481, %v4569
        %v4571 = vpop.f32.mrf.mxu0
        %v4572 = vadd.f32 %v4483, %v4571
        %4573 = vdwg.mxu0
        %4574 = vmatpush.bf16.msra.mxu0 %v2192
        %4575 = vmatpush.bf16.msra.mxu0 %v2190
        %4576 = vmatpush.bf16.msra.mxu0 %v2188
        %4577 = vmatpush.bf16.msra.mxu0 %v2186
        %4578 = vmatpush.bf16.msra.mxu0 %v2184
        %4579 = vmatpush.bf16.msra.mxu0 %v2182
        %4580 = vmatpush.bf16.msra.mxu0 %v2180
        %4581 = vmatpush.bf16.msra.mxu0 %v2178
        %4582 = vmatmul.bf16.gmra.mxu0 %v714
        %v4583 = vpop.f32.mrf.mxu0
        %v4584 = vadd.f32 %v4495, %v4583
        %v4585 = vpop.f32.mrf.mxu0
        %v4586 = vadd.f32 %v4497, %v4585
        %4587 = vmatmul.bf16.gmra.mxu0 %v716
        %v4588 = vpop.f32.mrf.mxu0
        %v4589 = vadd.f32 %v4500, %v4588
        %v4590 = vpop.f32.mrf.mxu0
        %v4591 = vadd.f32 %v4502, %v4590
        %4592 = vmatmul.bf16.gmra.mxu0 %v718
        %v4593 = vpop.f32.mrf.mxu0
        %v4594 = vadd.f32 %v4505, %v4593
        %v4595 = vpop.f32.mrf.mxu0
        %v4596 = vadd.f32 %v4507, %v4595
        %4597 = vmatmul.bf16.gmra.mxu0 %v716
        %v4598 = vpop.f32.mrf.mxu0
        %v4599 = vadd.f32 %v4510, %v4598
        %v4600 = vpop.f32.mrf.mxu0
        %v4601 = vadd.f32 %v4512, %v4600
        %4602 = vmatmul.bf16.gmra.mxu0 %v714
        %v4603 = vpop.f32.mrf.mxu0
        %v4604 = vadd.f32 %v4515, %v4603
        %v4605 = vpop.f32.mrf.mxu0
        %v4606 = vadd.f32 %v4517, %v4605
        %4607 = vmatmul.bf16.gmra.mxu0 %v720
        %v4608 = vpop.f32.mrf.mxu0
        %v4609 = vadd.f32 %v4520, %v4608
        %v4610 = vpop.f32.mrf.mxu0
        %v4611 = vadd.f32 %v4522, %v4610
        %4612 = vmatmul.bf16.gmra.mxu0 %v722
        %v4613 = vpop.f32.mrf.mxu0
        %v4614 = vadd.f32 %v4525, %v4613
        %v4615 = vpop.f32.mrf.mxu0
        %v4616 = vadd.f32 %v4527, %v4615
        %4617 = vmatmul.bf16.gmra.mxu0 %v724
        %v4618 = vpop.f32.mrf.mxu0
        %v4619 = vadd.f32 %v4530, %v4618
        %v4620 = vpop.f32.mrf.mxu0
        %v4621 = vadd.f32 %v4532, %v4620
        %4622 = vmatmul.bf16.gmra.mxu0 %v726
        %v4623 = vpop.f32.mrf.mxu0
        %v4624 = vadd.f32 %v4535, %v4623
        %v4625 = vpop.f32.mrf.mxu0
        %v4626 = vadd.f32 %v4537, %v4625
        %4627 = vmatmul.bf16.gmra.mxu0 %v728
        %v4628 = vpop.f32.mrf.mxu0
        %v4629 = vadd.f32 %v4540, %v4628
        %v4630 = vpop.f32.mrf.mxu0
        %v4631 = vadd.f32 %v4542, %v4630
        %4632 = vmatmul.bf16.gmra.mxu0 %v730
        %v4633 = vpop.f32.mrf.mxu0
        %v4634 = vadd.f32 %v4545, %v4633
        %v4635 = vpop.f32.mrf.mxu0
        %v4636 = vadd.f32 %v4547, %v4635
        %4637 = vmatmul.bf16.gmra.mxu0 %v732
        %v4638 = vpop.f32.mrf.mxu0
        %v4639 = vadd.f32 %v4550, %v4638
        %v4640 = vpop.f32.mrf.mxu0
        %v4641 = vadd.f32 %v4552, %v4640
        %4642 = vmatmul.bf16.gmra.mxu0 %v734
        %v4643 = vpop.f32.mrf.mxu0
        %v4644 = vadd.f32 %v4555, %v4643
        %v4645 = vpop.f32.mrf.mxu0
        %v4646 = vadd.f32 %v4557, %v4645
        %4647 = vmatmul.bf16.gmra.mxu0 %v736
        %v4648 = vpop.f32.mrf.mxu0
        %v4649 = vadd.f32 %v4560, %v4648
        %v4650 = vpop.f32.mrf.mxu0
        %v4651 = vadd.f32 %v4562, %v4650
        %4652 = vmatmul.bf16.gmra.mxu0 %v738
        %v4653 = vpop.f32.mrf.mxu0
        %v4654 = vadd.f32 %v4565, %v4653
        %v4655 = vpop.f32.mrf.mxu0
        %v4656 = vadd.f32 %v4567, %v4655
        %4657 = vmatmul.bf16.gmra.mxu0 %v740
        %v4658 = vpop.f32.mrf.mxu0
        %v4659 = vadd.f32 %v4570, %v4658
        %v4660 = vpop.f32.mrf.mxu0
        %v4661 = vadd.f32 %v4572, %v4660
        %4662 = vdwg.mxu0
        %4663 = vmatpush.bf16.msra.mxu0 %v2208
        %4664 = vmatpush.bf16.msra.mxu0 %v2206
        %4665 = vmatpush.bf16.msra.mxu0 %v2204
        %4666 = vmatpush.bf16.msra.mxu0 %v2202
        %4667 = vmatpush.bf16.msra.mxu0 %v2200
        %4668 = vmatpush.bf16.msra.mxu0 %v2198
        %4669 = vmatpush.bf16.msra.mxu0 %v2196
        %4670 = vmatpush.bf16.msra.mxu0 %v2194
        %4671 = vmatmul.bf16.gmra.mxu0 %v1201
        %v4672 = vpop.f32.mrf.mxu0
        %v4673 = vadd.f32 %v4584, %v4672
        %v4674 = vpop.f32.mrf.mxu0
        %v4675 = vadd.f32 %v4586, %v4674
        %4676 = vmatmul.bf16.gmra.mxu0 %v1203
        %v4677 = vpop.f32.mrf.mxu0
        %v4678 = vadd.f32 %v4589, %v4677
        %v4679 = vpop.f32.mrf.mxu0
        %v4680 = vadd.f32 %v4591, %v4679
        %4681 = vmatmul.bf16.gmra.mxu0 %v1205
        %v4682 = vpop.f32.mrf.mxu0
        %v4683 = vadd.f32 %v4594, %v4682
        %v4684 = vpop.f32.mrf.mxu0
        %v4685 = vadd.f32 %v4596, %v4684
        %4686 = vmatmul.bf16.gmra.mxu0 %v1203
        %v4687 = vpop.f32.mrf.mxu0
        %v4688 = vadd.f32 %v4599, %v4687
        %v4689 = vpop.f32.mrf.mxu0
        %v4690 = vadd.f32 %v4601, %v4689
        %4691 = vmatmul.bf16.gmra.mxu0 %v1201
        %v4692 = vpop.f32.mrf.mxu0
        %v4693 = vadd.f32 %v4604, %v4692
        %v4694 = vpop.f32.mrf.mxu0
        %v4695 = vadd.f32 %v4606, %v4694
        %4696 = vmatmul.bf16.gmra.mxu0 %v1207
        %v4697 = vpop.f32.mrf.mxu0
        %v4698 = vadd.f32 %v4609, %v4697
        %v4699 = vpop.f32.mrf.mxu0
        %v4700 = vadd.f32 %v4611, %v4699
        %4701 = vmatmul.bf16.gmra.mxu0 %v1209
        %v4702 = vpop.f32.mrf.mxu0
        %v4703 = vadd.f32 %v4614, %v4702
        %v4704 = vpop.f32.mrf.mxu0
        %v4705 = vadd.f32 %v4616, %v4704
        %4706 = vmatmul.bf16.gmra.mxu0 %v1211
        %v4707 = vpop.f32.mrf.mxu0
        %v4708 = vadd.f32 %v4619, %v4707
        %v4709 = vpop.f32.mrf.mxu0
        %v4710 = vadd.f32 %v4621, %v4709
        %4711 = vmatmul.bf16.gmra.mxu0 %v1213
        %v4712 = vpop.f32.mrf.mxu0
        %v4713 = vadd.f32 %v4624, %v4712
        %v4714 = vpop.f32.mrf.mxu0
        %v4715 = vadd.f32 %v4626, %v4714
        %4716 = vmatmul.bf16.gmra.mxu0 %v1215
        %v4717 = vpop.f32.mrf.mxu0
        %v4718 = vadd.f32 %v4629, %v4717
        %v4719 = vpop.f32.mrf.mxu0
        %v4720 = vadd.f32 %v4631, %v4719
        %4721 = vmatmul.bf16.gmra.mxu0 %v1217
        %v4722 = vpop.f32.mrf.mxu0
        %v4723 = vadd.f32 %v4634, %v4722
        %v4724 = vpop.f32.mrf.mxu0
        %v4725 = vadd.f32 %v4636, %v4724
        %4726 = vmatmul.bf16.gmra.mxu0 %v1219
        %v4727 = vpop.f32.mrf.mxu0
        %v4728 = vadd.f32 %v4639, %v4727
        %v4729 = vpop.f32.mrf.mxu0
        %v4730 = vadd.f32 %v4641, %v4729
        %4731 = vmatmul.bf16.gmra.mxu0 %v1221
        %v4732 = vpop.f32.mrf.mxu0
        %v4733 = vadd.f32 %v4644, %v4732
        %v4734 = vpop.f32.mrf.mxu0
        %v4735 = vadd.f32 %v4646, %v4734
        %4736 = vmatmul.bf16.gmra.mxu0 %v1223
        %v4737 = vpop.f32.mrf.mxu0
        %v4738 = vadd.f32 %v4649, %v4737
        %v4739 = vpop.f32.mrf.mxu0
        %v4740 = vadd.f32 %v4651, %v4739
        %4741 = vmatmul.bf16.gmra.mxu0 %v1225
        %v4742 = vpop.f32.mrf.mxu0
        %v4743 = vadd.f32 %v4654, %v4742
        %v4744 = vpop.f32.mrf.mxu0
        %v4745 = vadd.f32 %v4656, %v4744
        %4746 = vmatmul.bf16.gmra.mxu0 %v1227
        %v4747 = vpop.f32.mrf.mxu0
        %v4748 = vadd.f32 %v4659, %v4747
        %v4749 = vpop.f32.mrf.mxu0
        %v4750 = vadd.f32 %v4661, %v4749
        %4751 = vdwg.mxu0
        %4752 = vmatpush.bf16.msra.mxu0 %v2224
        %4753 = vmatpush.bf16.msra.mxu0 %v2222
        %4754 = vmatpush.bf16.msra.mxu0 %v2220
        %4755 = vmatpush.bf16.msra.mxu0 %v2218
        %4756 = vmatpush.bf16.msra.mxu0 %v2216
        %4757 = vmatpush.bf16.msra.mxu0 %v2214
        %4758 = vmatpush.bf16.msra.mxu0 %v2212
        %4759 = vmatpush.bf16.msra.mxu0 %v2210
        %4760 = vmatmul.bf16.gmra.mxu0 %v1202
        %v4761 = vpop.f32.mrf.mxu0
        %v4762 = vadd.f32 %v4673, %v4761
        %v4763 = vpop.f32.mrf.mxu0
        %v4764 = vadd.f32 %v4675, %v4763
        %4765 = vmatmul.bf16.gmra.mxu0 %v1204
        %v4766 = vpop.f32.mrf.mxu0
        %v4767 = vadd.f32 %v4678, %v4766
        %v4768 = vpop.f32.mrf.mxu0
        %v4769 = vadd.f32 %v4680, %v4768
        %4770 = vmatmul.bf16.gmra.mxu0 %v1206
        %v4771 = vpop.f32.mrf.mxu0
        %v4772 = vadd.f32 %v4683, %v4771
        %v4773 = vpop.f32.mrf.mxu0
        %v4774 = vadd.f32 %v4685, %v4773
        %4775 = vmatmul.bf16.gmra.mxu0 %v1204
        %v4776 = vpop.f32.mrf.mxu0
        %v4777 = vadd.f32 %v4688, %v4776
        %v4778 = vpop.f32.mrf.mxu0
        %v4779 = vadd.f32 %v4690, %v4778
        %4780 = vmatmul.bf16.gmra.mxu0 %v1202
        %v4781 = vpop.f32.mrf.mxu0
        %v4782 = vadd.f32 %v4693, %v4781
        %v4783 = vpop.f32.mrf.mxu0
        %v4784 = vadd.f32 %v4695, %v4783
        %4785 = vmatmul.bf16.gmra.mxu0 %v1208
        %v4786 = vpop.f32.mrf.mxu0
        %v4787 = vadd.f32 %v4698, %v4786
        %v4788 = vpop.f32.mrf.mxu0
        %v4789 = vadd.f32 %v4700, %v4788
        %4790 = vmatmul.bf16.gmra.mxu0 %v1210
        %v4791 = vpop.f32.mrf.mxu0
        %v4792 = vadd.f32 %v4703, %v4791
        %v4793 = vpop.f32.mrf.mxu0
        %v4794 = vadd.f32 %v4705, %v4793
        %4795 = vmatmul.bf16.gmra.mxu0 %v1212
        %v4796 = vpop.f32.mrf.mxu0
        %v4797 = vadd.f32 %v4708, %v4796
        %v4798 = vpop.f32.mrf.mxu0
        %v4799 = vadd.f32 %v4710, %v4798
        %4800 = vmatmul.bf16.gmra.mxu0 %v1214
        %v4801 = vpop.f32.mrf.mxu0
        %v4802 = vadd.f32 %v4713, %v4801
        %v4803 = vpop.f32.mrf.mxu0
        %v4804 = vadd.f32 %v4715, %v4803
        %4805 = vmatmul.bf16.gmra.mxu0 %v1216
        %v4806 = vpop.f32.mrf.mxu0
        %v4807 = vadd.f32 %v4718, %v4806
        %v4808 = vpop.f32.mrf.mxu0
        %v4809 = vadd.f32 %v4720, %v4808
        %4810 = vmatmul.bf16.gmra.mxu0 %v1218
        %v4811 = vpop.f32.mrf.mxu0
        %v4812 = vadd.f32 %v4723, %v4811
        %v4813 = vpop.f32.mrf.mxu0
        %v4814 = vadd.f32 %v4725, %v4813
        %4815 = vmatmul.bf16.gmra.mxu0 %v1220
        %v4816 = vpop.f32.mrf.mxu0
        %v4817 = vadd.f32 %v4728, %v4816
        %v4818 = vpop.f32.mrf.mxu0
        %v4819 = vadd.f32 %v4730, %v4818
        %4820 = vmatmul.bf16.gmra.mxu0 %v1222
        %v4821 = vpop.f32.mrf.mxu0
        %v4822 = vadd.f32 %v4733, %v4821
        %v4823 = vpop.f32.mrf.mxu0
        %v4824 = vadd.f32 %v4735, %v4823
        %4825 = vmatmul.bf16.gmra.mxu0 %v1224
        %v4826 = vpop.f32.mrf.mxu0
        %v4827 = vadd.f32 %v4738, %v4826
        %v4828 = vpop.f32.mrf.mxu0
        %v4829 = vadd.f32 %v4740, %v4828
        %4830 = vmatmul.bf16.gmra.mxu0 %v1226
        %v4831 = vpop.f32.mrf.mxu0
        %v4832 = vadd.f32 %v4743, %v4831
        %v4833 = vpop.f32.mrf.mxu0
        %v4834 = vadd.f32 %v4745, %v4833
        %4835 = vmatmul.bf16.gmra.mxu0 %v1228
        %v4836 = vpop.f32.mrf.mxu0
        %v4837 = vadd.f32 %v4748, %v4836
        %v4838 = vpop.f32.mrf.mxu0
        %v4839 = vadd.f32 %v4750, %v4838
        %4840 = vdwg.mxu0
        %4841 = vmatpush.bf16.msra.mxu0 %v2240
        %4842 = vmatpush.bf16.msra.mxu0 %v2238
        %4843 = vmatpush.bf16.msra.mxu0 %v2236
        %4844 = vmatpush.bf16.msra.mxu0 %v2234
        %4845 = vmatpush.bf16.msra.mxu0 %v2232
        %4846 = vmatpush.bf16.msra.mxu0 %v2230
        %4847 = vmatpush.bf16.msra.mxu0 %v2228
        %4848 = vmatpush.bf16.msra.mxu0 %v2226
        %4849 = vmatmul.bf16.gmra.mxu0 %v831
        %v4850 = vpop.f32.mrf.mxu0
        %v4851 = vadd.f32 %v4762, %v4850
        %v4852 = vpop.f32.mrf.mxu0
        %v4853 = vadd.f32 %v4764, %v4852
        %4854 = vmatmul.bf16.gmra.mxu0 %v823
        %v4855 = vpop.f32.mrf.mxu0
        %v4856 = vadd.f32 %v4767, %v4855
        %v4857 = vpop.f32.mrf.mxu0
        %v4858 = vadd.f32 %v4769, %v4857
        %4859 = vmatmul.bf16.gmra.mxu0 %v815
        %v4860 = vpop.f32.mrf.mxu0
        %v4861 = vadd.f32 %v4772, %v4860
        %v4862 = vpop.f32.mrf.mxu0
        %v4863 = vadd.f32 %v4774, %v4862
        %4864 = vmatmul.bf16.gmra.mxu0 %v839
        %v4865 = vpop.f32.mrf.mxu0
        %v4866 = vadd.f32 %v4777, %v4865
        %v4867 = vpop.f32.mrf.mxu0
        %v4868 = vadd.f32 %v4779, %v4867
        %4869 = vmatmul.bf16.gmra.mxu0 %v847
        %v4870 = vpop.f32.mrf.mxu0
        %v4871 = vadd.f32 %v4782, %v4870
        %v4872 = vpop.f32.mrf.mxu0
        %v4873 = vadd.f32 %v4784, %v4872
        %4874 = vmatmul.bf16.gmra.mxu0 %v855
        %v4875 = vpop.f32.mrf.mxu0
        %v4876 = vadd.f32 %v4787, %v4875
        %v4877 = vpop.f32.mrf.mxu0
        %v4878 = vadd.f32 %v4789, %v4877
        %4879 = vmatmul.bf16.gmra.mxu0 %v863
        %v4880 = vpop.f32.mrf.mxu0
        %v4881 = vadd.f32 %v4792, %v4880
        %v4882 = vpop.f32.mrf.mxu0
        %v4883 = vadd.f32 %v4794, %v4882
        %4884 = vmatmul.bf16.gmra.mxu0 %v871
        %v4885 = vpop.f32.mrf.mxu0
        %v4886 = vadd.f32 %v4797, %v4885
        %v4887 = vpop.f32.mrf.mxu0
        %v4888 = vadd.f32 %v4799, %v4887
        %4889 = vmatmul.bf16.gmra.mxu0 %v879
        %v4890 = vpop.f32.mrf.mxu0
        %v4891 = vadd.f32 %v4802, %v4890
        %v4892 = vpop.f32.mrf.mxu0
        %v4893 = vadd.f32 %v4804, %v4892
        %4894 = vmatmul.bf16.gmra.mxu0 %v887
        %v4895 = vpop.f32.mrf.mxu0
        %v4896 = vadd.f32 %v4807, %v4895
        %v4897 = vpop.f32.mrf.mxu0
        %v4898 = vadd.f32 %v4809, %v4897
        %4899 = vmatmul.bf16.gmra.mxu0 %v895
        %v4900 = vpop.f32.mrf.mxu0
        %v4901 = vadd.f32 %v4812, %v4900
        %v4902 = vpop.f32.mrf.mxu0
        %v4903 = vadd.f32 %v4814, %v4902
        %4904 = vmatmul.bf16.gmra.mxu0 %v903
        %v4905 = vpop.f32.mrf.mxu0
        %v4906 = vadd.f32 %v4817, %v4905
        %v4907 = vpop.f32.mrf.mxu0
        %v4908 = vadd.f32 %v4819, %v4907
        %4909 = vmatmul.bf16.gmra.mxu0 %v911
        %v4910 = vpop.f32.mrf.mxu0
        %v4911 = vadd.f32 %v4822, %v4910
        %v4912 = vpop.f32.mrf.mxu0
        %v4913 = vadd.f32 %v4824, %v4912
        %4914 = vmatmul.bf16.gmra.mxu0 %v919
        %v4915 = vpop.f32.mrf.mxu0
        %v4916 = vadd.f32 %v4827, %v4915
        %v4917 = vpop.f32.mrf.mxu0
        %v4918 = vadd.f32 %v4829, %v4917
        %4919 = vmatmul.bf16.gmra.mxu0 %v927
        %v4920 = vpop.f32.mrf.mxu0
        %v4921 = vadd.f32 %v4832, %v4920
        %v4922 = vpop.f32.mrf.mxu0
        %v4923 = vadd.f32 %v4834, %v4922
        %4924 = vmatmul.bf16.gmra.mxu0 %v935
        %v4925 = vpop.f32.mrf.mxu0
        %v4926 = vadd.f32 %v4837, %v4925
        %v4927 = vpop.f32.mrf.mxu0
        %v4928 = vadd.f32 %v4839, %v4927
        %4929 = vdwg.mxu0
        %4930 = vmatpush.bf16.msra.mxu0 %v2256
        %4931 = vmatpush.bf16.msra.mxu0 %v2254
        %4932 = vmatpush.bf16.msra.mxu0 %v2252
        %4933 = vmatpush.bf16.msra.mxu0 %v2250
        %4934 = vmatpush.bf16.msra.mxu0 %v2248
        %4935 = vmatpush.bf16.msra.mxu0 %v2246
        %4936 = vmatpush.bf16.msra.mxu0 %v2244
        %4937 = vmatpush.bf16.msra.mxu0 %v2242
        %4938 = vmatmul.bf16.gmra.mxu0 %v835
        %v4939 = vpop.f32.mrf.mxu0
        %v4940 = vadd.f32 %v4851, %v4939
        %v4941 = vpop.f32.mrf.mxu0
        %v4942 = vadd.f32 %v4853, %v4941
        %4943 = vmatmul.bf16.gmra.mxu0 %v827
        %v4944 = vpop.f32.mrf.mxu0
        %v4945 = vadd.f32 %v4856, %v4944
        %v4946 = vpop.f32.mrf.mxu0
        %v4947 = vadd.f32 %v4858, %v4946
        %4948 = vmatmul.bf16.gmra.mxu0 %v819
        %v4949 = vpop.f32.mrf.mxu0
        %v4950 = vadd.f32 %v4861, %v4949
        %v4951 = vpop.f32.mrf.mxu0
        %v4952 = vadd.f32 %v4863, %v4951
        %4953 = vmatmul.bf16.gmra.mxu0 %v843
        %v4954 = vpop.f32.mrf.mxu0
        %v4955 = vadd.f32 %v4866, %v4954
        %v4956 = vpop.f32.mrf.mxu0
        %v4957 = vadd.f32 %v4868, %v4956
        %4958 = vmatmul.bf16.gmra.mxu0 %v851
        %v4959 = vpop.f32.mrf.mxu0
        %v4960 = vadd.f32 %v4871, %v4959
        %v4961 = vpop.f32.mrf.mxu0
        %v4962 = vadd.f32 %v4873, %v4961
        %4963 = vmatmul.bf16.gmra.mxu0 %v859
        %v4964 = vpop.f32.mrf.mxu0
        %v4965 = vadd.f32 %v4876, %v4964
        %v4966 = vpop.f32.mrf.mxu0
        %v4967 = vadd.f32 %v4878, %v4966
        %4968 = vmatmul.bf16.gmra.mxu0 %v867
        %v4969 = vpop.f32.mrf.mxu0
        %v4970 = vadd.f32 %v4881, %v4969
        %v4971 = vpop.f32.mrf.mxu0
        %v4972 = vadd.f32 %v4883, %v4971
        %4973 = vmatmul.bf16.gmra.mxu0 %v875
        %v4974 = vpop.f32.mrf.mxu0
        %v4975 = vadd.f32 %v4886, %v4974
        %v4976 = vpop.f32.mrf.mxu0
        %v4977 = vadd.f32 %v4888, %v4976
        %4978 = vmatmul.bf16.gmra.mxu0 %v883
        %v4979 = vpop.f32.mrf.mxu0
        %v4980 = vadd.f32 %v4891, %v4979
        %v4981 = vpop.f32.mrf.mxu0
        %v4982 = vadd.f32 %v4893, %v4981
        %4983 = vmatmul.bf16.gmra.mxu0 %v891
        %v4984 = vpop.f32.mrf.mxu0
        %v4985 = vadd.f32 %v4896, %v4984
        %v4986 = vpop.f32.mrf.mxu0
        %v4987 = vadd.f32 %v4898, %v4986
        %4988 = vmatmul.bf16.gmra.mxu0 %v899
        %v4989 = vpop.f32.mrf.mxu0
        %v4990 = vadd.f32 %v4901, %v4989
        %v4991 = vpop.f32.mrf.mxu0
        %v4992 = vadd.f32 %v4903, %v4991
        %4993 = vmatmul.bf16.gmra.mxu0 %v907
        %v4994 = vpop.f32.mrf.mxu0
        %v4995 = vadd.f32 %v4906, %v4994
        %v4996 = vpop.f32.mrf.mxu0
        %v4997 = vadd.f32 %v4908, %v4996
        %4998 = vmatmul.bf16.gmra.mxu0 %v915
        %v4999 = vpop.f32.mrf.mxu0
        %v5000 = vadd.f32 %v4911, %v4999
        %v5001 = vpop.f32.mrf.mxu0
        %v5002 = vadd.f32 %v4913, %v5001
        %5003 = vmatmul.bf16.gmra.mxu0 %v923
        %v5004 = vpop.f32.mrf.mxu0
        %v5005 = vadd.f32 %v4916, %v5004
        %v5006 = vpop.f32.mrf.mxu0
        %v5007 = vadd.f32 %v4918, %v5006
        %5008 = vmatmul.bf16.gmra.mxu0 %v931
        %v5009 = vpop.f32.mrf.mxu0
        %v5010 = vadd.f32 %v4921, %v5009
        %v5011 = vpop.f32.mrf.mxu0
        %v5012 = vadd.f32 %v4923, %v5011
        %5013 = vmatmul.bf16.gmra.mxu0 %v939
        %v5014 = vpop.f32.mrf.mxu0
        %v5015 = vadd.f32 %v4926, %v5014
        %v5016 = vpop.f32.mrf.mxu0
        %v5017 = vadd.f32 %v4928, %v5016
        %5018 = vdwg.mxu0
        %5019 = vmatpush.bf16.msra.mxu0 %v2272
        %5020 = vmatpush.bf16.msra.mxu0 %v2270
        %5021 = vmatpush.bf16.msra.mxu0 %v2268
        %5022 = vmatpush.bf16.msra.mxu0 %v2266
        %5023 = vmatpush.bf16.msra.mxu0 %v2264
        %5024 = vmatpush.bf16.msra.mxu0 %v2262
        %5025 = vmatpush.bf16.msra.mxu0 %v2260
        %5026 = vmatpush.bf16.msra.mxu0 %v2258
        %5027 = vmatmul.bf16.gmra.mxu0 %v717
        %v5028 = vpop.f32.mrf.mxu0
        %v5029 = vadd.f32 %v4940, %v5028
        %v5030 = vpop.f32.mrf.mxu0
        %v5031 = vadd.f32 %v4942, %v5030
        %5032 = vmatmul.bf16.gmra.mxu0 %v715
        %v5033 = vpop.f32.mrf.mxu0
        %v5034 = vadd.f32 %v4945, %v5033
        %v5035 = vpop.f32.mrf.mxu0
        %v5036 = vadd.f32 %v4947, %v5035
        %5037 = vmatmul.bf16.gmra.mxu0 %v713
        %v5038 = vpop.f32.mrf.mxu0
        %v5039 = vadd.f32 %v4950, %v5038
        %v5040 = vpop.f32.mrf.mxu0
        %v5041 = vadd.f32 %v4952, %v5040
        %5042 = vmatmul.bf16.gmra.mxu0 %v719
        %v5043 = vpop.f32.mrf.mxu0
        %v5044 = vadd.f32 %v4955, %v5043
        %v5045 = vpop.f32.mrf.mxu0
        %v5046 = vadd.f32 %v4957, %v5045
        %5047 = vmatmul.bf16.gmra.mxu0 %v721
        %v5048 = vpop.f32.mrf.mxu0
        %v5049 = vadd.f32 %v4960, %v5048
        %v5050 = vpop.f32.mrf.mxu0
        %v5051 = vadd.f32 %v4962, %v5050
        %5052 = vmatmul.bf16.gmra.mxu0 %v723
        %v5053 = vpop.f32.mrf.mxu0
        %v5054 = vadd.f32 %v4965, %v5053
        %v5055 = vpop.f32.mrf.mxu0
        %v5056 = vadd.f32 %v4967, %v5055
        %5057 = vmatmul.bf16.gmra.mxu0 %v725
        %v5058 = vpop.f32.mrf.mxu0
        %v5059 = vadd.f32 %v4970, %v5058
        %v5060 = vpop.f32.mrf.mxu0
        %v5061 = vadd.f32 %v4972, %v5060
        %5062 = vmatmul.bf16.gmra.mxu0 %v727
        %v5063 = vpop.f32.mrf.mxu0
        %v5064 = vadd.f32 %v4975, %v5063
        %v5065 = vpop.f32.mrf.mxu0
        %v5066 = vadd.f32 %v4977, %v5065
        %5067 = vmatmul.bf16.gmra.mxu0 %v729
        %v5068 = vpop.f32.mrf.mxu0
        %v5069 = vadd.f32 %v4980, %v5068
        %v5070 = vpop.f32.mrf.mxu0
        %v5071 = vadd.f32 %v4982, %v5070
        %5072 = vmatmul.bf16.gmra.mxu0 %v731
        %v5073 = vpop.f32.mrf.mxu0
        %v5074 = vadd.f32 %v4985, %v5073
        %v5075 = vpop.f32.mrf.mxu0
        %v5076 = vadd.f32 %v4987, %v5075
        %5077 = vmatmul.bf16.gmra.mxu0 %v733
        %v5078 = vpop.f32.mrf.mxu0
        %v5079 = vadd.f32 %v4990, %v5078
        %v5080 = vpop.f32.mrf.mxu0
        %v5081 = vadd.f32 %v4992, %v5080
        %5082 = vmatmul.bf16.gmra.mxu0 %v735
        %v5083 = vpop.f32.mrf.mxu0
        %v5084 = vadd.f32 %v4995, %v5083
        %v5085 = vpop.f32.mrf.mxu0
        %v5086 = vadd.f32 %v4997, %v5085
        %5087 = vmatmul.bf16.gmra.mxu0 %v737
        %v5088 = vpop.f32.mrf.mxu0
        %v5089 = vadd.f32 %v5000, %v5088
        %v5090 = vpop.f32.mrf.mxu0
        %v5091 = vadd.f32 %v5002, %v5090
        %5092 = vmatmul.bf16.gmra.mxu0 %v739
        %v5093 = vpop.f32.mrf.mxu0
        %v5094 = vadd.f32 %v5005, %v5093
        %v5095 = vpop.f32.mrf.mxu0
        %v5096 = vadd.f32 %v5007, %v5095
        %5097 = vmatmul.bf16.gmra.mxu0 %v741
        %v5098 = vpop.f32.mrf.mxu0
        %v5099 = vadd.f32 %v5010, %v5098
        %v5100 = vpop.f32.mrf.mxu0
        %v5101 = vadd.f32 %v5012, %v5100
        %5102 = vmatmul.bf16.gmra.mxu0 %v743
        %v5103 = vpop.f32.mrf.mxu0
        %v5104 = vadd.f32 %v5015, %v5103
        %v5105 = vpop.f32.mrf.mxu0
        %v5106 = vadd.f32 %v5017, %v5105
        %5107 = vdwg.mxu0
        %5108 = vmatpush.bf16.msra.mxu0 %v2288
        %5109 = vmatpush.bf16.msra.mxu0 %v2286
        %5110 = vmatpush.bf16.msra.mxu0 %v2284
        %5111 = vmatpush.bf16.msra.mxu0 %v2282
        %5112 = vmatpush.bf16.msra.mxu0 %v2280
        %5113 = vmatpush.bf16.msra.mxu0 %v2278
        %5114 = vmatpush.bf16.msra.mxu0 %v2276
        %5115 = vmatpush.bf16.msra.mxu0 %v2274
        %5116 = vmatmul.bf16.gmra.mxu0 %v718
        %v5117 = vpop.f32.mrf.mxu0
        %v5118 = vadd.f32 %v5029, %v5117
        %v5119 = vpop.f32.mrf.mxu0
        %v5120 = vadd.f32 %v5031, %v5119
        %5121 = vmatmul.bf16.gmra.mxu0 %v716
        %v5122 = vpop.f32.mrf.mxu0
        %v5123 = vadd.f32 %v5034, %v5122
        %v5124 = vpop.f32.mrf.mxu0
        %v5125 = vadd.f32 %v5036, %v5124
        %5126 = vmatmul.bf16.gmra.mxu0 %v714
        %v5127 = vpop.f32.mrf.mxu0
        %v5128 = vadd.f32 %v5039, %v5127
        %v5129 = vpop.f32.mrf.mxu0
        %v5130 = vadd.f32 %v5041, %v5129
        %5131 = vmatmul.bf16.gmra.mxu0 %v720
        %v5132 = vpop.f32.mrf.mxu0
        %v5133 = vadd.f32 %v5044, %v5132
        %v5134 = vpop.f32.mrf.mxu0
        %v5135 = vadd.f32 %v5046, %v5134
        %5136 = vmatmul.bf16.gmra.mxu0 %v722
        %v5137 = vpop.f32.mrf.mxu0
        %v5138 = vadd.f32 %v5049, %v5137
        %v5139 = vpop.f32.mrf.mxu0
        %v5140 = vadd.f32 %v5051, %v5139
        %5141 = vmatmul.bf16.gmra.mxu0 %v724
        %v5142 = vpop.f32.mrf.mxu0
        %v5143 = vadd.f32 %v5054, %v5142
        %v5144 = vpop.f32.mrf.mxu0
        %v5145 = vadd.f32 %v5056, %v5144
        %5146 = vmatmul.bf16.gmra.mxu0 %v726
        %v5147 = vpop.f32.mrf.mxu0
        %v5148 = vadd.f32 %v5059, %v5147
        %v5149 = vpop.f32.mrf.mxu0
        %v5150 = vadd.f32 %v5061, %v5149
        %5151 = vmatmul.bf16.gmra.mxu0 %v728
        %v5152 = vpop.f32.mrf.mxu0
        %v5153 = vadd.f32 %v5064, %v5152
        %v5154 = vpop.f32.mrf.mxu0
        %v5155 = vadd.f32 %v5066, %v5154
        %5156 = vmatmul.bf16.gmra.mxu0 %v730
        %v5157 = vpop.f32.mrf.mxu0
        %v5158 = vadd.f32 %v5069, %v5157
        %v5159 = vpop.f32.mrf.mxu0
        %v5160 = vadd.f32 %v5071, %v5159
        %5161 = vmatmul.bf16.gmra.mxu0 %v732
        %v5162 = vpop.f32.mrf.mxu0
        %v5163 = vadd.f32 %v5074, %v5162
        %v5164 = vpop.f32.mrf.mxu0
        %v5165 = vadd.f32 %v5076, %v5164
        %5166 = vmatmul.bf16.gmra.mxu0 %v734
        %v5167 = vpop.f32.mrf.mxu0
        %v5168 = vadd.f32 %v5079, %v5167
        %v5169 = vpop.f32.mrf.mxu0
        %v5170 = vadd.f32 %v5081, %v5169
        %5171 = vmatmul.bf16.gmra.mxu0 %v736
        %v5172 = vpop.f32.mrf.mxu0
        %v5173 = vadd.f32 %v5084, %v5172
        %v5174 = vpop.f32.mrf.mxu0
        %v5175 = vadd.f32 %v5086, %v5174
        %5176 = vmatmul.bf16.gmra.mxu0 %v738
        %v5177 = vpop.f32.mrf.mxu0
        %v5178 = vadd.f32 %v5089, %v5177
        %v5179 = vpop.f32.mrf.mxu0
        %v5180 = vadd.f32 %v5091, %v5179
        %5181 = vmatmul.bf16.gmra.mxu0 %v740
        %v5182 = vpop.f32.mrf.mxu0
        %v5183 = vadd.f32 %v5094, %v5182
        %v5184 = vpop.f32.mrf.mxu0
        %v5185 = vadd.f32 %v5096, %v5184
        %5186 = vmatmul.bf16.gmra.mxu0 %v742
        %v5187 = vpop.f32.mrf.mxu0
        %v5188 = vadd.f32 %v5099, %v5187
        %v5189 = vpop.f32.mrf.mxu0
        %v5190 = vadd.f32 %v5101, %v5189
        %5191 = vmatmul.bf16.gmra.mxu0 %v744
        %v5192 = vpop.f32.mrf.mxu0
        %v5193 = vadd.f32 %v5104, %v5192
        %v5194 = vpop.f32.mrf.mxu0
        %v5195 = vadd.f32 %v5106, %v5194
        %5196 = vdwg.mxu0
        %5197 = vmatpush.bf16.msra.mxu0 %v2304
        %5198 = vmatpush.bf16.msra.mxu0 %v2302
        %5199 = vmatpush.bf16.msra.mxu0 %v2300
        %5200 = vmatpush.bf16.msra.mxu0 %v2298
        %5201 = vmatpush.bf16.msra.mxu0 %v2296
        %5202 = vmatpush.bf16.msra.mxu0 %v2294
        %5203 = vmatpush.bf16.msra.mxu0 %v2292
        %5204 = vmatpush.bf16.msra.mxu0 %v2290
        %5205 = vmatmul.bf16.gmra.mxu0 %v1205
        %v5206 = vpop.f32.mrf.mxu0
        %v5207 = vadd.f32 %v5118, %v5206
        %v5208 = vpop.f32.mrf.mxu0
        %v5209 = vadd.f32 %v5120, %v5208
        %5210 = vmatmul.bf16.gmra.mxu0 %v1203
        %v5211 = vpop.f32.mrf.mxu0
        %v5212 = vadd.f32 %v5123, %v5211
        %v5213 = vpop.f32.mrf.mxu0
        %v5214 = vadd.f32 %v5125, %v5213
        %5215 = vmatmul.bf16.gmra.mxu0 %v1201
        %v5216 = vpop.f32.mrf.mxu0
        %v5217 = vadd.f32 %v5128, %v5216
        %v5218 = vpop.f32.mrf.mxu0
        %v5219 = vadd.f32 %v5130, %v5218
        %5220 = vmatmul.bf16.gmra.mxu0 %v1207
        %v5221 = vpop.f32.mrf.mxu0
        %v5222 = vadd.f32 %v5133, %v5221
        %v5223 = vpop.f32.mrf.mxu0
        %v5224 = vadd.f32 %v5135, %v5223
        %5225 = vmatmul.bf16.gmra.mxu0 %v1209
        %v5226 = vpop.f32.mrf.mxu0
        %v5227 = vadd.f32 %v5138, %v5226
        %v5228 = vpop.f32.mrf.mxu0
        %v5229 = vadd.f32 %v5140, %v5228
        %5230 = vmatmul.bf16.gmra.mxu0 %v1211
        %v5231 = vpop.f32.mrf.mxu0
        %v5232 = vadd.f32 %v5143, %v5231
        %v5233 = vpop.f32.mrf.mxu0
        %v5234 = vadd.f32 %v5145, %v5233
        %5235 = vmatmul.bf16.gmra.mxu0 %v1213
        %v5236 = vpop.f32.mrf.mxu0
        %v5237 = vadd.f32 %v5148, %v5236
        %v5238 = vpop.f32.mrf.mxu0
        %v5239 = vadd.f32 %v5150, %v5238
        %5240 = vmatmul.bf16.gmra.mxu0 %v1215
        %v5241 = vpop.f32.mrf.mxu0
        %v5242 = vadd.f32 %v5153, %v5241
        %v5243 = vpop.f32.mrf.mxu0
        %v5244 = vadd.f32 %v5155, %v5243
        %5245 = vmatmul.bf16.gmra.mxu0 %v1217
        %v5246 = vpop.f32.mrf.mxu0
        %v5247 = vadd.f32 %v5158, %v5246
        %v5248 = vpop.f32.mrf.mxu0
        %v5249 = vadd.f32 %v5160, %v5248
        %5250 = vmatmul.bf16.gmra.mxu0 %v1219
        %v5251 = vpop.f32.mrf.mxu0
        %v5252 = vadd.f32 %v5163, %v5251
        %v5253 = vpop.f32.mrf.mxu0
        %v5254 = vadd.f32 %v5165, %v5253
        %5255 = vmatmul.bf16.gmra.mxu0 %v1221
        %v5256 = vpop.f32.mrf.mxu0
        %v5257 = vadd.f32 %v5168, %v5256
        %v5258 = vpop.f32.mrf.mxu0
        %v5259 = vadd.f32 %v5170, %v5258
        %5260 = vmatmul.bf16.gmra.mxu0 %v1223
        %v5261 = vpop.f32.mrf.mxu0
        %v5262 = vadd.f32 %v5173, %v5261
        %v5263 = vpop.f32.mrf.mxu0
        %v5264 = vadd.f32 %v5175, %v5263
        %5265 = vmatmul.bf16.gmra.mxu0 %v1225
        %v5266 = vpop.f32.mrf.mxu0
        %v5267 = vadd.f32 %v5178, %v5266
        %v5268 = vpop.f32.mrf.mxu0
        %v5269 = vadd.f32 %v5180, %v5268
        %5270 = vmatmul.bf16.gmra.mxu0 %v1227
        %v5271 = vpop.f32.mrf.mxu0
        %v5272 = vadd.f32 %v5183, %v5271
        %v5273 = vpop.f32.mrf.mxu0
        %v5274 = vadd.f32 %v5185, %v5273
        %5275 = vmatmul.bf16.gmra.mxu0 %v1229
        %v5276 = vpop.f32.mrf.mxu0
        %v5277 = vadd.f32 %v5188, %v5276
        %v5278 = vpop.f32.mrf.mxu0
        %v5279 = vadd.f32 %v5190, %v5278
        %5280 = vmatmul.bf16.gmra.mxu0 %v1231
        %v5281 = vpop.f32.mrf.mxu0
        %v5282 = vadd.f32 %v5193, %v5281
        %v5283 = vpop.f32.mrf.mxu0
        %v5284 = vadd.f32 %v5195, %v5283
        %5285 = vdwg.mxu0
        %5286 = vmatpush.bf16.msra.mxu0 %v2320
        %5287 = vmatpush.bf16.msra.mxu0 %v2318
        %5288 = vmatpush.bf16.msra.mxu0 %v2316
        %5289 = vmatpush.bf16.msra.mxu0 %v2314
        %5290 = vmatpush.bf16.msra.mxu0 %v2312
        %5291 = vmatpush.bf16.msra.mxu0 %v2310
        %5292 = vmatpush.bf16.msra.mxu0 %v2308
        %5293 = vmatpush.bf16.msra.mxu0 %v2306
        %5294 = vmatmul.bf16.gmra.mxu0 %v1206
        %v5295 = vpop.f32.mrf.mxu0
        %v5296 = vadd.f32 %v5207, %v5295
        %v5297 = vpop.f32.mrf.mxu0
        %v5298 = vadd.f32 %v5209, %v5297
        %5299 = vmatmul.bf16.gmra.mxu0 %v1204
        %v5300 = vpop.f32.mrf.mxu0
        %v5301 = vadd.f32 %v5212, %v5300
        %v5302 = vpop.f32.mrf.mxu0
        %v5303 = vadd.f32 %v5214, %v5302
        %5304 = vmatmul.bf16.gmra.mxu0 %v1202
        %v5305 = vpop.f32.mrf.mxu0
        %v5306 = vadd.f32 %v5217, %v5305
        %v5307 = vpop.f32.mrf.mxu0
        %v5308 = vadd.f32 %v5219, %v5307
        %5309 = vmatmul.bf16.gmra.mxu0 %v1208
        %v5310 = vpop.f32.mrf.mxu0
        %v5311 = vadd.f32 %v5222, %v5310
        %v5312 = vpop.f32.mrf.mxu0
        %v5313 = vadd.f32 %v5224, %v5312
        %5314 = vmatmul.bf16.gmra.mxu0 %v1210
        %v5315 = vpop.f32.mrf.mxu0
        %v5316 = vadd.f32 %v5227, %v5315
        %v5317 = vpop.f32.mrf.mxu0
        %v5318 = vadd.f32 %v5229, %v5317
        %5319 = vmatmul.bf16.gmra.mxu0 %v1212
        %v5320 = vpop.f32.mrf.mxu0
        %v5321 = vadd.f32 %v5232, %v5320
        %v5322 = vpop.f32.mrf.mxu0
        %v5323 = vadd.f32 %v5234, %v5322
        %5324 = vmatmul.bf16.gmra.mxu0 %v1214
        %v5325 = vpop.f32.mrf.mxu0
        %v5326 = vadd.f32 %v5237, %v5325
        %v5327 = vpop.f32.mrf.mxu0
        %v5328 = vadd.f32 %v5239, %v5327
        %5329 = vmatmul.bf16.gmra.mxu0 %v1216
        %v5330 = vpop.f32.mrf.mxu0
        %v5331 = vadd.f32 %v5242, %v5330
        %v5332 = vpop.f32.mrf.mxu0
        %v5333 = vadd.f32 %v5244, %v5332
        %5334 = vmatmul.bf16.gmra.mxu0 %v1218
        %v5335 = vpop.f32.mrf.mxu0
        %v5336 = vadd.f32 %v5247, %v5335
        %v5337 = vpop.f32.mrf.mxu0
        %v5338 = vadd.f32 %v5249, %v5337
        %5339 = vmatmul.bf16.gmra.mxu0 %v1220
        %v5340 = vpop.f32.mrf.mxu0
        %v5341 = vadd.f32 %v5252, %v5340
        %v5342 = vpop.f32.mrf.mxu0
        %v5343 = vadd.f32 %v5254, %v5342
        %5344 = vmatmul.bf16.gmra.mxu0 %v1222
        %v5345 = vpop.f32.mrf.mxu0
        %v5346 = vadd.f32 %v5257, %v5345
        %v5347 = vpop.f32.mrf.mxu0
        %v5348 = vadd.f32 %v5259, %v5347
        %5349 = vmatmul.bf16.gmra.mxu0 %v1224
        %v5350 = vpop.f32.mrf.mxu0
        %v5351 = vadd.f32 %v5262, %v5350
        %v5352 = vpop.f32.mrf.mxu0
        %v5353 = vadd.f32 %v5264, %v5352
        %5354 = vmatmul.bf16.gmra.mxu0 %v1226
        %v5355 = vpop.f32.mrf.mxu0
        %v5356 = vadd.f32 %v5267, %v5355
        %v5357 = vpop.f32.mrf.mxu0
        %v5358 = vadd.f32 %v5269, %v5357
        %5359 = vmatmul.bf16.gmra.mxu0 %v1228
        %v5360 = vpop.f32.mrf.mxu0
        %v5361 = vadd.f32 %v5272, %v5360
        %v5362 = vpop.f32.mrf.mxu0
        %v5363 = vadd.f32 %v5274, %v5362
        %5364 = vmatmul.bf16.gmra.mxu0 %v1230
        %v5365 = vpop.f32.mrf.mxu0
        %v5366 = vadd.f32 %v5277, %v5365
        %v5367 = vpop.f32.mrf.mxu0
        %v5368 = vadd.f32 %v5279, %v5367
        %5369 = vmatmul.bf16.gmra.mxu0 %v1232
        %v5370 = vpop.f32.mrf.mxu0
        %v5371 = vadd.f32 %v5282, %v5370
        %v5372 = vpop.f32.mrf.mxu0
        %v5373 = vadd.f32 %v5284, %v5372
        %5374 = vdwg.mxu0
        %5375 = vmatpush.bf16.msra.mxu0 %v2336
        %5376 = vmatpush.bf16.msra.mxu0 %v2334
        %5377 = vmatpush.bf16.msra.mxu0 %v2332
        %5378 = vmatpush.bf16.msra.mxu0 %v2330
        %5379 = vmatpush.bf16.msra.mxu0 %v2328
        %5380 = vmatpush.bf16.msra.mxu0 %v2326
        %5381 = vmatpush.bf16.msra.mxu0 %v2324
        %5382 = vmatpush.bf16.msra.mxu0 %v2322
        %5383 = vmatmul.bf16.gmra.mxu0 %v815
        %v5384 = vpop.f32.mrf.mxu0
        %v5385 = vadd.f32 %v5296, %v5384
        %v5386 = vpop.f32.mrf.mxu0
        %v5387 = vadd.f32 %v5298, %v5386
        %5388 = vmatmul.bf16.gmra.mxu0 %v839
        %v5389 = vpop.f32.mrf.mxu0
        %v5390 = vadd.f32 %v5301, %v5389
        %v5391 = vpop.f32.mrf.mxu0
        %v5392 = vadd.f32 %v5303, %v5391
        %5393 = vmatmul.bf16.gmra.mxu0 %v847
        %v5394 = vpop.f32.mrf.mxu0
        %v5395 = vadd.f32 %v5306, %v5394
        %v5396 = vpop.f32.mrf.mxu0
        %v5397 = vadd.f32 %v5308, %v5396
        %5398 = vmatmul.bf16.gmra.mxu0 %v855
        %v5399 = vpop.f32.mrf.mxu0
        %v5400 = vadd.f32 %v5311, %v5399
        %v5401 = vpop.f32.mrf.mxu0
        %v5402 = vadd.f32 %v5313, %v5401
        %5403 = vmatmul.bf16.gmra.mxu0 %v863
        %v5404 = vpop.f32.mrf.mxu0
        %v5405 = vadd.f32 %v5316, %v5404
        %v5406 = vpop.f32.mrf.mxu0
        %v5407 = vadd.f32 %v5318, %v5406
        %5408 = vmatmul.bf16.gmra.mxu0 %v871
        %v5409 = vpop.f32.mrf.mxu0
        %v5410 = vadd.f32 %v5321, %v5409
        %v5411 = vpop.f32.mrf.mxu0
        %v5412 = vadd.f32 %v5323, %v5411
        %5413 = vmatmul.bf16.gmra.mxu0 %v879
        %v5414 = vpop.f32.mrf.mxu0
        %v5415 = vadd.f32 %v5326, %v5414
        %v5416 = vpop.f32.mrf.mxu0
        %v5417 = vadd.f32 %v5328, %v5416
        %5418 = vmatmul.bf16.gmra.mxu0 %v887
        %v5419 = vpop.f32.mrf.mxu0
        %v5420 = vadd.f32 %v5331, %v5419
        %v5421 = vpop.f32.mrf.mxu0
        %v5422 = vadd.f32 %v5333, %v5421
        %5423 = vmatmul.bf16.gmra.mxu0 %v895
        %v5424 = vpop.f32.mrf.mxu0
        %v5425 = vadd.f32 %v5336, %v5424
        %v5426 = vpop.f32.mrf.mxu0
        %v5427 = vadd.f32 %v5338, %v5426
        %5428 = vmatmul.bf16.gmra.mxu0 %v903
        %v5429 = vpop.f32.mrf.mxu0
        %v5430 = vadd.f32 %v5341, %v5429
        %v5431 = vpop.f32.mrf.mxu0
        %v5432 = vadd.f32 %v5343, %v5431
        %5433 = vmatmul.bf16.gmra.mxu0 %v911
        %v5434 = vpop.f32.mrf.mxu0
        %v5435 = vadd.f32 %v5346, %v5434
        %v5436 = vpop.f32.mrf.mxu0
        %v5437 = vadd.f32 %v5348, %v5436
        %5438 = vmatmul.bf16.gmra.mxu0 %v919
        %v5439 = vpop.f32.mrf.mxu0
        %v5440 = vadd.f32 %v5351, %v5439
        %v5441 = vpop.f32.mrf.mxu0
        %v5442 = vadd.f32 %v5353, %v5441
        %5443 = vmatmul.bf16.gmra.mxu0 %v927
        %v5444 = vpop.f32.mrf.mxu0
        %v5445 = vadd.f32 %v5356, %v5444
        %v5446 = vpop.f32.mrf.mxu0
        %v5447 = vadd.f32 %v5358, %v5446
        %5448 = vmatmul.bf16.gmra.mxu0 %v935
        %v5449 = vpop.f32.mrf.mxu0
        %v5450 = vadd.f32 %v5361, %v5449
        %v5451 = vpop.f32.mrf.mxu0
        %v5452 = vadd.f32 %v5363, %v5451
        %5453 = vmatmul.bf16.gmra.mxu0 %v927
        %v5454 = vpop.f32.mrf.mxu0
        %v5455 = vadd.f32 %v5366, %v5454
        %v5456 = vpop.f32.mrf.mxu0
        %v5457 = vadd.f32 %v5368, %v5456
        %5458 = vmatmul.bf16.gmra.mxu0 %v919
        %v5459 = vpop.f32.mrf.mxu0
        %v5460 = vadd.f32 %v5371, %v5459
        %v5461 = vpop.f32.mrf.mxu0
        %v5462 = vadd.f32 %v5373, %v5461
        %5463 = vdwg.mxu0
        %5464 = vmatpush.bf16.msra.mxu0 %v2352
        %5465 = vmatpush.bf16.msra.mxu0 %v2350
        %5466 = vmatpush.bf16.msra.mxu0 %v2348
        %5467 = vmatpush.bf16.msra.mxu0 %v2346
        %5468 = vmatpush.bf16.msra.mxu0 %v2344
        %5469 = vmatpush.bf16.msra.mxu0 %v2342
        %5470 = vmatpush.bf16.msra.mxu0 %v2340
        %5471 = vmatpush.bf16.msra.mxu0 %v2338
        %5472 = vmatmul.bf16.gmra.mxu0 %v819
        %v5473 = vpop.f32.mrf.mxu0
        %v5474 = vadd.f32 %v5385, %v5473
        %v5475 = vpop.f32.mrf.mxu0
        %v5476 = vadd.f32 %v5387, %v5475
        %5477 = vmatmul.bf16.gmra.mxu0 %v843
        %v5478 = vpop.f32.mrf.mxu0
        %v5479 = vadd.f32 %v5390, %v5478
        %v5480 = vpop.f32.mrf.mxu0
        %v5481 = vadd.f32 %v5392, %v5480
        %5482 = vmatmul.bf16.gmra.mxu0 %v851
        %v5483 = vpop.f32.mrf.mxu0
        %v5484 = vadd.f32 %v5395, %v5483
        %v5485 = vpop.f32.mrf.mxu0
        %v5486 = vadd.f32 %v5397, %v5485
        %5487 = vmatmul.bf16.gmra.mxu0 %v859
        %v5488 = vpop.f32.mrf.mxu0
        %v5489 = vadd.f32 %v5400, %v5488
        %v5490 = vpop.f32.mrf.mxu0
        %v5491 = vadd.f32 %v5402, %v5490
        %5492 = vmatmul.bf16.gmra.mxu0 %v867
        %v5493 = vpop.f32.mrf.mxu0
        %v5494 = vadd.f32 %v5405, %v5493
        %v5495 = vpop.f32.mrf.mxu0
        %v5496 = vadd.f32 %v5407, %v5495
        %5497 = vmatmul.bf16.gmra.mxu0 %v875
        %v5498 = vpop.f32.mrf.mxu0
        %v5499 = vadd.f32 %v5410, %v5498
        %v5500 = vpop.f32.mrf.mxu0
        %v5501 = vadd.f32 %v5412, %v5500
        %5502 = vmatmul.bf16.gmra.mxu0 %v883
        %v5503 = vpop.f32.mrf.mxu0
        %v5504 = vadd.f32 %v5415, %v5503
        %v5505 = vpop.f32.mrf.mxu0
        %v5506 = vadd.f32 %v5417, %v5505
        %5507 = vmatmul.bf16.gmra.mxu0 %v891
        %v5508 = vpop.f32.mrf.mxu0
        %v5509 = vadd.f32 %v5420, %v5508
        %v5510 = vpop.f32.mrf.mxu0
        %v5511 = vadd.f32 %v5422, %v5510
        %5512 = vmatmul.bf16.gmra.mxu0 %v899
        %v5513 = vpop.f32.mrf.mxu0
        %v5514 = vadd.f32 %v5425, %v5513
        %v5515 = vpop.f32.mrf.mxu0
        %v5516 = vadd.f32 %v5427, %v5515
        %5517 = vmatmul.bf16.gmra.mxu0 %v907
        %v5518 = vpop.f32.mrf.mxu0
        %v5519 = vadd.f32 %v5430, %v5518
        %v5520 = vpop.f32.mrf.mxu0
        %v5521 = vadd.f32 %v5432, %v5520
        %5522 = vmatmul.bf16.gmra.mxu0 %v915
        %v5523 = vpop.f32.mrf.mxu0
        %v5524 = vadd.f32 %v5435, %v5523
        %v5525 = vpop.f32.mrf.mxu0
        %v5526 = vadd.f32 %v5437, %v5525
        %5527 = vmatmul.bf16.gmra.mxu0 %v923
        %v5528 = vpop.f32.mrf.mxu0
        %v5529 = vadd.f32 %v5440, %v5528
        %v5530 = vpop.f32.mrf.mxu0
        %v5531 = vadd.f32 %v5442, %v5530
        %5532 = vmatmul.bf16.gmra.mxu0 %v931
        %v5533 = vpop.f32.mrf.mxu0
        %v5534 = vadd.f32 %v5445, %v5533
        %v5535 = vpop.f32.mrf.mxu0
        %v5536 = vadd.f32 %v5447, %v5535
        %5537 = vmatmul.bf16.gmra.mxu0 %v939
        %v5538 = vpop.f32.mrf.mxu0
        %v5539 = vadd.f32 %v5450, %v5538
        %v5540 = vpop.f32.mrf.mxu0
        %v5541 = vadd.f32 %v5452, %v5540
        %5542 = vmatmul.bf16.gmra.mxu0 %v931
        %v5543 = vpop.f32.mrf.mxu0
        %v5544 = vadd.f32 %v5455, %v5543
        %v5545 = vpop.f32.mrf.mxu0
        %v5546 = vadd.f32 %v5457, %v5545
        %5547 = vmatmul.bf16.gmra.mxu0 %v923
        %v5548 = vpop.f32.mrf.mxu0
        %v5549 = vadd.f32 %v5460, %v5548
        %v5550 = vpop.f32.mrf.mxu0
        %v5551 = vadd.f32 %v5462, %v5550
        %5552 = vdwg.mxu0
        %5553 = vmatpush.bf16.msra.mxu0 %v2368
        %5554 = vmatpush.bf16.msra.mxu0 %v2366
        %5555 = vmatpush.bf16.msra.mxu0 %v2364
        %5556 = vmatpush.bf16.msra.mxu0 %v2362
        %5557 = vmatpush.bf16.msra.mxu0 %v2360
        %5558 = vmatpush.bf16.msra.mxu0 %v2358
        %5559 = vmatpush.bf16.msra.mxu0 %v2356
        %5560 = vmatpush.bf16.msra.mxu0 %v2354
        %5561 = vmatmul.bf16.gmra.mxu0 %v713
        %v5562 = vpop.f32.mrf.mxu0
        %v5563 = vadd.f32 %v5474, %v5562
        %v5564 = vpop.f32.mrf.mxu0
        %v5565 = vadd.f32 %v5476, %v5564
        %5566 = vmatmul.bf16.gmra.mxu0 %v719
        %v5567 = vpop.f32.mrf.mxu0
        %v5568 = vadd.f32 %v5479, %v5567
        %v5569 = vpop.f32.mrf.mxu0
        %v5570 = vadd.f32 %v5481, %v5569
        %5571 = vmatmul.bf16.gmra.mxu0 %v721
        %v5572 = vpop.f32.mrf.mxu0
        %v5573 = vadd.f32 %v5484, %v5572
        %v5574 = vpop.f32.mrf.mxu0
        %v5575 = vadd.f32 %v5486, %v5574
        %5576 = vmatmul.bf16.gmra.mxu0 %v723
        %v5577 = vpop.f32.mrf.mxu0
        %v5578 = vadd.f32 %v5489, %v5577
        %v5579 = vpop.f32.mrf.mxu0
        %v5580 = vadd.f32 %v5491, %v5579
        %5581 = vmatmul.bf16.gmra.mxu0 %v725
        %v5582 = vpop.f32.mrf.mxu0
        %v5583 = vadd.f32 %v5494, %v5582
        %v5584 = vpop.f32.mrf.mxu0
        %v5585 = vadd.f32 %v5496, %v5584
        %5586 = vmatmul.bf16.gmra.mxu0 %v727
        %v5587 = vpop.f32.mrf.mxu0
        %v5588 = vadd.f32 %v5499, %v5587
        %v5589 = vpop.f32.mrf.mxu0
        %v5590 = vadd.f32 %v5501, %v5589
        %5591 = vmatmul.bf16.gmra.mxu0 %v729
        %v5592 = vpop.f32.mrf.mxu0
        %v5593 = vadd.f32 %v5504, %v5592
        %v5594 = vpop.f32.mrf.mxu0
        %v5595 = vadd.f32 %v5506, %v5594
        %5596 = vmatmul.bf16.gmra.mxu0 %v731
        %v5597 = vpop.f32.mrf.mxu0
        %v5598 = vadd.f32 %v5509, %v5597
        %v5599 = vpop.f32.mrf.mxu0
        %v5600 = vadd.f32 %v5511, %v5599
        %5601 = vmatmul.bf16.gmra.mxu0 %v733
        %v5602 = vpop.f32.mrf.mxu0
        %v5603 = vadd.f32 %v5514, %v5602
        %v5604 = vpop.f32.mrf.mxu0
        %v5605 = vadd.f32 %v5516, %v5604
        %5606 = vmatmul.bf16.gmra.mxu0 %v735
        %v5607 = vpop.f32.mrf.mxu0
        %v5608 = vadd.f32 %v5519, %v5607
        %v5609 = vpop.f32.mrf.mxu0
        %v5610 = vadd.f32 %v5521, %v5609
        %5611 = vmatmul.bf16.gmra.mxu0 %v737
        %v5612 = vpop.f32.mrf.mxu0
        %v5613 = vadd.f32 %v5524, %v5612
        %v5614 = vpop.f32.mrf.mxu0
        %v5615 = vadd.f32 %v5526, %v5614
        %5616 = vmatmul.bf16.gmra.mxu0 %v739
        %v5617 = vpop.f32.mrf.mxu0
        %v5618 = vadd.f32 %v5529, %v5617
        %v5619 = vpop.f32.mrf.mxu0
        %v5620 = vadd.f32 %v5531, %v5619
        %5621 = vmatmul.bf16.gmra.mxu0 %v741
        %v5622 = vpop.f32.mrf.mxu0
        %v5623 = vadd.f32 %v5534, %v5622
        %v5624 = vpop.f32.mrf.mxu0
        %v5625 = vadd.f32 %v5536, %v5624
        %5626 = vmatmul.bf16.gmra.mxu0 %v743
        %v5627 = vpop.f32.mrf.mxu0
        %v5628 = vadd.f32 %v5539, %v5627
        %v5629 = vpop.f32.mrf.mxu0
        %v5630 = vadd.f32 %v5541, %v5629
        %5631 = vmatmul.bf16.gmra.mxu0 %v741
        %v5632 = vpop.f32.mrf.mxu0
        %v5633 = vadd.f32 %v5544, %v5632
        %v5634 = vpop.f32.mrf.mxu0
        %v5635 = vadd.f32 %v5546, %v5634
        %5636 = vmatmul.bf16.gmra.mxu0 %v739
        %v5637 = vpop.f32.mrf.mxu0
        %v5638 = vadd.f32 %v5549, %v5637
        %v5639 = vpop.f32.mrf.mxu0
        %v5640 = vadd.f32 %v5551, %v5639
        %5641 = vdwg.mxu0
        %5642 = vmatpush.bf16.msra.mxu0 %v2384
        %5643 = vmatpush.bf16.msra.mxu0 %v2382
        %5644 = vmatpush.bf16.msra.mxu0 %v2380
        %5645 = vmatpush.bf16.msra.mxu0 %v2378
        %5646 = vmatpush.bf16.msra.mxu0 %v2376
        %5647 = vmatpush.bf16.msra.mxu0 %v2374
        %5648 = vmatpush.bf16.msra.mxu0 %v2372
        %5649 = vmatpush.bf16.msra.mxu0 %v2370
        %5650 = vmatmul.bf16.gmra.mxu0 %v714
        %v5651 = vpop.f32.mrf.mxu0
        %v5652 = vadd.f32 %v5563, %v5651
        %v5653 = vpop.f32.mrf.mxu0
        %v5654 = vadd.f32 %v5565, %v5653
        %5655 = vmatmul.bf16.gmra.mxu0 %v720
        %v5656 = vpop.f32.mrf.mxu0
        %v5657 = vadd.f32 %v5568, %v5656
        %v5658 = vpop.f32.mrf.mxu0
        %v5659 = vadd.f32 %v5570, %v5658
        %5660 = vmatmul.bf16.gmra.mxu0 %v722
        %v5661 = vpop.f32.mrf.mxu0
        %v5662 = vadd.f32 %v5573, %v5661
        %v5663 = vpop.f32.mrf.mxu0
        %v5664 = vadd.f32 %v5575, %v5663
        %5665 = vmatmul.bf16.gmra.mxu0 %v724
        %v5666 = vpop.f32.mrf.mxu0
        %v5667 = vadd.f32 %v5578, %v5666
        %v5668 = vpop.f32.mrf.mxu0
        %v5669 = vadd.f32 %v5580, %v5668
        %5670 = vmatmul.bf16.gmra.mxu0 %v726
        %v5671 = vpop.f32.mrf.mxu0
        %v5672 = vadd.f32 %v5583, %v5671
        %v5673 = vpop.f32.mrf.mxu0
        %v5674 = vadd.f32 %v5585, %v5673
        %5675 = vmatmul.bf16.gmra.mxu0 %v728
        %v5676 = vpop.f32.mrf.mxu0
        %v5677 = vadd.f32 %v5588, %v5676
        %v5678 = vpop.f32.mrf.mxu0
        %v5679 = vadd.f32 %v5590, %v5678
        %5680 = vmatmul.bf16.gmra.mxu0 %v730
        %v5681 = vpop.f32.mrf.mxu0
        %v5682 = vadd.f32 %v5593, %v5681
        %v5683 = vpop.f32.mrf.mxu0
        %v5684 = vadd.f32 %v5595, %v5683
        %5685 = vmatmul.bf16.gmra.mxu0 %v732
        %v5686 = vpop.f32.mrf.mxu0
        %v5687 = vadd.f32 %v5598, %v5686
        %v5688 = vpop.f32.mrf.mxu0
        %v5689 = vadd.f32 %v5600, %v5688
        %5690 = vmatmul.bf16.gmra.mxu0 %v734
        %v5691 = vpop.f32.mrf.mxu0
        %v5692 = vadd.f32 %v5603, %v5691
        %v5693 = vpop.f32.mrf.mxu0
        %v5694 = vadd.f32 %v5605, %v5693
        %5695 = vmatmul.bf16.gmra.mxu0 %v736
        %v5696 = vpop.f32.mrf.mxu0
        %v5697 = vadd.f32 %v5608, %v5696
        %v5698 = vpop.f32.mrf.mxu0
        %v5699 = vadd.f32 %v5610, %v5698
        %5700 = vmatmul.bf16.gmra.mxu0 %v738
        %v5701 = vpop.f32.mrf.mxu0
        %v5702 = vadd.f32 %v5613, %v5701
        %v5703 = vpop.f32.mrf.mxu0
        %v5704 = vadd.f32 %v5615, %v5703
        %5705 = vmatmul.bf16.gmra.mxu0 %v740
        %v5706 = vpop.f32.mrf.mxu0
        %v5707 = vadd.f32 %v5618, %v5706
        %v5708 = vpop.f32.mrf.mxu0
        %v5709 = vadd.f32 %v5620, %v5708
        %5710 = vmatmul.bf16.gmra.mxu0 %v742
        %v5711 = vpop.f32.mrf.mxu0
        %v5712 = vadd.f32 %v5623, %v5711
        %v5713 = vpop.f32.mrf.mxu0
        %v5714 = vadd.f32 %v5625, %v5713
        %5715 = vmatmul.bf16.gmra.mxu0 %v744
        %v5716 = vpop.f32.mrf.mxu0
        %v5717 = vadd.f32 %v5628, %v5716
        %v5718 = vpop.f32.mrf.mxu0
        %v5719 = vadd.f32 %v5630, %v5718
        %5720 = vmatmul.bf16.gmra.mxu0 %v742
        %v5721 = vpop.f32.mrf.mxu0
        %v5722 = vadd.f32 %v5633, %v5721
        %v5723 = vpop.f32.mrf.mxu0
        %v5724 = vadd.f32 %v5635, %v5723
        %5725 = vmatmul.bf16.gmra.mxu0 %v740
        %v5726 = vpop.f32.mrf.mxu0
        %v5727 = vadd.f32 %v5638, %v5726
        %v5728 = vpop.f32.mrf.mxu0
        %v5729 = vadd.f32 %v5640, %v5728
        %5730 = vdwg.mxu0
        %5731 = vmatpush.bf16.msra.mxu0 %v2400
        %5732 = vmatpush.bf16.msra.mxu0 %v2398
        %5733 = vmatpush.bf16.msra.mxu0 %v2396
        %5734 = vmatpush.bf16.msra.mxu0 %v2394
        %5735 = vmatpush.bf16.msra.mxu0 %v2392
        %5736 = vmatpush.bf16.msra.mxu0 %v2390
        %5737 = vmatpush.bf16.msra.mxu0 %v2388
        %5738 = vmatpush.bf16.msra.mxu0 %v2386
        %5739 = vmatmul.bf16.gmra.mxu0 %v1201
        %v5740 = vpop.f32.mrf.mxu0
        %v5741 = vadd.f32 %v5652, %v5740
        %v5742 = vpop.f32.mrf.mxu0
        %v5743 = vadd.f32 %v5654, %v5742
        %5744 = vmatmul.bf16.gmra.mxu0 %v1207
        %v5745 = vpop.f32.mrf.mxu0
        %v5746 = vadd.f32 %v5657, %v5745
        %v5747 = vpop.f32.mrf.mxu0
        %v5748 = vadd.f32 %v5659, %v5747
        %5749 = vmatmul.bf16.gmra.mxu0 %v1209
        %v5750 = vpop.f32.mrf.mxu0
        %v5751 = vadd.f32 %v5662, %v5750
        %v5752 = vpop.f32.mrf.mxu0
        %v5753 = vadd.f32 %v5664, %v5752
        %5754 = vmatmul.bf16.gmra.mxu0 %v1211
        %v5755 = vpop.f32.mrf.mxu0
        %v5756 = vadd.f32 %v5667, %v5755
        %v5757 = vpop.f32.mrf.mxu0
        %v5758 = vadd.f32 %v5669, %v5757
        %5759 = vmatmul.bf16.gmra.mxu0 %v1213
        %v5760 = vpop.f32.mrf.mxu0
        %v5761 = vadd.f32 %v5672, %v5760
        %v5762 = vpop.f32.mrf.mxu0
        %v5763 = vadd.f32 %v5674, %v5762
        %5764 = vmatmul.bf16.gmra.mxu0 %v1215
        %v5765 = vpop.f32.mrf.mxu0
        %v5766 = vadd.f32 %v5677, %v5765
        %v5767 = vpop.f32.mrf.mxu0
        %v5768 = vadd.f32 %v5679, %v5767
        %5769 = vmatmul.bf16.gmra.mxu0 %v1217
        %v5770 = vpop.f32.mrf.mxu0
        %v5771 = vadd.f32 %v5682, %v5770
        %v5772 = vpop.f32.mrf.mxu0
        %v5773 = vadd.f32 %v5684, %v5772
        %5774 = vmatmul.bf16.gmra.mxu0 %v1219
        %v5775 = vpop.f32.mrf.mxu0
        %v5776 = vadd.f32 %v5687, %v5775
        %v5777 = vpop.f32.mrf.mxu0
        %v5778 = vadd.f32 %v5689, %v5777
        %5779 = vmatmul.bf16.gmra.mxu0 %v1221
        %v5780 = vpop.f32.mrf.mxu0
        %v5781 = vadd.f32 %v5692, %v5780
        %v5782 = vpop.f32.mrf.mxu0
        %v5783 = vadd.f32 %v5694, %v5782
        %5784 = vmatmul.bf16.gmra.mxu0 %v1223
        %v5785 = vpop.f32.mrf.mxu0
        %v5786 = vadd.f32 %v5697, %v5785
        %v5787 = vpop.f32.mrf.mxu0
        %v5788 = vadd.f32 %v5699, %v5787
        %5789 = vmatmul.bf16.gmra.mxu0 %v1225
        %v5790 = vpop.f32.mrf.mxu0
        %v5791 = vadd.f32 %v5702, %v5790
        %v5792 = vpop.f32.mrf.mxu0
        %v5793 = vadd.f32 %v5704, %v5792
        %5794 = vmatmul.bf16.gmra.mxu0 %v1227
        %v5795 = vpop.f32.mrf.mxu0
        %v5796 = vadd.f32 %v5707, %v5795
        %v5797 = vpop.f32.mrf.mxu0
        %v5798 = vadd.f32 %v5709, %v5797
        %5799 = vmatmul.bf16.gmra.mxu0 %v1229
        %v5800 = vpop.f32.mrf.mxu0
        %v5801 = vadd.f32 %v5712, %v5800
        %v5802 = vpop.f32.mrf.mxu0
        %v5803 = vadd.f32 %v5714, %v5802
        %5804 = vmatmul.bf16.gmra.mxu0 %v1231
        %v5805 = vpop.f32.mrf.mxu0
        %v5806 = vadd.f32 %v5717, %v5805
        %v5807 = vpop.f32.mrf.mxu0
        %v5808 = vadd.f32 %v5719, %v5807
        %5809 = vmatmul.bf16.gmra.mxu0 %v1229
        %v5810 = vpop.f32.mrf.mxu0
        %v5811 = vadd.f32 %v5722, %v5810
        %v5812 = vpop.f32.mrf.mxu0
        %v5813 = vadd.f32 %v5724, %v5812
        %5814 = vmatmul.bf16.gmra.mxu0 %v1227
        %v5815 = vpop.f32.mrf.mxu0
        %v5816 = vadd.f32 %v5727, %v5815
        %v5817 = vpop.f32.mrf.mxu0
        %v5818 = vadd.f32 %v5729, %v5817
        %5819 = vdwg.mxu0
        %5820 = vmatpush.bf16.msra.mxu0 %v2416
        %5821 = vmatpush.bf16.msra.mxu0 %v2414
        %5822 = vmatpush.bf16.msra.mxu0 %v2412
        %5823 = vmatpush.bf16.msra.mxu0 %v2410
        %5824 = vmatpush.bf16.msra.mxu0 %v2408
        %5825 = vmatpush.bf16.msra.mxu0 %v2406
        %5826 = vmatpush.bf16.msra.mxu0 %v2404
        %5827 = vmatpush.bf16.msra.mxu0 %v2402
        %5828 = vmatmul.bf16.gmra.mxu0 %v1202
        %v5829 = vpop.f32.mrf.mxu0
        %v5830 = vadd.f32 %v5741, %v5829
        %v5831 = vpop.f32.mrf.mxu0
        %v5832 = vadd.f32 %v5743, %v5831
        %5833 = vmatmul.bf16.gmra.mxu0 %v1208
        %v5834 = vpop.f32.mrf.mxu0
        %v5835 = vadd.f32 %v5746, %v5834
        %v5836 = vpop.f32.mrf.mxu0
        %v5837 = vadd.f32 %v5748, %v5836
        %5838 = vmatmul.bf16.gmra.mxu0 %v1210
        %v5839 = vpop.f32.mrf.mxu0
        %v5840 = vadd.f32 %v5751, %v5839
        %v5841 = vpop.f32.mrf.mxu0
        %v5842 = vadd.f32 %v5753, %v5841
        %5843 = vmatmul.bf16.gmra.mxu0 %v1212
        %v5844 = vpop.f32.mrf.mxu0
        %v5845 = vadd.f32 %v5756, %v5844
        %v5846 = vpop.f32.mrf.mxu0
        %v5847 = vadd.f32 %v5758, %v5846
        %5848 = vmatmul.bf16.gmra.mxu0 %v1214
        %v5849 = vpop.f32.mrf.mxu0
        %v5850 = vadd.f32 %v5761, %v5849
        %v5851 = vpop.f32.mrf.mxu0
        %v5852 = vadd.f32 %v5763, %v5851
        %5853 = vmatmul.bf16.gmra.mxu0 %v1216
        %v5854 = vpop.f32.mrf.mxu0
        %v5855 = vadd.f32 %v5766, %v5854
        %v5856 = vpop.f32.mrf.mxu0
        %v5857 = vadd.f32 %v5768, %v5856
        %5858 = vmatmul.bf16.gmra.mxu0 %v1218
        %v5859 = vpop.f32.mrf.mxu0
        %v5860 = vadd.f32 %v5771, %v5859
        %v5861 = vpop.f32.mrf.mxu0
        %v5862 = vadd.f32 %v5773, %v5861
        %5863 = vmatmul.bf16.gmra.mxu0 %v1220
        %v5864 = vpop.f32.mrf.mxu0
        %v5865 = vadd.f32 %v5776, %v5864
        %v5866 = vpop.f32.mrf.mxu0
        %v5867 = vadd.f32 %v5778, %v5866
        %5868 = vmatmul.bf16.gmra.mxu0 %v1222
        %v5869 = vpop.f32.mrf.mxu0
        %v5870 = vadd.f32 %v5781, %v5869
        %v5871 = vpop.f32.mrf.mxu0
        %v5872 = vadd.f32 %v5783, %v5871
        %5873 = vmatmul.bf16.gmra.mxu0 %v1224
        %v5874 = vpop.f32.mrf.mxu0
        %v5875 = vadd.f32 %v5786, %v5874
        %v5876 = vpop.f32.mrf.mxu0
        %v5877 = vadd.f32 %v5788, %v5876
        %5878 = vmatmul.bf16.gmra.mxu0 %v1226
        %v5879 = vpop.f32.mrf.mxu0
        %v5880 = vadd.f32 %v5791, %v5879
        %v5881 = vpop.f32.mrf.mxu0
        %v5882 = vadd.f32 %v5793, %v5881
        %5883 = vmatmul.bf16.gmra.mxu0 %v1228
        %v5884 = vpop.f32.mrf.mxu0
        %v5885 = vadd.f32 %v5796, %v5884
        %v5886 = vpop.f32.mrf.mxu0
        %v5887 = vadd.f32 %v5798, %v5886
        %5888 = vmatmul.bf16.gmra.mxu0 %v1230
        %v5889 = vpop.f32.mrf.mxu0
        %v5890 = vadd.f32 %v5801, %v5889
        %v5891 = vpop.f32.mrf.mxu0
        %v5892 = vadd.f32 %v5803, %v5891
        %5893 = vmatmul.bf16.gmra.mxu0 %v1232
        %v5894 = vpop.f32.mrf.mxu0
        %v5895 = vadd.f32 %v5806, %v5894
        %v5896 = vpop.f32.mrf.mxu0
        %v5897 = vadd.f32 %v5808, %v5896
        %5898 = vmatmul.bf16.gmra.mxu0 %v1230
        %v5899 = vpop.f32.mrf.mxu0
        %v5900 = vadd.f32 %v5811, %v5899
        %v5901 = vpop.f32.mrf.mxu0
        %v5902 = vadd.f32 %v5813, %v5901
        %5903 = vmatmul.bf16.gmra.mxu0 %v1228
        %v5904 = vpop.f32.mrf.mxu0
        %v5905 = vadd.f32 %v5816, %v5904
        %v5906 = vpop.f32.mrf.mxu0
        %v5907 = vadd.f32 %v5818, %v5906
        %5908 = vdwg.mxu0
        %v5909 = vadd.f32 %v4228, %v4230
        %v5910 = vadd.f32 %v5909, %v4233
        %v5911 = vadd.f32 %v5910, %v4235
        %v5912 = vadd.f32 %v5911, %v4238
        %v5913 = vadd.f32 %v5912, %v4240
        %v5914 = vadd.f32 %v5913, %v4243
        %v5915 = vadd.f32 %v5914, %v4245
        %v5916 = vadd.f32 %v5915, %v4248
        %v5917 = vadd.f32 %v5916, %v4250
        %v5918 = vadd.f32 %v5917, %v4253
        %v5919 = vadd.f32 %v5918, %v4255
        %v5920 = vadd.f32 %v5919, %v4258
        %v5921 = vadd.f32 %v5920, %v4260
        %v5922 = vadd.f32 %v5921, %v4263
        %v5923 = vadd.f32 %v5922, %v4265
        %v5924 = vadd.f32 %v5923, %v4268
        %v5925 = vadd.f32 %v5924, %v4270
        %v5926 = vadd.f32 %v5925, %v4273
        %v5927 = vadd.f32 %v5926, %v4275
        %v5928 = vadd.f32 %v5927, %v4278
        %v5929 = vadd.f32 %v5928, %v4280
        %v5930 = vadd.f32 %v5929, %v4283
        %v5931 = vadd.f32 %v5930, %v4285
        %v5932 = vadd.f32 %v5931, %v4288
        %v5933 = vadd.f32 %v5932, %v4290
        %v5934 = vadd.f32 %v5933, %v4293
        %v5935 = vadd.f32 %v5934, %v4295
        %v5936 = vadd.f32 %v5935, %v4298
        %v5937 = vadd.f32 %v5936, %v4300
        %v5938 = vadd.f32 %v5937, %v4303
        %v5939 = vadd.f32 %v5938, %v4305
        %v5940 = vrot.slane %v5939, 4
        %v5941 = vadd.f32 %v5939, %v5940
        %v5942 = vrot.slane %v5941, 2
        %v5943 = vadd.f32 %v5941, %v5942
        %v5944 = vrot.slane %v5943, 1
        %v5945 = vadd.f32 %v5943, %v5944
        %v5946 = vadd.f32 %v5830, %v5832
        %v5947 = vadd.f32 %v5946, %v5835
        %v5948 = vadd.f32 %v5947, %v5837
        %v5949 = vadd.f32 %v5948, %v5840
        %v5950 = vadd.f32 %v5949, %v5842
        %v5951 = vadd.f32 %v5950, %v5845
        %v5952 = vadd.f32 %v5951, %v5847
        %v5953 = vadd.f32 %v5952, %v5850
        %v5954 = vadd.f32 %v5953, %v5852
        %v5955 = vadd.f32 %v5954, %v5855
        %v5956 = vadd.f32 %v5955, %v5857
        %v5957 = vadd.f32 %v5956, %v5860
        %v5958 = vadd.f32 %v5957, %v5862
        %v5959 = vadd.f32 %v5958, %v5865
        %v5960 = vadd.f32 %v5959, %v5867
        %v5961 = vadd.f32 %v5960, %v5870
        %v5962 = vadd.f32 %v5961, %v5872
        %v5963 = vadd.f32 %v5962, %v5875
        %v5964 = vadd.f32 %v5963, %v5877
        %v5965 = vadd.f32 %v5964, %v5880
        %v5966 = vadd.f32 %v5965, %v5882
        %v5967 = vadd.f32 %v5966, %v5885
        %v5968 = vadd.f32 %v5967, %v5887
        %v5969 = vadd.f32 %v5968, %v5890
        %v5970 = vadd.f32 %v5969, %v5892
        %v5971 = vadd.f32 %v5970, %v5895
        %v5972 = vadd.f32 %v5971, %v5897
        %v5973 = vadd.f32 %v5972, %v5900
        %v5974 = vadd.f32 %v5973, %v5902
        %v5975 = vadd.f32 %v5974, %v5905
        %v5976 = vadd.f32 %v5975, %v5907
        %v5977 = vrot.slane %v5976, 4
        %v5978 = vadd.f32 %v5976, %v5977
        %v5979 = vrot.slane %v5978, 2
        %v5980 = vadd.f32 %v5978, %v5979
        %v5981 = vrot.slane %v5980, 1
        %v5982 = vadd.f32 %v5980, %v5981
        %v5983 = vmul.f32 %v5945, 0.00390625
        %v5984 = vmul.f32 %v5982, 0.00390625
        %v5985 = vmul.f32 %v4228, %v4228
        %v5986 = vmul.f32 %v5830, %v5830
        %v5987 = vmul.f32 %v4230, %v4230
        %v5988 = vmul.f32 %v5832, %v5832
        %v5989 = vmul.f32 %v4233, %v4233
        %v5990 = vmul.f32 %v5835, %v5835
        %v5991 = vmul.f32 %v4235, %v4235
        %v5992 = vmul.f32 %v5837, %v5837
        %v5993 = vmul.f32 %v4238, %v4238
        %v5994 = vmul.f32 %v5840, %v5840
        %v5995 = vmul.f32 %v4240, %v4240
        %v5996 = vmul.f32 %v5842, %v5842
        %v5997 = vmul.f32 %v4243, %v4243
        %v5998 = vmul.f32 %v5845, %v5845
        %v5999 = vmul.f32 %v4245, %v4245
        %v6000 = vmul.f32 %v5847, %v5847
        %v6001 = vmul.f32 %v4248, %v4248
        %v6002 = vmul.f32 %v5850, %v5850
        %v6003 = vmul.f32 %v4250, %v4250
        %v6004 = vmul.f32 %v5852, %v5852
        %v6005 = vmul.f32 %v4253, %v4253
        %v6006 = vmul.f32 %v5855, %v5855
        %v6007 = vmul.f32 %v4255, %v4255
        %v6008 = vmul.f32 %v5857, %v5857
        %v6009 = vmul.f32 %v4258, %v4258
        %v6010 = vmul.f32 %v5860, %v5860
        %v6011 = vmul.f32 %v4260, %v4260
        %v6012 = vmul.f32 %v5862, %v5862
        %v6013 = vmul.f32 %v4263, %v4263
        %v6014 = vmul.f32 %v5865, %v5865
        %v6015 = vmul.f32 %v4265, %v4265
        %v6016 = vmul.f32 %v5867, %v5867
        %v6017 = vmul.f32 %v4268, %v4268
        %v6018 = vmul.f32 %v5870, %v5870
        %v6019 = vmul.f32 %v4270, %v4270
        %v6020 = vmul.f32 %v5872, %v5872
        %v6021 = vmul.f32 %v4273, %v4273
        %v6022 = vmul.f32 %v5875, %v5875
        %v6023 = vmul.f32 %v4275, %v4275
        %v6024 = vmul.f32 %v5877, %v5877
        %v6025 = vmul.f32 %v4278, %v4278
        %v6026 = vmul.f32 %v5880, %v5880
        %v6027 = vmul.f32 %v4280, %v4280
        %v6028 = vmul.f32 %v5882, %v5882
        %v6029 = vmul.f32 %v4283, %v4283
        %v6030 = vmul.f32 %v5885, %v5885
        %v6031 = vmul.f32 %v4285, %v4285
        %v6032 = vmul.f32 %v5887, %v5887
        %v6033 = vmul.f32 %v4288, %v4288
        %v6034 = vmul.f32 %v5890, %v5890
        %v6035 = vmul.f32 %v4290, %v4290
        %v6036 = vmul.f32 %v5892, %v5892
        %v6037 = vmul.f32 %v4293, %v4293
        %v6038 = vmul.f32 %v5895, %v5895
        %v6039 = vmul.f32 %v4295, %v4295
        %v6040 = vmul.f32 %v5897, %v5897
        %v6041 = vmul.f32 %v4298, %v4298
        %v6042 = vmul.f32 %v5900, %v5900
        %v6043 = vmul.f32 %v4300, %v4300
        %v6044 = vmul.f32 %v5902, %v5902
        %v6045 = vmul.f32 %v4303, %v4303
        %v6046 = vmul.f32 %v5905, %v5905
        %v6047 = vmul.f32 %v4305, %v4305
        %v6048 = vmul.f32 %v5907, %v5907
        %v6049 = vadd.f32 %v5985, %v5987
        %v6050 = vadd.f32 %v6049, %v5989
        %v6051 = vadd.f32 %v6050, %v5991
        %v6052 = vadd.f32 %v6051, %v5993
        %v6053 = vadd.f32 %v6052, %v5995
        %v6054 = vadd.f32 %v6053, %v5997
        %v6055 = vadd.f32 %v6054, %v5999
        %v6056 = vadd.f32 %v6055, %v6001
        %v6057 = vadd.f32 %v6056, %v6003
        %v6058 = vadd.f32 %v6057, %v6005
        %v6059 = vadd.f32 %v6058, %v6007
        %v6060 = vadd.f32 %v6059, %v6009
        %v6061 = vadd.f32 %v6060, %v6011
        %v6062 = vadd.f32 %v6061, %v6013
        %v6063 = vadd.f32 %v6062, %v6015
        %v6064 = vadd.f32 %v6063, %v6017
        %v6065 = vadd.f32 %v6064, %v6019
        %v6066 = vadd.f32 %v6065, %v6021
        %v6067 = vadd.f32 %v6066, %v6023
        %v6068 = vadd.f32 %v6067, %v6025
        %v6069 = vadd.f32 %v6068, %v6027
        %v6070 = vadd.f32 %v6069, %v6029
        %v6071 = vadd.f32 %v6070, %v6031
        %v6072 = vadd.f32 %v6071, %v6033
        %v6073 = vadd.f32 %v6072, %v6035
        %v6074 = vadd.f32 %v6073, %v6037
        %v6075 = vadd.f32 %v6074, %v6039
        %v6076 = vadd.f32 %v6075, %v6041
        %v6077 = vadd.f32 %v6076, %v6043
        %v6078 = vadd.f32 %v6077, %v6045
        %v6079 = vadd.f32 %v6078, %v6047
        %v6080 = vrot.slane %v6079, 4
        %v6081 = vadd.f32 %v6079, %v6080
        %v6082 = vrot.slane %v6081, 2
        %v6083 = vadd.f32 %v6081, %v6082
        %v6084 = vrot.slane %v6083, 1
        %v6085 = vadd.f32 %v6083, %v6084
        %v6086 = vadd.f32 %v5986, %v5988
        %v6087 = vadd.f32 %v6086, %v5990
        %v6088 = vadd.f32 %v6087, %v5992
        %v6089 = vadd.f32 %v6088, %v5994
        %v6090 = vadd.f32 %v6089, %v5996
        %v6091 = vadd.f32 %v6090, %v5998
        %v6092 = vadd.f32 %v6091, %v6000
        %v6093 = vadd.f32 %v6092, %v6002
        %v6094 = vadd.f32 %v6093, %v6004
        %v6095 = vadd.f32 %v6094, %v6006
        %v6096 = vadd.f32 %v6095, %v6008
        %v6097 = vadd.f32 %v6096, %v6010
        %v6098 = vadd.f32 %v6097, %v6012
        %v6099 = vadd.f32 %v6098, %v6014
        %v6100 = vadd.f32 %v6099, %v6016
        %v6101 = vadd.f32 %v6100, %v6018
        %v6102 = vadd.f32 %v6101, %v6020
        %v6103 = vadd.f32 %v6102, %v6022
        %v6104 = vadd.f32 %v6103, %v6024
        %v6105 = vadd.f32 %v6104, %v6026
        %v6106 = vadd.f32 %v6105, %v6028
        %v6107 = vadd.f32 %v6106, %v6030
        %v6108 = vadd.f32 %v6107, %v6032
        %v6109 = vadd.f32 %v6108, %v6034
        %v6110 = vadd.f32 %v6109, %v6036
        %v6111 = vadd.f32 %v6110, %v6038
        %v6112 = vadd.f32 %v6111, %v6040
        %v6113 = vadd.f32 %v6112, %v6042
        %v6114 = vadd.f32 %v6113, %v6044
        %v6115 = vadd.f32 %v6114, %v6046
        %v6116 = vadd.f32 %v6115, %v6048
        %v6117 = vrot.slane %v6116, 4
        %v6118 = vadd.f32 %v6116, %v6117
        %v6119 = vrot.slane %v6118, 2
        %v6120 = vadd.f32 %v6118, %v6119
        %v6121 = vrot.slane %v6120, 1
        %v6122 = vadd.f32 %v6120, %v6121
        %v6123 = vmul.f32 %v6085, 0.00390625
        %v6124 = vmul.f32 %v6122, 0.00390625
        %v6125 = vmul.f32 %v5983, %v5983
        %v6126 = vmul.f32 %v5984, %v5984
        %v6127 = vsub.f32 %v6123, %v6125
        %v6128 = vsub.f32 %v6124, %v6126
        %v6129 = vsub.f32 %v4228, %v5983
        %v6130 = vsub.f32 %v5830, %v5984
        %v6131 = vsub.f32 %v4230, %v5983
        %v6132 = vsub.f32 %v5832, %v5984
        %v6133 = vsub.f32 %v4233, %v5983
        %v6134 = vsub.f32 %v5835, %v5984
        %v6135 = vsub.f32 %v4235, %v5983
        %v6136 = vsub.f32 %v5837, %v5984
        %v6137 = vsub.f32 %v4238, %v5983
        %v6138 = vsub.f32 %v5840, %v5984
        %v6139 = vsub.f32 %v4240, %v5983
        %v6140 = vsub.f32 %v5842, %v5984
        %v6141 = vsub.f32 %v4243, %v5983
        %v6142 = vsub.f32 %v5845, %v5984
        %v6143 = vsub.f32 %v4245, %v5983
        %v6144 = vsub.f32 %v5847, %v5984
        %v6145 = vsub.f32 %v4248, %v5983
        %v6146 = vsub.f32 %v5850, %v5984
        %v6147 = vsub.f32 %v4250, %v5983
        %v6148 = vsub.f32 %v5852, %v5984
        %v6149 = vsub.f32 %v4253, %v5983
        %v6150 = vsub.f32 %v5855, %v5984
        %v6151 = vsub.f32 %v4255, %v5983
        %v6152 = vsub.f32 %v5857, %v5984
        %v6153 = vsub.f32 %v4258, %v5983
        %v6154 = vsub.f32 %v5860, %v5984
        %v6155 = vsub.f32 %v4260, %v5983
        %v6156 = vsub.f32 %v5862, %v5984
        %v6157 = vsub.f32 %v4263, %v5983
        %v6158 = vsub.f32 %v5865, %v5984
        %v6159 = vsub.f32 %v4265, %v5983
        %v6160 = vsub.f32 %v5867, %v5984
        %v6161 = vsub.f32 %v4268, %v5983
        %v6162 = vsub.f32 %v5870, %v5984
        %v6163 = vsub.f32 %v4270, %v5983
        %v6164 = vsub.f32 %v5872, %v5984
        %v6165 = vsub.f32 %v4273, %v5983
        %v6166 = vsub.f32 %v5875, %v5984
        %v6167 = vsub.f32 %v4275, %v5983
        %v6168 = vsub.f32 %v5877, %v5984
        %v6169 = vsub.f32 %v4278, %v5983
        %v6170 = vsub.f32 %v5880, %v5984
        %v6171 = vsub.f32 %v4280, %v5983
        %v6172 = vsub.f32 %v5882, %v5984
        %v6173 = vsub.f32 %v4283, %v5983
        %v6174 = vsub.f32 %v5885, %v5984
        %v6175 = vsub.f32 %v4285, %v5983
        %v6176 = vsub.f32 %v5887, %v5984
        %v6177 = vsub.f32 %v4288, %v5983
        %v6178 = vsub.f32 %v5890, %v5984
        %v6179 = vsub.f32 %v4290, %v5983
        %v6180 = vsub.f32 %v5892, %v5984
        %v6181 = vsub.f32 %v4293, %v5983
        %v6182 = vsub.f32 %v5895, %v5984
        %v6183 = vsub.f32 %v4295, %v5983
        %v6184 = vsub.f32 %v5897, %v5984
        %v6185 = vsub.f32 %v4298, %v5983
        %v6186 = vsub.f32 %v5900, %v5984
        %v6187 = vsub.f32 %v4300, %v5983
        %v6188 = vsub.f32 %v5902, %v5984
        %v6189 = vsub.f32 %v4303, %v5983
        %v6190 = vsub.f32 %v5905, %v5984
        %v6191 = vsub.f32 %v4305, %v5983
        %v6192 = vsub.f32 %v5907, %v5984
        %v6193 = vadd.f32 %v6127, 1e-05
        %v6194 = vadd.f32 %v6128, 1e-05
        %v6195 = vrsqrt.pop %v6193
        %v6196 = vmul.f32 %v6195, %v6193
        %v6197 = vmul.f32 %v6196, %v6195
        %v6198 = vmul.f32 0.5, %v6197
        %v6199 = vsub.f32 1.5, %v6198
        %v6200 = vmul.f32 %v6195, %v6199
        %vm6201 = vweird.f32 %v6193
        %vm6202 = vweird.f32 %v6195
        %vm6203 = vmor %vm6201, %vm6202
        %v6204 = vsel %vm6203, %v6195, %v6200
        %v6205 = vrsqrt.pop %v6194
        %v6206 = vmul.f32 %v6205, %v6194
        %v6207 = vmul.f32 %v6206, %v6205
        %v6208 = vmul.f32 0.5, %v6207
        %v6209 = vsub.f32 1.5, %v6208
        %v6210 = vmul.f32 %v6205, %v6209
        %vm6211 = vweird.f32 %v6194
        %vm6212 = vweird.f32 %v6205
        %vm6213 = vmor %vm6211, %vm6212
        %v6214 = vsel %vm6213, %v6205, %v6210
        %v6215 = vmul.f32 %v6129, %v6204
        %v6216 = vmul.f32 %v6130, %v6214
        %v6217 = vmul.f32 %v6131, %v6204
        %v6218 = vmul.f32 %v6132, %v6214
        %v6219 = vmul.f32 %v6133, %v6204
        %v6220 = vmul.f32 %v6134, %v6214
        %v6221 = vmul.f32 %v6135, %v6204
        %v6222 = vmul.f32 %v6136, %v6214
        %v6223 = vmul.f32 %v6137, %v6204
        %v6224 = vmul.f32 %v6138, %v6214
        %v6225 = vmul.f32 %v6139, %v6204
        %v6226 = vmul.f32 %v6140, %v6214
        %v6227 = vmul.f32 %v6141, %v6204
        %v6228 = vmul.f32 %v6142, %v6214
        %v6229 = vmul.f32 %v6143, %v6204
        %v6230 = vmul.f32 %v6144, %v6214
        %v6231 = vmul.f32 %v6145, %v6204
        %v6232 = vmul.f32 %v6146, %v6214
        %v6233 = vmul.f32 %v6147, %v6204
        %v6234 = vmul.f32 %v6148, %v6214
        %v6235 = vmul.f32 %v6149, %v6204
        %v6236 = vmul.f32 %v6150, %v6214
        %v6237 = vmul.f32 %v6151, %v6204
        %v6238 = vmul.f32 %v6152, %v6214
        %v6239 = vmul.f32 %v6153, %v6204
        %v6240 = vmul.f32 %v6154, %v6214
        %v6241 = vmul.f32 %v6155, %v6204
        %v6242 = vmul.f32 %v6156, %v6214
        %v6243 = vmul.f32 %v6157, %v6204
        %v6244 = vmul.f32 %v6158, %v6214
        %v6245 = vmul.f32 %v6159, %v6204
        %v6246 = vmul.f32 %v6160, %v6214
        %v6247 = vmul.f32 %v6161, %v6204
        %v6248 = vmul.f32 %v6162, %v6214
        %v6249 = vmul.f32 %v6163, %v6204
        %v6250 = vmul.f32 %v6164, %v6214
        %v6251 = vmul.f32 %v6165, %v6204
        %v6252 = vmul.f32 %v6166, %v6214
        %v6253 = vmul.f32 %v6167, %v6204
        %v6254 = vmul.f32 %v6168, %v6214
        %v6255 = vmul.f32 %v6169, %v6204
        %v6256 = vmul.f32 %v6170, %v6214
        %v6257 = vmul.f32 %v6171, %v6204
        %v6258 = vmul.f32 %v6172, %v6214
        %v6259 = vmul.f32 %v6173, %v6204
        %v6260 = vmul.f32 %v6174, %v6214
        %v6261 = vmul.f32 %v6175, %v6204
        %v6262 = vmul.f32 %v6176, %v6214
        %v6263 = vmul.f32 %v6177, %v6204
        %v6264 = vmul.f32 %v6178, %v6214
        %v6265 = vmul.f32 %v6179, %v6204
        %v6266 = vmul.f32 %v6180, %v6214
        %v6267 = vmul.f32 %v6181, %v6204
        %v6268 = vmul.f32 %v6182, %v6214
        %v6269 = vmul.f32 %v6183, %v6204
        %v6270 = vmul.f32 %v6184, %v6214
        %v6271 = vmul.f32 %v6185, %v6204
        %v6272 = vmul.f32 %v6186, %v6214
        %v6273 = vmul.f32 %v6187, %v6204
        %v6274 = vmul.f32 %v6188, %v6214
        %v6275 = vmul.f32 %v6189, %v6204
        %v6276 = vmul.f32 %v6190, %v6214
        %v6277 = vmul.f32 %v6191, %v6204
        %v6278 = vmul.f32 %v6192, %v6214
        %v6279 = vmax.f32 %v6215, 0.0
        %v6280 = vmax.f32 %v6216, 0.0
        %v6281 = vmax.f32 %v6217, 0.0
        %v6282 = vmax.f32 %v6218, 0.0
        %v6283 = vmax.f32 %v6219, 0.0
        %v6284 = vmax.f32 %v6220, 0.0
        %v6285 = vmax.f32 %v6221, 0.0
        %v6286 = vmax.f32 %v6222, 0.0
        %v6287 = vmax.f32 %v6223, 0.0
        %v6288 = vmax.f32 %v6224, 0.0
        %v6289 = vmax.f32 %v6225, 0.0
        %v6290 = vmax.f32 %v6226, 0.0
        %v6291 = vmax.f32 %v6227, 0.0
        %v6292 = vmax.f32 %v6228, 0.0
        %v6293 = vmax.f32 %v6229, 0.0
        %v6294 = vmax.f32 %v6230, 0.0
        %v6295 = vmax.f32 %v6231, 0.0
        %v6296 = vmax.f32 %v6232, 0.0
        %v6297 = vmax.f32 %v6233, 0.0
        %v6298 = vmax.f32 %v6234, 0.0
        %v6299 = vmax.f32 %v6235, 0.0
        %v6300 = vmax.f32 %v6236, 0.0
        %v6301 = vmax.f32 %v6237, 0.0
        %v6302 = vmax.f32 %v6238, 0.0
        %v6303 = vmax.f32 %v6239, 0.0
        %v6304 = vmax.f32 %v6240, 0.0
        %v6305 = vmax.f32 %v6241, 0.0
        %v6306 = vmax.f32 %v6242, 0.0
        %v6307 = vmax.f32 %v6243, 0.0
        %v6308 = vmax.f32 %v6244, 0.0
        %v6309 = vmax.f32 %v6245, 0.0
        %v6310 = vmax.f32 %v6246, 0.0
        %v6311 = vmax.f32 %v6247, 0.0
        %v6312 = vmax.f32 %v6248, 0.0
        %v6313 = vmax.f32 %v6249, 0.0
        %v6314 = vmax.f32 %v6250, 0.0
        %v6315 = vmax.f32 %v6251, 0.0
        %v6316 = vmax.f32 %v6252, 0.0
        %v6317 = vmax.f32 %v6253, 0.0
        %v6318 = vmax.f32 %v6254, 0.0
        %v6319 = vmax.f32 %v6255, 0.0
        %v6320 = vmax.f32 %v6256, 0.0
        %v6321 = vmax.f32 %v6257, 0.0
        %v6322 = vmax.f32 %v6258, 0.0
        %v6323 = vmax.f32 %v6259, 0.0
        %v6324 = vmax.f32 %v6260, 0.0
        %v6325 = vmax.f32 %v6261, 0.0
        %v6326 = vmax.f32 %v6262, 0.0
        %v6327 = vmax.f32 %v6263, 0.0
        %v6328 = vmax.f32 %v6264, 0.0
        %v6329 = vmax.f32 %v6265, 0.0
        %v6330 = vmax.f32 %v6266, 0.0
        %v6331 = vmax.f32 %v6267, 0.0
        %v6332 = vmax.f32 %v6268, 0.0
        %v6333 = vmax.f32 %v6269, 0.0
        %v6334 = vmax.f32 %v6270, 0.0
        %v6335 = vmax.f32 %v6271, 0.0
        %v6336 = vmax.f32 %v6272, 0.0
        %v6337 = vmax.f32 %v6273, 0.0
        %v6338 = vmax.f32 %v6274, 0.0
        %v6339 = vmax.f32 %v6275, 0.0
        %v6340 = vmax.f32 %v6276, 0.0
        %v6341 = vmax.f32 %v6277, 0.0
        %v6342 = vmax.f32 %v6278, 0.0
        %v6343 = vpack.c.bf16 %v6280, %v6279
        %v6344 = vpack.c.bf16 %v6282, %v6281
        %v6345 = vpack.c.bf16 %v6284, %v6283
        %v6346 = vpack.c.bf16 %v6286, %v6285
        %v6347 = vpack.c.bf16 %v6288, %v6287
        %v6348 = vpack.c.bf16 %v6290, %v6289
        %v6349 = vpack.c.bf16 %v6292, %v6291
        %v6350 = vpack.c.bf16 %v6294, %v6293
        %v6351 = vpack.c.bf16 %v6296, %v6295
        %v6352 = vpack.c.bf16 %v6298, %v6297
        %v6353 = vpack.c.bf16 %v6300, %v6299
        %v6354 = vpack.c.bf16 %v6302, %v6301
        %v6355 = vpack.c.bf16 %v6304, %v6303
        %v6356 = vpack.c.bf16 %v6306, %v6305
        %v6357 = vpack.c.bf16 %v6308, %v6307
        %v6358 = vpack.c.bf16 %v6310, %v6309
        %v6359 = vpack.c.bf16 %v6312, %v6311
        %v6360 = vpack.c.bf16 %v6314, %v6313
        %v6361 = vpack.c.bf16 %v6316, %v6315
        %v6362 = vpack.c.bf16 %v6318, %v6317
        %v6363 = vpack.c.bf16 %v6320, %v6319
        %v6364 = vpack.c.bf16 %v6322, %v6321
        %v6365 = vpack.c.bf16 %v6324, %v6323
        %v6366 = vpack.c.bf16 %v6326, %v6325
        %v6367 = vpack.c.bf16 %v6328, %v6327
        %v6368 = vpack.c.bf16 %v6330, %v6329
        %v6369 = vpack.c.bf16 %v6332, %v6331
        %v6370 = vpack.c.bf16 %v6334, %v6333
        %v6371 = vpack.c.bf16 %v6336, %v6335
        %v6372 = vpack.c.bf16 %v6338, %v6337
        %v6373 = vpack.c.bf16 %v6340, %v6339
        %v6374 = vpack.c.bf16 %v6342, %v6341
        %v6375 = vld [vmem:[%s2] sm:$0xff]
        %v6376 = vld [vmem:[%s2 + $0x8] sm:$0xff]
        %v6377 = vld [vmem:[%s2 + $0x10] sm:$0xff]
        %v6378 = vld [vmem:[%s2 + $0x18] sm:$0xff]
        %v6379 = vld [vmem:[%s2 + $0x20] sm:$0xff]
        %v6380 = vld [vmem:[%s2 + $0x28] sm:$0xff]
        %v6381 = vld [vmem:[%s2 + $0x30] sm:$0xff]
        %v6382 = vld [vmem:[%s2 + $0x38] sm:$0xff]
        %v6383 = vld [vmem:[%s2 + $0x40] sm:$0xff]
        %v6384 = vld [vmem:[%s2 + $0x48] sm:$0xff]
        %v6385 = vld [vmem:[%s2 + $0x50] sm:$0xff]
        %v6386 = vld [vmem:[%s2 + $0x58] sm:$0xff]
        %v6387 = vld [vmem:[%s2 + $0x60] sm:$0xff]
        %v6388 = vld [vmem:[%s2 + $0x68] sm:$0xff]
        %v6389 = vld [vmem:[%s2 + $0x70] sm:$0xff]
        %v6390 = vld [vmem:[%s2 + $0x78] sm:$0xff]
        %v6391 = vld [vmem:[%s2 + $0x80] sm:$0xff]
        %v6392 = vld [vmem:[%s2 + $0x88] sm:$0xff]
        %v6393 = vld [vmem:[%s2 + $0x90] sm:$0xff]
        %v6394 = vld [vmem:[%s2 + $0x98] sm:$0xff]
        %v6395 = vld [vmem:[%s2 + $0xa0] sm:$0xff]
        %v6396 = vld [vmem:[%s2 + $0xa8] sm:$0xff]
        %v6397 = vld [vmem:[%s2 + $0xb0] sm:$0xff]
        %v6398 = vld [vmem:[%s2 + $0xb8] sm:$0xff]
        %v6399 = vld [vmem:[%s2 + $0xc0] sm:$0xff]
        %v6400 = vld [vmem:[%s2 + $0xc8] sm:$0xff]
        %v6401 = vld [vmem:[%s2 + $0xd0] sm:$0xff]
        %v6402 = vld [vmem:[%s2 + $0xd8] sm:$0xff]
        %v6403 = vld [vmem:[%s2 + $0xe0] sm:$0xff]
        %v6404 = vld [vmem:[%s2 + $0xe8] sm:$0xff]
        %v6405 = vld [vmem:[%s2 + $0xf0] sm:$0xff]
        %v6406 = vld [vmem:[%s2 + $0xf8] sm:$0xff]
        %v6407 = vld [vmem:[%s2 + $0x100] sm:$0xff]
        %v6408 = vld [vmem:[%s2 + $0x108] sm:$0xff]
        %v6409 = vld [vmem:[%s2 + $0x110] sm:$0xff]
        %v6410 = vld [vmem:[%s2 + $0x118] sm:$0xff]
        %v6411 = vld [vmem:[%s2 + $0x120] sm:$0xff]
        %v6412 = vld [vmem:[%s2 + $0x128] sm:$0xff]
        %v6413 = vld [vmem:[%s2 + $0x130] sm:$0xff]
        %v6414 = vld [vmem:[%s2 + $0x138] sm:$0xff]
        %v6415 = vld [vmem:[%s2 + $0x140] sm:$0xff]
        %v6416 = vld [vmem:[%s2 + $0x148] sm:$0xff]
        %v6417 = vld [vmem:[%s2 + $0x150] sm:$0xff]
        %v6418 = vld [vmem:[%s2 + $0x158] sm:$0xff]
        %v6419 = vld [vmem:[%s2 + $0x160] sm:$0xff]
        %v6420 = vld [vmem:[%s2 + $0x168] sm:$0xff]
        %v6421 = vld [vmem:[%s2 + $0x170] sm:$0xff]
        %v6422 = vld [vmem:[%s2 + $0x178] sm:$0xff]
        %v6423 = vld [vmem:[%s2 + $0x180] sm:$0xff]
        %v6424 = vld [vmem:[%s2 + $0x188] sm:$0xff]
        %v6425 = vld [vmem:[%s2 + $0x190] sm:$0xff]
        %v6426 = vld [vmem:[%s2 + $0x198] sm:$0xff]
        %v6427 = vld [vmem:[%s2 + $0x1a0] sm:$0xff]
        %v6428 = vld [vmem:[%s2 + $0x1a8] sm:$0xff]
        %v6429 = vld [vmem:[%s2 + $0x1b0] sm:$0xff]
        %v6430 = vld [vmem:[%s2 + $0x1b8] sm:$0xff]
        %v6431 = vld [vmem:[%s2 + $0x1c0] sm:$0xff]
        %v6432 = vld [vmem:[%s2 + $0x1c8] sm:$0xff]
        %v6433 = vld [vmem:[%s2 + $0x1d0] sm:$0xff]
        %v6434 = vld [vmem:[%s2 + $0x1d8] sm:$0xff]
        %v6435 = vld [vmem:[%s2 + $0x1e0] sm:$0xff]
        %v6436 = vld [vmem:[%s2 + $0x1e8] sm:$0xff]
        %v6437 = vld [vmem:[%s2 + $0x1f0] sm:$0xff]
        %v6438 = vld [vmem:[%s2 + $0x1f8] sm:$0xff]
        %v6439 = vld [vmem:[%s2 + $0x200] sm:$0xff]
        %v6440 = vld [vmem:[%s2 + $0x208] sm:$0xff]
        %v6441 = vld [vmem:[%s2 + $0x210] sm:$0xff]
        %v6442 = vld [vmem:[%s2 + $0x218] sm:$0xff]
        %v6443 = vld [vmem:[%s2 + $0x220] sm:$0xff]
        %v6444 = vld [vmem:[%s2 + $0x228] sm:$0xff]
        %v6445 = vld [vmem:[%s2 + $0x230] sm:$0xff]
        %v6446 = vld [vmem:[%s2 + $0x238] sm:$0xff]
        %v6447 = vld [vmem:[%s2 + $0x240] sm:$0xff]
        %v6448 = vld [vmem:[%s2 + $0x248] sm:$0xff]
        %v6449 = vld [vmem:[%s2 + $0x250] sm:$0xff]
        %v6450 = vld [vmem:[%s2 + $0x258] sm:$0xff]
        %v6451 = vld [vmem:[%s2 + $0x260] sm:$0xff]
        %v6452 = vld [vmem:[%s2 + $0x268] sm:$0xff]
        %v6453 = vld [vmem:[%s2 + $0x270] sm:$0xff]
        %v6454 = vld [vmem:[%s2 + $0x278] sm:$0xff]
        %v6455 = vld [vmem:[%s2 + $0x280] sm:$0xff]
        %v6456 = vld [vmem:[%s2 + $0x288] sm:$0xff]
        %v6457 = vld [vmem:[%s2 + $0x290] sm:$0xff]
        %v6458 = vld [vmem:[%s2 + $0x298] sm:$0xff]
        %v6459 = vld [vmem:[%s2 + $0x2a0] sm:$0xff]
        %v6460 = vld [vmem:[%s2 + $0x2a8] sm:$0xff]
        %v6461 = vld [vmem:[%s2 + $0x2b0] sm:$0xff]
        %v6462 = vld [vmem:[%s2 + $0x2b8] sm:$0xff]
        %v6463 = vld [vmem:[%s2 + $0x2c0] sm:$0xff]
        %v6464 = vld [vmem:[%s2 + $0x2c8] sm:$0xff]
        %v6465 = vld [vmem:[%s2 + $0x2d0] sm:$0xff]
        %v6466 = vld [vmem:[%s2 + $0x2d8] sm:$0xff]
        %v6467 = vld [vmem:[%s2 + $0x2e0] sm:$0xff]
        %v6468 = vld [vmem:[%s2 + $0x2e8] sm:$0xff]
        %v6469 = vld [vmem:[%s2 + $0x2f0] sm:$0xff]
        %v6470 = vld [vmem:[%s2 + $0x2f8] sm:$0xff]
        %v6471 = vld [vmem:[%s2 + $0x300] sm:$0xff]
        %v6472 = vld [vmem:[%s2 + $0x308] sm:$0xff]
        %v6473 = vld [vmem:[%s2 + $0x310] sm:$0xff]
        %v6474 = vld [vmem:[%s2 + $0x318] sm:$0xff]
        %v6475 = vld [vmem:[%s2 + $0x320] sm:$0xff]
        %v6476 = vld [vmem:[%s2 + $0x328] sm:$0xff]
        %v6477 = vld [vmem:[%s2 + $0x330] sm:$0xff]
        %v6478 = vld [vmem:[%s2 + $0x338] sm:$0xff]
        %v6479 = vld [vmem:[%s2 + $0x340] sm:$0xff]
        %v6480 = vld [vmem:[%s2 + $0x348] sm:$0xff]
        %v6481 = vld [vmem:[%s2 + $0x350] sm:$0xff]
        %v6482 = vld [vmem:[%s2 + $0x358] sm:$0xff]
        %v6483 = vld [vmem:[%s2 + $0x360] sm:$0xff]
        %v6484 = vld [vmem:[%s2 + $0x368] sm:$0xff]
        %v6485 = vld [vmem:[%s2 + $0x370] sm:$0xff]
        %v6486 = vld [vmem:[%s2 + $0x378] sm:$0xff]
        %v6487 = vld [vmem:[%s2 + $0x380] sm:$0xff]
        %v6488 = vld [vmem:[%s2 + $0x388] sm:$0xff]
        %v6489 = vld [vmem:[%s2 + $0x390] sm:$0xff]
        %v6490 = vld [vmem:[%s2 + $0x398] sm:$0xff]
        %v6491 = vld [vmem:[%s2 + $0x3a0] sm:$0xff]
        %v6492 = vld [vmem:[%s2 + $0x3a8] sm:$0xff]
        %v6493 = vld [vmem:[%s2 + $0x3b0] sm:$0xff]
        %v6494 = vld [vmem:[%s2 + $0x3b8] sm:$0xff]
        %v6495 = vld [vmem:[%s2 + $0x3c0] sm:$0xff]
        %v6496 = vld [vmem:[%s2 + $0x3c8] sm:$0xff]
        %v6497 = vld [vmem:[%s2 + $0x3d0] sm:$0xff]
        %v6498 = vld [vmem:[%s2 + $0x3d8] sm:$0xff]
        %v6499 = vld [vmem:[%s2 + $0x3e0] sm:$0xff]
        %v6500 = vld [vmem:[%s2 + $0x3e8] sm:$0xff]
        %v6501 = vld [vmem:[%s2 + $0x3f0] sm:$0xff]
        %v6502 = vld [vmem:[%s2 + $0x3f8] sm:$0xff]
        %v6503 = vld [vmem:[%s2 + $0x400] sm:$0xff]
        %v6504 = vld [vmem:[%s2 + $0x408] sm:$0xff]
        %v6505 = vld [vmem:[%s2 + $0x410] sm:$0xff]
        %v6506 = vld [vmem:[%s2 + $0x418] sm:$0xff]
        %v6507 = vld [vmem:[%s2 + $0x420] sm:$0xff]
        %v6508 = vld [vmem:[%s2 + $0x428] sm:$0xff]
        %v6509 = vld [vmem:[%s2 + $0x430] sm:$0xff]
        %v6510 = vld [vmem:[%s2 + $0x438] sm:$0xff]
        %v6511 = vld [vmem:[%s2 + $0x440] sm:$0xff]
        %v6512 = vld [vmem:[%s2 + $0x448] sm:$0xff]
        %v6513 = vld [vmem:[%s2 + $0x450] sm:$0xff]
        %v6514 = vld [vmem:[%s2 + $0x458] sm:$0xff]
        %v6515 = vld [vmem:[%s2 + $0x460] sm:$0xff]
        %v6516 = vld [vmem:[%s2 + $0x468] sm:$0xff]
        %v6517 = vld [vmem:[%s2 + $0x470] sm:$0xff]
        %v6518 = vld [vmem:[%s2 + $0x478] sm:$0xff]
        %v6519 = vld [vmem:[%s2 + $0x480] sm:$0xff]
        %v6520 = vld [vmem:[%s2 + $0x488] sm:$0xff]
        %v6521 = vld [vmem:[%s2 + $0x490] sm:$0xff]
        %v6522 = vld [vmem:[%s2 + $0x498] sm:$0xff]
        %v6523 = vld [vmem:[%s2 + $0x4a0] sm:$0xff]
        %v6524 = vld [vmem:[%s2 + $0x4a8] sm:$0xff]
        %v6525 = vld [vmem:[%s2 + $0x4b0] sm:$0xff]
        %v6526 = vld [vmem:[%s2 + $0x4b8] sm:$0xff]
        %v6527 = vld [vmem:[%s2 + $0x4c0] sm:$0xff]
        %v6528 = vld [vmem:[%s2 + $0x4c8] sm:$0xff]
        %v6529 = vld [vmem:[%s2 + $0x4d0] sm:$0xff]
        %v6530 = vld [vmem:[%s2 + $0x4d8] sm:$0xff]
        %v6531 = vld [vmem:[%s2 + $0x4e0] sm:$0xff]
        %v6532 = vld [vmem:[%s2 + $0x4e8] sm:$0xff]
        %v6533 = vld [vmem:[%s2 + $0x4f0] sm:$0xff]
        %v6534 = vld [vmem:[%s2 + $0x4f8] sm:$0xff]
        %v6535 = vld [vmem:[%s2 + $0x500] sm:$0xff]
        %v6536 = vld [vmem:[%s2 + $0x508] sm:$0xff]
        %v6537 = vld [vmem:[%s2 + $0x510] sm:$0xff]
        %v6538 = vld [vmem:[%s2 + $0x518] sm:$0xff]
        %v6539 = vld [vmem:[%s2 + $0x520] sm:$0xff]
        %v6540 = vld [vmem:[%s2 + $0x528] sm:$0xff]
        %v6541 = vld [vmem:[%s2 + $0x530] sm:$0xff]
        %v6542 = vld [vmem:[%s2 + $0x538] sm:$0xff]
        %v6543 = vld [vmem:[%s2 + $0x540] sm:$0xff]
        %v6544 = vld [vmem:[%s2 + $0x548] sm:$0xff]
        %v6545 = vld [vmem:[%s2 + $0x550] sm:$0xff]
        %v6546 = vld [vmem:[%s2 + $0x558] sm:$0xff]
        %v6547 = vld [vmem:[%s2 + $0x560] sm:$0xff]
        %v6548 = vld [vmem:[%s2 + $0x568] sm:$0xff]
        %v6549 = vld [vmem:[%s2 + $0x570] sm:$0xff]
        %v6550 = vld [vmem:[%s2 + $0x578] sm:$0xff]
        %v6551 = vld [vmem:[%s2 + $0x580] sm:$0xff]
        %v6552 = vld [vmem:[%s2 + $0x588] sm:$0xff]
        %v6553 = vld [vmem:[%s2 + $0x590] sm:$0xff]
        %v6554 = vld [vmem:[%s2 + $0x598] sm:$0xff]
        %v6555 = vld [vmem:[%s2 + $0x5a0] sm:$0xff]
        %v6556 = vld [vmem:[%s2 + $0x5a8] sm:$0xff]
        %v6557 = vld [vmem:[%s2 + $0x5b0] sm:$0xff]
        %v6558 = vld [vmem:[%s2 + $0x5b8] sm:$0xff]
        %v6559 = vld [vmem:[%s2 + $0x5c0] sm:$0xff]
        %v6560 = vld [vmem:[%s2 + $0x5c8] sm:$0xff]
        %v6561 = vld [vmem:[%s2 + $0x5d0] sm:$0xff]
        %v6562 = vld [vmem:[%s2 + $0x5d8] sm:$0xff]
        %v6563 = vld [vmem:[%s2 + $0x5e0] sm:$0xff]
        %v6564 = vld [vmem:[%s2 + $0x5e8] sm:$0xff]
        %v6565 = vld [vmem:[%s2 + $0x5f0] sm:$0xff]
        %v6566 = vld [vmem:[%s2 + $0x5f8] sm:$0xff]
        %v6567 = vld [vmem:[%s2 + $0x600] sm:$0xff]
        %v6568 = vld [vmem:[%s2 + $0x608] sm:$0xff]
        %v6569 = vld [vmem:[%s2 + $0x610] sm:$0xff]
        %v6570 = vld [vmem:[%s2 + $0x618] sm:$0xff]
        %v6571 = vld [vmem:[%s2 + $0x620] sm:$0xff]
        %v6572 = vld [vmem:[%s2 + $0x628] sm:$0xff]
        %v6573 = vld [vmem:[%s2 + $0x630] sm:$0xff]
        %v6574 = vld [vmem:[%s2 + $0x638] sm:$0xff]
        %v6575 = vld [vmem:[%s2 + $0x640] sm:$0xff]
        %v6576 = vld [vmem:[%s2 + $0x648] sm:$0xff]
        %v6577 = vld [vmem:[%s2 + $0x650] sm:$0xff]
        %v6578 = vld [vmem:[%s2 + $0x658] sm:$0xff]
        %v6579 = vld [vmem:[%s2 + $0x660] sm:$0xff]
        %v6580 = vld [vmem:[%s2 + $0x668] sm:$0xff]
        %v6581 = vld [vmem:[%s2 + $0x670] sm:$0xff]
        %v6582 = vld [vmem:[%s2 + $0x678] sm:$0xff]
        %v6583 = vld [vmem:[%s2 + $0x680] sm:$0xff]
        %v6584 = vld [vmem:[%s2 + $0x688] sm:$0xff]
        %v6585 = vld [vmem:[%s2 + $0x690] sm:$0xff]
        %v6586 = vld [vmem:[%s2 + $0x698] sm:$0xff]
        %v6587 = vld [vmem:[%s2 + $0x6a0] sm:$0xff]
        %v6588 = vld [vmem:[%s2 + $0x6a8] sm:$0xff]
        %v6589 = vld [vmem:[%s2 + $0x6b0] sm:$0xff]
        %v6590 = vld [vmem:[%s2 + $0x6b8] sm:$0xff]
        %v6591 = vld [vmem:[%s2 + $0x6c0] sm:$0xff]
        %v6592 = vld [vmem:[%s2 + $0x6c8] sm:$0xff]
        %v6593 = vld [vmem:[%s2 + $0x6d0] sm:$0xff]
        %v6594 = vld [vmem:[%s2 + $0x6d8] sm:$0xff]
        %v6595 = vld [vmem:[%s2 + $0x6e0] sm:$0xff]
        %v6596 = vld [vmem:[%s2 + $0x6e8] sm:$0xff]
        %v6597 = vld [vmem:[%s2 + $0x6f0] sm:$0xff]
        %v6598 = vld [vmem:[%s2 + $0x6f8] sm:$0xff]
        %v6599 = vld [vmem:[%s2 + $0x700] sm:$0xff]
        %v6600 = vld [vmem:[%s2 + $0x708] sm:$0xff]
        %v6601 = vld [vmem:[%s2 + $0x710] sm:$0xff]
        %v6602 = vld [vmem:[%s2 + $0x718] sm:$0xff]
        %v6603 = vld [vmem:[%s2 + $0x720] sm:$0xff]
        %v6604 = vld [vmem:[%s2 + $0x728] sm:$0xff]
        %v6605 = vld [vmem:[%s2 + $0x730] sm:$0xff]
        %v6606 = vld [vmem:[%s2 + $0x738] sm:$0xff]
        %v6607 = vld [vmem:[%s2 + $0x740] sm:$0xff]
        %v6608 = vld [vmem:[%s2 + $0x748] sm:$0xff]
        %v6609 = vld [vmem:[%s2 + $0x750] sm:$0xff]
        %v6610 = vld [vmem:[%s2 + $0x758] sm:$0xff]
        %v6611 = vld [vmem:[%s2 + $0x760] sm:$0xff]
        %v6612 = vld [vmem:[%s2 + $0x768] sm:$0xff]
        %v6613 = vld [vmem:[%s2 + $0x770] sm:$0xff]
        %v6614 = vld [vmem:[%s2 + $0x778] sm:$0xff]
        %v6615 = vld [vmem:[%s2 + $0x780] sm:$0xff]
        %v6616 = vld [vmem:[%s2 + $0x788] sm:$0xff]
        %v6617 = vld [vmem:[%s2 + $0x790] sm:$0xff]
        %v6618 = vld [vmem:[%s2 + $0x798] sm:$0xff]
        %v6619 = vld [vmem:[%s2 + $0x7a0] sm:$0xff]
        %v6620 = vld [vmem:[%s2 + $0x7a8] sm:$0xff]
        %v6621 = vld [vmem:[%s2 + $0x7b0] sm:$0xff]
        %v6622 = vld [vmem:[%s2 + $0x7b8] sm:$0xff]
        %v6623 = vld [vmem:[%s2 + $0x7c0] sm:$0xff]
        %v6624 = vld [vmem:[%s2 + $0x7c8] sm:$0xff]
        %v6625 = vld [vmem:[%s2 + $0x7d0] sm:$0xff]
        %v6626 = vld [vmem:[%s2 + $0x7d8] sm:$0xff]
        %v6627 = vld [vmem:[%s2 + $0x7e0] sm:$0xff]
        %v6628 = vld [vmem:[%s2 + $0x7e8] sm:$0xff]
        %v6629 = vld [vmem:[%s2 + $0x7f0] sm:$0xff]
        %v6630 = vld [vmem:[%s2 + $0x7f8] sm:$0xff]
        %v6631 = vld [vmem:[%s2 + $0x800] sm:$0xff]
        %v6632 = vld [vmem:[%s2 + $0x808] sm:$0xff]
        %v6633 = vld [vmem:[%s2 + $0x810] sm:$0xff]
        %v6634 = vld [vmem:[%s2 + $0x818] sm:$0xff]
        %v6635 = vld [vmem:[%s2 + $0x820] sm:$0xff]
        %v6636 = vld [vmem:[%s2 + $0x828] sm:$0xff]
        %v6637 = vld [vmem:[%s2 + $0x830] sm:$0xff]
        %v6638 = vld [vmem:[%s2 + $0x838] sm:$0xff]
        %v6639 = vld [vmem:[%s2 + $0x840] sm:$0xff]
        %v6640 = vld [vmem:[%s2 + $0x848] sm:$0xff]
        %v6641 = vld [vmem:[%s2 + $0x850] sm:$0xff]
        %v6642 = vld [vmem:[%s2 + $0x858] sm:$0xff]
        %v6643 = vld [vmem:[%s2 + $0x860] sm:$0xff]
        %v6644 = vld [vmem:[%s2 + $0x868] sm:$0xff]
        %v6645 = vld [vmem:[%s2 + $0x870] sm:$0xff]
        %v6646 = vld [vmem:[%s2 + $0x878] sm:$0xff]
        %v6647 = vld [vmem:[%s2 + $0x880] sm:$0xff]
        %v6648 = vld [vmem:[%s2 + $0x888] sm:$0xff]
        %v6649 = vld [vmem:[%s2 + $0x890] sm:$0xff]
        %v6650 = vld [vmem:[%s2 + $0x898] sm:$0xff]
        %v6651 = vld [vmem:[%s2 + $0x8a0] sm:$0xff]
        %v6652 = vld [vmem:[%s2 + $0x8a8] sm:$0xff]
        %v6653 = vld [vmem:[%s2 + $0x8b0] sm:$0xff]
        %v6654 = vld [vmem:[%s2 + $0x8b8] sm:$0xff]
        %v6655 = vld [vmem:[%s2 + $0x8c0] sm:$0xff]
        %v6656 = vld [vmem:[%s2 + $0x8c8] sm:$0xff]
        %v6657 = vld [vmem:[%s2 + $0x8d0] sm:$0xff]
        %v6658 = vld [vmem:[%s2 + $0x8d8] sm:$0xff]
        %v6659 = vld [vmem:[%s2 + $0x8e0] sm:$0xff]
        %v6660 = vld [vmem:[%s2 + $0x8e8] sm:$0xff]
        %v6661 = vld [vmem:[%s2 + $0x8f0] sm:$0xff]
        %v6662 = vld [vmem:[%s2 + $0x8f8] sm:$0xff]
        %v6679 = vunpack.c.l.b16 %v6345
        %v6680 = vunpack.c.h.b16 %v6345
        %v6681 = vunpack.c.l.b16 %v6343
        %v6682 = vunpack.c.h.b16 %v6343
        %v6683 = vunpack.c.l.b16 %v6347
        %v6684 = vunpack.c.h.b16 %v6347
        %v6685 = vunpack.c.l.b16 %v6349
        %v6686 = vunpack.c.h.b16 %v6349
        %v6687 = vunpack.c.l.b16 %v6351
        %v6688 = vunpack.c.h.b16 %v6351
        %v6689 = vunpack.c.l.b16 %v6353
        %v6690 = vunpack.c.h.b16 %v6353
        %v6691 = vunpack.c.l.b16 %v6355
        %v6692 = vunpack.c.h.b16 %v6355
        %v6693 = vunpack.c.l.b16 %v6357
        %v6694 = vunpack.c.h.b16 %v6357
        %v6695 = vunpack.c.l.b16 %v6359
        %v6696 = vunpack.c.h.b16 %v6359
        %v6697 = vunpack.c.l.b16 %v6361
        %v6698 = vunpack.c.h.b16 %v6361
        %v6699 = vunpack.c.l.b16 %v6363
        %v6700 = vunpack.c.h.b16 %v6363
        %v6701 = vunpack.c.l.b16 %v6365
        %v6702 = vunpack.c.h.b16 %v6365
        %v6703 = vunpack.c.l.b16 %v6367
        %v6704 = vunpack.c.h.b16 %v6367
        %v6705 = vunpack.c.l.b16 %v6369
        %v6706 = vunpack.c.h.b16 %v6369
        %v6707 = vunpack.c.l.b16 %v6371
        %v6708 = vunpack.c.h.b16 %v6371
        %v6709 = vunpack.c.l.b16 %v6373
        %v6710 = vunpack.c.h.b16 %v6373
        %v6711 = vpack.c.b16 %v6679, %v6679
        %v6712 = vpack.c.b16 %v6680, %v6680
        %v6713 = vpack.c.b16 %v6681, %v6681
        %v6714 = vpack.c.b16 %v6682, %v6682
        %v6715 = vpack.c.b16 %v6683, %v6683
        %v6716 = vpack.c.b16 %v6684, %v6684
        %v6717 = vpack.c.b16 %v6685, %v6685
        %v6718 = vpack.c.b16 %v6686, %v6686
        %v6719 = vpack.c.b16 %v6687, %v6687
        %v6720 = vpack.c.b16 %v6688, %v6688
        %v6721 = vpack.c.b16 %v6689, %v6689
        %v6722 = vpack.c.b16 %v6690, %v6690
        %v6723 = vpack.c.b16 %v6691, %v6691
        %v6724 = vpack.c.b16 %v6692, %v6692
        %v6725 = vpack.c.b16 %v6693, %v6693
        %v6726 = vpack.c.b16 %v6694, %v6694
        %v6727 = vpack.c.b16 %v6695, %v6695
        %v6728 = vpack.c.b16 %v6696, %v6696
        %v6729 = vpack.c.b16 %v6697, %v6697
        %v6730 = vpack.c.b16 %v6698, %v6698
        %v6731 = vpack.c.b16 %v6699, %v6699
        %v6732 = vpack.c.b16 %v6700, %v6700
        %v6733 = vpack.c.b16 %v6701, %v6701
        %v6734 = vpack.c.b16 %v6702, %v6702
        %v6735 = vpack.c.b16 %v6703, %v6703
        %v6736 = vpack.c.b16 %v6704, %v6704
        %v6737 = vpack.c.b16 %v6705, %v6705
        %v6738 = vpack.c.b16 %v6706, %v6706
        %v6739 = vpack.c.b16 %v6707, %v6707
        %v6740 = vpack.c.b16 %v6708, %v6708
        %v6741 = vpack.c.b16 %v6709, %v6709
        %v6742 = vpack.c.b16 %v6710, %v6710
        %v6744 = vshrl.u32 %v6711, 16
        %v6747 = vshrl.u32 %v6712, 16
        %v6750 = vshrl.u32 %v6713, 16
        %v6753 = vshrl.u32 %v6714, 16
        %v6756 = vshrl.u32 %v6715, 16
        %v6759 = vshrl.u32 %v6716, 16
        %v6762 = vshrl.u32 %v6717, 16
        %v6765 = vshrl.u32 %v6718, 16
        %v6768 = vshrl.u32 %v6719, 16
        %v6771 = vshrl.u32 %v6720, 16
        %v6774 = vshrl.u32 %v6721, 16
        %v6777 = vshrl.u32 %v6722, 16
        %v6780 = vshrl.u32 %v6723, 16
        %v6783 = vshrl.u32 %v6724, 16
        %v6786 = vshrl.u32 %v6725, 16
        %v6789 = vshrl.u32 %v6726, 16
        %v6792 = vshrl.u32 %v6727, 16
        %v6795 = vshrl.u32 %v6728, 16
        %v6798 = vshrl.u32 %v6729, 16
        %v6801 = vshrl.u32 %v6730, 16
        %v6804 = vshrl.u32 %v6731, 16
        %v6807 = vshrl.u32 %v6732, 16
        %v6810 = vshrl.u32 %v6733, 16
        %v6813 = vshrl.u32 %v6734, 16
        %v6816 = vshrl.u32 %v6735, 16
        %v6819 = vshrl.u32 %v6736, 16
        %v6822 = vshrl.u32 %v6737, 16
        %v6825 = vshrl.u32 %v6738, 16
        %v6828 = vshrl.u32 %v6739, 16
        %v6831 = vshrl.u32 %v6740, 16
        %v6834 = vshrl.u32 %v6741, 16
        %v6837 = vshrl.u32 %v6742, 16
        %v6887 = vunpack.c.l.b16 %v6346
        %v6888 = vunpack.c.h.b16 %v6346
        %v6889 = vunpack.c.l.b16 %v6344
        %v6890 = vunpack.c.h.b16 %v6344
        %v6891 = vunpack.c.l.b16 %v6348
        %v6892 = vunpack.c.h.b16 %v6348
        %v6893 = vunpack.c.l.b16 %v6350
        %v6894 = vunpack.c.h.b16 %v6350
        %v6895 = vunpack.c.l.b16 %v6352
        %v6896 = vunpack.c.h.b16 %v6352
        %v6897 = vunpack.c.l.b16 %v6354
        %v6898 = vunpack.c.h.b16 %v6354
        %v6899 = vunpack.c.l.b16 %v6356
        %v6900 = vunpack.c.h.b16 %v6356
        %v6901 = vunpack.c.l.b16 %v6358
        %v6902 = vunpack.c.h.b16 %v6358
        %v6903 = vunpack.c.l.b16 %v6360
        %v6904 = vunpack.c.h.b16 %v6360
        %v6905 = vunpack.c.l.b16 %v6362
        %v6906 = vunpack.c.h.b16 %v6362
        %v6907 = vunpack.c.l.b16 %v6364
        %v6908 = vunpack.c.h.b16 %v6364
        %v6909 = vunpack.c.l.b16 %v6366
        %v6910 = vunpack.c.h.b16 %v6366
        %v6911 = vunpack.c.l.b16 %v6368
        %v6912 = vunpack.c.h.b16 %v6368
        %v6913 = vunpack.c.l.b16 %v6370
        %v6914 = vunpack.c.h.b16 %v6370
        %v6915 = vunpack.c.l.b16 %v6372
        %v6916 = vunpack.c.h.b16 %v6372
        %v6917 = vunpack.c.l.b16 %v6374
        %v6918 = vunpack.c.h.b16 %v6374
        %v6919 = vpack.c.b16 %v6887, %v6679
        %v6920 = vpack.c.b16 %v6888, %v6680
        %v6921 = vpack.c.b16 %v6889, %v6681
        %v6922 = vpack.c.b16 %v6890, %v6682
        %v6923 = vpack.c.b16 %v6891, %v6683
        %v6924 = vpack.c.b16 %v6892, %v6684
        %v6925 = vpack.c.b16 %v6893, %v6685
        %v6926 = vpack.c.b16 %v6894, %v6686
        %v6927 = vpack.c.b16 %v6895, %v6687
        %v6928 = vpack.c.b16 %v6896, %v6688
        %v6929 = vpack.c.b16 %v6897, %v6689
        %v6930 = vpack.c.b16 %v6898, %v6690
        %v6931 = vpack.c.b16 %v6899, %v6691
        %v6932 = vpack.c.b16 %v6900, %v6692
        %v6933 = vpack.c.b16 %v6901, %v6693
        %v6934 = vpack.c.b16 %v6902, %v6694
        %v6935 = vpack.c.b16 %v6903, %v6695
        %v6936 = vpack.c.b16 %v6904, %v6696
        %v6937 = vpack.c.b16 %v6905, %v6697
        %v6938 = vpack.c.b16 %v6906, %v6698
        %v6939 = vpack.c.b16 %v6907, %v6699
        %v6940 = vpack.c.b16 %v6908, %v6700
        %v6941 = vpack.c.b16 %v6909, %v6701
        %v6942 = vpack.c.b16 %v6910, %v6702
        %v6943 = vpack.c.b16 %v6911, %v6703
        %v6944 = vpack.c.b16 %v6912, %v6704
        %v6945 = vpack.c.b16 %v6913, %v6705
        %v6946 = vpack.c.b16 %v6914, %v6706
        %v6947 = vpack.c.b16 %v6915, %v6707
        %v6948 = vpack.c.b16 %v6916, %v6708
        %v6949 = vpack.c.b16 %v6917, %v6709
        %v6950 = vpack.c.b16 %v6918, %v6710
        %v6952 = vshrl.u32 %v6919, 16
        %v6954 = vrot.slane %v6952, 7
        %v6955 = vshll.u32 %v6919, 16
        %v6957 = vor.u32 %v6954, %v6955
        %v6959 = vshrl.u32 %v6920, 16
        %v6961 = vrot.slane %v6959, 7
        %v6962 = vshll.u32 %v6920, 16
        %v6964 = vor.u32 %v6961, %v6962
        %v6966 = vshrl.u32 %v6921, 16
        %v6968 = vrot.slane %v6966, 7
        %v6969 = vshll.u32 %v6921, 16
        %v6971 = vor.u32 %v6968, %v6969
        %v6973 = vshrl.u32 %v6922, 16
        %v6975 = vrot.slane %v6973, 7
        %v6976 = vshll.u32 %v6922, 16
        %v6978 = vor.u32 %v6975, %v6976
        %v6980 = vshrl.u32 %v6923, 16
        %v6982 = vrot.slane %v6980, 7
        %v6983 = vshll.u32 %v6923, 16
        %v6985 = vor.u32 %v6982, %v6983
        %v6987 = vshrl.u32 %v6924, 16
        %v6989 = vrot.slane %v6987, 7
        %v6990 = vshll.u32 %v6924, 16
        %v6992 = vor.u32 %v6989, %v6990
        %v6994 = vshrl.u32 %v6925, 16
        %v6996 = vrot.slane %v6994, 7
        %v6997 = vshll.u32 %v6925, 16
        %v6999 = vor.u32 %v6996, %v6997
        %v7001 = vshrl.u32 %v6926, 16
        %v7003 = vrot.slane %v7001, 7
        %v7004 = vshll.u32 %v6926, 16
        %v7006 = vor.u32 %v7003, %v7004
        %v7008 = vshrl.u32 %v6927, 16
        %v7010 = vrot.slane %v7008, 7
        %v7011 = vshll.u32 %v6927, 16
        %v7013 = vor.u32 %v7010, %v7011
        %v7015 = vshrl.u32 %v6928, 16
        %v7017 = vrot.slane %v7015, 7
        %v7018 = vshll.u32 %v6928, 16
        %v7020 = vor.u32 %v7017, %v7018
        %v7022 = vshrl.u32 %v6929, 16
        %v7024 = vrot.slane %v7022, 7
        %v7025 = vshll.u32 %v6929, 16
        %v7027 = vor.u32 %v7024, %v7025
        %v7029 = vshrl.u32 %v6930, 16
        %v7031 = vrot.slane %v7029, 7
        %v7032 = vshll.u32 %v6930, 16
        %v7034 = vor.u32 %v7031, %v7032
        %v7036 = vshrl.u32 %v6931, 16
        %v7038 = vrot.slane %v7036, 7
        %v7039 = vshll.u32 %v6931, 16
        %v7041 = vor.u32 %v7038, %v7039
        %v7043 = vshrl.u32 %v6932, 16
        %v7045 = vrot.slane %v7043, 7
        %v7046 = vshll.u32 %v6932, 16
        %v7048 = vor.u32 %v7045, %v7046
        %v7050 = vshrl.u32 %v6933, 16
        %v7052 = vrot.slane %v7050, 7
        %v7053 = vshll.u32 %v6933, 16
        %v7055 = vor.u32 %v7052, %v7053
        %v7057 = vshrl.u32 %v6934, 16
        %v7059 = vrot.slane %v7057, 7
        %v7060 = vshll.u32 %v6934, 16
        %v7062 = vor.u32 %v7059, %v7060
        %v7064 = vshrl.u32 %v6935, 16
        %v7066 = vrot.slane %v7064, 7
        %v7067 = vshll.u32 %v6935, 16
        %v7069 = vor.u32 %v7066, %v7067
        %v7071 = vshrl.u32 %v6936, 16
        %v7073 = vrot.slane %v7071, 7
        %v7074 = vshll.u32 %v6936, 16
        %v7076 = vor.u32 %v7073, %v7074
        %v7078 = vshrl.u32 %v6937, 16
        %v7080 = vrot.slane %v7078, 7
        %v7081 = vshll.u32 %v6937, 16
        %v7083 = vor.u32 %v7080, %v7081
        %v7085 = vshrl.u32 %v6938, 16
        %v7087 = vrot.slane %v7085, 7
        %v7088 = vshll.u32 %v6938, 16
        %v7090 = vor.u32 %v7087, %v7088
        %v7092 = vshrl.u32 %v6939, 16
        %v7094 = vrot.slane %v7092, 7
        %v7095 = vshll.u32 %v6939, 16
        %v7097 = vor.u32 %v7094, %v7095
        %v7099 = vshrl.u32 %v6940, 16
        %v7101 = vrot.slane %v7099, 7
        %v7102 = vshll.u32 %v6940, 16
        %v7104 = vor.u32 %v7101, %v7102
        %v7106 = vshrl.u32 %v6941, 16
        %v7108 = vrot.slane %v7106, 7
        %v7109 = vshll.u32 %v6941, 16
        %v7111 = vor.u32 %v7108, %v7109
        %v7113 = vshrl.u32 %v6942, 16
        %v7115 = vrot.slane %v7113, 7
        %v7116 = vshll.u32 %v6942, 16
        %v7118 = vor.u32 %v7115, %v7116
        %v7120 = vshrl.u32 %v6943, 16
        %v7122 = vrot.slane %v7120, 7
        %v7123 = vshll.u32 %v6943, 16
        %v7125 = vor.u32 %v7122, %v7123
        %v7127 = vshrl.u32 %v6944, 16
        %v7129 = vrot.slane %v7127, 7
        %v7130 = vshll.u32 %v6944, 16
        %v7132 = vor.u32 %v7129, %v7130
        %v7134 = vshrl.u32 %v6945, 16
        %v7136 = vrot.slane %v7134, 7
        %v7137 = vshll.u32 %v6945, 16
        %v7139 = vor.u32 %v7136, %v7137
        %v7141 = vshrl.u32 %v6946, 16
        %v7143 = vrot.slane %v7141, 7
        %v7144 = vshll.u32 %v6946, 16
        %v7146 = vor.u32 %v7143, %v7144
        %v7148 = vshrl.u32 %v6947, 16
        %v7150 = vrot.slane %v7148, 7
        %v7151 = vshll.u32 %v6947, 16
        %v7153 = vor.u32 %v7150, %v7151
        %v7155 = vshrl.u32 %v6948, 16
        %v7157 = vrot.slane %v7155, 7
        %v7158 = vshll.u32 %v6948, 16
        %v7160 = vor.u32 %v7157, %v7158
        %v7162 = vshrl.u32 %v6949, 16
        %v7164 = vrot.slane %v7162, 7
        %v7165 = vshll.u32 %v6949, 16
        %v7167 = vor.u32 %v7164, %v7165
        %v7169 = vshrl.u32 %v6950, 16
        %v7171 = vrot.slane %v7169, 7
        %v7172 = vshll.u32 %v6950, 16
        %v7174 = vor.u32 %v7171, %v7172
        %v7207 = vsel %vm779, %v6744, %v6957
        %v7208 = vsel %vm779, %v6747, %v6964
        %v7209 = vsel %vm779, %v6750, %v6971
        %v7210 = vsel %vm779, %v6753, %v6978
        %v7211 = vsel %vm779, %v6756, %v6985
        %v7212 = vsel %vm779, %v6759, %v6992
        %v7213 = vsel %vm779, %v6762, %v6999
        %v7214 = vsel %vm779, %v6765, %v7006
        %v7215 = vsel %vm779, %v6768, %v7013
        %v7216 = vsel %vm779, %v6771, %v7020
        %v7217 = vsel %vm779, %v6774, %v7027
        %v7218 = vsel %vm779, %v6777, %v7034
        %v7219 = vsel %vm779, %v6780, %v7041
        %v7220 = vsel %vm779, %v6783, %v7048
        %v7221 = vsel %vm779, %v6786, %v7055
        %v7222 = vsel %vm779, %v6789, %v7062
        %v7223 = vsel %vm779, %v6792, %v7069
        %v7224 = vsel %vm779, %v6795, %v7076
        %v7225 = vsel %vm779, %v6798, %v7083
        %v7226 = vsel %vm779, %v6801, %v7090
        %v7227 = vsel %vm779, %v6804, %v7097
        %v7228 = vsel %vm779, %v6807, %v7104
        %v7229 = vsel %vm779, %v6810, %v7111
        %v7230 = vsel %vm779, %v6813, %v7118
        %v7231 = vsel %vm779, %v6816, %v7125
        %v7232 = vsel %vm779, %v6819, %v7132
        %v7233 = vsel %vm779, %v6822, %v7139
        %v7234 = vsel %vm779, %v6825, %v7146
        %v7235 = vsel %vm779, %v6828, %v7153
        %v7236 = vsel %vm779, %v6831, %v7160
        %v7237 = vsel %vm779, %v6834, %v7167
        %v7238 = vsel %vm779, %v6837, %v7174
        %v7239 = vrot.slane %v6955, 1
        %v7240 = vor.u32 %v6952, %v7239
        %v7241 = vrot.slane %v6962, 1
        %v7242 = vor.u32 %v6959, %v7241
        %v7243 = vrot.slane %v6969, 1
        %v7244 = vor.u32 %v6966, %v7243
        %v7245 = vrot.slane %v6976, 1
        %v7246 = vor.u32 %v6973, %v7245
        %v7247 = vrot.slane %v6983, 1
        %v7248 = vor.u32 %v6980, %v7247
        %v7249 = vrot.slane %v6990, 1
        %v7250 = vor.u32 %v6987, %v7249
        %v7251 = vrot.slane %v6997, 1
        %v7252 = vor.u32 %v6994, %v7251
        %v7253 = vrot.slane %v7004, 1
        %v7254 = vor.u32 %v7001, %v7253
        %v7255 = vrot.slane %v7011, 1
        %v7256 = vor.u32 %v7008, %v7255
        %v7257 = vrot.slane %v7018, 1
        %v7258 = vor.u32 %v7015, %v7257
        %v7259 = vrot.slane %v7025, 1
        %v7260 = vor.u32 %v7022, %v7259
        %v7261 = vrot.slane %v7032, 1
        %v7262 = vor.u32 %v7029, %v7261
        %v7263 = vrot.slane %v7039, 1
        %v7264 = vor.u32 %v7036, %v7263
        %v7265 = vrot.slane %v7046, 1
        %v7266 = vor.u32 %v7043, %v7265
        %v7267 = vrot.slane %v7053, 1
        %v7268 = vor.u32 %v7050, %v7267
        %v7269 = vrot.slane %v7060, 1
        %v7270 = vor.u32 %v7057, %v7269
        %v7271 = vrot.slane %v7067, 1
        %v7272 = vor.u32 %v7064, %v7271
        %v7273 = vrot.slane %v7074, 1
        %v7274 = vor.u32 %v7071, %v7273
        %v7275 = vrot.slane %v7081, 1
        %v7276 = vor.u32 %v7078, %v7275
        %v7277 = vrot.slane %v7088, 1
        %v7278 = vor.u32 %v7085, %v7277
        %v7279 = vrot.slane %v7095, 1
        %v7280 = vor.u32 %v7092, %v7279
        %v7281 = vrot.slane %v7102, 1
        %v7282 = vor.u32 %v7099, %v7281
        %v7283 = vrot.slane %v7109, 1
        %v7284 = vor.u32 %v7106, %v7283
        %v7285 = vrot.slane %v7116, 1
        %v7286 = vor.u32 %v7113, %v7285
        %v7287 = vrot.slane %v7123, 1
        %v7288 = vor.u32 %v7120, %v7287
        %v7289 = vrot.slane %v7130, 1
        %v7290 = vor.u32 %v7127, %v7289
        %v7291 = vrot.slane %v7137, 1
        %v7292 = vor.u32 %v7134, %v7291
        %v7293 = vrot.slane %v7144, 1
        %v7294 = vor.u32 %v7141, %v7293
        %v7295 = vrot.slane %v7151, 1
        %v7296 = vor.u32 %v7148, %v7295
        %v7297 = vrot.slane %v7158, 1
        %v7298 = vor.u32 %v7155, %v7297
        %v7299 = vrot.slane %v7165, 1
        %v7300 = vor.u32 %v7162, %v7299
        %v7301 = vrot.slane %v7172, 1
        %v7302 = vor.u32 %v7169, %v7301
        %v7335 = vpack.c.b16 %v6887, %v6887
        %v7336 = vpack.c.b16 %v6888, %v6888
        %v7337 = vpack.c.b16 %v6889, %v6889
        %v7338 = vpack.c.b16 %v6890, %v6890
        %v7339 = vpack.c.b16 %v6891, %v6891
        %v7340 = vpack.c.b16 %v6892, %v6892
        %v7341 = vpack.c.b16 %v6893, %v6893
        %v7342 = vpack.c.b16 %v6894, %v6894
        %v7343 = vpack.c.b16 %v6895, %v6895
        %v7344 = vpack.c.b16 %v6896, %v6896
        %v7345 = vpack.c.b16 %v6897, %v6897
        %v7346 = vpack.c.b16 %v6898, %v6898
        %v7347 = vpack.c.b16 %v6899, %v6899
        %v7348 = vpack.c.b16 %v6900, %v6900
        %v7349 = vpack.c.b16 %v6901, %v6901
        %v7350 = vpack.c.b16 %v6902, %v6902
        %v7351 = vpack.c.b16 %v6903, %v6903
        %v7352 = vpack.c.b16 %v6904, %v6904
        %v7353 = vpack.c.b16 %v6905, %v6905
        %v7354 = vpack.c.b16 %v6906, %v6906
        %v7355 = vpack.c.b16 %v6907, %v6907
        %v7356 = vpack.c.b16 %v6908, %v6908
        %v7357 = vpack.c.b16 %v6909, %v6909
        %v7358 = vpack.c.b16 %v6910, %v6910
        %v7359 = vpack.c.b16 %v6911, %v6911
        %v7360 = vpack.c.b16 %v6912, %v6912
        %v7361 = vpack.c.b16 %v6913, %v6913
        %v7362 = vpack.c.b16 %v6914, %v6914
        %v7363 = vpack.c.b16 %v6915, %v6915
        %v7364 = vpack.c.b16 %v6916, %v6916
        %v7365 = vpack.c.b16 %v6917, %v6917
        %v7366 = vpack.c.b16 %v6918, %v6918
        %v7368 = vshll.u32 %v7335, 16
        %v7370 = vrot.slane %v7368, 4
        %v7372 = vshll.u32 %v7336, 16
        %v7374 = vrot.slane %v7372, 4
        %v7376 = vshll.u32 %v7337, 16
        %v7378 = vrot.slane %v7376, 4
        %v7380 = vshll.u32 %v7338, 16
        %v7382 = vrot.slane %v7380, 4
        %v7384 = vshll.u32 %v7339, 16
        %v7386 = vrot.slane %v7384, 4
        %v7388 = vshll.u32 %v7340, 16
        %v7390 = vrot.slane %v7388, 4
        %v7392 = vshll.u32 %v7341, 16
        %v7394 = vrot.slane %v7392, 4
        %v7396 = vshll.u32 %v7342, 16
        %v7398 = vrot.slane %v7396, 4
        %v7400 = vshll.u32 %v7343, 16
        %v7402 = vrot.slane %v7400, 4
        %v7404 = vshll.u32 %v7344, 16
        %v7406 = vrot.slane %v7404, 4
        %v7408 = vshll.u32 %v7345, 16
        %v7410 = vrot.slane %v7408, 4
        %v7412 = vshll.u32 %v7346, 16
        %v7414 = vrot.slane %v7412, 4
        %v7416 = vshll.u32 %v7347, 16
        %v7418 = vrot.slane %v7416, 4
        %v7420 = vshll.u32 %v7348, 16
        %v7422 = vrot.slane %v7420, 4
        %v7424 = vshll.u32 %v7349, 16
        %v7426 = vrot.slane %v7424, 4
        %v7428 = vshll.u32 %v7350, 16
        %v7430 = vrot.slane %v7428, 4
        %v7432 = vshll.u32 %v7351, 16
        %v7434 = vrot.slane %v7432, 4
        %v7436 = vshll.u32 %v7352, 16
        %v7438 = vrot.slane %v7436, 4
        %v7440 = vshll.u32 %v7353, 16
        %v7442 = vrot.slane %v7440, 4
        %v7444 = vshll.u32 %v7354, 16
        %v7446 = vrot.slane %v7444, 4
        %v7448 = vshll.u32 %v7355, 16
        %v7450 = vrot.slane %v7448, 4
        %v7452 = vshll.u32 %v7356, 16
        %v7454 = vrot.slane %v7452, 4
        %v7456 = vshll.u32 %v7357, 16
        %v7458 = vrot.slane %v7456, 4
        %v7460 = vshll.u32 %v7358, 16
        %v7462 = vrot.slane %v7460, 4
        %v7464 = vshll.u32 %v7359, 16
        %v7466 = vrot.slane %v7464, 4
        %v7468 = vshll.u32 %v7360, 16
        %v7470 = vrot.slane %v7468, 4
        %v7472 = vshll.u32 %v7361, 16
        %v7474 = vrot.slane %v7472, 4
        %v7476 = vshll.u32 %v7362, 16
        %v7478 = vrot.slane %v7476, 4
        %v7480 = vshll.u32 %v7363, 16
        %v7482 = vrot.slane %v7480, 4
        %v7484 = vshll.u32 %v7364, 16
        %v7486 = vrot.slane %v7484, 4
        %v7488 = vshll.u32 %v7365, 16
        %v7490 = vrot.slane %v7488, 4
        %v7492 = vshll.u32 %v7366, 16
        %v7494 = vrot.slane %v7492, 4
        %v7527 = vsel %vm1200, %v7240, %v7370
        %v7528 = vsel %vm1200, %v7242, %v7374
        %v7529 = vsel %vm1200, %v7244, %v7378
        %v7530 = vsel %vm1200, %v7246, %v7382
        %v7531 = vsel %vm1200, %v7248, %v7386
        %v7532 = vsel %vm1200, %v7250, %v7390
        %v7533 = vsel %vm1200, %v7252, %v7394
        %v7534 = vsel %vm1200, %v7254, %v7398
        %v7535 = vsel %vm1200, %v7256, %v7402
        %v7536 = vsel %vm1200, %v7258, %v7406
        %v7537 = vsel %vm1200, %v7260, %v7410
        %v7538 = vsel %vm1200, %v7262, %v7414
        %v7539 = vsel %vm1200, %v7264, %v7418
        %v7540 = vsel %vm1200, %v7266, %v7422
        %v7541 = vsel %vm1200, %v7268, %v7426
        %v7542 = vsel %vm1200, %v7270, %v7430
        %v7543 = vsel %vm1200, %v7272, %v7434
        %v7544 = vsel %vm1200, %v7274, %v7438
        %v7545 = vsel %vm1200, %v7276, %v7442
        %v7546 = vsel %vm1200, %v7278, %v7446
        %v7547 = vsel %vm1200, %v7280, %v7450
        %v7548 = vsel %vm1200, %v7282, %v7454
        %v7549 = vsel %vm1200, %v7284, %v7458
        %v7550 = vsel %vm1200, %v7286, %v7462
        %v7551 = vsel %vm1200, %v7288, %v7466
        %v7552 = vsel %vm1200, %v7290, %v7470
        %v7553 = vsel %vm1200, %v7292, %v7474
        %v7554 = vsel %vm1200, %v7294, %v7478
        %v7555 = vsel %vm1200, %v7296, %v7482
        %v7556 = vsel %vm1200, %v7298, %v7486
        %v7557 = vsel %vm1200, %v7300, %v7490
        %v7558 = vsel %vm1200, %v7302, %v7494
        %v7879 = vunpack.c.l.b16 %v6375
        %v7880 = vunpack.c.h.b16 %v6375
        %v7881 = vunpack.c.l.b16 %v6376
        %v7882 = vunpack.c.h.b16 %v6376
        %v7883 = vunpack.c.l.b16 %v6377
        %v7884 = vunpack.c.h.b16 %v6377
        %v7885 = vunpack.c.l.b16 %v6378
        %v7886 = vunpack.c.h.b16 %v6378
        %v7887 = vunpack.c.l.b16 %v6379
        %v7888 = vunpack.c.h.b16 %v6379
        %v7889 = vunpack.c.l.b16 %v6380
        %v7890 = vunpack.c.h.b16 %v6380
        %v7891 = vunpack.c.l.b16 %v6381
        %v7892 = vunpack.c.h.b16 %v6381
        %v7893 = vunpack.c.l.b16 %v6382
        %v7894 = vunpack.c.h.b16 %v6382
        %v7895 = vunpack.c.l.b16 %v6383
        %v7896 = vunpack.c.h.b16 %v6383
        %v7897 = vunpack.c.l.b16 %v6384
        %v7898 = vunpack.c.h.b16 %v6384
        %v7899 = vunpack.c.l.b16 %v6385
        %v7900 = vunpack.c.h.b16 %v6385
        %v7901 = vunpack.c.l.b16 %v6386
        %v7902 = vunpack.c.h.b16 %v6386
        %v7903 = vunpack.c.l.b16 %v6387
        %v7904 = vunpack.c.h.b16 %v6387
        %v7905 = vunpack.c.l.b16 %v6388
        %v7906 = vunpack.c.h.b16 %v6388
        %v7907 = vunpack.c.l.b16 %v6389
        %v7908 = vunpack.c.h.b16 %v6389
        %v7909 = vunpack.c.l.b16 %v6390
        %v7910 = vunpack.c.h.b16 %v6390
        %v7911 = vunpack.c.l.b16 %v6391
        %v7912 = vunpack.c.h.b16 %v6391
        %v7913 = vunpack.c.l.b16 %v6392
        %v7914 = vunpack.c.h.b16 %v6392
        %v7915 = vunpack.c.l.b16 %v6393
        %v7916 = vunpack.c.h.b16 %v6393
        %v7917 = vunpack.c.l.b16 %v6394
        %v7918 = vunpack.c.h.b16 %v6394
        %v7919 = vunpack.c.l.b16 %v6395
        %v7920 = vunpack.c.h.b16 %v6395
        %v7921 = vunpack.c.l.b16 %v6396
        %v7922 = vunpack.c.h.b16 %v6396
        %v7923 = vunpack.c.l.b16 %v6397
        %v7924 = vunpack.c.h.b16 %v6397
        %v7925 = vunpack.c.l.b16 %v6398
        %v7926 = vunpack.c.h.b16 %v6398
        %v7927 = vunpack.c.l.b16 %v6399
        %v7928 = vunpack.c.h.b16 %v6399
        %v7929 = vunpack.c.l.b16 %v6400
        %v7930 = vunpack.c.h.b16 %v6400
        %v7931 = vunpack.c.l.b16 %v6401
        %v7932 = vunpack.c.h.b16 %v6401
        %v7933 = vunpack.c.l.b16 %v6402
        %v7934 = vunpack.c.h.b16 %v6402
        %v7935 = vunpack.c.l.b16 %v6403
        %v7936 = vunpack.c.h.b16 %v6403
        %v7937 = vunpack.c.l.b16 %v6404
        %v7938 = vunpack.c.h.b16 %v6404
        %v7939 = vunpack.c.l.b16 %v6405
        %v7940 = vunpack.c.h.b16 %v6405
        %v7941 = vunpack.c.l.b16 %v6406
        %v7942 = vunpack.c.h.b16 %v6406
        %v7943 = vunpack.c.l.b16 %v6407
        %v7944 = vunpack.c.h.b16 %v6407
        %v7945 = vunpack.c.l.b16 %v6408
        %v7946 = vunpack.c.h.b16 %v6408
        %v7947 = vunpack.c.l.b16 %v6409
        %v7948 = vunpack.c.h.b16 %v6409
        %v7949 = vunpack.c.l.b16 %v6410
        %v7950 = vunpack.c.h.b16 %v6410
        %v7951 = vunpack.c.l.b16 %v6411
        %v7952 = vunpack.c.h.b16 %v6411
        %v7953 = vunpack.c.l.b16 %v6412
        %v7954 = vunpack.c.h.b16 %v6412
        %v7955 = vunpack.c.l.b16 %v6413
        %v7956 = vunpack.c.h.b16 %v6413
        %v7957 = vunpack.c.l.b16 %v6414
        %v7958 = vunpack.c.h.b16 %v6414
        %v7959 = vunpack.c.l.b16 %v6415
        %v7960 = vunpack.c.h.b16 %v6415
        %v7961 = vunpack.c.l.b16 %v6416
        %v7962 = vunpack.c.h.b16 %v6416
        %v7963 = vunpack.c.l.b16 %v6417
        %v7964 = vunpack.c.h.b16 %v6417
        %v7965 = vunpack.c.l.b16 %v6418
        %v7966 = vunpack.c.h.b16 %v6418
        %v7967 = vunpack.c.l.b16 %v6419
        %v7968 = vunpack.c.h.b16 %v6419
        %v7969 = vunpack.c.l.b16 %v6420
        %v7970 = vunpack.c.h.b16 %v6420
        %v7971 = vunpack.c.l.b16 %v6421
        %v7972 = vunpack.c.h.b16 %v6421
        %v7973 = vunpack.c.l.b16 %v6422
        %v7974 = vunpack.c.h.b16 %v6422
        %v7975 = vunpack.c.l.b16 %v6423
        %v7976 = vunpack.c.h.b16 %v6423
        %v7977 = vunpack.c.l.b16 %v6424
        %v7978 = vunpack.c.h.b16 %v6424
        %v7979 = vunpack.c.l.b16 %v6425
        %v7980 = vunpack.c.h.b16 %v6425
        %v7981 = vunpack.c.l.b16 %v6426
        %v7982 = vunpack.c.h.b16 %v6426
        %v7983 = vunpack.c.l.b16 %v6427
        %v7984 = vunpack.c.h.b16 %v6427
        %v7985 = vunpack.c.l.b16 %v6428
        %v7986 = vunpack.c.h.b16 %v6428
        %v7987 = vunpack.c.l.b16 %v6429
        %v7988 = vunpack.c.h.b16 %v6429
        %v7989 = vunpack.c.l.b16 %v6430
        %v7990 = vunpack.c.h.b16 %v6430
        %v7991 = vunpack.c.l.b16 %v6431
        %v7992 = vunpack.c.h.b16 %v6431
        %v7993 = vunpack.c.l.b16 %v6432
        %v7994 = vunpack.c.h.b16 %v6432
        %v7995 = vunpack.c.l.b16 %v6433
        %v7996 = vunpack.c.h.b16 %v6433
        %v7997 = vunpack.c.l.b16 %v6434
        %v7998 = vunpack.c.h.b16 %v6434
        %v7999 = vunpack.c.l.b16 %v6435
        %v8000 = vunpack.c.h.b16 %v6435
        %v8001 = vunpack.c.l.b16 %v6436
        %v8002 = vunpack.c.h.b16 %v6436
        %v8003 = vunpack.c.l.b16 %v6437
        %v8004 = vunpack.c.h.b16 %v6437
        %v8005 = vunpack.c.l.b16 %v6438
        %v8006 = vunpack.c.h.b16 %v6438
        %v8007 = vunpack.c.l.b16 %v6439
        %v8008 = vunpack.c.h.b16 %v6439
        %v8009 = vunpack.c.l.b16 %v6440
        %v8010 = vunpack.c.h.b16 %v6440
        %v8011 = vunpack.c.l.b16 %v6441
        %v8012 = vunpack.c.h.b16 %v6441
        %v8013 = vunpack.c.l.b16 %v6442
        %v8014 = vunpack.c.h.b16 %v6442
        %v8015 = vunpack.c.l.b16 %v6443
        %v8016 = vunpack.c.h.b16 %v6443
        %v8017 = vunpack.c.l.b16 %v6444
        %v8018 = vunpack.c.h.b16 %v6444
        %v8019 = vunpack.c.l.b16 %v6445
        %v8020 = vunpack.c.h.b16 %v6445
        %v8021 = vunpack.c.l.b16 %v6446
        %v8022 = vunpack.c.h.b16 %v6446
        %v8023 = vunpack.c.l.b16 %v6447
        %v8024 = vunpack.c.h.b16 %v6447
        %v8025 = vunpack.c.l.b16 %v6448
        %v8026 = vunpack.c.h.b16 %v6448
        %v8027 = vunpack.c.l.b16 %v6449
        %v8028 = vunpack.c.h.b16 %v6449
        %v8029 = vunpack.c.l.b16 %v6450
        %v8030 = vunpack.c.h.b16 %v6450
        %v8031 = vunpack.c.l.b16 %v6451
        %v8032 = vunpack.c.h.b16 %v6451
        %v8033 = vunpack.c.l.b16 %v6452
        %v8034 = vunpack.c.h.b16 %v6452
        %v8035 = vunpack.c.l.b16 %v6453
        %v8036 = vunpack.c.h.b16 %v6453
        %v8037 = vunpack.c.l.b16 %v6454
        %v8038 = vunpack.c.h.b16 %v6454
        %v8039 = vunpack.c.l.b16 %v6455
        %v8040 = vunpack.c.h.b16 %v6455
        %v8041 = vunpack.c.l.b16 %v6456
        %v8042 = vunpack.c.h.b16 %v6456
        %v8043 = vunpack.c.l.b16 %v6457
        %v8044 = vunpack.c.h.b16 %v6457
        %v8045 = vunpack.c.l.b16 %v6458
        %v8046 = vunpack.c.h.b16 %v6458
        %v8047 = vunpack.c.l.b16 %v6459
        %v8048 = vunpack.c.h.b16 %v6459
        %v8049 = vunpack.c.l.b16 %v6460
        %v8050 = vunpack.c.h.b16 %v6460
        %v8051 = vunpack.c.l.b16 %v6461
        %v8052 = vunpack.c.h.b16 %v6461
        %v8053 = vunpack.c.l.b16 %v6462
        %v8054 = vunpack.c.h.b16 %v6462
        %v8055 = vunpack.c.l.b16 %v6463
        %v8056 = vunpack.c.h.b16 %v6463
        %v8057 = vunpack.c.l.b16 %v6464
        %v8058 = vunpack.c.h.b16 %v6464
        %v8059 = vunpack.c.l.b16 %v6465
        %v8060 = vunpack.c.h.b16 %v6465
        %v8061 = vunpack.c.l.b16 %v6466
        %v8062 = vunpack.c.h.b16 %v6466
        %v8063 = vunpack.c.l.b16 %v6467
        %v8064 = vunpack.c.h.b16 %v6467
        %v8065 = vunpack.c.l.b16 %v6468
        %v8066 = vunpack.c.h.b16 %v6468
        %v8067 = vunpack.c.l.b16 %v6469
        %v8068 = vunpack.c.h.b16 %v6469
        %v8069 = vunpack.c.l.b16 %v6470
        %v8070 = vunpack.c.h.b16 %v6470
        %v8071 = vunpack.c.l.b16 %v6471
        %v8072 = vunpack.c.h.b16 %v6471
        %v8073 = vunpack.c.l.b16 %v6472
        %v8074 = vunpack.c.h.b16 %v6472
        %v8075 = vunpack.c.l.b16 %v6473
        %v8076 = vunpack.c.h.b16 %v6473
        %v8077 = vunpack.c.l.b16 %v6474
        %v8078 = vunpack.c.h.b16 %v6474
        %v8079 = vunpack.c.l.b16 %v6475
        %v8080 = vunpack.c.h.b16 %v6475
        %v8081 = vunpack.c.l.b16 %v6476
        %v8082 = vunpack.c.h.b16 %v6476
        %v8083 = vunpack.c.l.b16 %v6477
        %v8084 = vunpack.c.h.b16 %v6477
        %v8085 = vunpack.c.l.b16 %v6478
        %v8086 = vunpack.c.h.b16 %v6478
        %v8087 = vunpack.c.l.b16 %v6479
        %v8088 = vunpack.c.h.b16 %v6479
        %v8089 = vunpack.c.l.b16 %v6480
        %v8090 = vunpack.c.h.b16 %v6480
        %v8091 = vunpack.c.l.b16 %v6481
        %v8092 = vunpack.c.h.b16 %v6481
        %v8093 = vunpack.c.l.b16 %v6482
        %v8094 = vunpack.c.h.b16 %v6482
        %v8095 = vunpack.c.l.b16 %v6483
        %v8096 = vunpack.c.h.b16 %v6483
        %v8097 = vunpack.c.l.b16 %v6484
        %v8098 = vunpack.c.h.b16 %v6484
        %v8099 = vunpack.c.l.b16 %v6485
        %v8100 = vunpack.c.h.b16 %v6485
        %v8101 = vunpack.c.l.b16 %v6486
        %v8102 = vunpack.c.h.b16 %v6486
        %v8103 = vunpack.c.l.b16 %v6487
        %v8104 = vunpack.c.h.b16 %v6487
        %v8105 = vunpack.c.l.b16 %v6488
        %v8106 = vunpack.c.h.b16 %v6488
        %v8107 = vunpack.c.l.b16 %v6489
        %v8108 = vunpack.c.h.b16 %v6489
        %v8109 = vunpack.c.l.b16 %v6490
        %v8110 = vunpack.c.h.b16 %v6490
        %v8111 = vunpack.c.l.b16 %v6491
        %v8112 = vunpack.c.h.b16 %v6491
        %v8113 = vunpack.c.l.b16 %v6492
        %v8114 = vunpack.c.h.b16 %v6492
        %v8115 = vunpack.c.l.b16 %v6493
        %v8116 = vunpack.c.h.b16 %v6493
        %v8117 = vunpack.c.l.b16 %v6494
        %v8118 = vunpack.c.h.b16 %v6494
        %v8119 = vunpack.c.l.b16 %v6495
        %v8120 = vunpack.c.h.b16 %v6495
        %v8121 = vunpack.c.l.b16 %v6496
        %v8122 = vunpack.c.h.b16 %v6496
        %v8123 = vunpack.c.l.b16 %v6497
        %v8124 = vunpack.c.h.b16 %v6497
        %v8125 = vunpack.c.l.b16 %v6498
        %v8126 = vunpack.c.h.b16 %v6498
        %v8127 = vunpack.c.l.b16 %v6499
        %v8128 = vunpack.c.h.b16 %v6499
        %v8129 = vunpack.c.l.b16 %v6500
        %v8130 = vunpack.c.h.b16 %v6500
        %v8131 = vunpack.c.l.b16 %v6501
        %v8132 = vunpack.c.h.b16 %v6501
        %v8133 = vunpack.c.l.b16 %v6502
        %v8134 = vunpack.c.h.b16 %v6502
        %v8135 = vunpack.c.l.b16 %v6503
        %v8136 = vunpack.c.h.b16 %v6503
        %v8137 = vunpack.c.l.b16 %v6504
        %v8138 = vunpack.c.h.b16 %v6504
        %v8139 = vunpack.c.l.b16 %v6505
        %v8140 = vunpack.c.h.b16 %v6505
        %v8141 = vunpack.c.l.b16 %v6506
        %v8142 = vunpack.c.h.b16 %v6506
        %v8143 = vunpack.c.l.b16 %v6507
        %v8144 = vunpack.c.h.b16 %v6507
        %v8145 = vunpack.c.l.b16 %v6508
        %v8146 = vunpack.c.h.b16 %v6508
        %v8147 = vunpack.c.l.b16 %v6509
        %v8148 = vunpack.c.h.b16 %v6509
        %v8149 = vunpack.c.l.b16 %v6510
        %v8150 = vunpack.c.h.b16 %v6510
        %v8151 = vunpack.c.l.b16 %v6511
        %v8152 = vunpack.c.h.b16 %v6511
        %v8153 = vunpack.c.l.b16 %v6512
        %v8154 = vunpack.c.h.b16 %v6512
        %v8155 = vunpack.c.l.b16 %v6513
        %v8156 = vunpack.c.h.b16 %v6513
        %v8157 = vunpack.c.l.b16 %v6514
        %v8158 = vunpack.c.h.b16 %v6514
        %v8159 = vunpack.c.l.b16 %v6515
        %v8160 = vunpack.c.h.b16 %v6515
        %v8161 = vunpack.c.l.b16 %v6516
        %v8162 = vunpack.c.h.b16 %v6516
        %v8163 = vunpack.c.l.b16 %v6517
        %v8164 = vunpack.c.h.b16 %v6517
        %v8165 = vunpack.c.l.b16 %v6518
        %v8166 = vunpack.c.h.b16 %v6518
        %v8167 = vunpack.c.l.b16 %v6519
        %v8168 = vunpack.c.h.b16 %v6519
        %v8169 = vunpack.c.l.b16 %v6520
        %v8170 = vunpack.c.h.b16 %v6520
        %v8171 = vunpack.c.l.b16 %v6521
        %v8172 = vunpack.c.h.b16 %v6521
        %v8173 = vunpack.c.l.b16 %v6522
        %v8174 = vunpack.c.h.b16 %v6522
        %v8175 = vunpack.c.l.b16 %v6523
        %v8176 = vunpack.c.h.b16 %v6523
        %v8177 = vunpack.c.l.b16 %v6524
        %v8178 = vunpack.c.h.b16 %v6524
        %v8179 = vunpack.c.l.b16 %v6525
        %v8180 = vunpack.c.h.b16 %v6525
        %v8181 = vunpack.c.l.b16 %v6526
        %v8182 = vunpack.c.h.b16 %v6526
        %v8183 = vunpack.c.l.b16 %v6527
        %v8184 = vunpack.c.h.b16 %v6527
        %v8185 = vunpack.c.l.b16 %v6528
        %v8186 = vunpack.c.h.b16 %v6528
        %v8187 = vunpack.c.l.b16 %v6529
        %v8188 = vunpack.c.h.b16 %v6529
        %v8189 = vunpack.c.l.b16 %v6530
        %v8190 = vunpack.c.h.b16 %v6530
        %v8191 = vunpack.c.l.b16 %v6531
        %v8192 = vunpack.c.h.b16 %v6531
        %v8193 = vunpack.c.l.b16 %v6532
        %v8194 = vunpack.c.h.b16 %v6532
        %v8195 = vunpack.c.l.b16 %v6533
        %v8196 = vunpack.c.h.b16 %v6533
        %v8197 = vunpack.c.l.b16 %v6534
        %v8198 = vunpack.c.h.b16 %v6534
        %v8199 = vunpack.c.l.b16 %v6535
        %v8200 = vunpack.c.h.b16 %v6535
        %v8201 = vunpack.c.l.b16 %v6536
        %v8202 = vunpack.c.h.b16 %v6536
        %v8203 = vunpack.c.l.b16 %v6537
        %v8204 = vunpack.c.h.b16 %v6537
        %v8205 = vunpack.c.l.b16 %v6538
        %v8206 = vunpack.c.h.b16 %v6538
        %v8207 = vunpack.c.l.b16 %v6539
        %v8208 = vunpack.c.h.b16 %v6539
        %v8209 = vunpack.c.l.b16 %v6540
        %v8210 = vunpack.c.h.b16 %v6540
        %v8211 = vunpack.c.l.b16 %v6541
        %v8212 = vunpack.c.h.b16 %v6541
        %v8213 = vunpack.c.l.b16 %v6542
        %v8214 = vunpack.c.h.b16 %v6542
        %v8215 = vunpack.c.l.b16 %v6543
        %v8216 = vunpack.c.h.b16 %v6543
        %v8217 = vunpack.c.l.b16 %v6544
        %v8218 = vunpack.c.h.b16 %v6544
        %v8219 = vunpack.c.l.b16 %v6545
        %v8220 = vunpack.c.h.b16 %v6545
        %v8221 = vunpack.c.l.b16 %v6546
        %v8222 = vunpack.c.h.b16 %v6546
        %v8223 = vunpack.c.l.b16 %v6547
        %v8224 = vunpack.c.h.b16 %v6547
        %v8225 = vunpack.c.l.b16 %v6548
        %v8226 = vunpack.c.h.b16 %v6548
        %v8227 = vunpack.c.l.b16 %v6549
        %v8228 = vunpack.c.h.b16 %v6549
        %v8229 = vunpack.c.l.b16 %v6550
        %v8230 = vunpack.c.h.b16 %v6550
        %v8231 = vunpack.c.l.b16 %v6551
        %v8232 = vunpack.c.h.b16 %v6551
        %v8233 = vunpack.c.l.b16 %v6552
        %v8234 = vunpack.c.h.b16 %v6552
        %v8235 = vunpack.c.l.b16 %v6553
        %v8236 = vunpack.c.h.b16 %v6553
        %v8237 = vunpack.c.l.b16 %v6554
        %v8238 = vunpack.c.h.b16 %v6554
        %v8239 = vunpack.c.l.b16 %v6555
        %v8240 = vunpack.c.h.b16 %v6555
        %v8241 = vunpack.c.l.b16 %v6556
        %v8242 = vunpack.c.h.b16 %v6556
        %v8243 = vunpack.c.l.b16 %v6557
        %v8244 = vunpack.c.h.b16 %v6557
        %v8245 = vunpack.c.l.b16 %v6558
        %v8246 = vunpack.c.h.b16 %v6558
        %v8247 = vunpack.c.l.b16 %v6559
        %v8248 = vunpack.c.h.b16 %v6559
        %v8249 = vunpack.c.l.b16 %v6560
        %v8250 = vunpack.c.h.b16 %v6560
        %v8251 = vunpack.c.l.b16 %v6561
        %v8252 = vunpack.c.h.b16 %v6561
        %v8253 = vunpack.c.l.b16 %v6562
        %v8254 = vunpack.c.h.b16 %v6562
        %v8255 = vunpack.c.l.b16 %v6563
        %v8256 = vunpack.c.h.b16 %v6563
        %v8257 = vunpack.c.l.b16 %v6564
        %v8258 = vunpack.c.h.b16 %v6564
        %v8259 = vunpack.c.l.b16 %v6565
        %v8260 = vunpack.c.h.b16 %v6565
        %v8261 = vunpack.c.l.b16 %v6566
        %v8262 = vunpack.c.h.b16 %v6566
        %v8263 = vunpack.c.l.b16 %v6567
        %v8264 = vunpack.c.h.b16 %v6567
        %v8265 = vunpack.c.l.b16 %v6568
        %v8266 = vunpack.c.h.b16 %v6568
        %v8267 = vunpack.c.l.b16 %v6569
        %v8268 = vunpack.c.h.b16 %v6569
        %v8269 = vunpack.c.l.b16 %v6570
        %v8270 = vunpack.c.h.b16 %v6570
        %v8271 = vunpack.c.l.b16 %v6571
        %v8272 = vunpack.c.h.b16 %v6571
        %v8273 = vunpack.c.l.b16 %v6572
        %v8274 = vunpack.c.h.b16 %v6572
        %v8275 = vunpack.c.l.b16 %v6573
        %v8276 = vunpack.c.h.b16 %v6573
        %v8277 = vunpack.c.l.b16 %v6574
        %v8278 = vunpack.c.h.b16 %v6574
        %v8279 = vunpack.c.l.b16 %v6575
        %v8280 = vunpack.c.h.b16 %v6575
        %v8281 = vunpack.c.l.b16 %v6576
        %v8282 = vunpack.c.h.b16 %v6576
        %v8283 = vunpack.c.l.b16 %v6577
        %v8284 = vunpack.c.h.b16 %v6577
        %v8285 = vunpack.c.l.b16 %v6578
        %v8286 = vunpack.c.h.b16 %v6578
        %v8287 = vunpack.c.l.b16 %v6579
        %v8288 = vunpack.c.h.b16 %v6579
        %v8289 = vunpack.c.l.b16 %v6580
        %v8290 = vunpack.c.h.b16 %v6580
        %v8291 = vunpack.c.l.b16 %v6581
        %v8292 = vunpack.c.h.b16 %v6581
        %v8293 = vunpack.c.l.b16 %v6582
        %v8294 = vunpack.c.h.b16 %v6582
        %v8295 = vunpack.c.l.b16 %v6583
        %v8296 = vunpack.c.h.b16 %v6583
        %v8297 = vunpack.c.l.b16 %v6584
        %v8298 = vunpack.c.h.b16 %v6584
        %v8299 = vunpack.c.l.b16 %v6585
        %v8300 = vunpack.c.h.b16 %v6585
        %v8301 = vunpack.c.l.b16 %v6586
        %v8302 = vunpack.c.h.b16 %v6586
        %v8303 = vunpack.c.l.b16 %v6587
        %v8304 = vunpack.c.h.b16 %v6587
        %v8305 = vunpack.c.l.b16 %v6588
        %v8306 = vunpack.c.h.b16 %v6588
        %v8307 = vunpack.c.l.b16 %v6589
        %v8308 = vunpack.c.h.b16 %v6589
        %v8309 = vunpack.c.l.b16 %v6590
        %v8310 = vunpack.c.h.b16 %v6590
        %v8311 = vunpack.c.l.b16 %v6591
        %v8312 = vunpack.c.h.b16 %v6591
        %v8313 = vunpack.c.l.b16 %v6592
        %v8314 = vunpack.c.h.b16 %v6592
        %v8315 = vunpack.c.l.b16 %v6593
        %v8316 = vunpack.c.h.b16 %v6593
        %v8317 = vunpack.c.l.b16 %v6594
        %v8318 = vunpack.c.h.b16 %v6594
        %v8319 = vunpack.c.l.b16 %v6595
        %v8320 = vunpack.c.h.b16 %v6595
        %v8321 = vunpack.c.l.b16 %v6596
        %v8322 = vunpack.c.h.b16 %v6596
        %v8323 = vunpack.c.l.b16 %v6597
        %v8324 = vunpack.c.h.b16 %v6597
        %v8325 = vunpack.c.l.b16 %v6598
        %v8326 = vunpack.c.h.b16 %v6598
        %v8327 = vunpack.c.l.b16 %v6599
        %v8328 = vunpack.c.h.b16 %v6599
        %v8329 = vunpack.c.l.b16 %v6600
        %v8330 = vunpack.c.h.b16 %v6600
        %v8331 = vunpack.c.l.b16 %v6601
        %v8332 = vunpack.c.h.b16 %v6601
        %v8333 = vunpack.c.l.b16 %v6602
        %v8334 = vunpack.c.h.b16 %v6602
        %v8335 = vunpack.c.l.b16 %v6603
        %v8336 = vunpack.c.h.b16 %v6603
        %v8337 = vunpack.c.l.b16 %v6604
        %v8338 = vunpack.c.h.b16 %v6604
        %v8339 = vunpack.c.l.b16 %v6605
        %v8340 = vunpack.c.h.b16 %v6605
        %v8341 = vunpack.c.l.b16 %v6606
        %v8342 = vunpack.c.h.b16 %v6606
        %v8343 = vunpack.c.l.b16 %v6607
        %v8344 = vunpack.c.h.b16 %v6607
        %v8345 = vunpack.c.l.b16 %v6608
        %v8346 = vunpack.c.h.b16 %v6608
        %v8347 = vunpack.c.l.b16 %v6609
        %v8348 = vunpack.c.h.b16 %v6609
        %v8349 = vunpack.c.l.b16 %v6610
        %v8350 = vunpack.c.h.b16 %v6610
        %v8351 = vunpack.c.l.b16 %v6611
        %v8352 = vunpack.c.h.b16 %v6611
        %v8353 = vunpack.c.l.b16 %v6612
        %v8354 = vunpack.c.h.b16 %v6612
        %v8355 = vunpack.c.l.b16 %v6613
        %v8356 = vunpack.c.h.b16 %v6613
        %v8357 = vunpack.c.l.b16 %v6614
        %v8358 = vunpack.c.h.b16 %v6614
        %v8359 = vunpack.c.l.b16 %v6615
        %v8360 = vunpack.c.h.b16 %v6615
        %v8361 = vunpack.c.l.b16 %v6616
        %v8362 = vunpack.c.h.b16 %v6616
        %v8363 = vunpack.c.l.b16 %v6617
        %v8364 = vunpack.c.h.b16 %v6617
        %v8365 = vunpack.c.l.b16 %v6618
        %v8366 = vunpack.c.h.b16 %v6618
        %v8367 = vunpack.c.l.b16 %v6619
        %v8368 = vunpack.c.h.b16 %v6619
        %v8369 = vunpack.c.l.b16 %v6620
        %v8370 = vunpack.c.h.b16 %v6620
        %v8371 = vunpack.c.l.b16 %v6621
        %v8372 = vunpack.c.h.b16 %v6621
        %v8373 = vunpack.c.l.b16 %v6622
        %v8374 = vunpack.c.h.b16 %v6622
        %v8375 = vunpack.c.l.b16 %v6623
        %v8376 = vunpack.c.h.b16 %v6623
        %v8377 = vunpack.c.l.b16 %v6624
        %v8378 = vunpack.c.h.b16 %v6624
        %v8379 = vunpack.c.l.b16 %v6625
        %v8380 = vunpack.c.h.b16 %v6625
        %v8381 = vunpack.c.l.b16 %v6626
        %v8382 = vunpack.c.h.b16 %v6626
        %v8383 = vunpack.c.l.b16 %v6627
        %v8384 = vunpack.c.h.b16 %v6627
        %v8385 = vunpack.c.l.b16 %v6628
        %v8386 = vunpack.c.h.b16 %v6628
        %v8387 = vunpack.c.l.b16 %v6629
        %v8388 = vunpack.c.h.b16 %v6629
        %v8389 = vunpack.c.l.b16 %v6630
        %v8390 = vunpack.c.h.b16 %v6630
        %v8391 = vunpack.c.l.b16 %v6631
        %v8392 = vunpack.c.h.b16 %v6631
        %v8393 = vunpack.c.l.b16 %v6632
        %v8394 = vunpack.c.h.b16 %v6632
        %v8395 = vunpack.c.l.b16 %v6633
        %v8396 = vunpack.c.h.b16 %v6633
        %v8397 = vunpack.c.l.b16 %v6634
        %v8398 = vunpack.c.h.b16 %v6634
        %v8399 = vunpack.c.l.b16 %v6635
        %v8400 = vunpack.c.h.b16 %v6635
        %v8401 = vunpack.c.l.b16 %v6636
        %v8402 = vunpack.c.h.b16 %v6636
        %v8403 = vunpack.c.l.b16 %v6637
        %v8404 = vunpack.c.h.b16 %v6637
        %v8405 = vunpack.c.l.b16 %v6638
        %v8406 = vunpack.c.h.b16 %v6638
        %v8407 = vunpack.c.l.b16 %v6639
        %v8408 = vunpack.c.h.b16 %v6639
        %v8409 = vunpack.c.l.b16 %v6640
        %v8410 = vunpack.c.h.b16 %v6640
        %v8411 = vunpack.c.l.b16 %v6641
        %v8412 = vunpack.c.h.b16 %v6641
        %v8413 = vunpack.c.l.b16 %v6642
        %v8414 = vunpack.c.h.b16 %v6642
        %v8415 = vunpack.c.l.b16 %v6643
        %v8416 = vunpack.c.h.b16 %v6643
        %v8417 = vunpack.c.l.b16 %v6644
        %v8418 = vunpack.c.h.b16 %v6644
        %v8419 = vunpack.c.l.b16 %v6645
        %v8420 = vunpack.c.h.b16 %v6645
        %v8421 = vunpack.c.l.b16 %v6646
        %v8422 = vunpack.c.h.b16 %v6646
        %v8423 = vunpack.c.l.b16 %v6647
        %v8424 = vunpack.c.h.b16 %v6647
        %v8425 = vunpack.c.l.b16 %v6648
        %v8426 = vunpack.c.h.b16 %v6648
        %v8427 = vunpack.c.l.b16 %v6649
        %v8428 = vunpack.c.h.b16 %v6649
        %v8429 = vunpack.c.l.b16 %v6650
        %v8430 = vunpack.c.h.b16 %v6650
        %v8431 = vunpack.c.l.b16 %v6651
        %v8432 = vunpack.c.h.b16 %v6651
        %v8433 = vunpack.c.l.b16 %v6652
        %v8434 = vunpack.c.h.b16 %v6652
        %v8435 = vunpack.c.l.b16 %v6653
        %v8436 = vunpack.c.h.b16 %v6653
        %v8437 = vunpack.c.l.b16 %v6654
        %v8438 = vunpack.c.h.b16 %v6654
        %v8439 = vunpack.c.l.b16 %v6655
        %v8440 = vunpack.c.h.b16 %v6655
        %v8441 = vunpack.c.l.b16 %v6656
        %v8442 = vunpack.c.h.b16 %v6656
        %v8443 = vunpack.c.l.b16 %v6657
        %v8444 = vunpack.c.h.b16 %v6657
        %v8445 = vunpack.c.l.b16 %v6658
        %v8446 = vunpack.c.h.b16 %v6658
        %v8447 = vunpack.c.l.b16 %v6659
        %v8448 = vunpack.c.h.b16 %v6659
        %v8449 = vunpack.c.l.b16 %v6660
        %v8450 = vunpack.c.h.b16 %v6660
        %v8451 = vunpack.c.l.b16 %v6661
        %v8452 = vunpack.c.h.b16 %v6661
        %v8453 = vunpack.c.l.b16 %v6662
        %v8454 = vunpack.c.h.b16 %v6662
        %v8455 = vpack.c.b16 %v7881, %v7879
        %v8456 = vpack.c.b16 %v7882, %v7880
        %v8457 = vpack.c.b16 %v7885, %v7883
        %v8458 = vpack.c.b16 %v7886, %v7884
        %v8459 = vpack.c.b16 %v7889, %v7887
        %v8460 = vpack.c.b16 %v7890, %v7888
        %v8461 = vpack.c.b16 %v7893, %v7891
        %v8462 = vpack.c.b16 %v7894, %v7892
        %v8463 = vpack.c.b16 %v7897, %v7895
        %v8464 = vpack.c.b16 %v7898, %v7896
        %v8465 = vpack.c.b16 %v7901, %v7899
        %v8466 = vpack.c.b16 %v7902, %v7900
        %v8467 = vpack.c.b16 %v7905, %v7903
        %v8468 = vpack.c.b16 %v7906, %v7904
        %v8469 = vpack.c.b16 %v7909, %v7907
        %v8470 = vpack.c.b16 %v7910, %v7908
        %v8471 = vpack.c.b16 %v7913, %v7911
        %v8472 = vpack.c.b16 %v7914, %v7912
        %v8473 = vpack.c.b16 %v7917, %v7915
        %v8474 = vpack.c.b16 %v7918, %v7916
        %v8475 = vpack.c.b16 %v7921, %v7919
        %v8476 = vpack.c.b16 %v7922, %v7920
        %v8477 = vpack.c.b16 %v7925, %v7923
        %v8478 = vpack.c.b16 %v7926, %v7924
        %v8479 = vpack.c.b16 %v7929, %v7927
        %v8480 = vpack.c.b16 %v7930, %v7928
        %v8481 = vpack.c.b16 %v7933, %v7931
        %v8482 = vpack.c.b16 %v7934, %v7932
        %v8483 = vpack.c.b16 %v7937, %v7935
        %v8484 = vpack.c.b16 %v7938, %v7936
        %v8485 = vpack.c.b16 %v7941, %v7939
        %v8486 = vpack.c.b16 %v7942, %v7940
        %v8487 = vpack.c.b16 %v7945, %v7943
        %v8488 = vpack.c.b16 %v7946, %v7944
        %v8489 = vpack.c.b16 %v7949, %v7947
        %v8490 = vpack.c.b16 %v7950, %v7948
        %v8491 = vpack.c.b16 %v7953, %v7951
        %v8492 = vpack.c.b16 %v7954, %v7952
        %v8493 = vpack.c.b16 %v7957, %v7955
        %v8494 = vpack.c.b16 %v7958, %v7956
        %v8495 = vpack.c.b16 %v7961, %v7959
        %v8496 = vpack.c.b16 %v7962, %v7960
        %v8497 = vpack.c.b16 %v7965, %v7963
        %v8498 = vpack.c.b16 %v7966, %v7964
        %v8499 = vpack.c.b16 %v7969, %v7967
        %v8500 = vpack.c.b16 %v7970, %v7968
        %v8501 = vpack.c.b16 %v7973, %v7971
        %v8502 = vpack.c.b16 %v7974, %v7972
        %v8503 = vpack.c.b16 %v7977, %v7975
        %v8504 = vpack.c.b16 %v7978, %v7976
        %v8505 = vpack.c.b16 %v7981, %v7979
        %v8506 = vpack.c.b16 %v7982, %v7980
        %v8507 = vpack.c.b16 %v7985, %v7983
        %v8508 = vpack.c.b16 %v7986, %v7984
        %v8509 = vpack.c.b16 %v7989, %v7987
        %v8510 = vpack.c.b16 %v7990, %v7988
        %v8511 = vpack.c.b16 %v7993, %v7991
        %v8512 = vpack.c.b16 %v7994, %v7992
        %v8513 = vpack.c.b16 %v7997, %v7995
        %v8514 = vpack.c.b16 %v7998, %v7996
        %v8515 = vpack.c.b16 %v8001, %v7999
        %v8516 = vpack.c.b16 %v8002, %v8000
        %v8517 = vpack.c.b16 %v8005, %v8003
        %v8518 = vpack.c.b16 %v8006, %v8004
        %v8519 = vpack.c.b16 %v8009, %v8007
        %v8520 = vpack.c.b16 %v8010, %v8008
        %v8521 = vpack.c.b16 %v8013, %v8011
        %v8522 = vpack.c.b16 %v8014, %v8012
        %v8523 = vpack.c.b16 %v8017, %v8015
        %v8524 = vpack.c.b16 %v8018, %v8016
        %v8525 = vpack.c.b16 %v8021, %v8019
        %v8526 = vpack.c.b16 %v8022, %v8020
        %v8527 = vpack.c.b16 %v8025, %v8023
        %v8528 = vpack.c.b16 %v8026, %v8024
        %v8529 = vpack.c.b16 %v8029, %v8027
        %v8530 = vpack.c.b16 %v8030, %v8028
        %v8531 = vpack.c.b16 %v8033, %v8031
        %v8532 = vpack.c.b16 %v8034, %v8032
        %v8533 = vpack.c.b16 %v8037, %v8035
        %v8534 = vpack.c.b16 %v8038, %v8036
        %v8535 = vpack.c.b16 %v8041, %v8039
        %v8536 = vpack.c.b16 %v8042, %v8040
        %v8537 = vpack.c.b16 %v8045, %v8043
        %v8538 = vpack.c.b16 %v8046, %v8044
        %v8539 = vpack.c.b16 %v8049, %v8047
        %v8540 = vpack.c.b16 %v8050, %v8048
        %v8541 = vpack.c.b16 %v8053, %v8051
        %v8542 = vpack.c.b16 %v8054, %v8052
        %v8543 = vpack.c.b16 %v8057, %v8055
        %v8544 = vpack.c.b16 %v8058, %v8056
        %v8545 = vpack.c.b16 %v8061, %v8059
        %v8546 = vpack.c.b16 %v8062, %v8060
        %v8547 = vpack.c.b16 %v8065, %v8063
        %v8548 = vpack.c.b16 %v8066, %v8064
        %v8549 = vpack.c.b16 %v8069, %v8067
        %v8550 = vpack.c.b16 %v8070, %v8068
        %v8551 = vpack.c.b16 %v8073, %v8071
        %v8552 = vpack.c.b16 %v8074, %v8072
        %v8553 = vpack.c.b16 %v8077, %v8075
        %v8554 = vpack.c.b16 %v8078, %v8076
        %v8555 = vpack.c.b16 %v8081, %v8079
        %v8556 = vpack.c.b16 %v8082, %v8080
        %v8557 = vpack.c.b16 %v8085, %v8083
        %v8558 = vpack.c.b16 %v8086, %v8084
        %v8559 = vpack.c.b16 %v8089, %v8087
        %v8560 = vpack.c.b16 %v8090, %v8088
        %v8561 = vpack.c.b16 %v8093, %v8091
        %v8562 = vpack.c.b16 %v8094, %v8092
        %v8563 = vpack.c.b16 %v8097, %v8095
        %v8564 = vpack.c.b16 %v8098, %v8096
        %v8565 = vpack.c.b16 %v8101, %v8099
        %v8566 = vpack.c.b16 %v8102, %v8100
        %v8567 = vpack.c.b16 %v8105, %v8103
        %v8568 = vpack.c.b16 %v8106, %v8104
        %v8569 = vpack.c.b16 %v8109, %v8107
        %v8570 = vpack.c.b16 %v8110, %v8108
        %v8571 = vpack.c.b16 %v8113, %v8111
        %v8572 = vpack.c.b16 %v8114, %v8112
        %v8573 = vpack.c.b16 %v8117, %v8115
        %v8574 = vpack.c.b16 %v8118, %v8116
        %v8575 = vpack.c.b16 %v8121, %v8119
        %v8576 = vpack.c.b16 %v8122, %v8120
        %v8577 = vpack.c.b16 %v8125, %v8123
        %v8578 = vpack.c.b16 %v8126, %v8124
        %v8579 = vpack.c.b16 %v8129, %v8127
        %v8580 = vpack.c.b16 %v8130, %v8128
        %v8581 = vpack.c.b16 %v8133, %v8131
        %v8582 = vpack.c.b16 %v8134, %v8132
        %v8583 = vpack.c.b16 %v8137, %v8135
        %v8584 = vpack.c.b16 %v8138, %v8136
        %v8585 = vpack.c.b16 %v8141, %v8139
        %v8586 = vpack.c.b16 %v8142, %v8140
        %v8587 = vpack.c.b16 %v8145, %v8143
        %v8588 = vpack.c.b16 %v8146, %v8144
        %v8589 = vpack.c.b16 %v8149, %v8147
        %v8590 = vpack.c.b16 %v8150, %v8148
        %v8591 = vpack.c.b16 %v8153, %v8151
        %v8592 = vpack.c.b16 %v8154, %v8152
        %v8593 = vpack.c.b16 %v8157, %v8155
        %v8594 = vpack.c.b16 %v8158, %v8156
        %v8595 = vpack.c.b16 %v8161, %v8159
        %v8596 = vpack.c.b16 %v8162, %v8160
        %v8597 = vpack.c.b16 %v8165, %v8163
        %v8598 = vpack.c.b16 %v8166, %v8164
        %v8599 = vpack.c.b16 %v8169, %v8167
        %v8600 = vpack.c.b16 %v8170, %v8168
        %v8601 = vpack.c.b16 %v8173, %v8171
        %v8602 = vpack.c.b16 %v8174, %v8172
        %v8603 = vpack.c.b16 %v8177, %v8175
        %v8604 = vpack.c.b16 %v8178, %v8176
        %v8605 = vpack.c.b16 %v8181, %v8179
        %v8606 = vpack.c.b16 %v8182, %v8180
        %v8607 = vpack.c.b16 %v8185, %v8183
        %v8608 = vpack.c.b16 %v8186, %v8184
        %v8609 = vpack.c.b16 %v8189, %v8187
        %v8610 = vpack.c.b16 %v8190, %v8188
        %v8611 = vpack.c.b16 %v8193, %v8191
        %v8612 = vpack.c.b16 %v8194, %v8192
        %v8613 = vpack.c.b16 %v8197, %v8195
        %v8614 = vpack.c.b16 %v8198, %v8196
        %v8615 = vpack.c.b16 %v8201, %v8199
        %v8616 = vpack.c.b16 %v8202, %v8200
        %v8617 = vpack.c.b16 %v8205, %v8203
        %v8618 = vpack.c.b16 %v8206, %v8204
        %v8619 = vpack.c.b16 %v8209, %v8207
        %v8620 = vpack.c.b16 %v8210, %v8208
        %v8621 = vpack.c.b16 %v8213, %v8211
        %v8622 = vpack.c.b16 %v8214, %v8212
        %v8623 = vpack.c.b16 %v8217, %v8215
        %v8624 = vpack.c.b16 %v8218, %v8216
        %v8625 = vpack.c.b16 %v8221, %v8219
        %v8626 = vpack.c.b16 %v8222, %v8220
        %v8627 = vpack.c.b16 %v8225, %v8223
        %v8628 = vpack.c.b16 %v8226, %v8224
        %v8629 = vpack.c.b16 %v8229, %v8227
        %v8630 = vpack.c.b16 %v8230, %v8228
        %v8631 = vpack.c.b16 %v8233, %v8231
        %v8632 = vpack.c.b16 %v8234, %v8232
        %v8633 = vpack.c.b16 %v8237, %v8235
        %v8634 = vpack.c.b16 %v8238, %v8236
        %v8635 = vpack.c.b16 %v8241, %v8239
        %v8636 = vpack.c.b16 %v8242, %v8240
        %v8637 = vpack.c.b16 %v8245, %v8243
        %v8638 = vpack.c.b16 %v8246, %v8244
        %v8639 = vpack.c.b16 %v8249, %v8247
        %v8640 = vpack.c.b16 %v8250, %v8248
        %v8641 = vpack.c.b16 %v8253, %v8251
        %v8642 = vpack.c.b16 %v8254, %v8252
        %v8643 = vpack.c.b16 %v8257, %v8255
        %v8644 = vpack.c.b16 %v8258, %v8256
        %v8645 = vpack.c.b16 %v8261, %v8259
        %v8646 = vpack.c.b16 %v8262, %v8260
        %v8647 = vpack.c.b16 %v8265, %v8263
        %v8648 = vpack.c.b16 %v8266, %v8264
        %v8649 = vpack.c.b16 %v8269, %v8267
        %v8650 = vpack.c.b16 %v8270, %v8268
        %v8651 = vpack.c.b16 %v8273, %v8271
        %v8652 = vpack.c.b16 %v8274, %v8272
        %v8653 = vpack.c.b16 %v8277, %v8275
        %v8654 = vpack.c.b16 %v8278, %v8276
        %v8655 = vpack.c.b16 %v8281, %v8279
        %v8656 = vpack.c.b16 %v8282, %v8280
        %v8657 = vpack.c.b16 %v8285, %v8283
        %v8658 = vpack.c.b16 %v8286, %v8284
        %v8659 = vpack.c.b16 %v8289, %v8287
        %v8660 = vpack.c.b16 %v8290, %v8288
        %v8661 = vpack.c.b16 %v8293, %v8291
        %v8662 = vpack.c.b16 %v8294, %v8292
        %v8663 = vpack.c.b16 %v8297, %v8295
        %v8664 = vpack.c.b16 %v8298, %v8296
        %v8665 = vpack.c.b16 %v8301, %v8299
        %v8666 = vpack.c.b16 %v8302, %v8300
        %v8667 = vpack.c.b16 %v8305, %v8303
        %v8668 = vpack.c.b16 %v8306, %v8304
        %v8669 = vpack.c.b16 %v8309, %v8307
        %v8670 = vpack.c.b16 %v8310, %v8308
        %v8671 = vpack.c.b16 %v8313, %v8311
        %v8672 = vpack.c.b16 %v8314, %v8312
        %v8673 = vpack.c.b16 %v8317, %v8315
        %v8674 = vpack.c.b16 %v8318, %v8316
        %v8675 = vpack.c.b16 %v8321, %v8319
        %v8676 = vpack.c.b16 %v8322, %v8320
        %v8677 = vpack.c.b16 %v8325, %v8323
        %v8678 = vpack.c.b16 %v8326, %v8324
        %v8679 = vpack.c.b16 %v8329, %v8327
        %v8680 = vpack.c.b16 %v8330, %v8328
        %v8681 = vpack.c.b16 %v8333, %v8331
        %v8682 = vpack.c.b16 %v8334, %v8332
        %v8683 = vpack.c.b16 %v8337, %v8335
        %v8684 = vpack.c.b16 %v8338, %v8336
        %v8685 = vpack.c.b16 %v8341, %v8339
        %v8686 = vpack.c.b16 %v8342, %v8340
        %v8687 = vpack.c.b16 %v8345, %v8343
        %v8688 = vpack.c.b16 %v8346, %v8344
        %v8689 = vpack.c.b16 %v8349, %v8347
        %v8690 = vpack.c.b16 %v8350, %v8348
        %v8691 = vpack.c.b16 %v8353, %v8351
        %v8692 = vpack.c.b16 %v8354, %v8352
        %v8693 = vpack.c.b16 %v8357, %v8355
        %v8694 = vpack.c.b16 %v8358, %v8356
        %v8695 = vpack.c.b16 %v8361, %v8359
        %v8696 = vpack.c.b16 %v8362, %v8360
        %v8697 = vpack.c.b16 %v8365, %v8363
        %v8698 = vpack.c.b16 %v8366, %v8364
        %v8699 = vpack.c.b16 %v8369, %v8367
        %v8700 = vpack.c.b16 %v8370, %v8368
        %v8701 = vpack.c.b16 %v8373, %v8371
        %v8702 = vpack.c.b16 %v8374, %v8372
        %v8703 = vpack.c.b16 %v8377, %v8375
        %v8704 = vpack.c.b16 %v8378, %v8376
        %v8705 = vpack.c.b16 %v8381, %v8379
        %v8706 = vpack.c.b16 %v8382, %v8380
        %v8707 = vpack.c.b16 %v8385, %v8383
        %v8708 = vpack.c.b16 %v8386, %v8384
        %v8709 = vpack.c.b16 %v8389, %v8387
        %v8710 = vpack.c.b16 %v8390, %v8388
        %v8711 = vpack.c.b16 %v8393, %v8391
        %v8712 = vpack.c.b16 %v8394, %v8392
        %v8713 = vpack.c.b16 %v8397, %v8395
        %v8714 = vpack.c.b16 %v8398, %v8396
        %v8715 = vpack.c.b16 %v8401, %v8399
        %v8716 = vpack.c.b16 %v8402, %v8400
        %v8717 = vpack.c.b16 %v8405, %v8403
        %v8718 = vpack.c.b16 %v8406, %v8404
        %v8719 = vpack.c.b16 %v8409, %v8407
        %v8720 = vpack.c.b16 %v8410, %v8408
        %v8721 = vpack.c.b16 %v8413, %v8411
        %v8722 = vpack.c.b16 %v8414, %v8412
        %v8723 = vpack.c.b16 %v8417, %v8415
        %v8724 = vpack.c.b16 %v8418, %v8416
        %v8725 = vpack.c.b16 %v8421, %v8419
        %v8726 = vpack.c.b16 %v8422, %v8420
        %v8727 = vpack.c.b16 %v8425, %v8423
        %v8728 = vpack.c.b16 %v8426, %v8424
        %v8729 = vpack.c.b16 %v8429, %v8427
        %v8730 = vpack.c.b16 %v8430, %v8428
        %v8731 = vpack.c.b16 %v8433, %v8431
        %v8732 = vpack.c.b16 %v8434, %v8432
        %v8733 = vpack.c.b16 %v8437, %v8435
        %v8734 = vpack.c.b16 %v8438, %v8436
        %v8735 = vpack.c.b16 %v8441, %v8439
        %v8736 = vpack.c.b16 %v8442, %v8440
        %v8737 = vpack.c.b16 %v8445, %v8443
        %v8738 = vpack.c.b16 %v8446, %v8444
        %v8739 = vpack.c.b16 %v8449, %v8447
        %v8740 = vpack.c.b16 %v8450, %v8448
        %v8741 = vpack.c.b16 %v8453, %v8451
        %v8742 = vpack.c.b16 %v8454, %v8452
        %9031 = vmatpush.bf16.msra.mxu0 %v8469
        %9032 = vmatpush.bf16.msra.mxu0 %v8467
        %9033 = vmatpush.bf16.msra.mxu0 %v8465
        %9034 = vmatpush.bf16.msra.mxu0 %v8463
        %9035 = vmatpush.bf16.msra.mxu0 %v8461
        %9036 = vmatpush.bf16.msra.mxu0 %v8459
        %9037 = vmatpush.bf16.msra.mxu0 %v8457
        %9038 = vmatpush.bf16.msra.mxu0 %v8455
        %9039 = vmatmul.bf16.gmra.mxu0 %v7207
        %v9040 = vpop.f32.mrf.mxu0
        %v9041 = vadd.f32 0.0, %v9040
        %v9042 = vpop.f32.mrf.mxu0
        %v9043 = vadd.f32 0.0, %v9042
        %9044 = vmatmul.bf16.gmra.mxu0 %v7209
        %v9045 = vpop.f32.mrf.mxu0
        %v9046 = vadd.f32 0.0, %v9045
        %v9047 = vpop.f32.mrf.mxu0
        %v9048 = vadd.f32 0.0, %v9047
        %9049 = vmatmul.bf16.gmra.mxu0 %v7207
        %v9050 = vpop.f32.mrf.mxu0
        %v9051 = vadd.f32 0.0, %v9050
        %v9052 = vpop.f32.mrf.mxu0
        %v9053 = vadd.f32 0.0, %v9052
        %9054 = vmatmul.bf16.gmra.mxu0 %v7211
        %v9055 = vpop.f32.mrf.mxu0
        %v9056 = vadd.f32 0.0, %v9055
        %v9057 = vpop.f32.mrf.mxu0
        %v9058 = vadd.f32 0.0, %v9057
        %9059 = vmatmul.bf16.gmra.mxu0 %v7213
        %v9060 = vpop.f32.mrf.mxu0
        %v9061 = vadd.f32 0.0, %v9060
        %v9062 = vpop.f32.mrf.mxu0
        %v9063 = vadd.f32 0.0, %v9062
        %9064 = vmatmul.bf16.gmra.mxu0 %v7215
        %v9065 = vpop.f32.mrf.mxu0
        %v9066 = vadd.f32 0.0, %v9065
        %v9067 = vpop.f32.mrf.mxu0
        %v9068 = vadd.f32 0.0, %v9067
        %9069 = vmatmul.bf16.gmra.mxu0 %v7217
        %v9070 = vpop.f32.mrf.mxu0
        %v9071 = vadd.f32 0.0, %v9070
        %v9072 = vpop.f32.mrf.mxu0
        %v9073 = vadd.f32 0.0, %v9072
        %9074 = vmatmul.bf16.gmra.mxu0 %v7219
        %v9075 = vpop.f32.mrf.mxu0
        %v9076 = vadd.f32 0.0, %v9075
        %v9077 = vpop.f32.mrf.mxu0
        %v9078 = vadd.f32 0.0, %v9077
        %9079 = vmatmul.bf16.gmra.mxu0 %v7221
        %v9080 = vpop.f32.mrf.mxu0
        %v9081 = vadd.f32 0.0, %v9080
        %v9082 = vpop.f32.mrf.mxu0
        %v9083 = vadd.f32 0.0, %v9082
        %9084 = vmatmul.bf16.gmra.mxu0 %v7223
        %v9085 = vpop.f32.mrf.mxu0
        %v9086 = vadd.f32 0.0, %v9085
        %v9087 = vpop.f32.mrf.mxu0
        %v9088 = vadd.f32 0.0, %v9087
        %9089 = vmatmul.bf16.gmra.mxu0 %v7225
        %v9090 = vpop.f32.mrf.mxu0
        %v9091 = vadd.f32 0.0, %v9090
        %v9092 = vpop.f32.mrf.mxu0
        %v9093 = vadd.f32 0.0, %v9092
        %9094 = vmatmul.bf16.gmra.mxu0 %v7227
        %v9095 = vpop.f32.mrf.mxu0
        %v9096 = vadd.f32 0.0, %v9095
        %v9097 = vpop.f32.mrf.mxu0
        %v9098 = vadd.f32 0.0, %v9097
        %9099 = vmatmul.bf16.gmra.mxu0 %v7229
        %v9100 = vpop.f32.mrf.mxu0
        %v9101 = vadd.f32 0.0, %v9100
        %v9102 = vpop.f32.mrf.mxu0
        %v9103 = vadd.f32 0.0, %v9102
        %9104 = vmatmul.bf16.gmra.mxu0 %v7231
        %v9105 = vpop.f32.mrf.mxu0
        %v9106 = vadd.f32 0.0, %v9105
        %v9107 = vpop.f32.mrf.mxu0
        %v9108 = vadd.f32 0.0, %v9107
        %9109 = vmatmul.bf16.gmra.mxu0 %v7233
        %v9110 = vpop.f32.mrf.mxu0
        %v9111 = vadd.f32 0.0, %v9110
        %v9112 = vpop.f32.mrf.mxu0
        %v9113 = vadd.f32 0.0, %v9112
        %9114 = vmatmul.bf16.gmra.mxu0 %v7235
        %v9115 = vpop.f32.mrf.mxu0
        %v9116 = vadd.f32 0.0, %v9115
        %v9117 = vpop.f32.mrf.mxu0
        %v9118 = vadd.f32 0.0, %v9117
        %9119 = vdwg.mxu0
        %9120 = vmatpush.bf16.msra.mxu0 %v8485
        %9121 = vmatpush.bf16.msra.mxu0 %v8483
        %9122 = vmatpush.bf16.msra.mxu0 %v8481
        %9123 = vmatpush.bf16.msra.mxu0 %v8479
        %9124 = vmatpush.bf16.msra.mxu0 %v8477
        %9125 = vmatpush.bf16.msra.mxu0 %v8475
        %9126 = vmatpush.bf16.msra.mxu0 %v8473
        %9127 = vmatpush.bf16.msra.mxu0 %v8471
        %9128 = vmatmul.bf16.gmra.mxu0 %v7208
        %v9129 = vpop.f32.mrf.mxu0
        %v9130 = vadd.f32 %v9041, %v9129
        %v9131 = vpop.f32.mrf.mxu0
        %v9132 = vadd.f32 %v9043, %v9131
        %9133 = vmatmul.bf16.gmra.mxu0 %v7210
        %v9134 = vpop.f32.mrf.mxu0
        %v9135 = vadd.f32 %v9046, %v9134
        %v9136 = vpop.f32.mrf.mxu0
        %v9137 = vadd.f32 %v9048, %v9136
        %9138 = vmatmul.bf16.gmra.mxu0 %v7208
        %v9139 = vpop.f32.mrf.mxu0
        %v9140 = vadd.f32 %v9051, %v9139
        %v9141 = vpop.f32.mrf.mxu0
        %v9142 = vadd.f32 %v9053, %v9141
        %9143 = vmatmul.bf16.gmra.mxu0 %v7212
        %v9144 = vpop.f32.mrf.mxu0
        %v9145 = vadd.f32 %v9056, %v9144
        %v9146 = vpop.f32.mrf.mxu0
        %v9147 = vadd.f32 %v9058, %v9146
        %9148 = vmatmul.bf16.gmra.mxu0 %v7214
        %v9149 = vpop.f32.mrf.mxu0
        %v9150 = vadd.f32 %v9061, %v9149
        %v9151 = vpop.f32.mrf.mxu0
        %v9152 = vadd.f32 %v9063, %v9151
        %9153 = vmatmul.bf16.gmra.mxu0 %v7216
        %v9154 = vpop.f32.mrf.mxu0
        %v9155 = vadd.f32 %v9066, %v9154
        %v9156 = vpop.f32.mrf.mxu0
        %v9157 = vadd.f32 %v9068, %v9156
        %9158 = vmatmul.bf16.gmra.mxu0 %v7218
        %v9159 = vpop.f32.mrf.mxu0
        %v9160 = vadd.f32 %v9071, %v9159
        %v9161 = vpop.f32.mrf.mxu0
        %v9162 = vadd.f32 %v9073, %v9161
        %9163 = vmatmul.bf16.gmra.mxu0 %v7220
        %v9164 = vpop.f32.mrf.mxu0
        %v9165 = vadd.f32 %v9076, %v9164
        %v9166 = vpop.f32.mrf.mxu0
        %v9167 = vadd.f32 %v9078, %v9166
        %9168 = vmatmul.bf16.gmra.mxu0 %v7222
        %v9169 = vpop.f32.mrf.mxu0
        %v9170 = vadd.f32 %v9081, %v9169
        %v9171 = vpop.f32.mrf.mxu0
        %v9172 = vadd.f32 %v9083, %v9171
        %9173 = vmatmul.bf16.gmra.mxu0 %v7224
        %v9174 = vpop.f32.mrf.mxu0
        %v9175 = vadd.f32 %v9086, %v9174
        %v9176 = vpop.f32.mrf.mxu0
        %v9177 = vadd.f32 %v9088, %v9176
        %9178 = vmatmul.bf16.gmra.mxu0 %v7226
        %v9179 = vpop.f32.mrf.mxu0
        %v9180 = vadd.f32 %v9091, %v9179
        %v9181 = vpop.f32.mrf.mxu0
        %v9182 = vadd.f32 %v9093, %v9181
        %9183 = vmatmul.bf16.gmra.mxu0 %v7228
        %v9184 = vpop.f32.mrf.mxu0
        %v9185 = vadd.f32 %v9096, %v9184
        %v9186 = vpop.f32.mrf.mxu0
        %v9187 = vadd.f32 %v9098, %v9186
        %9188 = vmatmul.bf16.gmra.mxu0 %v7230
        %v9189 = vpop.f32.mrf.mxu0
        %v9190 = vadd.f32 %v9101, %v9189
        %v9191 = vpop.f32.mrf.mxu0
        %v9192 = vadd.f32 %v9103, %v9191
        %9193 = vmatmul.bf16.gmra.mxu0 %v7232
        %v9194 = vpop.f32.mrf.mxu0
        %v9195 = vadd.f32 %v9106, %v9194
        %v9196 = vpop.f32.mrf.mxu0
        %v9197 = vadd.f32 %v9108, %v9196
        %9198 = vmatmul.bf16.gmra.mxu0 %v7234
        %v9199 = vpop.f32.mrf.mxu0
        %v9200 = vadd.f32 %v9111, %v9199
        %v9201 = vpop.f32.mrf.mxu0
        %v9202 = vadd.f32 %v9113, %v9201
        %9203 = vmatmul.bf16.gmra.mxu0 %v7236
        %v9204 = vpop.f32.mrf.mxu0
        %v9205 = vadd.f32 %v9116, %v9204
        %v9206 = vpop.f32.mrf.mxu0
        %v9207 = vadd.f32 %v9118, %v9206
        %9208 = vdwg.mxu0
        %9209 = vmatpush.bf16.msra.mxu0 %v8501
        %9210 = vmatpush.bf16.msra.mxu0 %v8499
        %9211 = vmatpush.bf16.msra.mxu0 %v8497
        %9212 = vmatpush.bf16.msra.mxu0 %v8495
        %9213 = vmatpush.bf16.msra.mxu0 %v8493
        %9214 = vmatpush.bf16.msra.mxu0 %v8491
        %9215 = vmatpush.bf16.msra.mxu0 %v8489
        %9216 = vmatpush.bf16.msra.mxu0 %v8487
        %9217 = vmatmul.bf16.gmra.mxu0 %v6919
        %v9218 = vpop.f32.mrf.mxu0
        %v9219 = vadd.f32 %v9130, %v9218
        %v9220 = vpop.f32.mrf.mxu0
        %v9221 = vadd.f32 %v9132, %v9220
        %9222 = vmatmul.bf16.gmra.mxu0 %v6921
        %v9223 = vpop.f32.mrf.mxu0
        %v9224 = vadd.f32 %v9135, %v9223
        %v9225 = vpop.f32.mrf.mxu0
        %v9226 = vadd.f32 %v9137, %v9225
        %9227 = vmatmul.bf16.gmra.mxu0 %v6919
        %v9228 = vpop.f32.mrf.mxu0
        %v9229 = vadd.f32 %v9140, %v9228
        %v9230 = vpop.f32.mrf.mxu0
        %v9231 = vadd.f32 %v9142, %v9230
        %9232 = vmatmul.bf16.gmra.mxu0 %v6923
        %v9233 = vpop.f32.mrf.mxu0
        %v9234 = vadd.f32 %v9145, %v9233
        %v9235 = vpop.f32.mrf.mxu0
        %v9236 = vadd.f32 %v9147, %v9235
        %9237 = vmatmul.bf16.gmra.mxu0 %v6925
        %v9238 = vpop.f32.mrf.mxu0
        %v9239 = vadd.f32 %v9150, %v9238
        %v9240 = vpop.f32.mrf.mxu0
        %v9241 = vadd.f32 %v9152, %v9240
        %9242 = vmatmul.bf16.gmra.mxu0 %v6927
        %v9243 = vpop.f32.mrf.mxu0
        %v9244 = vadd.f32 %v9155, %v9243
        %v9245 = vpop.f32.mrf.mxu0
        %v9246 = vadd.f32 %v9157, %v9245
        %9247 = vmatmul.bf16.gmra.mxu0 %v6929
        %v9248 = vpop.f32.mrf.mxu0
        %v9249 = vadd.f32 %v9160, %v9248
        %v9250 = vpop.f32.mrf.mxu0
        %v9251 = vadd.f32 %v9162, %v9250
        %9252 = vmatmul.bf16.gmra.mxu0 %v6931
        %v9253 = vpop.f32.mrf.mxu0
        %v9254 = vadd.f32 %v9165, %v9253
        %v9255 = vpop.f32.mrf.mxu0
        %v9256 = vadd.f32 %v9167, %v9255
        %9257 = vmatmul.bf16.gmra.mxu0 %v6933
        %v9258 = vpop.f32.mrf.mxu0
        %v9259 = vadd.f32 %v9170, %v9258
        %v9260 = vpop.f32.mrf.mxu0
        %v9261 = vadd.f32 %v9172, %v9260
        %9262 = vmatmul.bf16.gmra.mxu0 %v6935
        %v9263 = vpop.f32.mrf.mxu0
        %v9264 = vadd.f32 %v9175, %v9263
        %v9265 = vpop.f32.mrf.mxu0
        %v9266 = vadd.f32 %v9177, %v9265
        %9267 = vmatmul.bf16.gmra.mxu0 %v6937
        %v9268 = vpop.f32.mrf.mxu0
        %v9269 = vadd.f32 %v9180, %v9268
        %v9270 = vpop.f32.mrf.mxu0
        %v9271 = vadd.f32 %v9182, %v9270
        %9272 = vmatmul.bf16.gmra.mxu0 %v6939
        %v9273 = vpop.f32.mrf.mxu0
        %v9274 = vadd.f32 %v9185, %v9273
        %v9275 = vpop.f32.mrf.mxu0
        %v9276 = vadd.f32 %v9187, %v9275
        %9277 = vmatmul.bf16.gmra.mxu0 %v6941
        %v9278 = vpop.f32.mrf.mxu0
        %v9279 = vadd.f32 %v9190, %v9278
        %v9280 = vpop.f32.mrf.mxu0
        %v9281 = vadd.f32 %v9192, %v9280
        %9282 = vmatmul.bf16.gmra.mxu0 %v6943
        %v9283 = vpop.f32.mrf.mxu0
        %v9284 = vadd.f32 %v9195, %v9283
        %v9285 = vpop.f32.mrf.mxu0
        %v9286 = vadd.f32 %v9197, %v9285
        %9287 = vmatmul.bf16.gmra.mxu0 %v6945
        %v9288 = vpop.f32.mrf.mxu0
        %v9289 = vadd.f32 %v9200, %v9288
        %v9290 = vpop.f32.mrf.mxu0
        %v9291 = vadd.f32 %v9202, %v9290
        %9292 = vmatmul.bf16.gmra.mxu0 %v6947
        %v9293 = vpop.f32.mrf.mxu0
        %v9294 = vadd.f32 %v9205, %v9293
        %v9295 = vpop.f32.mrf.mxu0
        %v9296 = vadd.f32 %v9207, %v9295
        %9297 = vdwg.mxu0
        %9298 = vmatpush.bf16.msra.mxu0 %v8517
        %9299 = vmatpush.bf16.msra.mxu0 %v8515
        %9300 = vmatpush.bf16.msra.mxu0 %v8513
        %9301 = vmatpush.bf16.msra.mxu0 %v8511
        %9302 = vmatpush.bf16.msra.mxu0 %v8509
        %9303 = vmatpush.bf16.msra.mxu0 %v8507
        %9304 = vmatpush.bf16.msra.mxu0 %v8505
        %9305 = vmatpush.bf16.msra.mxu0 %v8503
        %9306 = vmatmul.bf16.gmra.mxu0 %v6920
        %v9307 = vpop.f32.mrf.mxu0
        %v9308 = vadd.f32 %v9219, %v9307
        %v9309 = vpop.f32.mrf.mxu0
        %v9310 = vadd.f32 %v9221, %v9309
        %9311 = vmatmul.bf16.gmra.mxu0 %v6922
        %v9312 = vpop.f32.mrf.mxu0
        %v9313 = vadd.f32 %v9224, %v9312
        %v9314 = vpop.f32.mrf.mxu0
        %v9315 = vadd.f32 %v9226, %v9314
        %9316 = vmatmul.bf16.gmra.mxu0 %v6920
        %v9317 = vpop.f32.mrf.mxu0
        %v9318 = vadd.f32 %v9229, %v9317
        %v9319 = vpop.f32.mrf.mxu0
        %v9320 = vadd.f32 %v9231, %v9319
        %9321 = vmatmul.bf16.gmra.mxu0 %v6924
        %v9322 = vpop.f32.mrf.mxu0
        %v9323 = vadd.f32 %v9234, %v9322
        %v9324 = vpop.f32.mrf.mxu0
        %v9325 = vadd.f32 %v9236, %v9324
        %9326 = vmatmul.bf16.gmra.mxu0 %v6926
        %v9327 = vpop.f32.mrf.mxu0
        %v9328 = vadd.f32 %v9239, %v9327
        %v9329 = vpop.f32.mrf.mxu0
        %v9330 = vadd.f32 %v9241, %v9329
        %9331 = vmatmul.bf16.gmra.mxu0 %v6928
        %v9332 = vpop.f32.mrf.mxu0
        %v9333 = vadd.f32 %v9244, %v9332
        %v9334 = vpop.f32.mrf.mxu0
        %v9335 = vadd.f32 %v9246, %v9334
        %9336 = vmatmul.bf16.gmra.mxu0 %v6930
        %v9337 = vpop.f32.mrf.mxu0
        %v9338 = vadd.f32 %v9249, %v9337
        %v9339 = vpop.f32.mrf.mxu0
        %v9340 = vadd.f32 %v9251, %v9339
        %9341 = vmatmul.bf16.gmra.mxu0 %v6932
        %v9342 = vpop.f32.mrf.mxu0
        %v9343 = vadd.f32 %v9254, %v9342
        %v9344 = vpop.f32.mrf.mxu0
        %v9345 = vadd.f32 %v9256, %v9344
        %9346 = vmatmul.bf16.gmra.mxu0 %v6934
        %v9347 = vpop.f32.mrf.mxu0
        %v9348 = vadd.f32 %v9259, %v9347
        %v9349 = vpop.f32.mrf.mxu0
        %v9350 = vadd.f32 %v9261, %v9349
        %9351 = vmatmul.bf16.gmra.mxu0 %v6936
        %v9352 = vpop.f32.mrf.mxu0
        %v9353 = vadd.f32 %v9264, %v9352
        %v9354 = vpop.f32.mrf.mxu0
        %v9355 = vadd.f32 %v9266, %v9354
        %9356 = vmatmul.bf16.gmra.mxu0 %v6938
        %v9357 = vpop.f32.mrf.mxu0
        %v9358 = vadd.f32 %v9269, %v9357
        %v9359 = vpop.f32.mrf.mxu0
        %v9360 = vadd.f32 %v9271, %v9359
        %9361 = vmatmul.bf16.gmra.mxu0 %v6940
        %v9362 = vpop.f32.mrf.mxu0
        %v9363 = vadd.f32 %v9274, %v9362
        %v9364 = vpop.f32.mrf.mxu0
        %v9365 = vadd.f32 %v9276, %v9364
        %9366 = vmatmul.bf16.gmra.mxu0 %v6942
        %v9367 = vpop.f32.mrf.mxu0
        %v9368 = vadd.f32 %v9279, %v9367
        %v9369 = vpop.f32.mrf.mxu0
        %v9370 = vadd.f32 %v9281, %v9369
        %9371 = vmatmul.bf16.gmra.mxu0 %v6944
        %v9372 = vpop.f32.mrf.mxu0
        %v9373 = vadd.f32 %v9284, %v9372
        %v9374 = vpop.f32.mrf.mxu0
        %v9375 = vadd.f32 %v9286, %v9374
        %9376 = vmatmul.bf16.gmra.mxu0 %v6946
        %v9377 = vpop.f32.mrf.mxu0
        %v9378 = vadd.f32 %v9289, %v9377
        %v9379 = vpop.f32.mrf.mxu0
        %v9380 = vadd.f32 %v9291, %v9379
        %9381 = vmatmul.bf16.gmra.mxu0 %v6948
        %v9382 = vpop.f32.mrf.mxu0
        %v9383 = vadd.f32 %v9294, %v9382
        %v9384 = vpop.f32.mrf.mxu0
        %v9385 = vadd.f32 %v9296, %v9384
        %9386 = vdwg.mxu0
        %9387 = vmatpush.bf16.msra.mxu0 %v8533
        %9388 = vmatpush.bf16.msra.mxu0 %v8531
        %9389 = vmatpush.bf16.msra.mxu0 %v8529
        %9390 = vmatpush.bf16.msra.mxu0 %v8527
        %9391 = vmatpush.bf16.msra.mxu0 %v8525
        %9392 = vmatpush.bf16.msra.mxu0 %v8523
        %9393 = vmatpush.bf16.msra.mxu0 %v8521
        %9394 = vmatpush.bf16.msra.mxu0 %v8519
        %9395 = vmatmul.bf16.gmra.mxu0 %v7527
        %v9396 = vpop.f32.mrf.mxu0
        %v9397 = vadd.f32 %v9308, %v9396
        %v9398 = vpop.f32.mrf.mxu0
        %v9399 = vadd.f32 %v9310, %v9398
        %9400 = vmatmul.bf16.gmra.mxu0 %v7529
        %v9401 = vpop.f32.mrf.mxu0
        %v9402 = vadd.f32 %v9313, %v9401
        %v9403 = vpop.f32.mrf.mxu0
        %v9404 = vadd.f32 %v9315, %v9403
        %9405 = vmatmul.bf16.gmra.mxu0 %v7527
        %v9406 = vpop.f32.mrf.mxu0
        %v9407 = vadd.f32 %v9318, %v9406
        %v9408 = vpop.f32.mrf.mxu0
        %v9409 = vadd.f32 %v9320, %v9408
        %9410 = vmatmul.bf16.gmra.mxu0 %v7531
        %v9411 = vpop.f32.mrf.mxu0
        %v9412 = vadd.f32 %v9323, %v9411
        %v9413 = vpop.f32.mrf.mxu0
        %v9414 = vadd.f32 %v9325, %v9413
        %9415 = vmatmul.bf16.gmra.mxu0 %v7533
        %v9416 = vpop.f32.mrf.mxu0
        %v9417 = vadd.f32 %v9328, %v9416
        %v9418 = vpop.f32.mrf.mxu0
        %v9419 = vadd.f32 %v9330, %v9418
        %9420 = vmatmul.bf16.gmra.mxu0 %v7535
        %v9421 = vpop.f32.mrf.mxu0
        %v9422 = vadd.f32 %v9333, %v9421
        %v9423 = vpop.f32.mrf.mxu0
        %v9424 = vadd.f32 %v9335, %v9423
        %9425 = vmatmul.bf16.gmra.mxu0 %v7537
        %v9426 = vpop.f32.mrf.mxu0
        %v9427 = vadd.f32 %v9338, %v9426
        %v9428 = vpop.f32.mrf.mxu0
        %v9429 = vadd.f32 %v9340, %v9428
        %9430 = vmatmul.bf16.gmra.mxu0 %v7539
        %v9431 = vpop.f32.mrf.mxu0
        %v9432 = vadd.f32 %v9343, %v9431
        %v9433 = vpop.f32.mrf.mxu0
        %v9434 = vadd.f32 %v9345, %v9433
        %9435 = vmatmul.bf16.gmra.mxu0 %v7541
        %v9436 = vpop.f32.mrf.mxu0
        %v9437 = vadd.f32 %v9348, %v9436
        %v9438 = vpop.f32.mrf.mxu0
        %v9439 = vadd.f32 %v9350, %v9438
        %9440 = vmatmul.bf16.gmra.mxu0 %v7543
        %v9441 = vpop.f32.mrf.mxu0
        %v9442 = vadd.f32 %v9353, %v9441
        %v9443 = vpop.f32.mrf.mxu0
        %v9444 = vadd.f32 %v9355, %v9443
        %9445 = vmatmul.bf16.gmra.mxu0 %v7545
        %v9446 = vpop.f32.mrf.mxu0
        %v9447 = vadd.f32 %v9358, %v9446
        %v9448 = vpop.f32.mrf.mxu0
        %v9449 = vadd.f32 %v9360, %v9448
        %9450 = vmatmul.bf16.gmra.mxu0 %v7547
        %v9451 = vpop.f32.mrf.mxu0
        %v9452 = vadd.f32 %v9363, %v9451
        %v9453 = vpop.f32.mrf.mxu0
        %v9454 = vadd.f32 %v9365, %v9453
        %9455 = vmatmul.bf16.gmra.mxu0 %v7549
        %v9456 = vpop.f32.mrf.mxu0
        %v9457 = vadd.f32 %v9368, %v9456
        %v9458 = vpop.f32.mrf.mxu0
        %v9459 = vadd.f32 %v9370, %v9458
        %9460 = vmatmul.bf16.gmra.mxu0 %v7551
        %v9461 = vpop.f32.mrf.mxu0
        %v9462 = vadd.f32 %v9373, %v9461
        %v9463 = vpop.f32.mrf.mxu0
        %v9464 = vadd.f32 %v9375, %v9463
        %9465 = vmatmul.bf16.gmra.mxu0 %v7553
        %v9466 = vpop.f32.mrf.mxu0
        %v9467 = vadd.f32 %v9378, %v9466
        %v9468 = vpop.f32.mrf.mxu0
        %v9469 = vadd.f32 %v9380, %v9468
        %9470 = vmatmul.bf16.gmra.mxu0 %v7555
        %v9471 = vpop.f32.mrf.mxu0
        %v9472 = vadd.f32 %v9383, %v9471
        %v9473 = vpop.f32.mrf.mxu0
        %v9474 = vadd.f32 %v9385, %v9473
        %9475 = vdwg.mxu0
        %9476 = vmatpush.bf16.msra.mxu0 %v8549
        %9477 = vmatpush.bf16.msra.mxu0 %v8547
        %9478 = vmatpush.bf16.msra.mxu0 %v8545
        %9479 = vmatpush.bf16.msra.mxu0 %v8543
        %9480 = vmatpush.bf16.msra.mxu0 %v8541
        %9481 = vmatpush.bf16.msra.mxu0 %v8539
        %9482 = vmatpush.bf16.msra.mxu0 %v8537
        %9483 = vmatpush.bf16.msra.mxu0 %v8535
        %9484 = vmatmul.bf16.gmra.mxu0 %v7528
        %v9485 = vpop.f32.mrf.mxu0
        %v9486 = vadd.f32 %v9397, %v9485
        %v9487 = vpop.f32.mrf.mxu0
        %v9488 = vadd.f32 %v9399, %v9487
        %9489 = vmatmul.bf16.gmra.mxu0 %v7530
        %v9490 = vpop.f32.mrf.mxu0
        %v9491 = vadd.f32 %v9402, %v9490
        %v9492 = vpop.f32.mrf.mxu0
        %v9493 = vadd.f32 %v9404, %v9492
        %9494 = vmatmul.bf16.gmra.mxu0 %v7528
        %v9495 = vpop.f32.mrf.mxu0
        %v9496 = vadd.f32 %v9407, %v9495
        %v9497 = vpop.f32.mrf.mxu0
        %v9498 = vadd.f32 %v9409, %v9497
        %9499 = vmatmul.bf16.gmra.mxu0 %v7532
        %v9500 = vpop.f32.mrf.mxu0
        %v9501 = vadd.f32 %v9412, %v9500
        %v9502 = vpop.f32.mrf.mxu0
        %v9503 = vadd.f32 %v9414, %v9502
        %9504 = vmatmul.bf16.gmra.mxu0 %v7534
        %v9505 = vpop.f32.mrf.mxu0
        %v9506 = vadd.f32 %v9417, %v9505
        %v9507 = vpop.f32.mrf.mxu0
        %v9508 = vadd.f32 %v9419, %v9507
        %9509 = vmatmul.bf16.gmra.mxu0 %v7536
        %v9510 = vpop.f32.mrf.mxu0
        %v9511 = vadd.f32 %v9422, %v9510
        %v9512 = vpop.f32.mrf.mxu0
        %v9513 = vadd.f32 %v9424, %v9512
        %9514 = vmatmul.bf16.gmra.mxu0 %v7538
        %v9515 = vpop.f32.mrf.mxu0
        %v9516 = vadd.f32 %v9427, %v9515
        %v9517 = vpop.f32.mrf.mxu0
        %v9518 = vadd.f32 %v9429, %v9517
        %9519 = vmatmul.bf16.gmra.mxu0 %v7540
        %v9520 = vpop.f32.mrf.mxu0
        %v9521 = vadd.f32 %v9432, %v9520
        %v9522 = vpop.f32.mrf.mxu0
        %v9523 = vadd.f32 %v9434, %v9522
        %9524 = vmatmul.bf16.gmra.mxu0 %v7542
        %v9525 = vpop.f32.mrf.mxu0
        %v9526 = vadd.f32 %v9437, %v9525
        %v9527 = vpop.f32.mrf.mxu0
        %v9528 = vadd.f32 %v9439, %v9527
        %9529 = vmatmul.bf16.gmra.mxu0 %v7544
        %v9530 = vpop.f32.mrf.mxu0
        %v9531 = vadd.f32 %v9442, %v9530
        %v9532 = vpop.f32.mrf.mxu0
        %v9533 = vadd.f32 %v9444, %v9532
        %9534 = vmatmul.bf16.gmra.mxu0 %v7546
        %v9535 = vpop.f32.mrf.mxu0
        %v9536 = vadd.f32 %v9447, %v9535
        %v9537 = vpop.f32.mrf.mxu0
        %v9538 = vadd.f32 %v9449, %v9537
        %9539 = vmatmul.bf16.gmra.mxu0 %v7548
        %v9540 = vpop.f32.mrf.mxu0
        %v9541 = vadd.f32 %v9452, %v9540
        %v9542 = vpop.f32.mrf.mxu0
        %v9543 = vadd.f32 %v9454, %v9542
        %9544 = vmatmul.bf16.gmra.mxu0 %v7550
        %v9545 = vpop.f32.mrf.mxu0
        %v9546 = vadd.f32 %v9457, %v9545
        %v9547 = vpop.f32.mrf.mxu0
        %v9548 = vadd.f32 %v9459, %v9547
        %9549 = vmatmul.bf16.gmra.mxu0 %v7552
        %v9550 = vpop.f32.mrf.mxu0
        %v9551 = vadd.f32 %v9462, %v9550
        %v9552 = vpop.f32.mrf.mxu0
        %v9553 = vadd.f32 %v9464, %v9552
        %9554 = vmatmul.bf16.gmra.mxu0 %v7554
        %v9555 = vpop.f32.mrf.mxu0
        %v9556 = vadd.f32 %v9467, %v9555
        %v9557 = vpop.f32.mrf.mxu0
        %v9558 = vadd.f32 %v9469, %v9557
        %9559 = vmatmul.bf16.gmra.mxu0 %v7556
        %v9560 = vpop.f32.mrf.mxu0
        %v9561 = vadd.f32 %v9472, %v9560
        %v9562 = vpop.f32.mrf.mxu0
        %v9563 = vadd.f32 %v9474, %v9562
        %9564 = vdwg.mxu0
        %9565 = vmatpush.bf16.msra.mxu0 %v8565
        %9566 = vmatpush.bf16.msra.mxu0 %v8563
        %9567 = vmatpush.bf16.msra.mxu0 %v8561
        %9568 = vmatpush.bf16.msra.mxu0 %v8559
        %9569 = vmatpush.bf16.msra.mxu0 %v8557
        %9570 = vmatpush.bf16.msra.mxu0 %v8555
        %9571 = vmatpush.bf16.msra.mxu0 %v8553
        %9572 = vmatpush.bf16.msra.mxu0 %v8551
        %9573 = vmatmul.bf16.gmra.mxu0 %v7209
        %v9574 = vpop.f32.mrf.mxu0
        %v9575 = vadd.f32 %v9486, %v9574
        %v9576 = vpop.f32.mrf.mxu0
        %v9577 = vadd.f32 %v9488, %v9576
        %9578 = vmatmul.bf16.gmra.mxu0 %v7207
        %v9579 = vpop.f32.mrf.mxu0
        %v9580 = vadd.f32 %v9491, %v9579
        %v9581 = vpop.f32.mrf.mxu0
        %v9582 = vadd.f32 %v9493, %v9581
        %9583 = vmatmul.bf16.gmra.mxu0 %v7211
        %v9584 = vpop.f32.mrf.mxu0
        %v9585 = vadd.f32 %v9496, %v9584
        %v9586 = vpop.f32.mrf.mxu0
        %v9587 = vadd.f32 %v9498, %v9586
        %9588 = vmatmul.bf16.gmra.mxu0 %v7213
        %v9589 = vpop.f32.mrf.mxu0
        %v9590 = vadd.f32 %v9501, %v9589
        %v9591 = vpop.f32.mrf.mxu0
        %v9592 = vadd.f32 %v9503, %v9591
        %9593 = vmatmul.bf16.gmra.mxu0 %v7215
        %v9594 = vpop.f32.mrf.mxu0
        %v9595 = vadd.f32 %v9506, %v9594
        %v9596 = vpop.f32.mrf.mxu0
        %v9597 = vadd.f32 %v9508, %v9596
        %9598 = vmatmul.bf16.gmra.mxu0 %v7217
        %v9599 = vpop.f32.mrf.mxu0
        %v9600 = vadd.f32 %v9511, %v9599
        %v9601 = vpop.f32.mrf.mxu0
        %v9602 = vadd.f32 %v9513, %v9601
        %9603 = vmatmul.bf16.gmra.mxu0 %v7219
        %v9604 = vpop.f32.mrf.mxu0
        %v9605 = vadd.f32 %v9516, %v9604
        %v9606 = vpop.f32.mrf.mxu0
        %v9607 = vadd.f32 %v9518, %v9606
        %9608 = vmatmul.bf16.gmra.mxu0 %v7221
        %v9609 = vpop.f32.mrf.mxu0
        %v9610 = vadd.f32 %v9521, %v9609
        %v9611 = vpop.f32.mrf.mxu0
        %v9612 = vadd.f32 %v9523, %v9611
        %9613 = vmatmul.bf16.gmra.mxu0 %v7223
        %v9614 = vpop.f32.mrf.mxu0
        %v9615 = vadd.f32 %v9526, %v9614
        %v9616 = vpop.f32.mrf.mxu0
        %v9617 = vadd.f32 %v9528, %v9616
        %9618 = vmatmul.bf16.gmra.mxu0 %v7225
        %v9619 = vpop.f32.mrf.mxu0
        %v9620 = vadd.f32 %v9531, %v9619
        %v9621 = vpop.f32.mrf.mxu0
        %v9622 = vadd.f32 %v9533, %v9621
        %9623 = vmatmul.bf16.gmra.mxu0 %v7227
        %v9624 = vpop.f32.mrf.mxu0
        %v9625 = vadd.f32 %v9536, %v9624
        %v9626 = vpop.f32.mrf.mxu0
        %v9627 = vadd.f32 %v9538, %v9626
        %9628 = vmatmul.bf16.gmra.mxu0 %v7229
        %v9629 = vpop.f32.mrf.mxu0
        %v9630 = vadd.f32 %v9541, %v9629
        %v9631 = vpop.f32.mrf.mxu0
        %v9632 = vadd.f32 %v9543, %v9631
        %9633 = vmatmul.bf16.gmra.mxu0 %v7231
        %v9634 = vpop.f32.mrf.mxu0
        %v9635 = vadd.f32 %v9546, %v9634
        %v9636 = vpop.f32.mrf.mxu0
        %v9637 = vadd.f32 %v9548, %v9636
        %9638 = vmatmul.bf16.gmra.mxu0 %v7233
        %v9639 = vpop.f32.mrf.mxu0
        %v9640 = vadd.f32 %v9551, %v9639
        %v9641 = vpop.f32.mrf.mxu0
        %v9642 = vadd.f32 %v9553, %v9641
        %9643 = vmatmul.bf16.gmra.mxu0 %v7235
        %v9644 = vpop.f32.mrf.mxu0
        %v9645 = vadd.f32 %v9556, %v9644
        %v9646 = vpop.f32.mrf.mxu0
        %v9647 = vadd.f32 %v9558, %v9646
        %9648 = vmatmul.bf16.gmra.mxu0 %v7237
        %v9649 = vpop.f32.mrf.mxu0
        %v9650 = vadd.f32 %v9561, %v9649
        %v9651 = vpop.f32.mrf.mxu0
        %v9652 = vadd.f32 %v9563, %v9651
        %9653 = vdwg.mxu0
        %9654 = vmatpush.bf16.msra.mxu0 %v8581
        %9655 = vmatpush.bf16.msra.mxu0 %v8579
        %9656 = vmatpush.bf16.msra.mxu0 %v8577
        %9657 = vmatpush.bf16.msra.mxu0 %v8575
        %9658 = vmatpush.bf16.msra.mxu0 %v8573
        %9659 = vmatpush.bf16.msra.mxu0 %v8571
        %9660 = vmatpush.bf16.msra.mxu0 %v8569
        %9661 = vmatpush.bf16.msra.mxu0 %v8567
        %9662 = vmatmul.bf16.gmra.mxu0 %v7210
        %v9663 = vpop.f32.mrf.mxu0
        %v9664 = vadd.f32 %v9575, %v9663
        %v9665 = vpop.f32.mrf.mxu0
        %v9666 = vadd.f32 %v9577, %v9665
        %9667 = vmatmul.bf16.gmra.mxu0 %v7208
        %v9668 = vpop.f32.mrf.mxu0
        %v9669 = vadd.f32 %v9580, %v9668
        %v9670 = vpop.f32.mrf.mxu0
        %v9671 = vadd.f32 %v9582, %v9670
        %9672 = vmatmul.bf16.gmra.mxu0 %v7212
        %v9673 = vpop.f32.mrf.mxu0
        %v9674 = vadd.f32 %v9585, %v9673
        %v9675 = vpop.f32.mrf.mxu0
        %v9676 = vadd.f32 %v9587, %v9675
        %9677 = vmatmul.bf16.gmra.mxu0 %v7214
        %v9678 = vpop.f32.mrf.mxu0
        %v9679 = vadd.f32 %v9590, %v9678
        %v9680 = vpop.f32.mrf.mxu0
        %v9681 = vadd.f32 %v9592, %v9680
        %9682 = vmatmul.bf16.gmra.mxu0 %v7216
        %v9683 = vpop.f32.mrf.mxu0
        %v9684 = vadd.f32 %v9595, %v9683
        %v9685 = vpop.f32.mrf.mxu0
        %v9686 = vadd.f32 %v9597, %v9685
        %9687 = vmatmul.bf16.gmra.mxu0 %v7218
        %v9688 = vpop.f32.mrf.mxu0
        %v9689 = vadd.f32 %v9600, %v9688
        %v9690 = vpop.f32.mrf.mxu0
        %v9691 = vadd.f32 %v9602, %v9690
        %9692 = vmatmul.bf16.gmra.mxu0 %v7220
        %v9693 = vpop.f32.mrf.mxu0
        %v9694 = vadd.f32 %v9605, %v9693
        %v9695 = vpop.f32.mrf.mxu0
        %v9696 = vadd.f32 %v9607, %v9695
        %9697 = vmatmul.bf16.gmra.mxu0 %v7222
        %v9698 = vpop.f32.mrf.mxu0
        %v9699 = vadd.f32 %v9610, %v9698
        %v9700 = vpop.f32.mrf.mxu0
        %v9701 = vadd.f32 %v9612, %v9700
        %9702 = vmatmul.bf16.gmra.mxu0 %v7224
        %v9703 = vpop.f32.mrf.mxu0
        %v9704 = vadd.f32 %v9615, %v9703
        %v9705 = vpop.f32.mrf.mxu0
        %v9706 = vadd.f32 %v9617, %v9705
        %9707 = vmatmul.bf16.gmra.mxu0 %v7226
        %v9708 = vpop.f32.mrf.mxu0
        %v9709 = vadd.f32 %v9620, %v9708
        %v9710 = vpop.f32.mrf.mxu0
        %v9711 = vadd.f32 %v9622, %v9710
        %9712 = vmatmul.bf16.gmra.mxu0 %v7228
        %v9713 = vpop.f32.mrf.mxu0
        %v9714 = vadd.f32 %v9625, %v9713
        %v9715 = vpop.f32.mrf.mxu0
        %v9716 = vadd.f32 %v9627, %v9715
        %9717 = vmatmul.bf16.gmra.mxu0 %v7230
        %v9718 = vpop.f32.mrf.mxu0
        %v9719 = vadd.f32 %v9630, %v9718
        %v9720 = vpop.f32.mrf.mxu0
        %v9721 = vadd.f32 %v9632, %v9720
        %9722 = vmatmul.bf16.gmra.mxu0 %v7232
        %v9723 = vpop.f32.mrf.mxu0
        %v9724 = vadd.f32 %v9635, %v9723
        %v9725 = vpop.f32.mrf.mxu0
        %v9726 = vadd.f32 %v9637, %v9725
        %9727 = vmatmul.bf16.gmra.mxu0 %v7234
        %v9728 = vpop.f32.mrf.mxu0
        %v9729 = vadd.f32 %v9640, %v9728
        %v9730 = vpop.f32.mrf.mxu0
        %v9731 = vadd.f32 %v9642, %v9730
        %9732 = vmatmul.bf16.gmra.mxu0 %v7236
        %v9733 = vpop.f32.mrf.mxu0
        %v9734 = vadd.f32 %v9645, %v9733
        %v9735 = vpop.f32.mrf.mxu0
        %v9736 = vadd.f32 %v9647, %v9735
        %9737 = vmatmul.bf16.gmra.mxu0 %v7238
        %v9738 = vpop.f32.mrf.mxu0
        %v9739 = vadd.f32 %v9650, %v9738
        %v9740 = vpop.f32.mrf.mxu0
        %v9741 = vadd.f32 %v9652, %v9740
        %9742 = vdwg.mxu0
        %9743 = vmatpush.bf16.msra.mxu0 %v8597
        %9744 = vmatpush.bf16.msra.mxu0 %v8595
        %9745 = vmatpush.bf16.msra.mxu0 %v8593
        %9746 = vmatpush.bf16.msra.mxu0 %v8591
        %9747 = vmatpush.bf16.msra.mxu0 %v8589
        %9748 = vmatpush.bf16.msra.mxu0 %v8587
        %9749 = vmatpush.bf16.msra.mxu0 %v8585
        %9750 = vmatpush.bf16.msra.mxu0 %v8583
        %9751 = vmatmul.bf16.gmra.mxu0 %v6921
        %v9752 = vpop.f32.mrf.mxu0
        %v9753 = vadd.f32 %v9664, %v9752
        %v9754 = vpop.f32.mrf.mxu0
        %v9755 = vadd.f32 %v9666, %v9754
        %9756 = vmatmul.bf16.gmra.mxu0 %v6919
        %v9757 = vpop.f32.mrf.mxu0
        %v9758 = vadd.f32 %v9669, %v9757
        %v9759 = vpop.f32.mrf.mxu0
        %v9760 = vadd.f32 %v9671, %v9759
        %9761 = vmatmul.bf16.gmra.mxu0 %v6923
        %v9762 = vpop.f32.mrf.mxu0
        %v9763 = vadd.f32 %v9674, %v9762
        %v9764 = vpop.f32.mrf.mxu0
        %v9765 = vadd.f32 %v9676, %v9764
        %9766 = vmatmul.bf16.gmra.mxu0 %v6925
        %v9767 = vpop.f32.mrf.mxu0
        %v9768 = vadd.f32 %v9679, %v9767
        %v9769 = vpop.f32.mrf.mxu0
        %v9770 = vadd.f32 %v9681, %v9769
        %9771 = vmatmul.bf16.gmra.mxu0 %v6927
        %v9772 = vpop.f32.mrf.mxu0
        %v9773 = vadd.f32 %v9684, %v9772
        %v9774 = vpop.f32.mrf.mxu0
        %v9775 = vadd.f32 %v9686, %v9774
        %9776 = vmatmul.bf16.gmra.mxu0 %v6929
        %v9777 = vpop.f32.mrf.mxu0
        %v9778 = vadd.f32 %v9689, %v9777
        %v9779 = vpop.f32.mrf.mxu0
        %v9780 = vadd.f32 %v9691, %v9779
        %9781 = vmatmul.bf16.gmra.mxu0 %v6931
        %v9782 = vpop.f32.mrf.mxu0
        %v9783 = vadd.f32 %v9694, %v9782
        %v9784 = vpop.f32.mrf.mxu0
        %v9785 = vadd.f32 %v9696, %v9784
        %9786 = vmatmul.bf16.gmra.mxu0 %v6933
        %v9787 = vpop.f32.mrf.mxu0
        %v9788 = vadd.f32 %v9699, %v9787
        %v9789 = vpop.f32.mrf.mxu0
        %v9790 = vadd.f32 %v9701, %v9789
        %9791 = vmatmul.bf16.gmra.mxu0 %v6935
        %v9792 = vpop.f32.mrf.mxu0
        %v9793 = vadd.f32 %v9704, %v9792
        %v9794 = vpop.f32.mrf.mxu0
        %v9795 = vadd.f32 %v9706, %v9794
        %9796 = vmatmul.bf16.gmra.mxu0 %v6937
        %v9797 = vpop.f32.mrf.mxu0
        %v9798 = vadd.f32 %v9709, %v9797
        %v9799 = vpop.f32.mrf.mxu0
        %v9800 = vadd.f32 %v9711, %v9799
        %9801 = vmatmul.bf16.gmra.mxu0 %v6939
        %v9802 = vpop.f32.mrf.mxu0
        %v9803 = vadd.f32 %v9714, %v9802
        %v9804 = vpop.f32.mrf.mxu0
        %v9805 = vadd.f32 %v9716, %v9804
        %9806 = vmatmul.bf16.gmra.mxu0 %v6941
        %v9807 = vpop.f32.mrf.mxu0
        %v9808 = vadd.f32 %v9719, %v9807
        %v9809 = vpop.f32.mrf.mxu0
        %v9810 = vadd.f32 %v9721, %v9809
        %9811 = vmatmul.bf16.gmra.mxu0 %v6943
        %v9812 = vpop.f32.mrf.mxu0
        %v9813 = vadd.f32 %v9724, %v9812
        %v9814 = vpop.f32.mrf.mxu0
        %v9815 = vadd.f32 %v9726, %v9814
        %9816 = vmatmul.bf16.gmra.mxu0 %v6945
        %v9817 = vpop.f32.mrf.mxu0
        %v9818 = vadd.f32 %v9729, %v9817
        %v9819 = vpop.f32.mrf.mxu0
        %v9820 = vadd.f32 %v9731, %v9819
        %9821 = vmatmul.bf16.gmra.mxu0 %v6947
        %v9822 = vpop.f32.mrf.mxu0
        %v9823 = vadd.f32 %v9734, %v9822
        %v9824 = vpop.f32.mrf.mxu0
        %v9825 = vadd.f32 %v9736, %v9824
        %9826 = vmatmul.bf16.gmra.mxu0 %v6949
        %v9827 = vpop.f32.mrf.mxu0
        %v9828 = vadd.f32 %v9739, %v9827
        %v9829 = vpop.f32.mrf.mxu0
        %v9830 = vadd.f32 %v9741, %v9829
        %9831 = vdwg.mxu0
        %9832 = vmatpush.bf16.msra.mxu0 %v8613
        %9833 = vmatpush.bf16.msra.mxu0 %v8611
        %9834 = vmatpush.bf16.msra.mxu0 %v8609
        %9835 = vmatpush.bf16.msra.mxu0 %v8607
        %9836 = vmatpush.bf16.msra.mxu0 %v8605
        %9837 = vmatpush.bf16.msra.mxu0 %v8603
        %9838 = vmatpush.bf16.msra.mxu0 %v8601
        %9839 = vmatpush.bf16.msra.mxu0 %v8599
        %9840 = vmatmul.bf16.gmra.mxu0 %v6922
        %v9841 = vpop.f32.mrf.mxu0
        %v9842 = vadd.f32 %v9753, %v9841
        %v9843 = vpop.f32.mrf.mxu0
        %v9844 = vadd.f32 %v9755, %v9843
        %9845 = vmatmul.bf16.gmra.mxu0 %v6920
        %v9846 = vpop.f32.mrf.mxu0
        %v9847 = vadd.f32 %v9758, %v9846
        %v9848 = vpop.f32.mrf.mxu0
        %v9849 = vadd.f32 %v9760, %v9848
        %9850 = vmatmul.bf16.gmra.mxu0 %v6924
        %v9851 = vpop.f32.mrf.mxu0
        %v9852 = vadd.f32 %v9763, %v9851
        %v9853 = vpop.f32.mrf.mxu0
        %v9854 = vadd.f32 %v9765, %v9853
        %9855 = vmatmul.bf16.gmra.mxu0 %v6926
        %v9856 = vpop.f32.mrf.mxu0
        %v9857 = vadd.f32 %v9768, %v9856
        %v9858 = vpop.f32.mrf.mxu0
        %v9859 = vadd.f32 %v9770, %v9858
        %9860 = vmatmul.bf16.gmra.mxu0 %v6928
        %v9861 = vpop.f32.mrf.mxu0
        %v9862 = vadd.f32 %v9773, %v9861
        %v9863 = vpop.f32.mrf.mxu0
        %v9864 = vadd.f32 %v9775, %v9863
        %9865 = vmatmul.bf16.gmra.mxu0 %v6930
        %v9866 = vpop.f32.mrf.mxu0
        %v9867 = vadd.f32 %v9778, %v9866
        %v9868 = vpop.f32.mrf.mxu0
        %v9869 = vadd.f32 %v9780, %v9868
        %9870 = vmatmul.bf16.gmra.mxu0 %v6932
        %v9871 = vpop.f32.mrf.mxu0
        %v9872 = vadd.f32 %v9783, %v9871
        %v9873 = vpop.f32.mrf.mxu0
        %v9874 = vadd.f32 %v9785, %v9873
        %9875 = vmatmul.bf16.gmra.mxu0 %v6934
        %v9876 = vpop.f32.mrf.mxu0
        %v9877 = vadd.f32 %v9788, %v9876
        %v9878 = vpop.f32.mrf.mxu0
        %v9879 = vadd.f32 %v9790, %v9878
        %9880 = vmatmul.bf16.gmra.mxu0 %v6936
        %v9881 = vpop.f32.mrf.mxu0
        %v9882 = vadd.f32 %v9793, %v9881
        %v9883 = vpop.f32.mrf.mxu0
        %v9884 = vadd.f32 %v9795, %v9883
        %9885 = vmatmul.bf16.gmra.mxu0 %v6938
        %v9886 = vpop.f32.mrf.mxu0
        %v9887 = vadd.f32 %v9798, %v9886
        %v9888 = vpop.f32.mrf.mxu0
        %v9889 = vadd.f32 %v9800, %v9888
        %9890 = vmatmul.bf16.gmra.mxu0 %v6940
        %v9891 = vpop.f32.mrf.mxu0
        %v9892 = vadd.f32 %v9803, %v9891
        %v9893 = vpop.f32.mrf.mxu0
        %v9894 = vadd.f32 %v9805, %v9893
        %9895 = vmatmul.bf16.gmra.mxu0 %v6942
        %v9896 = vpop.f32.mrf.mxu0
        %v9897 = vadd.f32 %v9808, %v9896
        %v9898 = vpop.f32.mrf.mxu0
        %v9899 = vadd.f32 %v9810, %v9898
        %9900 = vmatmul.bf16.gmra.mxu0 %v6944
        %v9901 = vpop.f32.mrf.mxu0
        %v9902 = vadd.f32 %v9813, %v9901
        %v9903 = vpop.f32.mrf.mxu0
        %v9904 = vadd.f32 %v9815, %v9903
        %9905 = vmatmul.bf16.gmra.mxu0 %v6946
        %v9906 = vpop.f32.mrf.mxu0
        %v9907 = vadd.f32 %v9818, %v9906
        %v9908 = vpop.f32.mrf.mxu0
        %v9909 = vadd.f32 %v9820, %v9908
        %9910 = vmatmul.bf16.gmra.mxu0 %v6948
        %v9911 = vpop.f32.mrf.mxu0
        %v9912 = vadd.f32 %v9823, %v9911
        %v9913 = vpop.f32.mrf.mxu0
        %v9914 = vadd.f32 %v9825, %v9913
        %9915 = vmatmul.bf16.gmra.mxu0 %v6950
        %v9916 = vpop.f32.mrf.mxu0
        %v9917 = vadd.f32 %v9828, %v9916
        %v9918 = vpop.f32.mrf.mxu0
        %v9919 = vadd.f32 %v9830, %v9918
        %9920 = vdwg.mxu0
        %9921 = vmatpush.bf16.msra.mxu0 %v8629
        %9922 = vmatpush.bf16.msra.mxu0 %v8627
        %9923 = vmatpush.bf16.msra.mxu0 %v8625
        %9924 = vmatpush.bf16.msra.mxu0 %v8623
        %9925 = vmatpush.bf16.msra.mxu0 %v8621
        %9926 = vmatpush.bf16.msra.mxu0 %v8619
        %9927 = vmatpush.bf16.msra.mxu0 %v8617
        %9928 = vmatpush.bf16.msra.mxu0 %v8615
        %9929 = vmatmul.bf16.gmra.mxu0 %v7529
        %v9930 = vpop.f32.mrf.mxu0
        %v9931 = vadd.f32 %v9842, %v9930
        %v9932 = vpop.f32.mrf.mxu0
        %v9933 = vadd.f32 %v9844, %v9932
        %9934 = vmatmul.bf16.gmra.mxu0 %v7527
        %v9935 = vpop.f32.mrf.mxu0
        %v9936 = vadd.f32 %v9847, %v9935
        %v9937 = vpop.f32.mrf.mxu0
        %v9938 = vadd.f32 %v9849, %v9937
        %9939 = vmatmul.bf16.gmra.mxu0 %v7531
        %v9940 = vpop.f32.mrf.mxu0
        %v9941 = vadd.f32 %v9852, %v9940
        %v9942 = vpop.f32.mrf.mxu0
        %v9943 = vadd.f32 %v9854, %v9942
        %9944 = vmatmul.bf16.gmra.mxu0 %v7533
        %v9945 = vpop.f32.mrf.mxu0
        %v9946 = vadd.f32 %v9857, %v9945
        %v9947 = vpop.f32.mrf.mxu0
        %v9948 = vadd.f32 %v9859, %v9947
        %9949 = vmatmul.bf16.gmra.mxu0 %v7535
        %v9950 = vpop.f32.mrf.mxu0
        %v9951 = vadd.f32 %v9862, %v9950
        %v9952 = vpop.f32.mrf.mxu0
        %v9953 = vadd.f32 %v9864, %v9952
        %9954 = vmatmul.bf16.gmra.mxu0 %v7537
        %v9955 = vpop.f32.mrf.mxu0
        %v9956 = vadd.f32 %v9867, %v9955
        %v9957 = vpop.f32.mrf.mxu0
        %v9958 = vadd.f32 %v9869, %v9957
        %9959 = vmatmul.bf16.gmra.mxu0 %v7539
        %v9960 = vpop.f32.mrf.mxu0
        %v9961 = vadd.f32 %v9872, %v9960
        %v9962 = vpop.f32.mrf.mxu0
        %v9963 = vadd.f32 %v9874, %v9962
        %9964 = vmatmul.bf16.gmra.mxu0 %v7541
        %v9965 = vpop.f32.mrf.mxu0
        %v9966 = vadd.f32 %v9877, %v9965
        %v9967 = vpop.f32.mrf.mxu0
        %v9968 = vadd.f32 %v9879, %v9967
        %9969 = vmatmul.bf16.gmra.mxu0 %v7543
        %v9970 = vpop.f32.mrf.mxu0
        %v9971 = vadd.f32 %v9882, %v9970
        %v9972 = vpop.f32.mrf.mxu0
        %v9973 = vadd.f32 %v9884, %v9972
        %9974 = vmatmul.bf16.gmra.mxu0 %v7545
        %v9975 = vpop.f32.mrf.mxu0
        %v9976 = vadd.f32 %v9887, %v9975
        %v9977 = vpop.f32.mrf.mxu0
        %v9978 = vadd.f32 %v9889, %v9977
        %9979 = vmatmul.bf16.gmra.mxu0 %v7547
        %v9980 = vpop.f32.mrf.mxu0
        %v9981 = vadd.f32 %v9892, %v9980
        %v9982 = vpop.f32.mrf.mxu0
        %v9983 = vadd.f32 %v9894, %v9982
        %9984 = vmatmul.bf16.gmra.mxu0 %v7549
        %v9985 = vpop.f32.mrf.mxu0
        %v9986 = vadd.f32 %v9897, %v9985
        %v9987 = vpop.f32.mrf.mxu0
        %v9988 = vadd.f32 %v9899, %v9987
        %9989 = vmatmul.bf16.gmra.mxu0 %v7551
        %v9990 = vpop.f32.mrf.mxu0
        %v9991 = vadd.f32 %v9902, %v9990
        %v9992 = vpop.f32.mrf.mxu0
        %v9993 = vadd.f32 %v9904, %v9992
        %9994 = vmatmul.bf16.gmra.mxu0 %v7553
        %v9995 = vpop.f32.mrf.mxu0
        %v9996 = vadd.f32 %v9907, %v9995
        %v9997 = vpop.f32.mrf.mxu0
        %v9998 = vadd.f32 %v9909, %v9997
        %9999 = vmatmul.bf16.gmra.mxu0 %v7555
        %v10000 = vpop.f32.mrf.mxu0
        %v10001 = vadd.f32 %v9912, %v10000
        %v10002 = vpop.f32.mrf.mxu0
        %v10003 = vadd.f32 %v9914, %v10002
        %10004 = vmatmul.bf16.gmra.mxu0 %v7557
        %v10005 = vpop.f32.mrf.mxu0
        %v10006 = vadd.f32 %v9917, %v10005
        %v10007 = vpop.f32.mrf.mxu0
        %v10008 = vadd.f32 %v9919, %v10007
        %10009 = vdwg.mxu0
        %10010 = vmatpush.bf16.msra.mxu0 %v8645
        %10011 = vmatpush.bf16.msra.mxu0 %v8643
        %10012 = vmatpush.bf16.msra.mxu0 %v8641
        %10013 = vmatpush.bf16.msra.mxu0 %v8639
        %10014 = vmatpush.bf16.msra.mxu0 %v8637
        %10015 = vmatpush.bf16.msra.mxu0 %v8635
        %10016 = vmatpush.bf16.msra.mxu0 %v8633
        %10017 = vmatpush.bf16.msra.mxu0 %v8631
        %10018 = vmatmul.bf16.gmra.mxu0 %v7530
        %v10019 = vpop.f32.mrf.mxu0
        %v10020 = vadd.f32 %v9931, %v10019
        %v10021 = vpop.f32.mrf.mxu0
        %v10022 = vadd.f32 %v9933, %v10021
        %10023 = vmatmul.bf16.gmra.mxu0 %v7528
        %v10024 = vpop.f32.mrf.mxu0
        %v10025 = vadd.f32 %v9936, %v10024
        %v10026 = vpop.f32.mrf.mxu0
        %v10027 = vadd.f32 %v9938, %v10026
        %10028 = vmatmul.bf16.gmra.mxu0 %v7532
        %v10029 = vpop.f32.mrf.mxu0
        %v10030 = vadd.f32 %v9941, %v10029
        %v10031 = vpop.f32.mrf.mxu0
        %v10032 = vadd.f32 %v9943, %v10031
        %10033 = vmatmul.bf16.gmra.mxu0 %v7534
        %v10034 = vpop.f32.mrf.mxu0
        %v10035 = vadd.f32 %v9946, %v10034
        %v10036 = vpop.f32.mrf.mxu0
        %v10037 = vadd.f32 %v9948, %v10036
        %10038 = vmatmul.bf16.gmra.mxu0 %v7536
        %v10039 = vpop.f32.mrf.mxu0
        %v10040 = vadd.f32 %v9951, %v10039
        %v10041 = vpop.f32.mrf.mxu0
        %v10042 = vadd.f32 %v9953, %v10041
        %10043 = vmatmul.bf16.gmra.mxu0 %v7538
        %v10044 = vpop.f32.mrf.mxu0
        %v10045 = vadd.f32 %v9956, %v10044
        %v10046 = vpop.f32.mrf.mxu0
        %v10047 = vadd.f32 %v9958, %v10046
        %10048 = vmatmul.bf16.gmra.mxu0 %v7540
        %v10049 = vpop.f32.mrf.mxu0
        %v10050 = vadd.f32 %v9961, %v10049
        %v10051 = vpop.f32.mrf.mxu0
        %v10052 = vadd.f32 %v9963, %v10051
        %10053 = vmatmul.bf16.gmra.mxu0 %v7542
        %v10054 = vpop.f32.mrf.mxu0
        %v10055 = vadd.f32 %v9966, %v10054
        %v10056 = vpop.f32.mrf.mxu0
        %v10057 = vadd.f32 %v9968, %v10056
        %10058 = vmatmul.bf16.gmra.mxu0 %v7544
        %v10059 = vpop.f32.mrf.mxu0
        %v10060 = vadd.f32 %v9971, %v10059
        %v10061 = vpop.f32.mrf.mxu0
        %v10062 = vadd.f32 %v9973, %v10061
        %10063 = vmatmul.bf16.gmra.mxu0 %v7546
        %v10064 = vpop.f32.mrf.mxu0
        %v10065 = vadd.f32 %v9976, %v10064
        %v10066 = vpop.f32.mrf.mxu0
        %v10067 = vadd.f32 %v9978, %v10066
        %10068 = vmatmul.bf16.gmra.mxu0 %v7548
        %v10069 = vpop.f32.mrf.mxu0
        %v10070 = vadd.f32 %v9981, %v10069
        %v10071 = vpop.f32.mrf.mxu0
        %v10072 = vadd.f32 %v9983, %v10071
        %10073 = vmatmul.bf16.gmra.mxu0 %v7550
        %v10074 = vpop.f32.mrf.mxu0
        %v10075 = vadd.f32 %v9986, %v10074
        %v10076 = vpop.f32.mrf.mxu0
        %v10077 = vadd.f32 %v9988, %v10076
        %10078 = vmatmul.bf16.gmra.mxu0 %v7552
        %v10079 = vpop.f32.mrf.mxu0
        %v10080 = vadd.f32 %v9991, %v10079
        %v10081 = vpop.f32.mrf.mxu0
        %v10082 = vadd.f32 %v9993, %v10081
        %10083 = vmatmul.bf16.gmra.mxu0 %v7554
        %v10084 = vpop.f32.mrf.mxu0
        %v10085 = vadd.f32 %v9996, %v10084
        %v10086 = vpop.f32.mrf.mxu0
        %v10087 = vadd.f32 %v9998, %v10086
        %10088 = vmatmul.bf16.gmra.mxu0 %v7556
        %v10089 = vpop.f32.mrf.mxu0
        %v10090 = vadd.f32 %v10001, %v10089
        %v10091 = vpop.f32.mrf.mxu0
        %v10092 = vadd.f32 %v10003, %v10091
        %10093 = vmatmul.bf16.gmra.mxu0 %v7558
        %v10094 = vpop.f32.mrf.mxu0
        %v10095 = vadd.f32 %v10006, %v10094
        %v10096 = vpop.f32.mrf.mxu0
        %v10097 = vadd.f32 %v10008, %v10096
        %10098 = vdwg.mxu0
        %10099 = vmatpush.bf16.msra.mxu0 %v8661
        %10100 = vmatpush.bf16.msra.mxu0 %v8659
        %10101 = vmatpush.bf16.msra.mxu0 %v8657
        %10102 = vmatpush.bf16.msra.mxu0 %v8655
        %10103 = vmatpush.bf16.msra.mxu0 %v8653
        %10104 = vmatpush.bf16.msra.mxu0 %v8651
        %10105 = vmatpush.bf16.msra.mxu0 %v8649
        %10106 = vmatpush.bf16.msra.mxu0 %v8647
        %10107 = vmatmul.bf16.gmra.mxu0 %v7207
        %v10108 = vpop.f32.mrf.mxu0
        %v10109 = vadd.f32 %v10020, %v10108
        %v10110 = vpop.f32.mrf.mxu0
        %v10111 = vadd.f32 %v10022, %v10110
        %10112 = vmatmul.bf16.gmra.mxu0 %v7211
        %v10113 = vpop.f32.mrf.mxu0
        %v10114 = vadd.f32 %v10025, %v10113
        %v10115 = vpop.f32.mrf.mxu0
        %v10116 = vadd.f32 %v10027, %v10115
        %10117 = vmatmul.bf16.gmra.mxu0 %v7213
        %v10118 = vpop.f32.mrf.mxu0
        %v10119 = vadd.f32 %v10030, %v10118
        %v10120 = vpop.f32.mrf.mxu0
        %v10121 = vadd.f32 %v10032, %v10120
        %10122 = vmatmul.bf16.gmra.mxu0 %v7215
        %v10123 = vpop.f32.mrf.mxu0
        %v10124 = vadd.f32 %v10035, %v10123
        %v10125 = vpop.f32.mrf.mxu0
        %v10126 = vadd.f32 %v10037, %v10125
        %10127 = vmatmul.bf16.gmra.mxu0 %v7217
        %v10128 = vpop.f32.mrf.mxu0
        %v10129 = vadd.f32 %v10040, %v10128
        %v10130 = vpop.f32.mrf.mxu0
        %v10131 = vadd.f32 %v10042, %v10130
        %10132 = vmatmul.bf16.gmra.mxu0 %v7219
        %v10133 = vpop.f32.mrf.mxu0
        %v10134 = vadd.f32 %v10045, %v10133
        %v10135 = vpop.f32.mrf.mxu0
        %v10136 = vadd.f32 %v10047, %v10135
        %10137 = vmatmul.bf16.gmra.mxu0 %v7221
        %v10138 = vpop.f32.mrf.mxu0
        %v10139 = vadd.f32 %v10050, %v10138
        %v10140 = vpop.f32.mrf.mxu0
        %v10141 = vadd.f32 %v10052, %v10140
        %10142 = vmatmul.bf16.gmra.mxu0 %v7223
        %v10143 = vpop.f32.mrf.mxu0
        %v10144 = vadd.f32 %v10055, %v10143
        %v10145 = vpop.f32.mrf.mxu0
        %v10146 = vadd.f32 %v10057, %v10145
        %10147 = vmatmul.bf16.gmra.mxu0 %v7225
        %v10148 = vpop.f32.mrf.mxu0
        %v10149 = vadd.f32 %v10060, %v10148
        %v10150 = vpop.f32.mrf.mxu0
        %v10151 = vadd.f32 %v10062, %v10150
        %10152 = vmatmul.bf16.gmra.mxu0 %v7227
        %v10153 = vpop.f32.mrf.mxu0
        %v10154 = vadd.f32 %v10065, %v10153
        %v10155 = vpop.f32.mrf.mxu0
        %v10156 = vadd.f32 %v10067, %v10155
        %10157 = vmatmul.bf16.gmra.mxu0 %v7229
        %v10158 = vpop.f32.mrf.mxu0
        %v10159 = vadd.f32 %v10070, %v10158
        %v10160 = vpop.f32.mrf.mxu0
        %v10161 = vadd.f32 %v10072, %v10160
        %10162 = vmatmul.bf16.gmra.mxu0 %v7231
        %v10163 = vpop.f32.mrf.mxu0
        %v10164 = vadd.f32 %v10075, %v10163
        %v10165 = vpop.f32.mrf.mxu0
        %v10166 = vadd.f32 %v10077, %v10165
        %10167 = vmatmul.bf16.gmra.mxu0 %v7233
        %v10168 = vpop.f32.mrf.mxu0
        %v10169 = vadd.f32 %v10080, %v10168
        %v10170 = vpop.f32.mrf.mxu0
        %v10171 = vadd.f32 %v10082, %v10170
        %10172 = vmatmul.bf16.gmra.mxu0 %v7235
        %v10173 = vpop.f32.mrf.mxu0
        %v10174 = vadd.f32 %v10085, %v10173
        %v10175 = vpop.f32.mrf.mxu0
        %v10176 = vadd.f32 %v10087, %v10175
        %10177 = vmatmul.bf16.gmra.mxu0 %v7237
        %v10178 = vpop.f32.mrf.mxu0
        %v10179 = vadd.f32 %v10090, %v10178
        %v10180 = vpop.f32.mrf.mxu0
        %v10181 = vadd.f32 %v10092, %v10180
        %10182 = vmatmul.bf16.gmra.mxu0 %v7235
        %v10183 = vpop.f32.mrf.mxu0
        %v10184 = vadd.f32 %v10095, %v10183
        %v10185 = vpop.f32.mrf.mxu0
        %v10186 = vadd.f32 %v10097, %v10185
        %10187 = vdwg.mxu0
        %10188 = vmatpush.bf16.msra.mxu0 %v8677
        %10189 = vmatpush.bf16.msra.mxu0 %v8675
        %10190 = vmatpush.bf16.msra.mxu0 %v8673
        %10191 = vmatpush.bf16.msra.mxu0 %v8671
        %10192 = vmatpush.bf16.msra.mxu0 %v8669
        %10193 = vmatpush.bf16.msra.mxu0 %v8667
        %10194 = vmatpush.bf16.msra.mxu0 %v8665
        %10195 = vmatpush.bf16.msra.mxu0 %v8663
        %10196 = vmatmul.bf16.gmra.mxu0 %v7208
        %v10197 = vpop.f32.mrf.mxu0
        %v10198 = vadd.f32 %v10109, %v10197
        %v10199 = vpop.f32.mrf.mxu0
        %v10200 = vadd.f32 %v10111, %v10199
        %10201 = vmatmul.bf16.gmra.mxu0 %v7212
        %v10202 = vpop.f32.mrf.mxu0
        %v10203 = vadd.f32 %v10114, %v10202
        %v10204 = vpop.f32.mrf.mxu0
        %v10205 = vadd.f32 %v10116, %v10204
        %10206 = vmatmul.bf16.gmra.mxu0 %v7214
        %v10207 = vpop.f32.mrf.mxu0
        %v10208 = vadd.f32 %v10119, %v10207
        %v10209 = vpop.f32.mrf.mxu0
        %v10210 = vadd.f32 %v10121, %v10209
        %10211 = vmatmul.bf16.gmra.mxu0 %v7216
        %v10212 = vpop.f32.mrf.mxu0
        %v10213 = vadd.f32 %v10124, %v10212
        %v10214 = vpop.f32.mrf.mxu0
        %v10215 = vadd.f32 %v10126, %v10214
        %10216 = vmatmul.bf16.gmra.mxu0 %v7218
        %v10217 = vpop.f32.mrf.mxu0
        %v10218 = vadd.f32 %v10129, %v10217
        %v10219 = vpop.f32.mrf.mxu0
        %v10220 = vadd.f32 %v10131, %v10219
        %10221 = vmatmul.bf16.gmra.mxu0 %v7220
        %v10222 = vpop.f32.mrf.mxu0
        %v10223 = vadd.f32 %v10134, %v10222
        %v10224 = vpop.f32.mrf.mxu0
        %v10225 = vadd.f32 %v10136, %v10224
        %10226 = vmatmul.bf16.gmra.mxu0 %v7222
        %v10227 = vpop.f32.mrf.mxu0
        %v10228 = vadd.f32 %v10139, %v10227
        %v10229 = vpop.f32.mrf.mxu0
        %v10230 = vadd.f32 %v10141, %v10229
        %10231 = vmatmul.bf16.gmra.mxu0 %v7224
        %v10232 = vpop.f32.mrf.mxu0
        %v10233 = vadd.f32 %v10144, %v10232
        %v10234 = vpop.f32.mrf.mxu0
        %v10235 = vadd.f32 %v10146, %v10234
        %10236 = vmatmul.bf16.gmra.mxu0 %v7226
        %v10237 = vpop.f32.mrf.mxu0
        %v10238 = vadd.f32 %v10149, %v10237
        %v10239 = vpop.f32.mrf.mxu0
        %v10240 = vadd.f32 %v10151, %v10239
        %10241 = vmatmul.bf16.gmra.mxu0 %v7228
        %v10242 = vpop.f32.mrf.mxu0
        %v10243 = vadd.f32 %v10154, %v10242
        %v10244 = vpop.f32.mrf.mxu0
        %v10245 = vadd.f32 %v10156, %v10244
        %10246 = vmatmul.bf16.gmra.mxu0 %v7230
        %v10247 = vpop.f32.mrf.mxu0
        %v10248 = vadd.f32 %v10159, %v10247
        %v10249 = vpop.f32.mrf.mxu0
        %v10250 = vadd.f32 %v10161, %v10249
        %10251 = vmatmul.bf16.gmra.mxu0 %v7232
        %v10252 = vpop.f32.mrf.mxu0
        %v10253 = vadd.f32 %v10164, %v10252
        %v10254 = vpop.f32.mrf.mxu0
        %v10255 = vadd.f32 %v10166, %v10254
        %10256 = vmatmul.bf16.gmra.mxu0 %v7234
        %v10257 = vpop.f32.mrf.mxu0
        %v10258 = vadd.f32 %v10169, %v10257
        %v10259 = vpop.f32.mrf.mxu0
        %v10260 = vadd.f32 %v10171, %v10259
        %10261 = vmatmul.bf16.gmra.mxu0 %v7236
        %v10262 = vpop.f32.mrf.mxu0
        %v10263 = vadd.f32 %v10174, %v10262
        %v10264 = vpop.f32.mrf.mxu0
        %v10265 = vadd.f32 %v10176, %v10264
        %10266 = vmatmul.bf16.gmra.mxu0 %v7238
        %v10267 = vpop.f32.mrf.mxu0
        %v10268 = vadd.f32 %v10179, %v10267
        %v10269 = vpop.f32.mrf.mxu0
        %v10270 = vadd.f32 %v10181, %v10269
        %10271 = vmatmul.bf16.gmra.mxu0 %v7236
        %v10272 = vpop.f32.mrf.mxu0
        %v10273 = vadd.f32 %v10184, %v10272
        %v10274 = vpop.f32.mrf.mxu0
        %v10275 = vadd.f32 %v10186, %v10274
        %10276 = vdwg.mxu0
        %10277 = vmatpush.bf16.msra.mxu0 %v8693
        %10278 = vmatpush.bf16.msra.mxu0 %v8691
        %10279 = vmatpush.bf16.msra.mxu0 %v8689
        %10280 = vmatpush.bf16.msra.mxu0 %v8687
        %10281 = vmatpush.bf16.msra.mxu0 %v8685
        %10282 = vmatpush.bf16.msra.mxu0 %v8683
        %10283 = vmatpush.bf16.msra.mxu0 %v8681
        %10284 = vmatpush.bf16.msra.mxu0 %v8679
        %10285 = vmatmul.bf16.gmra.mxu0 %v6919
        %v10286 = vpop.f32.mrf.mxu0
        %v10287 = vadd.f32 %v10198, %v10286
        %v10288 = vpop.f32.mrf.mxu0
        %v10289 = vadd.f32 %v10200, %v10288
        %10290 = vmatmul.bf16.gmra.mxu0 %v6923
        %v10291 = vpop.f32.mrf.mxu0
        %v10292 = vadd.f32 %v10203, %v10291
        %v10293 = vpop.f32.mrf.mxu0
        %v10294 = vadd.f32 %v10205, %v10293
        %10295 = vmatmul.bf16.gmra.mxu0 %v6925
        %v10296 = vpop.f32.mrf.mxu0
        %v10297 = vadd.f32 %v10208, %v10296
        %v10298 = vpop.f32.mrf.mxu0
        %v10299 = vadd.f32 %v10210, %v10298
        %10300 = vmatmul.bf16.gmra.mxu0 %v6927
        %v10301 = vpop.f32.mrf.mxu0
        %v10302 = vadd.f32 %v10213, %v10301
        %v10303 = vpop.f32.mrf.mxu0
        %v10304 = vadd.f32 %v10215, %v10303
        %10305 = vmatmul.bf16.gmra.mxu0 %v6929
        %v10306 = vpop.f32.mrf.mxu0
        %v10307 = vadd.f32 %v10218, %v10306
        %v10308 = vpop.f32.mrf.mxu0
        %v10309 = vadd.f32 %v10220, %v10308
        %10310 = vmatmul.bf16.gmra.mxu0 %v6931
        %v10311 = vpop.f32.mrf.mxu0
        %v10312 = vadd.f32 %v10223, %v10311
        %v10313 = vpop.f32.mrf.mxu0
        %v10314 = vadd.f32 %v10225, %v10313
        %10315 = vmatmul.bf16.gmra.mxu0 %v6933
        %v10316 = vpop.f32.mrf.mxu0
        %v10317 = vadd.f32 %v10228, %v10316
        %v10318 = vpop.f32.mrf.mxu0
        %v10319 = vadd.f32 %v10230, %v10318
        %10320 = vmatmul.bf16.gmra.mxu0 %v6935
        %v10321 = vpop.f32.mrf.mxu0
        %v10322 = vadd.f32 %v10233, %v10321
        %v10323 = vpop.f32.mrf.mxu0
        %v10324 = vadd.f32 %v10235, %v10323
        %10325 = vmatmul.bf16.gmra.mxu0 %v6937
        %v10326 = vpop.f32.mrf.mxu0
        %v10327 = vadd.f32 %v10238, %v10326
        %v10328 = vpop.f32.mrf.mxu0
        %v10329 = vadd.f32 %v10240, %v10328
        %10330 = vmatmul.bf16.gmra.mxu0 %v6939
        %v10331 = vpop.f32.mrf.mxu0
        %v10332 = vadd.f32 %v10243, %v10331
        %v10333 = vpop.f32.mrf.mxu0
        %v10334 = vadd.f32 %v10245, %v10333
        %10335 = vmatmul.bf16.gmra.mxu0 %v6941
        %v10336 = vpop.f32.mrf.mxu0
        %v10337 = vadd.f32 %v10248, %v10336
        %v10338 = vpop.f32.mrf.mxu0
        %v10339 = vadd.f32 %v10250, %v10338
        %10340 = vmatmul.bf16.gmra.mxu0 %v6943
        %v10341 = vpop.f32.mrf.mxu0
        %v10342 = vadd.f32 %v10253, %v10341
        %v10343 = vpop.f32.mrf.mxu0
        %v10344 = vadd.f32 %v10255, %v10343
        %10345 = vmatmul.bf16.gmra.mxu0 %v6945
        %v10346 = vpop.f32.mrf.mxu0
        %v10347 = vadd.f32 %v10258, %v10346
        %v10348 = vpop.f32.mrf.mxu0
        %v10349 = vadd.f32 %v10260, %v10348
        %10350 = vmatmul.bf16.gmra.mxu0 %v6947
        %v10351 = vpop.f32.mrf.mxu0
        %v10352 = vadd.f32 %v10263, %v10351
        %v10353 = vpop.f32.mrf.mxu0
        %v10354 = vadd.f32 %v10265, %v10353
        %10355 = vmatmul.bf16.gmra.mxu0 %v6949
        %v10356 = vpop.f32.mrf.mxu0
        %v10357 = vadd.f32 %v10268, %v10356
        %v10358 = vpop.f32.mrf.mxu0
        %v10359 = vadd.f32 %v10270, %v10358
        %10360 = vmatmul.bf16.gmra.mxu0 %v6947
        %v10361 = vpop.f32.mrf.mxu0
        %v10362 = vadd.f32 %v10273, %v10361
        %v10363 = vpop.f32.mrf.mxu0
        %v10364 = vadd.f32 %v10275, %v10363
        %10365 = vdwg.mxu0
        %10366 = vmatpush.bf16.msra.mxu0 %v8709
        %10367 = vmatpush.bf16.msra.mxu0 %v8707
        %10368 = vmatpush.bf16.msra.mxu0 %v8705
        %10369 = vmatpush.bf16.msra.mxu0 %v8703
        %10370 = vmatpush.bf16.msra.mxu0 %v8701
        %10371 = vmatpush.bf16.msra.mxu0 %v8699
        %10372 = vmatpush.bf16.msra.mxu0 %v8697
        %10373 = vmatpush.bf16.msra.mxu0 %v8695
        %10374 = vmatmul.bf16.gmra.mxu0 %v6920
        %v10375 = vpop.f32.mrf.mxu0
        %v10376 = vadd.f32 %v10287, %v10375
        %v10377 = vpop.f32.mrf.mxu0
        %v10378 = vadd.f32 %v10289, %v10377
        %10379 = vmatmul.bf16.gmra.mxu0 %v6924
        %v10380 = vpop.f32.mrf.mxu0
        %v10381 = vadd.f32 %v10292, %v10380
        %v10382 = vpop.f32.mrf.mxu0
        %v10383 = vadd.f32 %v10294, %v10382
        %10384 = vmatmul.bf16.gmra.mxu0 %v6926
        %v10385 = vpop.f32.mrf.mxu0
        %v10386 = vadd.f32 %v10297, %v10385
        %v10387 = vpop.f32.mrf.mxu0
        %v10388 = vadd.f32 %v10299, %v10387
        %10389 = vmatmul.bf16.gmra.mxu0 %v6928
        %v10390 = vpop.f32.mrf.mxu0
        %v10391 = vadd.f32 %v10302, %v10390
        %v10392 = vpop.f32.mrf.mxu0
        %v10393 = vadd.f32 %v10304, %v10392
        %10394 = vmatmul.bf16.gmra.mxu0 %v6930
        %v10395 = vpop.f32.mrf.mxu0
        %v10396 = vadd.f32 %v10307, %v10395
        %v10397 = vpop.f32.mrf.mxu0
        %v10398 = vadd.f32 %v10309, %v10397
        %10399 = vmatmul.bf16.gmra.mxu0 %v6932
        %v10400 = vpop.f32.mrf.mxu0
        %v10401 = vadd.f32 %v10312, %v10400
        %v10402 = vpop.f32.mrf.mxu0
        %v10403 = vadd.f32 %v10314, %v10402
        %10404 = vmatmul.bf16.gmra.mxu0 %v6934
        %v10405 = vpop.f32.mrf.mxu0
        %v10406 = vadd.f32 %v10317, %v10405
        %v10407 = vpop.f32.mrf.mxu0
        %v10408 = vadd.f32 %v10319, %v10407
        %10409 = vmatmul.bf16.gmra.mxu0 %v6936
        %v10410 = vpop.f32.mrf.mxu0
        %v10411 = vadd.f32 %v10322, %v10410
        %v10412 = vpop.f32.mrf.mxu0
        %v10413 = vadd.f32 %v10324, %v10412
        %10414 = vmatmul.bf16.gmra.mxu0 %v6938
        %v10415 = vpop.f32.mrf.mxu0
        %v10416 = vadd.f32 %v10327, %v10415
        %v10417 = vpop.f32.mrf.mxu0
        %v10418 = vadd.f32 %v10329, %v10417
        %10419 = vmatmul.bf16.gmra.mxu0 %v6940
        %v10420 = vpop.f32.mrf.mxu0
        %v10421 = vadd.f32 %v10332, %v10420
        %v10422 = vpop.f32.mrf.mxu0
        %v10423 = vadd.f32 %v10334, %v10422
        %10424 = vmatmul.bf16.gmra.mxu0 %v6942
        %v10425 = vpop.f32.mrf.mxu0
        %v10426 = vadd.f32 %v10337, %v10425
        %v10427 = vpop.f32.mrf.mxu0
        %v10428 = vadd.f32 %v10339, %v10427
        %10429 = vmatmul.bf16.gmra.mxu0 %v6944
        %v10430 = vpop.f32.mrf.mxu0
        %v10431 = vadd.f32 %v10342, %v10430
        %v10432 = vpop.f32.mrf.mxu0
        %v10433 = vadd.f32 %v10344, %v10432
        %10434 = vmatmul.bf16.gmra.mxu0 %v6946
        %v10435 = vpop.f32.mrf.mxu0
        %v10436 = vadd.f32 %v10347, %v10435
        %v10437 = vpop.f32.mrf.mxu0
        %v10438 = vadd.f32 %v10349, %v10437
        %10439 = vmatmul.bf16.gmra.mxu0 %v6948
        %v10440 = vpop.f32.mrf.mxu0
        %v10441 = vadd.f32 %v10352, %v10440
        %v10442 = vpop.f32.mrf.mxu0
        %v10443 = vadd.f32 %v10354, %v10442
        %10444 = vmatmul.bf16.gmra.mxu0 %v6950
        %v10445 = vpop.f32.mrf.mxu0
        %v10446 = vadd.f32 %v10357, %v10445
        %v10447 = vpop.f32.mrf.mxu0
        %v10448 = vadd.f32 %v10359, %v10447
        %10449 = vmatmul.bf16.gmra.mxu0 %v6948
        %v10450 = vpop.f32.mrf.mxu0
        %v10451 = vadd.f32 %v10362, %v10450
        %v10452 = vpop.f32.mrf.mxu0
        %v10453 = vadd.f32 %v10364, %v10452
        %10454 = vdwg.mxu0
        %10455 = vmatpush.bf16.msra.mxu0 %v8725
        %10456 = vmatpush.bf16.msra.mxu0 %v8723
        %10457 = vmatpush.bf16.msra.mxu0 %v8721
        %10458 = vmatpush.bf16.msra.mxu0 %v8719
        %10459 = vmatpush.bf16.msra.mxu0 %v8717
        %10460 = vmatpush.bf16.msra.mxu0 %v8715
        %10461 = vmatpush.bf16.msra.mxu0 %v8713
        %10462 = vmatpush.bf16.msra.mxu0 %v8711
        %10463 = vmatmul.bf16.gmra.mxu0 %v7527
        %v10464 = vpop.f32.mrf.mxu0
        %v10465 = vadd.f32 %v10376, %v10464
        %v10466 = vpop.f32.mrf.mxu0
        %v10467 = vadd.f32 %v10378, %v10466
        %10468 = vmatmul.bf16.gmra.mxu0 %v7531
        %v10469 = vpop.f32.mrf.mxu0
        %v10470 = vadd.f32 %v10381, %v10469
        %v10471 = vpop.f32.mrf.mxu0
        %v10472 = vadd.f32 %v10383, %v10471
        %10473 = vmatmul.bf16.gmra.mxu0 %v7533
        %v10474 = vpop.f32.mrf.mxu0
        %v10475 = vadd.f32 %v10386, %v10474
        %v10476 = vpop.f32.mrf.mxu0
        %v10477 = vadd.f32 %v10388, %v10476
        %10478 = vmatmul.bf16.gmra.mxu0 %v7535
        %v10479 = vpop.f32.mrf.mxu0
        %v10480 = vadd.f32 %v10391, %v10479
        %v10481 = vpop.f32.mrf.mxu0
        %v10482 = vadd.f32 %v10393, %v10481
        %10483 = vmatmul.bf16.gmra.mxu0 %v7537
        %v10484 = vpop.f32.mrf.mxu0
        %v10485 = vadd.f32 %v10396, %v10484
        %v10486 = vpop.f32.mrf.mxu0
        %v10487 = vadd.f32 %v10398, %v10486
        %10488 = vmatmul.bf16.gmra.mxu0 %v7539
        %v10489 = vpop.f32.mrf.mxu0
        %v10490 = vadd.f32 %v10401, %v10489
        %v10491 = vpop.f32.mrf.mxu0
        %v10492 = vadd.f32 %v10403, %v10491
        %10493 = vmatmul.bf16.gmra.mxu0 %v7541
        %v10494 = vpop.f32.mrf.mxu0
        %v10495 = vadd.f32 %v10406, %v10494
        %v10496 = vpop.f32.mrf.mxu0
        %v10497 = vadd.f32 %v10408, %v10496
        %10498 = vmatmul.bf16.gmra.mxu0 %v7543
        %v10499 = vpop.f32.mrf.mxu0
        %v10500 = vadd.f32 %v10411, %v10499
        %v10501 = vpop.f32.mrf.mxu0
        %v10502 = vadd.f32 %v10413, %v10501
        %10503 = vmatmul.bf16.gmra.mxu0 %v7545
        %v10504 = vpop.f32.mrf.mxu0
        %v10505 = vadd.f32 %v10416, %v10504
        %v10506 = vpop.f32.mrf.mxu0
        %v10507 = vadd.f32 %v10418, %v10506
        %10508 = vmatmul.bf16.gmra.mxu0 %v7547
        %v10509 = vpop.f32.mrf.mxu0
        %v10510 = vadd.f32 %v10421, %v10509
        %v10511 = vpop.f32.mrf.mxu0
        %v10512 = vadd.f32 %v10423, %v10511
        %10513 = vmatmul.bf16.gmra.mxu0 %v7549
        %v10514 = vpop.f32.mrf.mxu0
        %v10515 = vadd.f32 %v10426, %v10514
        %v10516 = vpop.f32.mrf.mxu0
        %v10517 = vadd.f32 %v10428, %v10516
        %10518 = vmatmul.bf16.gmra.mxu0 %v7551
        %v10519 = vpop.f32.mrf.mxu0
        %v10520 = vadd.f32 %v10431, %v10519
        %v10521 = vpop.f32.mrf.mxu0
        %v10522 = vadd.f32 %v10433, %v10521
        %10523 = vmatmul.bf16.gmra.mxu0 %v7553
        %v10524 = vpop.f32.mrf.mxu0
        %v10525 = vadd.f32 %v10436, %v10524
        %v10526 = vpop.f32.mrf.mxu0
        %v10527 = vadd.f32 %v10438, %v10526
        %10528 = vmatmul.bf16.gmra.mxu0 %v7555
        %v10529 = vpop.f32.mrf.mxu0
        %v10530 = vadd.f32 %v10441, %v10529
        %v10531 = vpop.f32.mrf.mxu0
        %v10532 = vadd.f32 %v10443, %v10531
        %10533 = vmatmul.bf16.gmra.mxu0 %v7557
        %v10534 = vpop.f32.mrf.mxu0
        %v10535 = vadd.f32 %v10446, %v10534
        %v10536 = vpop.f32.mrf.mxu0
        %v10537 = vadd.f32 %v10448, %v10536
        %10538 = vmatmul.bf16.gmra.mxu0 %v7555
        %v10539 = vpop.f32.mrf.mxu0
        %v10540 = vadd.f32 %v10451, %v10539
        %v10541 = vpop.f32.mrf.mxu0
        %v10542 = vadd.f32 %v10453, %v10541
        %10543 = vdwg.mxu0
        %10544 = vmatpush.bf16.msra.mxu0 %v8741
        %10545 = vmatpush.bf16.msra.mxu0 %v8739
        %10546 = vmatpush.bf16.msra.mxu0 %v8737
        %10547 = vmatpush.bf16.msra.mxu0 %v8735
        %10548 = vmatpush.bf16.msra.mxu0 %v8733
        %10549 = vmatpush.bf16.msra.mxu0 %v8731
        %10550 = vmatpush.bf16.msra.mxu0 %v8729
        %10551 = vmatpush.bf16.msra.mxu0 %v8727
        %10552 = vmatmul.bf16.gmra.mxu0 %v7528
        %v10553 = vpop.f32.mrf.mxu0
        %v10554 = vadd.f32 %v10465, %v10553
        %v10555 = vpop.f32.mrf.mxu0
        %v10556 = vadd.f32 %v10467, %v10555
        %10557 = vmatmul.bf16.gmra.mxu0 %v7532
        %v10558 = vpop.f32.mrf.mxu0
        %v10559 = vadd.f32 %v10470, %v10558
        %v10560 = vpop.f32.mrf.mxu0
        %v10561 = vadd.f32 %v10472, %v10560
        %10562 = vmatmul.bf16.gmra.mxu0 %v7534
        %v10563 = vpop.f32.mrf.mxu0
        %v10564 = vadd.f32 %v10475, %v10563
        %v10565 = vpop.f32.mrf.mxu0
        %v10566 = vadd.f32 %v10477, %v10565
        %10567 = vmatmul.bf16.gmra.mxu0 %v7536
        %v10568 = vpop.f32.mrf.mxu0
        %v10569 = vadd.f32 %v10480, %v10568
        %v10570 = vpop.f32.mrf.mxu0
        %v10571 = vadd.f32 %v10482, %v10570
        %10572 = vmatmul.bf16.gmra.mxu0 %v7538
        %v10573 = vpop.f32.mrf.mxu0
        %v10574 = vadd.f32 %v10485, %v10573
        %v10575 = vpop.f32.mrf.mxu0
        %v10576 = vadd.f32 %v10487, %v10575
        %10577 = vmatmul.bf16.gmra.mxu0 %v7540
        %v10578 = vpop.f32.mrf.mxu0
        %v10579 = vadd.f32 %v10490, %v10578
        %v10580 = vpop.f32.mrf.mxu0
        %v10581 = vadd.f32 %v10492, %v10580
        %10582 = vmatmul.bf16.gmra.mxu0 %v7542
        %v10583 = vpop.f32.mrf.mxu0
        %v10584 = vadd.f32 %v10495, %v10583
        %v10585 = vpop.f32.mrf.mxu0
        %v10586 = vadd.f32 %v10497, %v10585
        %10587 = vmatmul.bf16.gmra.mxu0 %v7544
        %v10588 = vpop.f32.mrf.mxu0
        %v10589 = vadd.f32 %v10500, %v10588
        %v10590 = vpop.f32.mrf.mxu0
        %v10591 = vadd.f32 %v10502, %v10590
        %10592 = vmatmul.bf16.gmra.mxu0 %v7546
        %v10593 = vpop.f32.mrf.mxu0
        %v10594 = vadd.f32 %v10505, %v10593
        %v10595 = vpop.f32.mrf.mxu0
        %v10596 = vadd.f32 %v10507, %v10595
        %10597 = vmatmul.bf16.gmra.mxu0 %v7548
        %v10598 = vpop.f32.mrf.mxu0
        %v10599 = vadd.f32 %v10510, %v10598
        %v10600 = vpop.f32.mrf.mxu0
        %v10601 = vadd.f32 %v10512, %v10600
        %10602 = vmatmul.bf16.gmra.mxu0 %v7550
        %v10603 = vpop.f32.mrf.mxu0
        %v10604 = vadd.f32 %v10515, %v10603
        %v10605 = vpop.f32.mrf.mxu0
        %v10606 = vadd.f32 %v10517, %v10605
        %10607 = vmatmul.bf16.gmra.mxu0 %v7552
        %v10608 = vpop.f32.mrf.mxu0
        %v10609 = vadd.f32 %v10520, %v10608
        %v10610 = vpop.f32.mrf.mxu0
        %v10611 = vadd.f32 %v10522, %v10610
        %10612 = vmatmul.bf16.gmra.mxu0 %v7554
        %v10613 = vpop.f32.mrf.mxu0
        %v10614 = vadd.f32 %v10525, %v10613
        %v10615 = vpop.f32.mrf.mxu0
        %v10616 = vadd.f32 %v10527, %v10615
        %10617 = vmatmul.bf16.gmra.mxu0 %v7556
        %v10618 = vpop.f32.mrf.mxu0
        %v10619 = vadd.f32 %v10530, %v10618
        %v10620 = vpop.f32.mrf.mxu0
        %v10621 = vadd.f32 %v10532, %v10620
        %10622 = vmatmul.bf16.gmra.mxu0 %v7558
        %v10623 = vpop.f32.mrf.mxu0
        %v10624 = vadd.f32 %v10535, %v10623
        %v10625 = vpop.f32.mrf.mxu0
        %v10626 = vadd.f32 %v10537, %v10625
        %10627 = vmatmul.bf16.gmra.mxu0 %v7556
        %v10628 = vpop.f32.mrf.mxu0
        %v10629 = vadd.f32 %v10540, %v10628
        %v10630 = vpop.f32.mrf.mxu0
        %v10631 = vadd.f32 %v10542, %v10630
        %10632 = vdwg.mxu0
        %10633 = vmatpush.bf16.msra.mxu0 %v8470
        %10634 = vmatpush.bf16.msra.mxu0 %v8468
        %10635 = vmatpush.bf16.msra.mxu0 %v8466
        %10636 = vmatpush.bf16.msra.mxu0 %v8464
        %10637 = vmatpush.bf16.msra.mxu0 %v8462
        %10638 = vmatpush.bf16.msra.mxu0 %v8460
        %10639 = vmatpush.bf16.msra.mxu0 %v8458
        %10640 = vmatpush.bf16.msra.mxu0 %v8456
        %10641 = vmatmul.bf16.gmra.mxu0 %v7207
        %v10642 = vpop.f32.mrf.mxu0
        %v10643 = vadd.f32 0.0, %v10642
        %v10644 = vpop.f32.mrf.mxu0
        %v10645 = vadd.f32 0.0, %v10644
        %10646 = vmatmul.bf16.gmra.mxu0 %v7209
        %v10647 = vpop.f32.mrf.mxu0
        %v10648 = vadd.f32 0.0, %v10647
        %v10649 = vpop.f32.mrf.mxu0
        %v10650 = vadd.f32 0.0, %v10649
        %10651 = vmatmul.bf16.gmra.mxu0 %v7207
        %v10652 = vpop.f32.mrf.mxu0
        %v10653 = vadd.f32 0.0, %v10652
        %v10654 = vpop.f32.mrf.mxu0
        %v10655 = vadd.f32 0.0, %v10654
        %10656 = vmatmul.bf16.gmra.mxu0 %v7211
        %v10657 = vpop.f32.mrf.mxu0
        %v10658 = vadd.f32 0.0, %v10657
        %v10659 = vpop.f32.mrf.mxu0
        %v10660 = vadd.f32 0.0, %v10659
        %10661 = vmatmul.bf16.gmra.mxu0 %v7213
        %v10662 = vpop.f32.mrf.mxu0
        %v10663 = vadd.f32 0.0, %v10662
        %v10664 = vpop.f32.mrf.mxu0
        %v10665 = vadd.f32 0.0, %v10664
        %10666 = vmatmul.bf16.gmra.mxu0 %v7215
        %v10667 = vpop.f32.mrf.mxu0
        %v10668 = vadd.f32 0.0, %v10667
        %v10669 = vpop.f32.mrf.mxu0
        %v10670 = vadd.f32 0.0, %v10669
        %10671 = vmatmul.bf16.gmra.mxu0 %v7217
        %v10672 = vpop.f32.mrf.mxu0
        %v10673 = vadd.f32 0.0, %v10672
        %v10674 = vpop.f32.mrf.mxu0
        %v10675 = vadd.f32 0.0, %v10674
        %10676 = vmatmul.bf16.gmra.mxu0 %v7219
        %v10677 = vpop.f32.mrf.mxu0
        %v10678 = vadd.f32 0.0, %v10677
        %v10679 = vpop.f32.mrf.mxu0
        %v10680 = vadd.f32 0.0, %v10679
        %10681 = vmatmul.bf16.gmra.mxu0 %v7221
        %v10682 = vpop.f32.mrf.mxu0
        %v10683 = vadd.f32 0.0, %v10682
        %v10684 = vpop.f32.mrf.mxu0
        %v10685 = vadd.f32 0.0, %v10684
        %10686 = vmatmul.bf16.gmra.mxu0 %v7223
        %v10687 = vpop.f32.mrf.mxu0
        %v10688 = vadd.f32 0.0, %v10687
        %v10689 = vpop.f32.mrf.mxu0
        %v10690 = vadd.f32 0.0, %v10689
        %10691 = vmatmul.bf16.gmra.mxu0 %v7225
        %v10692 = vpop.f32.mrf.mxu0
        %v10693 = vadd.f32 0.0, %v10692
        %v10694 = vpop.f32.mrf.mxu0
        %v10695 = vadd.f32 0.0, %v10694
        %10696 = vmatmul.bf16.gmra.mxu0 %v7227
        %v10697 = vpop.f32.mrf.mxu0
        %v10698 = vadd.f32 0.0, %v10697
        %v10699 = vpop.f32.mrf.mxu0
        %v10700 = vadd.f32 0.0, %v10699
        %10701 = vmatmul.bf16.gmra.mxu0 %v7229
        %v10702 = vpop.f32.mrf.mxu0
        %v10703 = vadd.f32 0.0, %v10702
        %v10704 = vpop.f32.mrf.mxu0
        %v10705 = vadd.f32 0.0, %v10704
        %10706 = vmatmul.bf16.gmra.mxu0 %v7231
        %v10707 = vpop.f32.mrf.mxu0
        %v10708 = vadd.f32 0.0, %v10707
        %v10709 = vpop.f32.mrf.mxu0
        %v10710 = vadd.f32 0.0, %v10709
        %10711 = vmatmul.bf16.gmra.mxu0 %v7233
        %v10712 = vpop.f32.mrf.mxu0
        %v10713 = vadd.f32 0.0, %v10712
        %v10714 = vpop.f32.mrf.mxu0
        %v10715 = vadd.f32 0.0, %v10714
        %10716 = vmatmul.bf16.gmra.mxu0 %v7235
        %v10717 = vpop.f32.mrf.mxu0
        %v10718 = vadd.f32 0.0, %v10717
        %v10719 = vpop.f32.mrf.mxu0
        %v10720 = vadd.f32 0.0, %v10719
        %10721 = vdwg.mxu0
        %10722 = vmatpush.bf16.msra.mxu0 %v8486
        %10723 = vmatpush.bf16.msra.mxu0 %v8484
        %10724 = vmatpush.bf16.msra.mxu0 %v8482
        %10725 = vmatpush.bf16.msra.mxu0 %v8480
        %10726 = vmatpush.bf16.msra.mxu0 %v8478
        %10727 = vmatpush.bf16.msra.mxu0 %v8476
        %10728 = vmatpush.bf16.msra.mxu0 %v8474
        %10729 = vmatpush.bf16.msra.mxu0 %v8472
        %10730 = vmatmul.bf16.gmra.mxu0 %v7208
        %v10731 = vpop.f32.mrf.mxu0
        %v10732 = vadd.f32 %v10643, %v10731
        %v10733 = vpop.f32.mrf.mxu0
        %v10734 = vadd.f32 %v10645, %v10733
        %10735 = vmatmul.bf16.gmra.mxu0 %v7210
        %v10736 = vpop.f32.mrf.mxu0
        %v10737 = vadd.f32 %v10648, %v10736
        %v10738 = vpop.f32.mrf.mxu0
        %v10739 = vadd.f32 %v10650, %v10738
        %10740 = vmatmul.bf16.gmra.mxu0 %v7208
        %v10741 = vpop.f32.mrf.mxu0
        %v10742 = vadd.f32 %v10653, %v10741
        %v10743 = vpop.f32.mrf.mxu0
        %v10744 = vadd.f32 %v10655, %v10743
        %10745 = vmatmul.bf16.gmra.mxu0 %v7212
        %v10746 = vpop.f32.mrf.mxu0
        %v10747 = vadd.f32 %v10658, %v10746
        %v10748 = vpop.f32.mrf.mxu0
        %v10749 = vadd.f32 %v10660, %v10748
        %10750 = vmatmul.bf16.gmra.mxu0 %v7214
        %v10751 = vpop.f32.mrf.mxu0
        %v10752 = vadd.f32 %v10663, %v10751
        %v10753 = vpop.f32.mrf.mxu0
        %v10754 = vadd.f32 %v10665, %v10753
        %10755 = vmatmul.bf16.gmra.mxu0 %v7216
        %v10756 = vpop.f32.mrf.mxu0
        %v10757 = vadd.f32 %v10668, %v10756
        %v10758 = vpop.f32.mrf.mxu0
        %v10759 = vadd.f32 %v10670, %v10758
        %10760 = vmatmul.bf16.gmra.mxu0 %v7218
        %v10761 = vpop.f32.mrf.mxu0
        %v10762 = vadd.f32 %v10673, %v10761
        %v10763 = vpop.f32.mrf.mxu0
        %v10764 = vadd.f32 %v10675, %v10763
        %10765 = vmatmul.bf16.gmra.mxu0 %v7220
        %v10766 = vpop.f32.mrf.mxu0
        %v10767 = vadd.f32 %v10678, %v10766
        %v10768 = vpop.f32.mrf.mxu0
        %v10769 = vadd.f32 %v10680, %v10768
        %10770 = vmatmul.bf16.gmra.mxu0 %v7222
        %v10771 = vpop.f32.mrf.mxu0
        %v10772 = vadd.f32 %v10683, %v10771
        %v10773 = vpop.f32.mrf.mxu0
        %v10774 = vadd.f32 %v10685, %v10773
        %10775 = vmatmul.bf16.gmra.mxu0 %v7224
        %v10776 = vpop.f32.mrf.mxu0
        %v10777 = vadd.f32 %v10688, %v10776
        %v10778 = vpop.f32.mrf.mxu0
        %v10779 = vadd.f32 %v10690, %v10778
        %10780 = vmatmul.bf16.gmra.mxu0 %v7226
        %v10781 = vpop.f32.mrf.mxu0
        %v10782 = vadd.f32 %v10693, %v10781
        %v10783 = vpop.f32.mrf.mxu0
        %v10784 = vadd.f32 %v10695, %v10783
        %10785 = vmatmul.bf16.gmra.mxu0 %v7228
        %v10786 = vpop.f32.mrf.mxu0
        %v10787 = vadd.f32 %v10698, %v10786
        %v10788 = vpop.f32.mrf.mxu0
        %v10789 = vadd.f32 %v10700, %v10788
        %10790 = vmatmul.bf16.gmra.mxu0 %v7230
        %v10791 = vpop.f32.mrf.mxu0
        %v10792 = vadd.f32 %v10703, %v10791
        %v10793 = vpop.f32.mrf.mxu0
        %v10794 = vadd.f32 %v10705, %v10793
        %10795 = vmatmul.bf16.gmra.mxu0 %v7232
        %v10796 = vpop.f32.mrf.mxu0
        %v10797 = vadd.f32 %v10708, %v10796
        %v10798 = vpop.f32.mrf.mxu0
        %v10799 = vadd.f32 %v10710, %v10798
        %10800 = vmatmul.bf16.gmra.mxu0 %v7234
        %v10801 = vpop.f32.mrf.mxu0
        %v10802 = vadd.f32 %v10713, %v10801
        %v10803 = vpop.f32.mrf.mxu0
        %v10804 = vadd.f32 %v10715, %v10803
        %10805 = vmatmul.bf16.gmra.mxu0 %v7236
        %v10806 = vpop.f32.mrf.mxu0
        %v10807 = vadd.f32 %v10718, %v10806
        %v10808 = vpop.f32.mrf.mxu0
        %v10809 = vadd.f32 %v10720, %v10808
        %10810 = vdwg.mxu0
        %10811 = vmatpush.bf16.msra.mxu0 %v8502
        %10812 = vmatpush.bf16.msra.mxu0 %v8500
        %10813 = vmatpush.bf16.msra.mxu0 %v8498
        %10814 = vmatpush.bf16.msra.mxu0 %v8496
        %10815 = vmatpush.bf16.msra.mxu0 %v8494
        %10816 = vmatpush.bf16.msra.mxu0 %v8492
        %10817 = vmatpush.bf16.msra.mxu0 %v8490
        %10818 = vmatpush.bf16.msra.mxu0 %v8488
        %10819 = vmatmul.bf16.gmra.mxu0 %v6919
        %v10820 = vpop.f32.mrf.mxu0
        %v10821 = vadd.f32 %v10732, %v10820
        %v10822 = vpop.f32.mrf.mxu0
        %v10823 = vadd.f32 %v10734, %v10822
        %10824 = vmatmul.bf16.gmra.mxu0 %v6921
        %v10825 = vpop.f32.mrf.mxu0
        %v10826 = vadd.f32 %v10737, %v10825
        %v10827 = vpop.f32.mrf.mxu0
        %v10828 = vadd.f32 %v10739, %v10827
        %10829 = vmatmul.bf16.gmra.mxu0 %v6919
        %v10830 = vpop.f32.mrf.mxu0
        %v10831 = vadd.f32 %v10742, %v10830
        %v10832 = vpop.f32.mrf.mxu0
        %v10833 = vadd.f32 %v10744, %v10832
        %10834 = vmatmul.bf16.gmra.mxu0 %v6923
        %v10835 = vpop.f32.mrf.mxu0
        %v10836 = vadd.f32 %v10747, %v10835
        %v10837 = vpop.f32.mrf.mxu0
        %v10838 = vadd.f32 %v10749, %v10837
        %10839 = vmatmul.bf16.gmra.mxu0 %v6925
        %v10840 = vpop.f32.mrf.mxu0
        %v10841 = vadd.f32 %v10752, %v10840
        %v10842 = vpop.f32.mrf.mxu0
        %v10843 = vadd.f32 %v10754, %v10842
        %10844 = vmatmul.bf16.gmra.mxu0 %v6927
        %v10845 = vpop.f32.mrf.mxu0
        %v10846 = vadd.f32 %v10757, %v10845
        %v10847 = vpop.f32.mrf.mxu0
        %v10848 = vadd.f32 %v10759, %v10847
        %10849 = vmatmul.bf16.gmra.mxu0 %v6929
        %v10850 = vpop.f32.mrf.mxu0
        %v10851 = vadd.f32 %v10762, %v10850
        %v10852 = vpop.f32.mrf.mxu0
        %v10853 = vadd.f32 %v10764, %v10852
        %10854 = vmatmul.bf16.gmra.mxu0 %v6931
        %v10855 = vpop.f32.mrf.mxu0
        %v10856 = vadd.f32 %v10767, %v10855
        %v10857 = vpop.f32.mrf.mxu0
        %v10858 = vadd.f32 %v10769, %v10857
        %10859 = vmatmul.bf16.gmra.mxu0 %v6933
        %v10860 = vpop.f32.mrf.mxu0
        %v10861 = vadd.f32 %v10772, %v10860
        %v10862 = vpop.f32.mrf.mxu0
        %v10863 = vadd.f32 %v10774, %v10862
        %10864 = vmatmul.bf16.gmra.mxu0 %v6935
        %v10865 = vpop.f32.mrf.mxu0
        %v10866 = vadd.f32 %v10777, %v10865
        %v10867 = vpop.f32.mrf.mxu0
        %v10868 = vadd.f32 %v10779, %v10867
        %10869 = vmatmul.bf16.gmra.mxu0 %v6937
        %v10870 = vpop.f32.mrf.mxu0
        %v10871 = vadd.f32 %v10782, %v10870
        %v10872 = vpop.f32.mrf.mxu0
        %v10873 = vadd.f32 %v10784, %v10872
        %10874 = vmatmul.bf16.gmra.mxu0 %v6939
        %v10875 = vpop.f32.mrf.mxu0
        %v10876 = vadd.f32 %v10787, %v10875
        %v10877 = vpop.f32.mrf.mxu0
        %v10878 = vadd.f32 %v10789, %v10877
        %10879 = vmatmul.bf16.gmra.mxu0 %v6941
        %v10880 = vpop.f32.mrf.mxu0
        %v10881 = vadd.f32 %v10792, %v10880
        %v10882 = vpop.f32.mrf.mxu0
        %v10883 = vadd.f32 %v10794, %v10882
        %10884 = vmatmul.bf16.gmra.mxu0 %v6943
        %v10885 = vpop.f32.mrf.mxu0
        %v10886 = vadd.f32 %v10797, %v10885
        %v10887 = vpop.f32.mrf.mxu0
        %v10888 = vadd.f32 %v10799, %v10887
        %10889 = vmatmul.bf16.gmra.mxu0 %v6945
        %v10890 = vpop.f32.mrf.mxu0
        %v10891 = vadd.f32 %v10802, %v10890
        %v10892 = vpop.f32.mrf.mxu0
        %v10893 = vadd.f32 %v10804, %v10892
        %10894 = vmatmul.bf16.gmra.mxu0 %v6947
        %v10895 = vpop.f32.mrf.mxu0
        %v10896 = vadd.f32 %v10807, %v10895
        %v10897 = vpop.f32.mrf.mxu0
        %v10898 = vadd.f32 %v10809, %v10897
        %10899 = vdwg.mxu0
        %10900 = vmatpush.bf16.msra.mxu0 %v8518
        %10901 = vmatpush.bf16.msra.mxu0 %v8516
        %10902 = vmatpush.bf16.msra.mxu0 %v8514
        %10903 = vmatpush.bf16.msra.mxu0 %v8512
        %10904 = vmatpush.bf16.msra.mxu0 %v8510
        %10905 = vmatpush.bf16.msra.mxu0 %v8508
        %10906 = vmatpush.bf16.msra.mxu0 %v8506
        %10907 = vmatpush.bf16.msra.mxu0 %v8504
        %10908 = vmatmul.bf16.gmra.mxu0 %v6920
        %v10909 = vpop.f32.mrf.mxu0
        %v10910 = vadd.f32 %v10821, %v10909
        %v10911 = vpop.f32.mrf.mxu0
        %v10912 = vadd.f32 %v10823, %v10911
        %10913 = vmatmul.bf16.gmra.mxu0 %v6922
        %v10914 = vpop.f32.mrf.mxu0
        %v10915 = vadd.f32 %v10826, %v10914
        %v10916 = vpop.f32.mrf.mxu0
        %v10917 = vadd.f32 %v10828, %v10916
        %10918 = vmatmul.bf16.gmra.mxu0 %v6920
        %v10919 = vpop.f32.mrf.mxu0
        %v10920 = vadd.f32 %v10831, %v10919
        %v10921 = vpop.f32.mrf.mxu0
        %v10922 = vadd.f32 %v10833, %v10921
        %10923 = vmatmul.bf16.gmra.mxu0 %v6924
        %v10924 = vpop.f32.mrf.mxu0
        %v10925 = vadd.f32 %v10836, %v10924
        %v10926 = vpop.f32.mrf.mxu0
        %v10927 = vadd.f32 %v10838, %v10926
        %10928 = vmatmul.bf16.gmra.mxu0 %v6926
        %v10929 = vpop.f32.mrf.mxu0
        %v10930 = vadd.f32 %v10841, %v10929
        %v10931 = vpop.f32.mrf.mxu0
        %v10932 = vadd.f32 %v10843, %v10931
        %10933 = vmatmul.bf16.gmra.mxu0 %v6928
        %v10934 = vpop.f32.mrf.mxu0
        %v10935 = vadd.f32 %v10846, %v10934
        %v10936 = vpop.f32.mrf.mxu0
        %v10937 = vadd.f32 %v10848, %v10936
        %10938 = vmatmul.bf16.gmra.mxu0 %v6930
        %v10939 = vpop.f32.mrf.mxu0
        %v10940 = vadd.f32 %v10851, %v10939
        %v10941 = vpop.f32.mrf.mxu0
        %v10942 = vadd.f32 %v10853, %v10941
        %10943 = vmatmul.bf16.gmra.mxu0 %v6932
        %v10944 = vpop.f32.mrf.mxu0
        %v10945 = vadd.f32 %v10856, %v10944
        %v10946 = vpop.f32.mrf.mxu0
        %v10947 = vadd.f32 %v10858, %v10946
        %10948 = vmatmul.bf16.gmra.mxu0 %v6934
        %v10949 = vpop.f32.mrf.mxu0
        %v10950 = vadd.f32 %v10861, %v10949
        %v10951 = vpop.f32.mrf.mxu0
        %v10952 = vadd.f32 %v10863, %v10951
        %10953 = vmatmul.bf16.gmra.mxu0 %v6936
        %v10954 = vpop.f32.mrf.mxu0
        %v10955 = vadd.f32 %v10866, %v10954
        %v10956 = vpop.f32.mrf.mxu0
        %v10957 = vadd.f32 %v10868, %v10956
        %10958 = vmatmul.bf16.gmra.mxu0 %v6938
        %v10959 = vpop.f32.mrf.mxu0
        %v10960 = vadd.f32 %v10871, %v10959
        %v10961 = vpop.f32.mrf.mxu0
        %v10962 = vadd.f32 %v10873, %v10961
        %10963 = vmatmul.bf16.gmra.mxu0 %v6940
        %v10964 = vpop.f32.mrf.mxu0
        %v10965 = vadd.f32 %v10876, %v10964
        %v10966 = vpop.f32.mrf.mxu0
        %v10967 = vadd.f32 %v10878, %v10966
        %10968 = vmatmul.bf16.gmra.mxu0 %v6942
        %v10969 = vpop.f32.mrf.mxu0
        %v10970 = vadd.f32 %v10881, %v10969
        %v10971 = vpop.f32.mrf.mxu0
        %v10972 = vadd.f32 %v10883, %v10971
        %10973 = vmatmul.bf16.gmra.mxu0 %v6944
        %v10974 = vpop.f32.mrf.mxu0
        %v10975 = vadd.f32 %v10886, %v10974
        %v10976 = vpop.f32.mrf.mxu0
        %v10977 = vadd.f32 %v10888, %v10976
        %10978 = vmatmul.bf16.gmra.mxu0 %v6946
        %v10979 = vpop.f32.mrf.mxu0
        %v10980 = vadd.f32 %v10891, %v10979
        %v10981 = vpop.f32.mrf.mxu0
        %v10982 = vadd.f32 %v10893, %v10981
        %10983 = vmatmul.bf16.gmra.mxu0 %v6948
        %v10984 = vpop.f32.mrf.mxu0
        %v10985 = vadd.f32 %v10896, %v10984
        %v10986 = vpop.f32.mrf.mxu0
        %v10987 = vadd.f32 %v10898, %v10986
        %10988 = vdwg.mxu0
        %10989 = vmatpush.bf16.msra.mxu0 %v8534
        %10990 = vmatpush.bf16.msra.mxu0 %v8532
        %10991 = vmatpush.bf16.msra.mxu0 %v8530
        %10992 = vmatpush.bf16.msra.mxu0 %v8528
        %10993 = vmatpush.bf16.msra.mxu0 %v8526
        %10994 = vmatpush.bf16.msra.mxu0 %v8524
        %10995 = vmatpush.bf16.msra.mxu0 %v8522
        %10996 = vmatpush.bf16.msra.mxu0 %v8520
        %10997 = vmatmul.bf16.gmra.mxu0 %v7527
        %v10998 = vpop.f32.mrf.mxu0
        %v10999 = vadd.f32 %v10910, %v10998
        %v11000 = vpop.f32.mrf.mxu0
        %v11001 = vadd.f32 %v10912, %v11000
        %11002 = vmatmul.bf16.gmra.mxu0 %v7529
        %v11003 = vpop.f32.mrf.mxu0
        %v11004 = vadd.f32 %v10915, %v11003
        %v11005 = vpop.f32.mrf.mxu0
        %v11006 = vadd.f32 %v10917, %v11005
        %11007 = vmatmul.bf16.gmra.mxu0 %v7527
        %v11008 = vpop.f32.mrf.mxu0
        %v11009 = vadd.f32 %v10920, %v11008
        %v11010 = vpop.f32.mrf.mxu0
        %v11011 = vadd.f32 %v10922, %v11010
        %11012 = vmatmul.bf16.gmra.mxu0 %v7531
        %v11013 = vpop.f32.mrf.mxu0
        %v11014 = vadd.f32 %v10925, %v11013
        %v11015 = vpop.f32.mrf.mxu0
        %v11016 = vadd.f32 %v10927, %v11015
        %11017 = vmatmul.bf16.gmra.mxu0 %v7533
        %v11018 = vpop.f32.mrf.mxu0
        %v11019 = vadd.f32 %v10930, %v11018
        %v11020 = vpop.f32.mrf.mxu0
        %v11021 = vadd.f32 %v10932, %v11020
        %11022 = vmatmul.bf16.gmra.mxu0 %v7535
        %v11023 = vpop.f32.mrf.mxu0
        %v11024 = vadd.f32 %v10935, %v11023
        %v11025 = vpop.f32.mrf.mxu0
        %v11026 = vadd.f32 %v10937, %v11025
        %11027 = vmatmul.bf16.gmra.mxu0 %v7537
        %v11028 = vpop.f32.mrf.mxu0
        %v11029 = vadd.f32 %v10940, %v11028
        %v11030 = vpop.f32.mrf.mxu0
        %v11031 = vadd.f32 %v10942, %v11030
        %11032 = vmatmul.bf16.gmra.mxu0 %v7539
        %v11033 = vpop.f32.mrf.mxu0
        %v11034 = vadd.f32 %v10945, %v11033
        %v11035 = vpop.f32.mrf.mxu0
        %v11036 = vadd.f32 %v10947, %v11035
        %11037 = vmatmul.bf16.gmra.mxu0 %v7541
        %v11038 = vpop.f32.mrf.mxu0
        %v11039 = vadd.f32 %v10950, %v11038
        %v11040 = vpop.f32.mrf.mxu0
        %v11041 = vadd.f32 %v10952, %v11040
        %11042 = vmatmul.bf16.gmra.mxu0 %v7543
        %v11043 = vpop.f32.mrf.mxu0
        %v11044 = vadd.f32 %v10955, %v11043
        %v11045 = vpop.f32.mrf.mxu0
        %v11046 = vadd.f32 %v10957, %v11045
        %11047 = vmatmul.bf16.gmra.mxu0 %v7545
        %v11048 = vpop.f32.mrf.mxu0
        %v11049 = vadd.f32 %v10960, %v11048
        %v11050 = vpop.f32.mrf.mxu0
        %v11051 = vadd.f32 %v10962, %v11050
        %11052 = vmatmul.bf16.gmra.mxu0 %v7547
        %v11053 = vpop.f32.mrf.mxu0
        %v11054 = vadd.f32 %v10965, %v11053
        %v11055 = vpop.f32.mrf.mxu0
        %v11056 = vadd.f32 %v10967, %v11055
        %11057 = vmatmul.bf16.gmra.mxu0 %v7549
        %v11058 = vpop.f32.mrf.mxu0
        %v11059 = vadd.f32 %v10970, %v11058
        %v11060 = vpop.f32.mrf.mxu0
        %v11061 = vadd.f32 %v10972, %v11060
        %11062 = vmatmul.bf16.gmra.mxu0 %v7551
        %v11063 = vpop.f32.mrf.mxu0
        %v11064 = vadd.f32 %v10975, %v11063
        %v11065 = vpop.f32.mrf.mxu0
        %v11066 = vadd.f32 %v10977, %v11065
        %11067 = vmatmul.bf16.gmra.mxu0 %v7553
        %v11068 = vpop.f32.mrf.mxu0
        %v11069 = vadd.f32 %v10980, %v11068
        %v11070 = vpop.f32.mrf.mxu0
        %v11071 = vadd.f32 %v10982, %v11070
        %11072 = vmatmul.bf16.gmra.mxu0 %v7555
        %v11073 = vpop.f32.mrf.mxu0
        %v11074 = vadd.f32 %v10985, %v11073
        %v11075 = vpop.f32.mrf.mxu0
        %v11076 = vadd.f32 %v10987, %v11075
        %11077 = vdwg.mxu0
        %11078 = vmatpush.bf16.msra.mxu0 %v8550
        %11079 = vmatpush.bf16.msra.mxu0 %v8548
        %11080 = vmatpush.bf16.msra.mxu0 %v8546
        %11081 = vmatpush.bf16.msra.mxu0 %v8544
        %11082 = vmatpush.bf16.msra.mxu0 %v8542
        %11083 = vmatpush.bf16.msra.mxu0 %v8540
        %11084 = vmatpush.bf16.msra.mxu0 %v8538
        %11085 = vmatpush.bf16.msra.mxu0 %v8536
        %11086 = vmatmul.bf16.gmra.mxu0 %v7528
        %v11087 = vpop.f32.mrf.mxu0
        %v11088 = vadd.f32 %v10999, %v11087
        %v11089 = vpop.f32.mrf.mxu0
        %v11090 = vadd.f32 %v11001, %v11089
        %11091 = vmatmul.bf16.gmra.mxu0 %v7530
        %v11092 = vpop.f32.mrf.mxu0
        %v11093 = vadd.f32 %v11004, %v11092
        %v11094 = vpop.f32.mrf.mxu0
        %v11095 = vadd.f32 %v11006, %v11094
        %11096 = vmatmul.bf16.gmra.mxu0 %v7528
        %v11097 = vpop.f32.mrf.mxu0
        %v11098 = vadd.f32 %v11009, %v11097
        %v11099 = vpop.f32.mrf.mxu0
        %v11100 = vadd.f32 %v11011, %v11099
        %11101 = vmatmul.bf16.gmra.mxu0 %v7532
        %v11102 = vpop.f32.mrf.mxu0
        %v11103 = vadd.f32 %v11014, %v11102
        %v11104 = vpop.f32.mrf.mxu0
        %v11105 = vadd.f32 %v11016, %v11104
        %11106 = vmatmul.bf16.gmra.mxu0 %v7534
        %v11107 = vpop.f32.mrf.mxu0
        %v11108 = vadd.f32 %v11019, %v11107
        %v11109 = vpop.f32.mrf.mxu0
        %v11110 = vadd.f32 %v11021, %v11109
        %11111 = vmatmul.bf16.gmra.mxu0 %v7536
        %v11112 = vpop.f32.mrf.mxu0
        %v11113 = vadd.f32 %v11024, %v11112
        %v11114 = vpop.f32.mrf.mxu0
        %v11115 = vadd.f32 %v11026, %v11114
        %11116 = vmatmul.bf16.gmra.mxu0 %v7538
        %v11117 = vpop.f32.mrf.mxu0
        %v11118 = vadd.f32 %v11029, %v11117
        %v11119 = vpop.f32.mrf.mxu0
        %v11120 = vadd.f32 %v11031, %v11119
        %11121 = vmatmul.bf16.gmra.mxu0 %v7540
        %v11122 = vpop.f32.mrf.mxu0
        %v11123 = vadd.f32 %v11034, %v11122
        %v11124 = vpop.f32.mrf.mxu0
        %v11125 = vadd.f32 %v11036, %v11124
        %11126 = vmatmul.bf16.gmra.mxu0 %v7542
        %v11127 = vpop.f32.mrf.mxu0
        %v11128 = vadd.f32 %v11039, %v11127
        %v11129 = vpop.f32.mrf.mxu0
        %v11130 = vadd.f32 %v11041, %v11129
        %11131 = vmatmul.bf16.gmra.mxu0 %v7544
        %v11132 = vpop.f32.mrf.mxu0
        %v11133 = vadd.f32 %v11044, %v11132
        %v11134 = vpop.f32.mrf.mxu0
        %v11135 = vadd.f32 %v11046, %v11134
        %11136 = vmatmul.bf16.gmra.mxu0 %v7546
        %v11137 = vpop.f32.mrf.mxu0
        %v11138 = vadd.f32 %v11049, %v11137
        %v11139 = vpop.f32.mrf.mxu0
        %v11140 = vadd.f32 %v11051, %v11139
        %11141 = vmatmul.bf16.gmra.mxu0 %v7548
        %v11142 = vpop.f32.mrf.mxu0
        %v11143 = vadd.f32 %v11054, %v11142
        %v11144 = vpop.f32.mrf.mxu0
        %v11145 = vadd.f32 %v11056, %v11144
        %11146 = vmatmul.bf16.gmra.mxu0 %v7550
        %v11147 = vpop.f32.mrf.mxu0
        %v11148 = vadd.f32 %v11059, %v11147
        %v11149 = vpop.f32.mrf.mxu0
        %v11150 = vadd.f32 %v11061, %v11149
        %11151 = vmatmul.bf16.gmra.mxu0 %v7552
        %v11152 = vpop.f32.mrf.mxu0
        %v11153 = vadd.f32 %v11064, %v11152
        %v11154 = vpop.f32.mrf.mxu0
        %v11155 = vadd.f32 %v11066, %v11154
        %11156 = vmatmul.bf16.gmra.mxu0 %v7554
        %v11157 = vpop.f32.mrf.mxu0
        %v11158 = vadd.f32 %v11069, %v11157
        %v11159 = vpop.f32.mrf.mxu0
        %v11160 = vadd.f32 %v11071, %v11159
        %11161 = vmatmul.bf16.gmra.mxu0 %v7556
        %v11162 = vpop.f32.mrf.mxu0
        %v11163 = vadd.f32 %v11074, %v11162
        %v11164 = vpop.f32.mrf.mxu0
        %v11165 = vadd.f32 %v11076, %v11164
        %11166 = vdwg.mxu0
        %11167 = vmatpush.bf16.msra.mxu0 %v8566
        %11168 = vmatpush.bf16.msra.mxu0 %v8564
        %11169 = vmatpush.bf16.msra.mxu0 %v8562
        %11170 = vmatpush.bf16.msra.mxu0 %v8560
        %11171 = vmatpush.bf16.msra.mxu0 %v8558
        %11172 = vmatpush.bf16.msra.mxu0 %v8556
        %11173 = vmatpush.bf16.msra.mxu0 %v8554
        %11174 = vmatpush.bf16.msra.mxu0 %v8552
        %11175 = vmatmul.bf16.gmra.mxu0 %v7209
        %v11176 = vpop.f32.mrf.mxu0
        %v11177 = vadd.f32 %v11088, %v11176
        %v11178 = vpop.f32.mrf.mxu0
        %v11179 = vadd.f32 %v11090, %v11178
        %11180 = vmatmul.bf16.gmra.mxu0 %v7207
        %v11181 = vpop.f32.mrf.mxu0
        %v11182 = vadd.f32 %v11093, %v11181
        %v11183 = vpop.f32.mrf.mxu0
        %v11184 = vadd.f32 %v11095, %v11183
        %11185 = vmatmul.bf16.gmra.mxu0 %v7211
        %v11186 = vpop.f32.mrf.mxu0
        %v11187 = vadd.f32 %v11098, %v11186
        %v11188 = vpop.f32.mrf.mxu0
        %v11189 = vadd.f32 %v11100, %v11188
        %11190 = vmatmul.bf16.gmra.mxu0 %v7213
        %v11191 = vpop.f32.mrf.mxu0
        %v11192 = vadd.f32 %v11103, %v11191
        %v11193 = vpop.f32.mrf.mxu0
        %v11194 = vadd.f32 %v11105, %v11193
        %11195 = vmatmul.bf16.gmra.mxu0 %v7215
        %v11196 = vpop.f32.mrf.mxu0
        %v11197 = vadd.f32 %v11108, %v11196
        %v11198 = vpop.f32.mrf.mxu0
        %v11199 = vadd.f32 %v11110, %v11198
        %11200 = vmatmul.bf16.gmra.mxu0 %v7217
        %v11201 = vpop.f32.mrf.mxu0
        %v11202 = vadd.f32 %v11113, %v11201
        %v11203 = vpop.f32.mrf.mxu0
        %v11204 = vadd.f32 %v11115, %v11203
        %11205 = vmatmul.bf16.gmra.mxu0 %v7219
        %v11206 = vpop.f32.mrf.mxu0
        %v11207 = vadd.f32 %v11118, %v11206
        %v11208 = vpop.f32.mrf.mxu0
        %v11209 = vadd.f32 %v11120, %v11208
        %11210 = vmatmul.bf16.gmra.mxu0 %v7221
        %v11211 = vpop.f32.mrf.mxu0
        %v11212 = vadd.f32 %v11123, %v11211
        %v11213 = vpop.f32.mrf.mxu0
        %v11214 = vadd.f32 %v11125, %v11213
        %11215 = vmatmul.bf16.gmra.mxu0 %v7223
        %v11216 = vpop.f32.mrf.mxu0
        %v11217 = vadd.f32 %v11128, %v11216
        %v11218 = vpop.f32.mrf.mxu0
        %v11219 = vadd.f32 %v11130, %v11218
        %11220 = vmatmul.bf16.gmra.mxu0 %v7225
        %v11221 = vpop.f32.mrf.mxu0
        %v11222 = vadd.f32 %v11133, %v11221
        %v11223 = vpop.f32.mrf.mxu0
        %v11224 = vadd.f32 %v11135, %v11223
        %11225 = vmatmul.bf16.gmra.mxu0 %v7227
        %v11226 = vpop.f32.mrf.mxu0
        %v11227 = vadd.f32 %v11138, %v11226
        %v11228 = vpop.f32.mrf.mxu0
        %v11229 = vadd.f32 %v11140, %v11228
        %11230 = vmatmul.bf16.gmra.mxu0 %v7229
        %v11231 = vpop.f32.mrf.mxu0
        %v11232 = vadd.f32 %v11143, %v11231
        %v11233 = vpop.f32.mrf.mxu0
        %v11234 = vadd.f32 %v11145, %v11233
        %11235 = vmatmul.bf16.gmra.mxu0 %v7231
        %v11236 = vpop.f32.mrf.mxu0
        %v11237 = vadd.f32 %v11148, %v11236
        %v11238 = vpop.f32.mrf.mxu0
        %v11239 = vadd.f32 %v11150, %v11238
        %11240 = vmatmul.bf16.gmra.mxu0 %v7233
        %v11241 = vpop.f32.mrf.mxu0
        %v11242 = vadd.f32 %v11153, %v11241
        %v11243 = vpop.f32.mrf.mxu0
        %v11244 = vadd.f32 %v11155, %v11243
        %11245 = vmatmul.bf16.gmra.mxu0 %v7235
        %v11246 = vpop.f32.mrf.mxu0
        %v11247 = vadd.f32 %v11158, %v11246
        %v11248 = vpop.f32.mrf.mxu0
        %v11249 = vadd.f32 %v11160, %v11248
        %11250 = vmatmul.bf16.gmra.mxu0 %v7237
        %v11251 = vpop.f32.mrf.mxu0
        %v11252 = vadd.f32 %v11163, %v11251
        %v11253 = vpop.f32.mrf.mxu0
        %v11254 = vadd.f32 %v11165, %v11253
        %11255 = vdwg.mxu0
        %11256 = vmatpush.bf16.msra.mxu0 %v8582
        %11257 = vmatpush.bf16.msra.mxu0 %v8580
        %11258 = vmatpush.bf16.msra.mxu0 %v8578
        %11259 = vmatpush.bf16.msra.mxu0 %v8576
        %11260 = vmatpush.bf16.msra.mxu0 %v8574
        %11261 = vmatpush.bf16.msra.mxu0 %v8572
        %11262 = vmatpush.bf16.msra.mxu0 %v8570
        %11263 = vmatpush.bf16.msra.mxu0 %v8568
        %11264 = vmatmul.bf16.gmra.mxu0 %v7210
        %v11265 = vpop.f32.mrf.mxu0
        %v11266 = vadd.f32 %v11177, %v11265
        %v11267 = vpop.f32.mrf.mxu0
        %v11268 = vadd.f32 %v11179, %v11267
        %11269 = vmatmul.bf16.gmra.mxu0 %v7208
        %v11270 = vpop.f32.mrf.mxu0
        %v11271 = vadd.f32 %v11182, %v11270
        %v11272 = vpop.f32.mrf.mxu0
        %v11273 = vadd.f32 %v11184, %v11272
        %11274 = vmatmul.bf16.gmra.mxu0 %v7212
        %v11275 = vpop.f32.mrf.mxu0
        %v11276 = vadd.f32 %v11187, %v11275
        %v11277 = vpop.f32.mrf.mxu0
        %v11278 = vadd.f32 %v11189, %v11277
        %11279 = vmatmul.bf16.gmra.mxu0 %v7214
        %v11280 = vpop.f32.mrf.mxu0
        %v11281 = vadd.f32 %v11192, %v11280
        %v11282 = vpop.f32.mrf.mxu0
        %v11283 = vadd.f32 %v11194, %v11282
        %11284 = vmatmul.bf16.gmra.mxu0 %v7216
        %v11285 = vpop.f32.mrf.mxu0
        %v11286 = vadd.f32 %v11197, %v11285
        %v11287 = vpop.f32.mrf.mxu0
        %v11288 = vadd.f32 %v11199, %v11287
        %11289 = vmatmul.bf16.gmra.mxu0 %v7218
        %v11290 = vpop.f32.mrf.mxu0
        %v11291 = vadd.f32 %v11202, %v11290
        %v11292 = vpop.f32.mrf.mxu0
        %v11293 = vadd.f32 %v11204, %v11292
        %11294 = vmatmul.bf16.gmra.mxu0 %v7220
        %v11295 = vpop.f32.mrf.mxu0
        %v11296 = vadd.f32 %v11207, %v11295
        %v11297 = vpop.f32.mrf.mxu0
        %v11298 = vadd.f32 %v11209, %v11297
        %11299 = vmatmul.bf16.gmra.mxu0 %v7222
        %v11300 = vpop.f32.mrf.mxu0
        %v11301 = vadd.f32 %v11212, %v11300
        %v11302 = vpop.f32.mrf.mxu0
        %v11303 = vadd.f32 %v11214, %v11302
        %11304 = vmatmul.bf16.gmra.mxu0 %v7224
        %v11305 = vpop.f32.mrf.mxu0
        %v11306 = vadd.f32 %v11217, %v11305
        %v11307 = vpop.f32.mrf.mxu0
        %v11308 = vadd.f32 %v11219, %v11307
        %11309 = vmatmul.bf16.gmra.mxu0 %v7226
        %v11310 = vpop.f32.mrf.mxu0
        %v11311 = vadd.f32 %v11222, %v11310
        %v11312 = vpop.f32.mrf.mxu0
        %v11313 = vadd.f32 %v11224, %v11312
        %11314 = vmatmul.bf16.gmra.mxu0 %v7228
        %v11315 = vpop.f32.mrf.mxu0
        %v11316 = vadd.f32 %v11227, %v11315
        %v11317 = vpop.f32.mrf.mxu0
        %v11318 = vadd.f32 %v11229, %v11317
        %11319 = vmatmul.bf16.gmra.mxu0 %v7230
        %v11320 = vpop.f32.mrf.mxu0
        %v11321 = vadd.f32 %v11232, %v11320
        %v11322 = vpop.f32.mrf.mxu0
        %v11323 = vadd.f32 %v11234, %v11322
        %11324 = vmatmul.bf16.gmra.mxu0 %v7232
        %v11325 = vpop.f32.mrf.mxu0
        %v11326 = vadd.f32 %v11237, %v11325
        %v11327 = vpop.f32.mrf.mxu0
        %v11328 = vadd.f32 %v11239, %v11327
        %11329 = vmatmul.bf16.gmra.mxu0 %v7234
        %v11330 = vpop.f32.mrf.mxu0
        %v11331 = vadd.f32 %v11242, %v11330
        %v11332 = vpop.f32.mrf.mxu0
        %v11333 = vadd.f32 %v11244, %v11332
        %11334 = vmatmul.bf16.gmra.mxu0 %v7236
        %v11335 = vpop.f32.mrf.mxu0
        %v11336 = vadd.f32 %v11247, %v11335
        %v11337 = vpop.f32.mrf.mxu0
        %v11338 = vadd.f32 %v11249, %v11337
        %11339 = vmatmul.bf16.gmra.mxu0 %v7238
        %v11340 = vpop.f32.mrf.mxu0
        %v11341 = vadd.f32 %v11252, %v11340
        %v11342 = vpop.f32.mrf.mxu0
        %v11343 = vadd.f32 %v11254, %v11342
        %11344 = vdwg.mxu0
        %11345 = vmatpush.bf16.msra.mxu0 %v8598
        %11346 = vmatpush.bf16.msra.mxu0 %v8596
        %11347 = vmatpush.bf16.msra.mxu0 %v8594
        %11348 = vmatpush.bf16.msra.mxu0 %v8592
        %11349 = vmatpush.bf16.msra.mxu0 %v8590
        %11350 = vmatpush.bf16.msra.mxu0 %v8588
        %11351 = vmatpush.bf16.msra.mxu0 %v8586
        %11352 = vmatpush.bf16.msra.mxu0 %v8584
        %11353 = vmatmul.bf16.gmra.mxu0 %v6921
        %v11354 = vpop.f32.mrf.mxu0
        %v11355 = vadd.f32 %v11266, %v11354
        %v11356 = vpop.f32.mrf.mxu0
        %v11357 = vadd.f32 %v11268, %v11356
        %11358 = vmatmul.bf16.gmra.mxu0 %v6919
        %v11359 = vpop.f32.mrf.mxu0
        %v11360 = vadd.f32 %v11271, %v11359
        %v11361 = vpop.f32.mrf.mxu0
        %v11362 = vadd.f32 %v11273, %v11361
        %11363 = vmatmul.bf16.gmra.mxu0 %v6923
        %v11364 = vpop.f32.mrf.mxu0
        %v11365 = vadd.f32 %v11276, %v11364
        %v11366 = vpop.f32.mrf.mxu0
        %v11367 = vadd.f32 %v11278, %v11366
        %11368 = vmatmul.bf16.gmra.mxu0 %v6925
        %v11369 = vpop.f32.mrf.mxu0
        %v11370 = vadd.f32 %v11281, %v11369
        %v11371 = vpop.f32.mrf.mxu0
        %v11372 = vadd.f32 %v11283, %v11371
        %11373 = vmatmul.bf16.gmra.mxu0 %v6927
        %v11374 = vpop.f32.mrf.mxu0
        %v11375 = vadd.f32 %v11286, %v11374
        %v11376 = vpop.f32.mrf.mxu0
        %v11377 = vadd.f32 %v11288, %v11376
        %11378 = vmatmul.bf16.gmra.mxu0 %v6929
        %v11379 = vpop.f32.mrf.mxu0
        %v11380 = vadd.f32 %v11291, %v11379
        %v11381 = vpop.f32.mrf.mxu0
        %v11382 = vadd.f32 %v11293, %v11381
        %11383 = vmatmul.bf16.gmra.mxu0 %v6931
        %v11384 = vpop.f32.mrf.mxu0
        %v11385 = vadd.f32 %v11296, %v11384
        %v11386 = vpop.f32.mrf.mxu0
        %v11387 = vadd.f32 %v11298, %v11386
        %11388 = vmatmul.bf16.gmra.mxu0 %v6933
        %v11389 = vpop.f32.mrf.mxu0
        %v11390 = vadd.f32 %v11301, %v11389
        %v11391 = vpop.f32.mrf.mxu0
        %v11392 = vadd.f32 %v11303, %v11391
        %11393 = vmatmul.bf16.gmra.mxu0 %v6935
        %v11394 = vpop.f32.mrf.mxu0
        %v11395 = vadd.f32 %v11306, %v11394
        %v11396 = vpop.f32.mrf.mxu0
        %v11397 = vadd.f32 %v11308, %v11396
        %11398 = vmatmul.bf16.gmra.mxu0 %v6937
        %v11399 = vpop.f32.mrf.mxu0
        %v11400 = vadd.f32 %v11311, %v11399
        %v11401 = vpop.f32.mrf.mxu0
        %v11402 = vadd.f32 %v11313, %v11401
        %11403 = vmatmul.bf16.gmra.mxu0 %v6939
        %v11404 = vpop.f32.mrf.mxu0
        %v11405 = vadd.f32 %v11316, %v11404
        %v11406 = vpop.f32.mrf.mxu0
        %v11407 = vadd.f32 %v11318, %v11406
        %11408 = vmatmul.bf16.gmra.mxu0 %v6941
        %v11409 = vpop.f32.mrf.mxu0
        %v11410 = vadd.f32 %v11321, %v11409
        %v11411 = vpop.f32.mrf.mxu0
        %v11412 = vadd.f32 %v11323, %v11411
        %11413 = vmatmul.bf16.gmra.mxu0 %v6943
        %v11414 = vpop.f32.mrf.mxu0
        %v11415 = vadd.f32 %v11326, %v11414
        %v11416 = vpop.f32.mrf.mxu0
        %v11417 = vadd.f32 %v11328, %v11416
        %11418 = vmatmul.bf16.gmra.mxu0 %v6945
        %v11419 = vpop.f32.mrf.mxu0
        %v11420 = vadd.f32 %v11331, %v11419
        %v11421 = vpop.f32.mrf.mxu0
        %v11422 = vadd.f32 %v11333, %v11421
        %11423 = vmatmul.bf16.gmra.mxu0 %v6947
        %v11424 = vpop.f32.mrf.mxu0
        %v11425 = vadd.f32 %v11336, %v11424
        %v11426 = vpop.f32.mrf.mxu0
        %v11427 = vadd.f32 %v11338, %v11426
        %11428 = vmatmul.bf16.gmra.mxu0 %v6949
        %v11429 = vpop.f32.mrf.mxu0
        %v11430 = vadd.f32 %v11341, %v11429
        %v11431 = vpop.f32.mrf.mxu0
        %v11432 = vadd.f32 %v11343, %v11431
        %11433 = vdwg.mxu0
        %11434 = vmatpush.bf16.msra.mxu0 %v8614
        %11435 = vmatpush.bf16.msra.mxu0 %v8612
        %11436 = vmatpush.bf16.msra.mxu0 %v8610
        %11437 = vmatpush.bf16.msra.mxu0 %v8608
        %11438 = vmatpush.bf16.msra.mxu0 %v8606
        %11439 = vmatpush.bf16.msra.mxu0 %v8604
        %11440 = vmatpush.bf16.msra.mxu0 %v8602
        %11441 = vmatpush.bf16.msra.mxu0 %v8600
        %11442 = vmatmul.bf16.gmra.mxu0 %v6922
        %v11443 = vpop.f32.mrf.mxu0
        %v11444 = vadd.f32 %v11355, %v11443
        %v11445 = vpop.f32.mrf.mxu0
        %v11446 = vadd.f32 %v11357, %v11445
        %11447 = vmatmul.bf16.gmra.mxu0 %v6920
        %v11448 = vpop.f32.mrf.mxu0
        %v11449 = vadd.f32 %v11360, %v11448
        %v11450 = vpop.f32.mrf.mxu0
        %v11451 = vadd.f32 %v11362, %v11450
        %11452 = vmatmul.bf16.gmra.mxu0 %v6924
        %v11453 = vpop.f32.mrf.mxu0
        %v11454 = vadd.f32 %v11365, %v11453
        %v11455 = vpop.f32.mrf.mxu0
        %v11456 = vadd.f32 %v11367, %v11455
        %11457 = vmatmul.bf16.gmra.mxu0 %v6926
        %v11458 = vpop.f32.mrf.mxu0
        %v11459 = vadd.f32 %v11370, %v11458
        %v11460 = vpop.f32.mrf.mxu0
        %v11461 = vadd.f32 %v11372, %v11460
        %11462 = vmatmul.bf16.gmra.mxu0 %v6928
        %v11463 = vpop.f32.mrf.mxu0
        %v11464 = vadd.f32 %v11375, %v11463
        %v11465 = vpop.f32.mrf.mxu0
        %v11466 = vadd.f32 %v11377, %v11465
        %11467 = vmatmul.bf16.gmra.mxu0 %v6930
        %v11468 = vpop.f32.mrf.mxu0
        %v11469 = vadd.f32 %v11380, %v11468
        %v11470 = vpop.f32.mrf.mxu0
        %v11471 = vadd.f32 %v11382, %v11470
        %11472 = vmatmul.bf16.gmra.mxu0 %v6932
        %v11473 = vpop.f32.mrf.mxu0
        %v11474 = vadd.f32 %v11385, %v11473
        %v11475 = vpop.f32.mrf.mxu0
        %v11476 = vadd.f32 %v11387, %v11475
        %11477 = vmatmul.bf16.gmra.mxu0 %v6934
        %v11478 = vpop.f32.mrf.mxu0
        %v11479 = vadd.f32 %v11390, %v11478
        %v11480 = vpop.f32.mrf.mxu0
        %v11481 = vadd.f32 %v11392, %v11480
        %11482 = vmatmul.bf16.gmra.mxu0 %v6936
        %v11483 = vpop.f32.mrf.mxu0
        %v11484 = vadd.f32 %v11395, %v11483
        %v11485 = vpop.f32.mrf.mxu0
        %v11486 = vadd.f32 %v11397, %v11485
        %11487 = vmatmul.bf16.gmra.mxu0 %v6938
        %v11488 = vpop.f32.mrf.mxu0
        %v11489 = vadd.f32 %v11400, %v11488
        %v11490 = vpop.f32.mrf.mxu0
        %v11491 = vadd.f32 %v11402, %v11490
        %11492 = vmatmul.bf16.gmra.mxu0 %v6940
        %v11493 = vpop.f32.mrf.mxu0
        %v11494 = vadd.f32 %v11405, %v11493
        %v11495 = vpop.f32.mrf.mxu0
        %v11496 = vadd.f32 %v11407, %v11495
        %11497 = vmatmul.bf16.gmra.mxu0 %v6942
        %v11498 = vpop.f32.mrf.mxu0
        %v11499 = vadd.f32 %v11410, %v11498
        %v11500 = vpop.f32.mrf.mxu0
        %v11501 = vadd.f32 %v11412, %v11500
        %11502 = vmatmul.bf16.gmra.mxu0 %v6944
        %v11503 = vpop.f32.mrf.mxu0
        %v11504 = vadd.f32 %v11415, %v11503
        %v11505 = vpop.f32.mrf.mxu0
        %v11506 = vadd.f32 %v11417, %v11505
        %11507 = vmatmul.bf16.gmra.mxu0 %v6946
        %v11508 = vpop.f32.mrf.mxu0
        %v11509 = vadd.f32 %v11420, %v11508
        %v11510 = vpop.f32.mrf.mxu0
        %v11511 = vadd.f32 %v11422, %v11510
        %11512 = vmatmul.bf16.gmra.mxu0 %v6948
        %v11513 = vpop.f32.mrf.mxu0
        %v11514 = vadd.f32 %v11425, %v11513
        %v11515 = vpop.f32.mrf.mxu0
        %v11516 = vadd.f32 %v11427, %v11515
        %11517 = vmatmul.bf16.gmra.mxu0 %v6950
        %v11518 = vpop.f32.mrf.mxu0
        %v11519 = vadd.f32 %v11430, %v11518
        %v11520 = vpop.f32.mrf.mxu0
        %v11521 = vadd.f32 %v11432, %v11520
        %11522 = vdwg.mxu0
        %11523 = vmatpush.bf16.msra.mxu0 %v8630
        %11524 = vmatpush.bf16.msra.mxu0 %v8628
        %11525 = vmatpush.bf16.msra.mxu0 %v8626
        %11526 = vmatpush.bf16.msra.mxu0 %v8624
        %11527 = vmatpush.bf16.msra.mxu0 %v8622
        %11528 = vmatpush.bf16.msra.mxu0 %v8620
        %11529 = vmatpush.bf16.msra.mxu0 %v8618
        %11530 = vmatpush.bf16.msra.mxu0 %v8616
        %11531 = vmatmul.bf16.gmra.mxu0 %v7529
        %v11532 = vpop.f32.mrf.mxu0
        %v11533 = vadd.f32 %v11444, %v11532
        %v11534 = vpop.f32.mrf.mxu0
        %v11535 = vadd.f32 %v11446, %v11534
        %11536 = vmatmul.bf16.gmra.mxu0 %v7527
        %v11537 = vpop.f32.mrf.mxu0
        %v11538 = vadd.f32 %v11449, %v11537
        %v11539 = vpop.f32.mrf.mxu0
        %v11540 = vadd.f32 %v11451, %v11539
        %11541 = vmatmul.bf16.gmra.mxu0 %v7531
        %v11542 = vpop.f32.mrf.mxu0
        %v11543 = vadd.f32 %v11454, %v11542
        %v11544 = vpop.f32.mrf.mxu0
        %v11545 = vadd.f32 %v11456, %v11544
        %11546 = vmatmul.bf16.gmra.mxu0 %v7533
        %v11547 = vpop.f32.mrf.mxu0
        %v11548 = vadd.f32 %v11459, %v11547
        %v11549 = vpop.f32.mrf.mxu0
        %v11550 = vadd.f32 %v11461, %v11549
        %11551 = vmatmul.bf16.gmra.mxu0 %v7535
        %v11552 = vpop.f32.mrf.mxu0
        %v11553 = vadd.f32 %v11464, %v11552
        %v11554 = vpop.f32.mrf.mxu0
        %v11555 = vadd.f32 %v11466, %v11554
        %11556 = vmatmul.bf16.gmra.mxu0 %v7537
        %v11557 = vpop.f32.mrf.mxu0
        %v11558 = vadd.f32 %v11469, %v11557
        %v11559 = vpop.f32.mrf.mxu0
        %v11560 = vadd.f32 %v11471, %v11559
        %11561 = vmatmul.bf16.gmra.mxu0 %v7539
        %v11562 = vpop.f32.mrf.mxu0
        %v11563 = vadd.f32 %v11474, %v11562
        %v11564 = vpop.f32.mrf.mxu0
        %v11565 = vadd.f32 %v11476, %v11564
        %11566 = vmatmul.bf16.gmra.mxu0 %v7541
        %v11567 = vpop.f32.mrf.mxu0
        %v11568 = vadd.f32 %v11479, %v11567
        %v11569 = vpop.f32.mrf.mxu0
        %v11570 = vadd.f32 %v11481, %v11569
        %11571 = vmatmul.bf16.gmra.mxu0 %v7543
        %v11572 = vpop.f32.mrf.mxu0
        %v11573 = vadd.f32 %v11484, %v11572
        %v11574 = vpop.f32.mrf.mxu0
        %v11575 = vadd.f32 %v11486, %v11574
        %11576 = vmatmul.bf16.gmra.mxu0 %v7545
        %v11577 = vpop.f32.mrf.mxu0
        %v11578 = vadd.f32 %v11489, %v11577
        %v11579 = vpop.f32.mrf.mxu0
        %v11580 = vadd.f32 %v11491, %v11579
        %11581 = vmatmul.bf16.gmra.mxu0 %v7547
        %v11582 = vpop.f32.mrf.mxu0
        %v11583 = vadd.f32 %v11494, %v11582
        %v11584 = vpop.f32.mrf.mxu0
        %v11585 = vadd.f32 %v11496, %v11584
        %11586 = vmatmul.bf16.gmra.mxu0 %v7549
        %v11587 = vpop.f32.mrf.mxu0
        %v11588 = vadd.f32 %v11499, %v11587
        %v11589 = vpop.f32.mrf.mxu0
        %v11590 = vadd.f32 %v11501, %v11589
        %11591 = vmatmul.bf16.gmra.mxu0 %v7551
        %v11592 = vpop.f32.mrf.mxu0
        %v11593 = vadd.f32 %v11504, %v11592
        %v11594 = vpop.f32.mrf.mxu0
        %v11595 = vadd.f32 %v11506, %v11594
        %11596 = vmatmul.bf16.gmra.mxu0 %v7553
        %v11597 = vpop.f32.mrf.mxu0
        %v11598 = vadd.f32 %v11509, %v11597
        %v11599 = vpop.f32.mrf.mxu0
        %v11600 = vadd.f32 %v11511, %v11599
        %11601 = vmatmul.bf16.gmra.mxu0 %v7555
        %v11602 = vpop.f32.mrf.mxu0
        %v11603 = vadd.f32 %v11514, %v11602
        %v11604 = vpop.f32.mrf.mxu0
        %v11605 = vadd.f32 %v11516, %v11604
        %11606 = vmatmul.bf16.gmra.mxu0 %v7557
        %v11607 = vpop.f32.mrf.mxu0
        %v11608 = vadd.f32 %v11519, %v11607
        %v11609 = vpop.f32.mrf.mxu0
        %v11610 = vadd.f32 %v11521, %v11609
        %11611 = vdwg.mxu0
        %11612 = vmatpush.bf16.msra.mxu0 %v8646
        %11613 = vmatpush.bf16.msra.mxu0 %v8644
        %11614 = vmatpush.bf16.msra.mxu0 %v8642
        %11615 = vmatpush.bf16.msra.mxu0 %v8640
        %11616 = vmatpush.bf16.msra.mxu0 %v8638
        %11617 = vmatpush.bf16.msra.mxu0 %v8636
        %11618 = vmatpush.bf16.msra.mxu0 %v8634
        %11619 = vmatpush.bf16.msra.mxu0 %v8632
        %11620 = vmatmul.bf16.gmra.mxu0 %v7530
        %v11621 = vpop.f32.mrf.mxu0
        %v11622 = vadd.f32 %v11533, %v11621
        %v11623 = vpop.f32.mrf.mxu0
        %v11624 = vadd.f32 %v11535, %v11623
        %11625 = vmatmul.bf16.gmra.mxu0 %v7528
        %v11626 = vpop.f32.mrf.mxu0
        %v11627 = vadd.f32 %v11538, %v11626
        %v11628 = vpop.f32.mrf.mxu0
        %v11629 = vadd.f32 %v11540, %v11628
        %11630 = vmatmul.bf16.gmra.mxu0 %v7532
        %v11631 = vpop.f32.mrf.mxu0
        %v11632 = vadd.f32 %v11543, %v11631
        %v11633 = vpop.f32.mrf.mxu0
        %v11634 = vadd.f32 %v11545, %v11633
        %11635 = vmatmul.bf16.gmra.mxu0 %v7534
        %v11636 = vpop.f32.mrf.mxu0
        %v11637 = vadd.f32 %v11548, %v11636
        %v11638 = vpop.f32.mrf.mxu0
        %v11639 = vadd.f32 %v11550, %v11638
        %11640 = vmatmul.bf16.gmra.mxu0 %v7536
        %v11641 = vpop.f32.mrf.mxu0
        %v11642 = vadd.f32 %v11553, %v11641
        %v11643 = vpop.f32.mrf.mxu0
        %v11644 = vadd.f32 %v11555, %v11643
        %11645 = vmatmul.bf16.gmra.mxu0 %v7538
        %v11646 = vpop.f32.mrf.mxu0
        %v11647 = vadd.f32 %v11558, %v11646
        %v11648 = vpop.f32.mrf.mxu0
        %v11649 = vadd.f32 %v11560, %v11648
        %11650 = vmatmul.bf16.gmra.mxu0 %v7540
        %v11651 = vpop.f32.mrf.mxu0
        %v11652 = vadd.f32 %v11563, %v11651
        %v11653 = vpop.f32.mrf.mxu0
        %v11654 = vadd.f32 %v11565, %v11653
        %11655 = vmatmul.bf16.gmra.mxu0 %v7542
        %v11656 = vpop.f32.mrf.mxu0
        %v11657 = vadd.f32 %v11568, %v11656
        %v11658 = vpop.f32.mrf.mxu0
        %v11659 = vadd.f32 %v11570, %v11658
        %11660 = vmatmul.bf16.gmra.mxu0 %v7544
        %v11661 = vpop.f32.mrf.mxu0
        %v11662 = vadd.f32 %v11573, %v11661
        %v11663 = vpop.f32.mrf.mxu0
        %v11664 = vadd.f32 %v11575, %v11663
        %11665 = vmatmul.bf16.gmra.mxu0 %v7546
        %v11666 = vpop.f32.mrf.mxu0
        %v11667 = vadd.f32 %v11578, %v11666
        %v11668 = vpop.f32.mrf.mxu0
        %v11669 = vadd.f32 %v11580, %v11668
        %11670 = vmatmul.bf16.gmra.mxu0 %v7548
        %v11671 = vpop.f32.mrf.mxu0
        %v11672 = vadd.f32 %v11583, %v11671
        %v11673 = vpop.f32.mrf.mxu0
        %v11674 = vadd.f32 %v11585, %v11673
        %11675 = vmatmul.bf16.gmra.mxu0 %v7550
        %v11676 = vpop.f32.mrf.mxu0
        %v11677 = vadd.f32 %v11588, %v11676
        %v11678 = vpop.f32.mrf.mxu0
        %v11679 = vadd.f32 %v11590, %v11678
        %11680 = vmatmul.bf16.gmra.mxu0 %v7552
        %v11681 = vpop.f32.mrf.mxu0
        %v11682 = vadd.f32 %v11593, %v11681
        %v11683 = vpop.f32.mrf.mxu0
        %v11684 = vadd.f32 %v11595, %v11683
        %11685 = vmatmul.bf16.gmra.mxu0 %v7554
        %v11686 = vpop.f32.mrf.mxu0
        %v11687 = vadd.f32 %v11598, %v11686
        %v11688 = vpop.f32.mrf.mxu0
        %v11689 = vadd.f32 %v11600, %v11688
        %11690 = vmatmul.bf16.gmra.mxu0 %v7556
        %v11691 = vpop.f32.mrf.mxu0
        %v11692 = vadd.f32 %v11603, %v11691
        %v11693 = vpop.f32.mrf.mxu0
        %v11694 = vadd.f32 %v11605, %v11693
        %11695 = vmatmul.bf16.gmra.mxu0 %v7558
        %v11696 = vpop.f32.mrf.mxu0
        %v11697 = vadd.f32 %v11608, %v11696
        %v11698 = vpop.f32.mrf.mxu0
        %v11699 = vadd.f32 %v11610, %v11698
        %11700 = vdwg.mxu0
        %11701 = vmatpush.bf16.msra.mxu0 %v8662
        %11702 = vmatpush.bf16.msra.mxu0 %v8660
        %11703 = vmatpush.bf16.msra.mxu0 %v8658
        %11704 = vmatpush.bf16.msra.mxu0 %v8656
        %11705 = vmatpush.bf16.msra.mxu0 %v8654
        %11706 = vmatpush.bf16.msra.mxu0 %v8652
        %11707 = vmatpush.bf16.msra.mxu0 %v8650
        %11708 = vmatpush.bf16.msra.mxu0 %v8648
        %11709 = vmatmul.bf16.gmra.mxu0 %v7207
        %v11710 = vpop.f32.mrf.mxu0
        %v11711 = vadd.f32 %v11622, %v11710
        %v11712 = vpop.f32.mrf.mxu0
        %v11713 = vadd.f32 %v11624, %v11712
        %11714 = vmatmul.bf16.gmra.mxu0 %v7211
        %v11715 = vpop.f32.mrf.mxu0
        %v11716 = vadd.f32 %v11627, %v11715
        %v11717 = vpop.f32.mrf.mxu0
        %v11718 = vadd.f32 %v11629, %v11717
        %11719 = vmatmul.bf16.gmra.mxu0 %v7213
        %v11720 = vpop.f32.mrf.mxu0
        %v11721 = vadd.f32 %v11632, %v11720
        %v11722 = vpop.f32.mrf.mxu0
        %v11723 = vadd.f32 %v11634, %v11722
        %11724 = vmatmul.bf16.gmra.mxu0 %v7215
        %v11725 = vpop.f32.mrf.mxu0
        %v11726 = vadd.f32 %v11637, %v11725
        %v11727 = vpop.f32.mrf.mxu0
        %v11728 = vadd.f32 %v11639, %v11727
        %11729 = vmatmul.bf16.gmra.mxu0 %v7217
        %v11730 = vpop.f32.mrf.mxu0
        %v11731 = vadd.f32 %v11642, %v11730
        %v11732 = vpop.f32.mrf.mxu0
        %v11733 = vadd.f32 %v11644, %v11732
        %11734 = vmatmul.bf16.gmra.mxu0 %v7219
        %v11735 = vpop.f32.mrf.mxu0
        %v11736 = vadd.f32 %v11647, %v11735
        %v11737 = vpop.f32.mrf.mxu0
        %v11738 = vadd.f32 %v11649, %v11737
        %11739 = vmatmul.bf16.gmra.mxu0 %v7221
        %v11740 = vpop.f32.mrf.mxu0
        %v11741 = vadd.f32 %v11652, %v11740
        %v11742 = vpop.f32.mrf.mxu0
        %v11743 = vadd.f32 %v11654, %v11742
        %11744 = vmatmul.bf16.gmra.mxu0 %v7223
        %v11745 = vpop.f32.mrf.mxu0
        %v11746 = vadd.f32 %v11657, %v11745
        %v11747 = vpop.f32.mrf.mxu0
        %v11748 = vadd.f32 %v11659, %v11747
        %11749 = vmatmul.bf16.gmra.mxu0 %v7225
        %v11750 = vpop.f32.mrf.mxu0
        %v11751 = vadd.f32 %v11662, %v11750
        %v11752 = vpop.f32.mrf.mxu0
        %v11753 = vadd.f32 %v11664, %v11752
        %11754 = vmatmul.bf16.gmra.mxu0 %v7227
        %v11755 = vpop.f32.mrf.mxu0
        %v11756 = vadd.f32 %v11667, %v11755
        %v11757 = vpop.f32.mrf.mxu0
        %v11758 = vadd.f32 %v11669, %v11757
        %11759 = vmatmul.bf16.gmra.mxu0 %v7229
        %v11760 = vpop.f32.mrf.mxu0
        %v11761 = vadd.f32 %v11672, %v11760
        %v11762 = vpop.f32.mrf.mxu0
        %v11763 = vadd.f32 %v11674, %v11762
        %11764 = vmatmul.bf16.gmra.mxu0 %v7231
        %v11765 = vpop.f32.mrf.mxu0
        %v11766 = vadd.f32 %v11677, %v11765
        %v11767 = vpop.f32.mrf.mxu0
        %v11768 = vadd.f32 %v11679, %v11767
        %11769 = vmatmul.bf16.gmra.mxu0 %v7233
        %v11770 = vpop.f32.mrf.mxu0
        %v11771 = vadd.f32 %v11682, %v11770
        %v11772 = vpop.f32.mrf.mxu0
        %v11773 = vadd.f32 %v11684, %v11772
        %11774 = vmatmul.bf16.gmra.mxu0 %v7235
        %v11775 = vpop.f32.mrf.mxu0
        %v11776 = vadd.f32 %v11687, %v11775
        %v11777 = vpop.f32.mrf.mxu0
        %v11778 = vadd.f32 %v11689, %v11777
        %11779 = vmatmul.bf16.gmra.mxu0 %v7237
        %v11780 = vpop.f32.mrf.mxu0
        %v11781 = vadd.f32 %v11692, %v11780
        %v11782 = vpop.f32.mrf.mxu0
        %v11783 = vadd.f32 %v11694, %v11782
        %11784 = vmatmul.bf16.gmra.mxu0 %v7235
        %v11785 = vpop.f32.mrf.mxu0
        %v11786 = vadd.f32 %v11697, %v11785
        %v11787 = vpop.f32.mrf.mxu0
        %v11788 = vadd.f32 %v11699, %v11787
        %11789 = vdwg.mxu0
        %11790 = vmatpush.bf16.msra.mxu0 %v8678
        %11791 = vmatpush.bf16.msra.mxu0 %v8676
        %11792 = vmatpush.bf16.msra.mxu0 %v8674
        %11793 = vmatpush.bf16.msra.mxu0 %v8672
        %11794 = vmatpush.bf16.msra.mxu0 %v8670
        %11795 = vmatpush.bf16.msra.mxu0 %v8668
        %11796 = vmatpush.bf16.msra.mxu0 %v8666
        %11797 = vmatpush.bf16.msra.mxu0 %v8664
        %11798 = vmatmul.bf16.gmra.mxu0 %v7208
        %v11799 = vpop.f32.mrf.mxu0
        %v11800 = vadd.f32 %v11711, %v11799
        %v11801 = vpop.f32.mrf.mxu0
        %v11802 = vadd.f32 %v11713, %v11801
        %11803 = vmatmul.bf16.gmra.mxu0 %v7212
        %v11804 = vpop.f32.mrf.mxu0
        %v11805 = vadd.f32 %v11716, %v11804
        %v11806 = vpop.f32.mrf.mxu0
        %v11807 = vadd.f32 %v11718, %v11806
        %11808 = vmatmul.bf16.gmra.mxu0 %v7214
        %v11809 = vpop.f32.mrf.mxu0
        %v11810 = vadd.f32 %v11721, %v11809
        %v11811 = vpop.f32.mrf.mxu0
        %v11812 = vadd.f32 %v11723, %v11811
        %11813 = vmatmul.bf16.gmra.mxu0 %v7216
        %v11814 = vpop.f32.mrf.mxu0
        %v11815 = vadd.f32 %v11726, %v11814
        %v11816 = vpop.f32.mrf.mxu0
        %v11817 = vadd.f32 %v11728, %v11816
        %11818 = vmatmul.bf16.gmra.mxu0 %v7218
        %v11819 = vpop.f32.mrf.mxu0
        %v11820 = vadd.f32 %v11731, %v11819
        %v11821 = vpop.f32.mrf.mxu0
        %v11822 = vadd.f32 %v11733, %v11821
        %11823 = vmatmul.bf16.gmra.mxu0 %v7220
        %v11824 = vpop.f32.mrf.mxu0
        %v11825 = vadd.f32 %v11736, %v11824
        %v11826 = vpop.f32.mrf.mxu0
        %v11827 = vadd.f32 %v11738, %v11826
        %11828 = vmatmul.bf16.gmra.mxu0 %v7222
        %v11829 = vpop.f32.mrf.mxu0
        %v11830 = vadd.f32 %v11741, %v11829
        %v11831 = vpop.f32.mrf.mxu0
        %v11832 = vadd.f32 %v11743, %v11831
        %11833 = vmatmul.bf16.gmra.mxu0 %v7224
        %v11834 = vpop.f32.mrf.mxu0
        %v11835 = vadd.f32 %v11746, %v11834
        %v11836 = vpop.f32.mrf.mxu0
        %v11837 = vadd.f32 %v11748, %v11836
        %11838 = vmatmul.bf16.gmra.mxu0 %v7226
        %v11839 = vpop.f32.mrf.mxu0
        %v11840 = vadd.f32 %v11751, %v11839
        %v11841 = vpop.f32.mrf.mxu0
        %v11842 = vadd.f32 %v11753, %v11841
        %11843 = vmatmul.bf16.gmra.mxu0 %v7228
        %v11844 = vpop.f32.mrf.mxu0
        %v11845 = vadd.f32 %v11756, %v11844
        %v11846 = vpop.f32.mrf.mxu0
        %v11847 = vadd.f32 %v11758, %v11846
        %11848 = vmatmul.bf16.gmra.mxu0 %v7230
        %v11849 = vpop.f32.mrf.mxu0
        %v11850 = vadd.f32 %v11761, %v11849
        %v11851 = vpop.f32.mrf.mxu0
        %v11852 = vadd.f32 %v11763, %v11851
        %11853 = vmatmul.bf16.gmra.mxu0 %v7232
        %v11854 = vpop.f32.mrf.mxu0
        %v11855 = vadd.f32 %v11766, %v11854
        %v11856 = vpop.f32.mrf.mxu0
        %v11857 = vadd.f32 %v11768, %v11856
        %11858 = vmatmul.bf16.gmra.mxu0 %v7234
        %v11859 = vpop.f32.mrf.mxu0
        %v11860 = vadd.f32 %v11771, %v11859
        %v11861 = vpop.f32.mrf.mxu0
        %v11862 = vadd.f32 %v11773, %v11861
        %11863 = vmatmul.bf16.gmra.mxu0 %v7236
        %v11864 = vpop.f32.mrf.mxu0
        %v11865 = vadd.f32 %v11776, %v11864
        %v11866 = vpop.f32.mrf.mxu0
        %v11867 = vadd.f32 %v11778, %v11866
        %11868 = vmatmul.bf16.gmra.mxu0 %v7238
        %v11869 = vpop.f32.mrf.mxu0
        %v11870 = vadd.f32 %v11781, %v11869
        %v11871 = vpop.f32.mrf.mxu0
        %v11872 = vadd.f32 %v11783, %v11871
        %11873 = vmatmul.bf16.gmra.mxu0 %v7236
        %v11874 = vpop.f32.mrf.mxu0
        %v11875 = vadd.f32 %v11786, %v11874
        %v11876 = vpop.f32.mrf.mxu0
        %v11877 = vadd.f32 %v11788, %v11876
        %11878 = vdwg.mxu0
        %11879 = vmatpush.bf16.msra.mxu0 %v8694
        %11880 = vmatpush.bf16.msra.mxu0 %v8692
        %11881 = vmatpush.bf16.msra.mxu0 %v8690
        %11882 = vmatpush.bf16.msra.mxu0 %v8688
        %11883 = vmatpush.bf16.msra.mxu0 %v8686
        %11884 = vmatpush.bf16.msra.mxu0 %v8684
        %11885 = vmatpush.bf16.msra.mxu0 %v8682
        %11886 = vmatpush.bf16.msra.mxu0 %v8680
        %11887 = vmatmul.bf16.gmra.mxu0 %v6919
        %v11888 = vpop.f32.mrf.mxu0
        %v11889 = vadd.f32 %v11800, %v11888
        %v11890 = vpop.f32.mrf.mxu0
        %v11891 = vadd.f32 %v11802, %v11890
        %11892 = vmatmul.bf16.gmra.mxu0 %v6923
        %v11893 = vpop.f32.mrf.mxu0
        %v11894 = vadd.f32 %v11805, %v11893
        %v11895 = vpop.f32.mrf.mxu0
        %v11896 = vadd.f32 %v11807, %v11895
        %11897 = vmatmul.bf16.gmra.mxu0 %v6925
        %v11898 = vpop.f32.mrf.mxu0
        %v11899 = vadd.f32 %v11810, %v11898
        %v11900 = vpop.f32.mrf.mxu0
        %v11901 = vadd.f32 %v11812, %v11900
        %11902 = vmatmul.bf16.gmra.mxu0 %v6927
        %v11903 = vpop.f32.mrf.mxu0
        %v11904 = vadd.f32 %v11815, %v11903
        %v11905 = vpop.f32.mrf.mxu0
        %v11906 = vadd.f32 %v11817, %v11905
        %11907 = vmatmul.bf16.gmra.mxu0 %v6929
        %v11908 = vpop.f32.mrf.mxu0
        %v11909 = vadd.f32 %v11820, %v11908
        %v11910 = vpop.f32.mrf.mxu0
        %v11911 = vadd.f32 %v11822, %v11910
        %11912 = vmatmul.bf16.gmra.mxu0 %v6931
        %v11913 = vpop.f32.mrf.mxu0
        %v11914 = vadd.f32 %v11825, %v11913
        %v11915 = vpop.f32.mrf.mxu0
        %v11916 = vadd.f32 %v11827, %v11915
        %11917 = vmatmul.bf16.gmra.mxu0 %v6933
        %v11918 = vpop.f32.mrf.mxu0
        %v11919 = vadd.f32 %v11830, %v11918
        %v11920 = vpop.f32.mrf.mxu0
        %v11921 = vadd.f32 %v11832, %v11920
        %11922 = vmatmul.bf16.gmra.mxu0 %v6935
        %v11923 = vpop.f32.mrf.mxu0
        %v11924 = vadd.f32 %v11835, %v11923
        %v11925 = vpop.f32.mrf.mxu0
        %v11926 = vadd.f32 %v11837, %v11925
        %11927 = vmatmul.bf16.gmra.mxu0 %v6937
        %v11928 = vpop.f32.mrf.mxu0
        %v11929 = vadd.f32 %v11840, %v11928
        %v11930 = vpop.f32.mrf.mxu0
        %v11931 = vadd.f32 %v11842, %v11930
        %11932 = vmatmul.bf16.gmra.mxu0 %v6939
        %v11933 = vpop.f32.mrf.mxu0
        %v11934 = vadd.f32 %v11845, %v11933
        %v11935 = vpop.f32.mrf.mxu0
        %v11936 = vadd.f32 %v11847, %v11935
        %11937 = vmatmul.bf16.gmra.mxu0 %v6941
        %v11938 = vpop.f32.mrf.mxu0
        %v11939 = vadd.f32 %v11850, %v11938
        %v11940 = vpop.f32.mrf.mxu0
        %v11941 = vadd.f32 %v11852, %v11940
        %11942 = vmatmul.bf16.gmra.mxu0 %v6943
        %v11943 = vpop.f32.mrf.mxu0
        %v11944 = vadd.f32 %v11855, %v11943
        %v11945 = vpop.f32.mrf.mxu0
        %v11946 = vadd.f32 %v11857, %v11945
        %11947 = vmatmul.bf16.gmra.mxu0 %v6945
        %v11948 = vpop.f32.mrf.mxu0
        %v11949 = vadd.f32 %v11860, %v11948
        %v11950 = vpop.f32.mrf.mxu0
        %v11951 = vadd.f32 %v11862, %v11950
        %11952 = vmatmul.bf16.gmra.mxu0 %v6947
        %v11953 = vpop.f32.mrf.mxu0
        %v11954 = vadd.f32 %v11865, %v11953
        %v11955 = vpop.f32.mrf.mxu0
        %v11956 = vadd.f32 %v11867, %v11955
        %11957 = vmatmul.bf16.gmra.mxu0 %v6949
        %v11958 = vpop.f32.mrf.mxu0
        %v11959 = vadd.f32 %v11870, %v11958
        %v11960 = vpop.f32.mrf.mxu0
        %v11961 = vadd.f32 %v11872, %v11960
        %11962 = vmatmul.bf16.gmra.mxu0 %v6947
        %v11963 = vpop.f32.mrf.mxu0
        %v11964 = vadd.f32 %v11875, %v11963
        %v11965 = vpop.f32.mrf.mxu0
        %v11966 = vadd.f32 %v11877, %v11965
        %11967 = vdwg.mxu0
        %11968 = vmatpush.bf16.msra.mxu0 %v8710
        %11969 = vmatpush.bf16.msra.mxu0 %v8708
        %11970 = vmatpush.bf16.msra.mxu0 %v8706
        %11971 = vmatpush.bf16.msra.mxu0 %v8704
        %11972 = vmatpush.bf16.msra.mxu0 %v8702
        %11973 = vmatpush.bf16.msra.mxu0 %v8700
        %11974 = vmatpush.bf16.msra.mxu0 %v8698
        %11975 = vmatpush.bf16.msra.mxu0 %v8696
        %11976 = vmatmul.bf16.gmra.mxu0 %v6920
        %v11977 = vpop.f32.mrf.mxu0
        %v11978 = vadd.f32 %v11889, %v11977
        %v11979 = vpop.f32.mrf.mxu0
        %v11980 = vadd.f32 %v11891, %v11979
        %11981 = vmatmul.bf16.gmra.mxu0 %v6924
        %v11982 = vpop.f32.mrf.mxu0
        %v11983 = vadd.f32 %v11894, %v11982
        %v11984 = vpop.f32.mrf.mxu0
        %v11985 = vadd.f32 %v11896, %v11984
        %11986 = vmatmul.bf16.gmra.mxu0 %v6926
        %v11987 = vpop.f32.mrf.mxu0
        %v11988 = vadd.f32 %v11899, %v11987
        %v11989 = vpop.f32.mrf.mxu0
        %v11990 = vadd.f32 %v11901, %v11989
        %11991 = vmatmul.bf16.gmra.mxu0 %v6928
        %v11992 = vpop.f32.mrf.mxu0
        %v11993 = vadd.f32 %v11904, %v11992
        %v11994 = vpop.f32.mrf.mxu0
        %v11995 = vadd.f32 %v11906, %v11994
        %11996 = vmatmul.bf16.gmra.mxu0 %v6930
        %v11997 = vpop.f32.mrf.mxu0
        %v11998 = vadd.f32 %v11909, %v11997
        %v11999 = vpop.f32.mrf.mxu0
        %v12000 = vadd.f32 %v11911, %v11999
        %12001 = vmatmul.bf16.gmra.mxu0 %v6932
        %v12002 = vpop.f32.mrf.mxu0
        %v12003 = vadd.f32 %v11914, %v12002
        %v12004 = vpop.f32.mrf.mxu0
        %v12005 = vadd.f32 %v11916, %v12004
        %12006 = vmatmul.bf16.gmra.mxu0 %v6934
        %v12007 = vpop.f32.mrf.mxu0
        %v12008 = vadd.f32 %v11919, %v12007
        %v12009 = vpop.f32.mrf.mxu0
        %v12010 = vadd.f32 %v11921, %v12009
        %12011 = vmatmul.bf16.gmra.mxu0 %v6936
        %v12012 = vpop.f32.mrf.mxu0
        %v12013 = vadd.f32 %v11924, %v12012
        %v12014 = vpop.f32.mrf.mxu0
        %v12015 = vadd.f32 %v11926, %v12014
        %12016 = vmatmul.bf16.gmra.mxu0 %v6938
        %v12017 = vpop.f32.mrf.mxu0
        %v12018 = vadd.f32 %v11929, %v12017
        %v12019 = vpop.f32.mrf.mxu0
        %v12020 = vadd.f32 %v11931, %v12019
        %12021 = vmatmul.bf16.gmra.mxu0 %v6940
        %v12022 = vpop.f32.mrf.mxu0
        %v12023 = vadd.f32 %v11934, %v12022
        %v12024 = vpop.f32.mrf.mxu0
        %v12025 = vadd.f32 %v11936, %v12024
        %12026 = vmatmul.bf16.gmra.mxu0 %v6942
        %v12027 = vpop.f32.mrf.mxu0
        %v12028 = vadd.f32 %v11939, %v12027
        %v12029 = vpop.f32.mrf.mxu0
        %v12030 = vadd.f32 %v11941, %v12029
        %12031 = vmatmul.bf16.gmra.mxu0 %v6944
        %v12032 = vpop.f32.mrf.mxu0
        %v12033 = vadd.f32 %v11944, %v12032
        %v12034 = vpop.f32.mrf.mxu0
        %v12035 = vadd.f32 %v11946, %v12034
        %12036 = vmatmul.bf16.gmra.mxu0 %v6946
        %v12037 = vpop.f32.mrf.mxu0
        %v12038 = vadd.f32 %v11949, %v12037
        %v12039 = vpop.f32.mrf.mxu0
        %v12040 = vadd.f32 %v11951, %v12039
        %12041 = vmatmul.bf16.gmra.mxu0 %v6948
        %v12042 = vpop.f32.mrf.mxu0
        %v12043 = vadd.f32 %v11954, %v12042
        %v12044 = vpop.f32.mrf.mxu0
        %v12045 = vadd.f32 %v11956, %v12044
        %12046 = vmatmul.bf16.gmra.mxu0 %v6950
        %v12047 = vpop.f32.mrf.mxu0
        %v12048 = vadd.f32 %v11959, %v12047
        %v12049 = vpop.f32.mrf.mxu0
        %v12050 = vadd.f32 %v11961, %v12049
        %12051 = vmatmul.bf16.gmra.mxu0 %v6948
        %v12052 = vpop.f32.mrf.mxu0
        %v12053 = vadd.f32 %v11964, %v12052
        %v12054 = vpop.f32.mrf.mxu0
        %v12055 = vadd.f32 %v11966, %v12054
        %12056 = vdwg.mxu0
        %12057 = vmatpush.bf16.msra.mxu0 %v8726
        %12058 = vmatpush.bf16.msra.mxu0 %v8724
        %12059 = vmatpush.bf16.msra.mxu0 %v8722
        %12060 = vmatpush.bf16.msra.mxu0 %v8720
        %12061 = vmatpush.bf16.msra.mxu0 %v8718
        %12062 = vmatpush.bf16.msra.mxu0 %v8716
        %12063 = vmatpush.bf16.msra.mxu0 %v8714
        %12064 = vmatpush.bf16.msra.mxu0 %v8712
        %12065 = vmatmul.bf16.gmra.mxu0 %v7527
        %v12066 = vpop.f32.mrf.mxu0
        %v12067 = vadd.f32 %v11978, %v12066
        %v12068 = vpop.f32.mrf.mxu0
        %v12069 = vadd.f32 %v11980, %v12068
        %12070 = vmatmul.bf16.gmra.mxu0 %v7531
        %v12071 = vpop.f32.mrf.mxu0
        %v12072 = vadd.f32 %v11983, %v12071
        %v12073 = vpop.f32.mrf.mxu0
        %v12074 = vadd.f32 %v11985, %v12073
        %12075 = vmatmul.bf16.gmra.mxu0 %v7533
        %v12076 = vpop.f32.mrf.mxu0
        %v12077 = vadd.f32 %v11988, %v12076
        %v12078 = vpop.f32.mrf.mxu0
        %v12079 = vadd.f32 %v11990, %v12078
        %12080 = vmatmul.bf16.gmra.mxu0 %v7535
        %v12081 = vpop.f32.mrf.mxu0
        %v12082 = vadd.f32 %v11993, %v12081
        %v12083 = vpop.f32.mrf.mxu0
        %v12084 = vadd.f32 %v11995, %v12083
        %12085 = vmatmul.bf16.gmra.mxu0 %v7537
        %v12086 = vpop.f32.mrf.mxu0
        %v12087 = vadd.f32 %v11998, %v12086
        %v12088 = vpop.f32.mrf.mxu0
        %v12089 = vadd.f32 %v12000, %v12088
        %12090 = vmatmul.bf16.gmra.mxu0 %v7539
        %v12091 = vpop.f32.mrf.mxu0
        %v12092 = vadd.f32 %v12003, %v12091
        %v12093 = vpop.f32.mrf.mxu0
        %v12094 = vadd.f32 %v12005, %v12093
        %12095 = vmatmul.bf16.gmra.mxu0 %v7541
        %v12096 = vpop.f32.mrf.mxu0
        %v12097 = vadd.f32 %v12008, %v12096
        %v12098 = vpop.f32.mrf.mxu0
        %v12099 = vadd.f32 %v12010, %v12098
        %12100 = vmatmul.bf16.gmra.mxu0 %v7543
        %v12101 = vpop.f32.mrf.mxu0
        %v12102 = vadd.f32 %v12013, %v12101
        %v12103 = vpop.f32.mrf.mxu0
        %v12104 = vadd.f32 %v12015, %v12103
        %12105 = vmatmul.bf16.gmra.mxu0 %v7545
        %v12106 = vpop.f32.mrf.mxu0
        %v12107 = vadd.f32 %v12018, %v12106
        %v12108 = vpop.f32.mrf.mxu0
        %v12109 = vadd.f32 %v12020, %v12108
        %12110 = vmatmul.bf16.gmra.mxu0 %v7547
        %v12111 = vpop.f32.mrf.mxu0
        %v12112 = vadd.f32 %v12023, %v12111
        %v12113 = vpop.f32.mrf.mxu0
        %v12114 = vadd.f32 %v12025, %v12113
        %12115 = vmatmul.bf16.gmra.mxu0 %v7549
        %v12116 = vpop.f32.mrf.mxu0
        %v12117 = vadd.f32 %v12028, %v12116
        %v12118 = vpop.f32.mrf.mxu0
        %v12119 = vadd.f32 %v12030, %v12118
        %12120 = vmatmul.bf16.gmra.mxu0 %v7551
        %v12121 = vpop.f32.mrf.mxu0
        %v12122 = vadd.f32 %v12033, %v12121
        %v12123 = vpop.f32.mrf.mxu0
        %v12124 = vadd.f32 %v12035, %v12123
        %12125 = vmatmul.bf16.gmra.mxu0 %v7553
        %v12126 = vpop.f32.mrf.mxu0
        %v12127 = vadd.f32 %v12038, %v12126
        %v12128 = vpop.f32.mrf.mxu0
        %v12129 = vadd.f32 %v12040, %v12128
        %12130 = vmatmul.bf16.gmra.mxu0 %v7555
        %v12131 = vpop.f32.mrf.mxu0
        %v12132 = vadd.f32 %v12043, %v12131
        %v12133 = vpop.f32.mrf.mxu0
        %v12134 = vadd.f32 %v12045, %v12133
        %12135 = vmatmul.bf16.gmra.mxu0 %v7557
        %v12136 = vpop.f32.mrf.mxu0
        %v12137 = vadd.f32 %v12048, %v12136
        %v12138 = vpop.f32.mrf.mxu0
        %v12139 = vadd.f32 %v12050, %v12138
        %12140 = vmatmul.bf16.gmra.mxu0 %v7555
        %v12141 = vpop.f32.mrf.mxu0
        %v12142 = vadd.f32 %v12053, %v12141
        %v12143 = vpop.f32.mrf.mxu0
        %v12144 = vadd.f32 %v12055, %v12143
        %12145 = vdwg.mxu0
        %12146 = vmatpush.bf16.msra.mxu0 %v8742
        %12147 = vmatpush.bf16.msra.mxu0 %v8740
        %12148 = vmatpush.bf16.msra.mxu0 %v8738
        %12149 = vmatpush.bf16.msra.mxu0 %v8736
        %12150 = vmatpush.bf16.msra.mxu0 %v8734
        %12151 = vmatpush.bf16.msra.mxu0 %v8732
        %12152 = vmatpush.bf16.msra.mxu0 %v8730
        %12153 = vmatpush.bf16.msra.mxu0 %v8728
        %12154 = vmatmul.bf16.gmra.mxu0 %v7528
        %v12155 = vpop.f32.mrf.mxu0
        %v12156 = vadd.f32 %v12067, %v12155
        %v12157 = vpop.f32.mrf.mxu0
        %v12158 = vadd.f32 %v12069, %v12157
        %12159 = vmatmul.bf16.gmra.mxu0 %v7532
        %v12160 = vpop.f32.mrf.mxu0
        %v12161 = vadd.f32 %v12072, %v12160
        %v12162 = vpop.f32.mrf.mxu0
        %v12163 = vadd.f32 %v12074, %v12162
        %12164 = vmatmul.bf16.gmra.mxu0 %v7534
        %v12165 = vpop.f32.mrf.mxu0
        %v12166 = vadd.f32 %v12077, %v12165
        %v12167 = vpop.f32.mrf.mxu0
        %v12168 = vadd.f32 %v12079, %v12167
        %12169 = vmatmul.bf16.gmra.mxu0 %v7536
        %v12170 = vpop.f32.mrf.mxu0
        %v12171 = vadd.f32 %v12082, %v12170
        %v12172 = vpop.f32.mrf.mxu0
        %v12173 = vadd.f32 %v12084, %v12172
        %12174 = vmatmul.bf16.gmra.mxu0 %v7538
        %v12175 = vpop.f32.mrf.mxu0
        %v12176 = vadd.f32 %v12087, %v12175
        %v12177 = vpop.f32.mrf.mxu0
        %v12178 = vadd.f32 %v12089, %v12177
        %12179 = vmatmul.bf16.gmra.mxu0 %v7540
        %v12180 = vpop.f32.mrf.mxu0
        %v12181 = vadd.f32 %v12092, %v12180
        %v12182 = vpop.f32.mrf.mxu0
        %v12183 = vadd.f32 %v12094, %v12182
        %12184 = vmatmul.bf16.gmra.mxu0 %v7542
        %v12185 = vpop.f32.mrf.mxu0
        %v12186 = vadd.f32 %v12097, %v12185
        %v12187 = vpop.f32.mrf.mxu0
        %v12188 = vadd.f32 %v12099, %v12187
        %12189 = vmatmul.bf16.gmra.mxu0 %v7544
        %v12190 = vpop.f32.mrf.mxu0
        %v12191 = vadd.f32 %v12102, %v12190
        %v12192 = vpop.f32.mrf.mxu0
        %v12193 = vadd.f32 %v12104, %v12192
        %12194 = vmatmul.bf16.gmra.mxu0 %v7546
        %v12195 = vpop.f32.mrf.mxu0
        %v12196 = vadd.f32 %v12107, %v12195
        %v12197 = vpop.f32.mrf.mxu0
        %v12198 = vadd.f32 %v12109, %v12197
        %12199 = vmatmul.bf16.gmra.mxu0 %v7548
        %v12200 = vpop.f32.mrf.mxu0
        %v12201 = vadd.f32 %v12112, %v12200
        %v12202 = vpop.f32.mrf.mxu0
        %v12203 = vadd.f32 %v12114, %v12202
        %12204 = vmatmul.bf16.gmra.mxu0 %v7550
        %v12205 = vpop.f32.mrf.mxu0
        %v12206 = vadd.f32 %v12117, %v12205
        %v12207 = vpop.f32.mrf.mxu0
        %v12208 = vadd.f32 %v12119, %v12207
        %12209 = vmatmul.bf16.gmra.mxu0 %v7552
        %v12210 = vpop.f32.mrf.mxu0
        %v12211 = vadd.f32 %v12122, %v12210
        %v12212 = vpop.f32.mrf.mxu0
        %v12213 = vadd.f32 %v12124, %v12212
        %12214 = vmatmul.bf16.gmra.mxu0 %v7554
        %v12215 = vpop.f32.mrf.mxu0
        %v12216 = vadd.f32 %v12127, %v12215
        %v12217 = vpop.f32.mrf.mxu0
        %v12218 = vadd.f32 %v12129, %v12217
        %12219 = vmatmul.bf16.gmra.mxu0 %v7556
        %v12220 = vpop.f32.mrf.mxu0
        %v12221 = vadd.f32 %v12132, %v12220
        %v12222 = vpop.f32.mrf.mxu0
        %v12223 = vadd.f32 %v12134, %v12222
        %12224 = vmatmul.bf16.gmra.mxu0 %v7558
        %v12225 = vpop.f32.mrf.mxu0
        %v12226 = vadd.f32 %v12137, %v12225
        %v12227 = vpop.f32.mrf.mxu0
        %v12228 = vadd.f32 %v12139, %v12227
        %12229 = vmatmul.bf16.gmra.mxu0 %v7556
        %v12230 = vpop.f32.mrf.mxu0
        %v12231 = vadd.f32 %v12142, %v12230
        %v12232 = vpop.f32.mrf.mxu0
        %v12233 = vadd.f32 %v12144, %v12232
        %12234 = vdwg.mxu0
        %v12235 = vadd.f32 %v10554, %v10556
        %v12236 = vadd.f32 %v12235, %v10559
        %v12237 = vadd.f32 %v12236, %v10561
        %v12238 = vadd.f32 %v12237, %v10564
        %v12239 = vadd.f32 %v12238, %v10566
        %v12240 = vadd.f32 %v12239, %v10569
        %v12241 = vadd.f32 %v12240, %v10571
        %v12242 = vadd.f32 %v12241, %v10574
        %v12243 = vadd.f32 %v12242, %v10576
        %v12244 = vadd.f32 %v12243, %v10579
        %v12245 = vadd.f32 %v12244, %v10581
        %v12246 = vadd.f32 %v12245, %v10584
        %v12247 = vadd.f32 %v12246, %v10586
        %v12248 = vadd.f32 %v12247, %v10589
        %v12249 = vadd.f32 %v12248, %v10591
        %v12250 = vadd.f32 %v12249, %v10594
        %v12251 = vadd.f32 %v12250, %v10596
        %v12252 = vadd.f32 %v12251, %v10599
        %v12253 = vadd.f32 %v12252, %v10601
        %v12254 = vadd.f32 %v12253, %v10604
        %v12255 = vadd.f32 %v12254, %v10606
        %v12256 = vadd.f32 %v12255, %v10609
        %v12257 = vadd.f32 %v12256, %v10611
        %v12258 = vadd.f32 %v12257, %v10614
        %v12259 = vadd.f32 %v12258, %v10616
        %v12260 = vadd.f32 %v12259, %v10619
        %v12261 = vadd.f32 %v12260, %v10621
        %v12262 = vadd.f32 %v12261, %v10624
        %v12263 = vadd.f32 %v12262, %v10626
        %v12264 = vadd.f32 %v12263, %v10629
        %v12265 = vadd.f32 %v12264, %v10631
        %v12266 = vrot.slane %v12265, 4
        %v12267 = vadd.f32 %v12265, %v12266
        %v12268 = vrot.slane %v12267, 2
        %v12269 = vadd.f32 %v12267, %v12268
        %v12270 = vrot.slane %v12269, 1
        %v12271 = vadd.f32 %v12269, %v12270
        %v12272 = vadd.f32 %v12156, %v12158
        %v12273 = vadd.f32 %v12272, %v12161
        %v12274 = vadd.f32 %v12273, %v12163
        %v12275 = vadd.f32 %v12274, %v12166
        %v12276 = vadd.f32 %v12275, %v12168
        %v12277 = vadd.f32 %v12276, %v12171
        %v12278 = vadd.f32 %v12277, %v12173
        %v12279 = vadd.f32 %v12278, %v12176
        %v12280 = vadd.f32 %v12279, %v12178
        %v12281 = vadd.f32 %v12280, %v12181
        %v12282 = vadd.f32 %v12281, %v12183
        %v12283 = vadd.f32 %v12282, %v12186
        %v12284 = vadd.f32 %v12283, %v12188
        %v12285 = vadd.f32 %v12284, %v12191
        %v12286 = vadd.f32 %v12285, %v12193
        %v12287 = vadd.f32 %v12286, %v12196
        %v12288 = vadd.f32 %v12287, %v12198
        %v12289 = vadd.f32 %v12288, %v12201
        %v12290 = vadd.f32 %v12289, %v12203
        %v12291 = vadd.f32 %v12290, %v12206
        %v12292 = vadd.f32 %v12291, %v12208
        %v12293 = vadd.f32 %v12292, %v12211
        %v12294 = vadd.f32 %v12293, %v12213
        %v12295 = vadd.f32 %v12294, %v12216
        %v12296 = vadd.f32 %v12295, %v12218
        %v12297 = vadd.f32 %v12296, %v12221
        %v12298 = vadd.f32 %v12297, %v12223
        %v12299 = vadd.f32 %v12298, %v12226
        %v12300 = vadd.f32 %v12299, %v12228
        %v12301 = vadd.f32 %v12300, %v12231
        %v12302 = vadd.f32 %v12301, %v12233
        %v12303 = vrot.slane %v12302, 4
        %v12304 = vadd.f32 %v12302, %v12303
        %v12305 = vrot.slane %v12304, 2
        %v12306 = vadd.f32 %v12304, %v12305
        %v12307 = vrot.slane %v12306, 1
        %v12308 = vadd.f32 %v12306, %v12307
        %v12309 = vmul.f32 %v12271, 0.00390625
        %v12310 = vmul.f32 %v12308, 0.00390625
        %v12311 = vmul.f32 %v10554, %v10554
        %v12312 = vmul.f32 %v12156, %v12156
        %v12313 = vmul.f32 %v10556, %v10556
        %v12314 = vmul.f32 %v12158, %v12158
        %v12315 = vmul.f32 %v10559, %v10559
        %v12316 = vmul.f32 %v12161, %v12161
        %v12317 = vmul.f32 %v10561, %v10561
        %v12318 = vmul.f32 %v12163, %v12163
        %v12319 = vmul.f32 %v10564, %v10564
        %v12320 = vmul.f32 %v12166, %v12166
        %v12321 = vmul.f32 %v10566, %v10566
        %v12322 = vmul.f32 %v12168, %v12168
        %v12323 = vmul.f32 %v10569, %v10569
        %v12324 = vmul.f32 %v12171, %v12171
        %v12325 = vmul.f32 %v10571, %v10571
        %v12326 = vmul.f32 %v12173, %v12173
        %v12327 = vmul.f32 %v10574, %v10574
        %v12328 = vmul.f32 %v12176, %v12176
        %v12329 = vmul.f32 %v10576, %v10576
        %v12330 = vmul.f32 %v12178, %v12178
        %v12331 = vmul.f32 %v10579, %v10579
        %v12332 = vmul.f32 %v12181, %v12181
        %v12333 = vmul.f32 %v10581, %v10581
        %v12334 = vmul.f32 %v12183, %v12183
        %v12335 = vmul.f32 %v10584, %v10584
        %v12336 = vmul.f32 %v12186, %v12186
        %v12337 = vmul.f32 %v10586, %v10586
        %v12338 = vmul.f32 %v12188, %v12188
        %v12339 = vmul.f32 %v10589, %v10589
        %v12340 = vmul.f32 %v12191, %v12191
        %v12341 = vmul.f32 %v10591, %v10591
        %v12342 = vmul.f32 %v12193, %v12193
        %v12343 = vmul.f32 %v10594, %v10594
        %v12344 = vmul.f32 %v12196, %v12196
        %v12345 = vmul.f32 %v10596, %v10596
        %v12346 = vmul.f32 %v12198, %v12198
        %v12347 = vmul.f32 %v10599, %v10599
        %v12348 = vmul.f32 %v12201, %v12201
        %v12349 = vmul.f32 %v10601, %v10601
        %v12350 = vmul.f32 %v12203, %v12203
        %v12351 = vmul.f32 %v10604, %v10604
        %v12352 = vmul.f32 %v12206, %v12206
        %v12353 = vmul.f32 %v10606, %v10606
        %v12354 = vmul.f32 %v12208, %v12208
        %v12355 = vmul.f32 %v10609, %v10609
        %v12356 = vmul.f32 %v12211, %v12211
        %v12357 = vmul.f32 %v10611, %v10611
        %v12358 = vmul.f32 %v12213, %v12213
        %v12359 = vmul.f32 %v10614, %v10614
        %v12360 = vmul.f32 %v12216, %v12216
        %v12361 = vmul.f32 %v10616, %v10616
        %v12362 = vmul.f32 %v12218, %v12218
        %v12363 = vmul.f32 %v10619, %v10619
        %v12364 = vmul.f32 %v12221, %v12221
        %v12365 = vmul.f32 %v10621, %v10621
        %v12366 = vmul.f32 %v12223, %v12223
        %v12367 = vmul.f32 %v10624, %v10624
        %v12368 = vmul.f32 %v12226, %v12226
        %v12369 = vmul.f32 %v10626, %v10626
        %v12370 = vmul.f32 %v12228, %v12228
        %v12371 = vmul.f32 %v10629, %v10629
        %v12372 = vmul.f32 %v12231, %v12231
        %v12373 = vmul.f32 %v10631, %v10631
        %v12374 = vmul.f32 %v12233, %v12233
        %v12375 = vadd.f32 %v12311, %v12313
        %v12376 = vadd.f32 %v12375, %v12315
        %v12377 = vadd.f32 %v12376, %v12317
        %v12378 = vadd.f32 %v12377, %v12319
        %v12379 = vadd.f32 %v12378, %v12321
        %v12380 = vadd.f32 %v12379, %v12323
        %v12381 = vadd.f32 %v12380, %v12325
        %v12382 = vadd.f32 %v12381, %v12327
        %v12383 = vadd.f32 %v12382, %v12329
        %v12384 = vadd.f32 %v12383, %v12331
        %v12385 = vadd.f32 %v12384, %v12333
        %v12386 = vadd.f32 %v12385, %v12335
        %v12387 = vadd.f32 %v12386, %v12337
        %v12388 = vadd.f32 %v12387, %v12339
        %v12389 = vadd.f32 %v12388, %v12341
        %v12390 = vadd.f32 %v12389, %v12343
        %v12391 = vadd.f32 %v12390, %v12345
        %v12392 = vadd.f32 %v12391, %v12347
        %v12393 = vadd.f32 %v12392, %v12349
        %v12394 = vadd.f32 %v12393, %v12351
        %v12395 = vadd.f32 %v12394, %v12353
        %v12396 = vadd.f32 %v12395, %v12355
        %v12397 = vadd.f32 %v12396, %v12357
        %v12398 = vadd.f32 %v12397, %v12359
        %v12399 = vadd.f32 %v12398, %v12361
        %v12400 = vadd.f32 %v12399, %v12363
        %v12401 = vadd.f32 %v12400, %v12365
        %v12402 = vadd.f32 %v12401, %v12367
        %v12403 = vadd.f32 %v12402, %v12369
        %v12404 = vadd.f32 %v12403, %v12371
        %v12405 = vadd.f32 %v12404, %v12373
        %v12406 = vrot.slane %v12405, 4
        %v12407 = vadd.f32 %v12405, %v12406
        %v12408 = vrot.slane %v12407, 2
        %v12409 = vadd.f32 %v12407, %v12408
        %v12410 = vrot.slane %v12409, 1
        %v12411 = vadd.f32 %v12409, %v12410
        %v12412 = vadd.f32 %v12312, %v12314
        %v12413 = vadd.f32 %v12412, %v12316
        %v12414 = vadd.f32 %v12413, %v12318
        %v12415 = vadd.f32 %v12414, %v12320
        %v12416 = vadd.f32 %v12415, %v12322
        %v12417 = vadd.f32 %v12416, %v12324
        %v12418 = vadd.f32 %v12417, %v12326
        %v12419 = vadd.f32 %v12418, %v12328
        %v12420 = vadd.f32 %v12419, %v12330
        %v12421 = vadd.f32 %v12420, %v12332
        %v12422 = vadd.f32 %v12421, %v12334
        %v12423 = vadd.f32 %v12422, %v12336
        %v12424 = vadd.f32 %v12423, %v12338
        %v12425 = vadd.f32 %v12424, %v12340
        %v12426 = vadd.f32 %v12425, %v12342
        %v12427 = vadd.f32 %v12426, %v12344
        %v12428 = vadd.f32 %v12427, %v12346
        %v12429 = vadd.f32 %v12428, %v12348
        %v12430 = vadd.f32 %v12429, %v12350
        %v12431 = vadd.f32 %v12430, %v12352
        %v12432 = vadd.f32 %v12431, %v12354
        %v12433 = vadd.f32 %v12432, %v12356
        %v12434 = vadd.f32 %v12433, %v12358
        %v12435 = vadd.f32 %v12434, %v12360
        %v12436 = vadd.f32 %v12435, %v12362
        %v12437 = vadd.f32 %v12436, %v12364
        %v12438 = vadd.f32 %v12437, %v12366
        %v12439 = vadd.f32 %v12438, %v12368
        %v12440 = vadd.f32 %v12439, %v12370
        %v12441 = vadd.f32 %v12440, %v12372
        %v12442 = vadd.f32 %v12441, %v12374
        %v12443 = vrot.slane %v12442, 4
        %v12444 = vadd.f32 %v12442, %v12443
        %v12445 = vrot.slane %v12444, 2
        %v12446 = vadd.f32 %v12444, %v12445
        %v12447 = vrot.slane %v12446, 1
        %v12448 = vadd.f32 %v12446, %v12447
        %v12449 = vmul.f32 %v12411, 0.00390625
        %v12450 = vmul.f32 %v12448, 0.00390625
        %v12451 = vmul.f32 %v12309, %v12309
        %v12452 = vmul.f32 %v12310, %v12310
        %v12453 = vsub.f32 %v12449, %v12451
        %v12454 = vsub.f32 %v12450, %v12452
        %v12455 = vsub.f32 %v10554, %v12309
        %v12456 = vsub.f32 %v12156, %v12310
        %v12457 = vsub.f32 %v10556, %v12309
        %v12458 = vsub.f32 %v12158, %v12310
        %v12459 = vsub.f32 %v10559, %v12309
        %v12460 = vsub.f32 %v12161, %v12310
        %v12461 = vsub.f32 %v10561, %v12309
        %v12462 = vsub.f32 %v12163, %v12310
        %v12463 = vsub.f32 %v10564, %v12309
        %v12464 = vsub.f32 %v12166, %v12310
        %v12465 = vsub.f32 %v10566, %v12309
        %v12466 = vsub.f32 %v12168, %v12310
        %v12467 = vsub.f32 %v10569, %v12309
        %v12468 = vsub.f32 %v12171, %v12310
        %v12469 = vsub.f32 %v10571, %v12309
        %v12470 = vsub.f32 %v12173, %v12310
        %v12471 = vsub.f32 %v10574, %v12309
        %v12472 = vsub.f32 %v12176, %v12310
        %v12473 = vsub.f32 %v10576, %v12309
        %v12474 = vsub.f32 %v12178, %v12310
        %v12475 = vsub.f32 %v10579, %v12309
        %v12476 = vsub.f32 %v12181, %v12310
        %v12477 = vsub.f32 %v10581, %v12309
        %v12478 = vsub.f32 %v12183, %v12310
        %v12479 = vsub.f32 %v10584, %v12309
        %v12480 = vsub.f32 %v12186, %v12310
        %v12481 = vsub.f32 %v10586, %v12309
        %v12482 = vsub.f32 %v12188, %v12310
        %v12483 = vsub.f32 %v10589, %v12309
        %v12484 = vsub.f32 %v12191, %v12310
        %v12485 = vsub.f32 %v10591, %v12309
        %v12486 = vsub.f32 %v12193, %v12310
        %v12487 = vsub.f32 %v10594, %v12309
        %v12488 = vsub.f32 %v12196, %v12310
        %v12489 = vsub.f32 %v10596, %v12309
        %v12490 = vsub.f32 %v12198, %v12310
        %v12491 = vsub.f32 %v10599, %v12309
        %v12492 = vsub.f32 %v12201, %v12310
        %v12493 = vsub.f32 %v10601, %v12309
        %v12494 = vsub.f32 %v12203, %v12310
        %v12495 = vsub.f32 %v10604, %v12309
        %v12496 = vsub.f32 %v12206, %v12310
        %v12497 = vsub.f32 %v10606, %v12309
        %v12498 = vsub.f32 %v12208, %v12310
        %v12499 = vsub.f32 %v10609, %v12309
        %v12500 = vsub.f32 %v12211, %v12310
        %v12501 = vsub.f32 %v10611, %v12309
        %v12502 = vsub.f32 %v12213, %v12310
        %v12503 = vsub.f32 %v10614, %v12309
        %v12504 = vsub.f32 %v12216, %v12310
        %v12505 = vsub.f32 %v10616, %v12309
        %v12506 = vsub.f32 %v12218, %v12310
        %v12507 = vsub.f32 %v10619, %v12309
        %v12508 = vsub.f32 %v12221, %v12310
        %v12509 = vsub.f32 %v10621, %v12309
        %v12510 = vsub.f32 %v12223, %v12310
        %v12511 = vsub.f32 %v10624, %v12309
        %v12512 = vsub.f32 %v12226, %v12310
        %v12513 = vsub.f32 %v10626, %v12309
        %v12514 = vsub.f32 %v12228, %v12310
        %v12515 = vsub.f32 %v10629, %v12309
        %v12516 = vsub.f32 %v12231, %v12310
        %v12517 = vsub.f32 %v10631, %v12309
        %v12518 = vsub.f32 %v12233, %v12310
        %v12519 = vadd.f32 %v12453, 1e-05
        %v12520 = vadd.f32 %v12454, 1e-05
        %v12521 = vrsqrt.pop %v12519
        %v12522 = vmul.f32 %v12521, %v12519
        %v12523 = vmul.f32 %v12522, %v12521
        %v12524 = vmul.f32 0.5, %v12523
        %v12525 = vsub.f32 1.5, %v12524
        %v12526 = vmul.f32 %v12521, %v12525
        %vm12527 = vweird.f32 %v12519
        %vm12528 = vweird.f32 %v12521
        %vm12529 = vmor %vm12527, %vm12528
        %v12530 = vsel %vm12529, %v12521, %v12526
        %v12531 = vrsqrt.pop %v12520
        %v12532 = vmul.f32 %v12531, %v12520
        %v12533 = vmul.f32 %v12532, %v12531
        %v12534 = vmul.f32 0.5, %v12533
        %v12535 = vsub.f32 1.5, %v12534
        %v12536 = vmul.f32 %v12531, %v12535
        %vm12537 = vweird.f32 %v12520
        %vm12538 = vweird.f32 %v12531
        %vm12539 = vmor %vm12537, %vm12538
        %v12540 = vsel %vm12539, %v12531, %v12536
        %v12541 = vmul.f32 %v12455, %v12530
        %v12542 = vmul.f32 %v12456, %v12540
        %v12543 = vmul.f32 %v12457, %v12530
        %v12544 = vmul.f32 %v12458, %v12540
        %v12545 = vmul.f32 %v12459, %v12530
        %v12546 = vmul.f32 %v12460, %v12540
        %v12547 = vmul.f32 %v12461, %v12530
        %v12548 = vmul.f32 %v12462, %v12540
        %v12549 = vmul.f32 %v12463, %v12530
        %v12550 = vmul.f32 %v12464, %v12540
        %v12551 = vmul.f32 %v12465, %v12530
        %v12552 = vmul.f32 %v12466, %v12540
        %v12553 = vmul.f32 %v12467, %v12530
        %v12554 = vmul.f32 %v12468, %v12540
        %v12555 = vmul.f32 %v12469, %v12530
        %v12556 = vmul.f32 %v12470, %v12540
        %v12557 = vmul.f32 %v12471, %v12530
        %v12558 = vmul.f32 %v12472, %v12540
        %v12559 = vmul.f32 %v12473, %v12530
        %v12560 = vmul.f32 %v12474, %v12540
        %v12561 = vmul.f32 %v12475, %v12530
        %v12562 = vmul.f32 %v12476, %v12540
        %v12563 = vmul.f32 %v12477, %v12530
        %v12564 = vmul.f32 %v12478, %v12540
        %v12565 = vmul.f32 %v12479, %v12530
        %v12566 = vmul.f32 %v12480, %v12540
        %v12567 = vmul.f32 %v12481, %v12530
        %v12568 = vmul.f32 %v12482, %v12540
        %v12569 = vmul.f32 %v12483, %v12530
        %v12570 = vmul.f32 %v12484, %v12540
        %v12571 = vmul.f32 %v12485, %v12530
        %v12572 = vmul.f32 %v12486, %v12540
        %v12573 = vmul.f32 %v12487, %v12530
        %v12574 = vmul.f32 %v12488, %v12540
        %v12575 = vmul.f32 %v12489, %v12530
        %v12576 = vmul.f32 %v12490, %v12540
        %v12577 = vmul.f32 %v12491, %v12530
        %v12578 = vmul.f32 %v12492, %v12540
        %v12579 = vmul.f32 %v12493, %v12530
        %v12580 = vmul.f32 %v12494, %v12540
        %v12581 = vmul.f32 %v12495, %v12530
        %v12582 = vmul.f32 %v12496, %v12540
        %v12583 = vmul.f32 %v12497, %v12530
        %v12584 = vmul.f32 %v12498, %v12540
        %v12585 = vmul.f32 %v12499, %v12530
        %v12586 = vmul.f32 %v12500, %v12540
        %v12587 = vmul.f32 %v12501, %v12530
        %v12588 = vmul.f32 %v12502, %v12540
        %v12589 = vmul.f32 %v12503, %v12530
        %v12590 = vmul.f32 %v12504, %v12540
        %v12591 = vmul.f32 %v12505, %v12530
        %v12592 = vmul.f32 %v12506, %v12540
        %v12593 = vmul.f32 %v12507, %v12530
        %v12594 = vmul.f32 %v12508, %v12540
        %v12595 = vmul.f32 %v12509, %v12530
        %v12596 = vmul.f32 %v12510, %v12540
        %v12597 = vmul.f32 %v12511, %v12530
        %v12598 = vmul.f32 %v12512, %v12540
        %v12599 = vmul.f32 %v12513, %v12530
        %v12600 = vmul.f32 %v12514, %v12540
        %v12601 = vmul.f32 %v12515, %v12530
        %v12602 = vmul.f32 %v12516, %v12540
        %v12603 = vmul.f32 %v12517, %v12530
        %v12604 = vmul.f32 %v12518, %v12540
        %v12605 = vunpack.c.l.bf16 %v169
        %v12606 = vunpack.c.h.bf16 %v169
        %v12607 = vunpack.c.l.bf16 %v170
        %v12608 = vunpack.c.h.bf16 %v170
        %v12609 = vunpack.c.l.bf16 %v171
        %v12610 = vunpack.c.h.bf16 %v171
        %v12611 = vunpack.c.l.bf16 %v172
        %v12612 = vunpack.c.h.bf16 %v172
        %v12613 = vunpack.c.l.bf16 %v173
        %v12614 = vunpack.c.h.bf16 %v173
        %v12615 = vunpack.c.l.bf16 %v174
        %v12616 = vunpack.c.h.bf16 %v174
        %v12617 = vunpack.c.l.bf16 %v175
        %v12618 = vunpack.c.h.bf16 %v175
        %v12619 = vunpack.c.l.bf16 %v176
        %v12620 = vunpack.c.h.bf16 %v176
        %v12621 = vunpack.c.l.bf16 %v177
        %v12622 = vunpack.c.h.bf16 %v177
        %v12623 = vunpack.c.l.bf16 %v178
        %v12624 = vunpack.c.h.bf16 %v178
        %v12625 = vunpack.c.l.bf16 %v179
        %v12626 = vunpack.c.h.bf16 %v179
        %v12627 = vunpack.c.l.bf16 %v180
        %v12628 = vunpack.c.h.bf16 %v180
        %v12629 = vunpack.c.l.bf16 %v181
        %v12630 = vunpack.c.h.bf16 %v181
        %v12631 = vunpack.c.l.bf16 %v182
        %v12632 = vunpack.c.h.bf16 %v182
        %v12633 = vunpack.c.l.bf16 %v183
        %v12634 = vunpack.c.h.bf16 %v183
        %v12635 = vunpack.c.l.bf16 %v184
        %v12636 = vunpack.c.h.bf16 %v184
        %v12637 = vunpack.c.l.bf16 %v185
        %v12638 = vunpack.c.h.bf16 %v185
        %v12639 = vunpack.c.l.bf16 %v186
        %v12640 = vunpack.c.h.bf16 %v186
        %v12641 = vunpack.c.l.bf16 %v187
        %v12642 = vunpack.c.h.bf16 %v187
        %v12643 = vunpack.c.l.bf16 %v188
        %v12644 = vunpack.c.h.bf16 %v188
        %v12645 = vunpack.c.l.bf16 %v189
        %v12646 = vunpack.c.h.bf16 %v189
        %v12647 = vunpack.c.l.bf16 %v190
        %v12648 = vunpack.c.h.bf16 %v190
        %v12649 = vunpack.c.l.bf16 %v191
        %v12650 = vunpack.c.h.bf16 %v191
        %v12651 = vunpack.c.l.bf16 %v192
        %v12652 = vunpack.c.h.bf16 %v192
        %v12653 = vunpack.c.l.bf16 %v193
        %v12654 = vunpack.c.h.bf16 %v193
        %v12655 = vunpack.c.l.bf16 %v194
        %v12656 = vunpack.c.h.bf16 %v194
        %v12657 = vunpack.c.l.bf16 %v195
        %v12658 = vunpack.c.h.bf16 %v195
        %v12659 = vunpack.c.l.bf16 %v196
        %v12660 = vunpack.c.h.bf16 %v196
        %v12661 = vunpack.c.l.bf16 %v197
        %v12662 = vunpack.c.h.bf16 %v197
        %v12663 = vunpack.c.l.bf16 %v198
        %v12664 = vunpack.c.h.bf16 %v198
        %v12665 = vunpack.c.l.bf16 %v199
        %v12666 = vunpack.c.h.bf16 %v199
        %v12667 = vunpack.c.l.bf16 %v200
        %v12668 = vunpack.c.h.bf16 %v200
        %v12669 = vadd.f32 %v12541, %v12605
        %v12670 = vadd.f32 %v12542, %v12606
        %v12671 = vadd.f32 %v12543, %v12607
        %v12672 = vadd.f32 %v12544, %v12608
        %v12673 = vadd.f32 %v12545, %v12609
        %v12674 = vadd.f32 %v12546, %v12610
        %v12675 = vadd.f32 %v12547, %v12611
        %v12676 = vadd.f32 %v12548, %v12612
        %v12677 = vadd.f32 %v12549, %v12613
        %v12678 = vadd.f32 %v12550, %v12614
        %v12679 = vadd.f32 %v12551, %v12615
        %v12680 = vadd.f32 %v12552, %v12616
        %v12681 = vadd.f32 %v12553, %v12617
        %v12682 = vadd.f32 %v12554, %v12618
        %v12683 = vadd.f32 %v12555, %v12619
        %v12684 = vadd.f32 %v12556, %v12620
        %v12685 = vadd.f32 %v12557, %v12621
        %v12686 = vadd.f32 %v12558, %v12622
        %v12687 = vadd.f32 %v12559, %v12623
        %v12688 = vadd.f32 %v12560, %v12624
        %v12689 = vadd.f32 %v12561, %v12625
        %v12690 = vadd.f32 %v12562, %v12626
        %v12691 = vadd.f32 %v12563, %v12627
        %v12692 = vadd.f32 %v12564, %v12628
        %v12693 = vadd.f32 %v12565, %v12629
        %v12694 = vadd.f32 %v12566, %v12630
        %v12695 = vadd.f32 %v12567, %v12631
        %v12696 = vadd.f32 %v12568, %v12632
        %v12697 = vadd.f32 %v12569, %v12633
        %v12698 = vadd.f32 %v12570, %v12634
        %v12699 = vadd.f32 %v12571, %v12635
        %v12700 = vadd.f32 %v12572, %v12636
        %v12701 = vadd.f32 %v12573, %v12637
        %v12702 = vadd.f32 %v12574, %v12638
        %v12703 = vadd.f32 %v12575, %v12639
        %v12704 = vadd.f32 %v12576, %v12640
        %v12705 = vadd.f32 %v12577, %v12641
        %v12706 = vadd.f32 %v12578, %v12642
        %v12707 = vadd.f32 %v12579, %v12643
        %v12708 = vadd.f32 %v12580, %v12644
        %v12709 = vadd.f32 %v12581, %v12645
        %v12710 = vadd.f32 %v12582, %v12646
        %v12711 = vadd.f32 %v12583, %v12647
        %v12712 = vadd.f32 %v12584, %v12648
        %v12713 = vadd.f32 %v12585, %v12649
        %v12714 = vadd.f32 %v12586, %v12650
        %v12715 = vadd.f32 %v12587, %v12651
        %v12716 = vadd.f32 %v12588, %v12652
        %v12717 = vadd.f32 %v12589, %v12653
        %v12718 = vadd.f32 %v12590, %v12654
        %v12719 = vadd.f32 %v12591, %v12655
        %v12720 = vadd.f32 %v12592, %v12656
        %v12721 = vadd.f32 %v12593, %v12657
        %v12722 = vadd.f32 %v12594, %v12658
        %v12723 = vadd.f32 %v12595, %v12659
        %v12724 = vadd.f32 %v12596, %v12660
        %v12725 = vadd.f32 %v12597, %v12661
        %v12726 = vadd.f32 %v12598, %v12662
        %v12727 = vadd.f32 %v12599, %v12663
        %v12728 = vadd.f32 %v12600, %v12664
        %v12729 = vadd.f32 %v12601, %v12665
        %v12730 = vadd.f32 %v12602, %v12666
        %v12731 = vadd.f32 %v12603, %v12667
        %v12732 = vadd.f32 %v12604, %v12668
        %12733 = vst [vmem:[%s163] sm:$0xff] %v12669
        %12734 = vst [vmem:[%s163 + $0x8] sm:$0xff] %v12670
        %12735 = vst [vmem:[%s163 + $0x10] sm:$0xff] %v12671
        %12736 = vst [vmem:[%s163 + $0x18] sm:$0xff] %v12672
        %12737 = vst [vmem:[%s163 + $0x20] sm:$0xff] %v12673
        %12738 = vst [vmem:[%s163 + $0x28] sm:$0xff] %v12674
        %12739 = vst [vmem:[%s163 + $0x30] sm:$0xff] %v12675
        %12740 = vst [vmem:[%s163 + $0x38] sm:$0xff] %v12676
        %12741 = vst [vmem:[%s163 + $0x40] sm:$0xff] %v12677
        %12742 = vst [vmem:[%s163 + $0x48] sm:$0xff] %v12678
        %12743 = vst [vmem:[%s163 + $0x50] sm:$0xff] %v12679
        %12744 = vst [vmem:[%s163 + $0x58] sm:$0xff] %v12680
        %12745 = vst [vmem:[%s163 + $0x60] sm:$0xff] %v12681
        %12746 = vst [vmem:[%s163 + $0x68] sm:$0xff] %v12682
        %12747 = vst [vmem:[%s163 + $0x70] sm:$0xff] %v12683
        %12748 = vst [vmem:[%s163 + $0x78] sm:$0xff] %v12684
        %12749 = vst [vmem:[%s163 + $0x80] sm:$0xff] %v12685
        %12750 = vst [vmem:[%s163 + $0x88] sm:$0xff] %v12686
        %12751 = vst [vmem:[%s163 + $0x90] sm:$0xff] %v12687
        %12752 = vst [vmem:[%s163 + $0x98] sm:$0xff] %v12688
        %12753 = vst [vmem:[%s163 + $0xa0] sm:$0xff] %v12689
        %12754 = vst [vmem:[%s163 + $0xa8] sm:$0xff] %v12690
        %12755 = vst [vmem:[%s163 + $0xb0] sm:$0xff] %v12691
        %12756 = vst [vmem:[%s163 + $0xb8] sm:$0xff] %v12692
        %12757 = vst [vmem:[%s163 + $0xc0] sm:$0xff] %v12693
        %12758 = vst [vmem:[%s163 + $0xc8] sm:$0xff] %v12694
        %12759 = vst [vmem:[%s163 + $0xd0] sm:$0xff] %v12695
        %12760 = vst [vmem:[%s163 + $0xd8] sm:$0xff] %v12696
        %12761 = vst [vmem:[%s163 + $0xe0] sm:$0xff] %v12697
        %12762 = vst [vmem:[%s163 + $0xe8] sm:$0xff] %v12698
        %12763 = vst [vmem:[%s163 + $0xf0] sm:$0xff] %v12699
        %12764 = vst [vmem:[%s163 + $0xf8] sm:$0xff] %v12700
        %12765 = vst [vmem:[%s163 + $0x100] sm:$0xff] %v12701
        %12766 = vst [vmem:[%s163 + $0x108] sm:$0xff] %v12702
        %12767 = vst [vmem:[%s163 + $0x110] sm:$0xff] %v12703
        %12768 = vst [vmem:[%s163 + $0x118] sm:$0xff] %v12704
        %12769 = vst [vmem:[%s163 + $0x120] sm:$0xff] %v12705
        %12770 = vst [vmem:[%s163 + $0x128] sm:$0xff] %v12706
        %12771 = vst [vmem:[%s163 + $0x130] sm:$0xff] %v12707
        %12772 = vst [vmem:[%s163 + $0x138] sm:$0xff] %v12708
        %12773 = vst [vmem:[%s163 + $0x140] sm:$0xff] %v12709
        %12774 = vst [vmem:[%s163 + $0x148] sm:$0xff] %v12710
        %12775 = vst [vmem:[%s163 + $0x150] sm:$0xff] %v12711
        %12776 = vst [vmem:[%s163 + $0x158] sm:$0xff] %v12712
        %12777 = vst [vmem:[%s163 + $0x160] sm:$0xff] %v12713
        %12778 = vst [vmem:[%s163 + $0x168] sm:$0xff] %v12714
        %12779 = vst [vmem:[%s163 + $0x170] sm:$0xff] %v12715
        %12780 = vst [vmem:[%s163 + $0x178] sm:$0xff] %v12716
        %12781 = vst [vmem:[%s163 + $0x180] sm:$0xff] %v12717
        %12782 = vst [vmem:[%s163 + $0x188] sm:$0xff] %v12718
        %12783 = vst [vmem:[%s163 + $0x190] sm:$0xff] %v12719
        %12784 = vst [vmem:[%s163 + $0x198] sm:$0xff] %v12720
        %12785 = vst [vmem:[%s163 + $0x1a0] sm:$0xff] %v12721
        %12786 = vst [vmem:[%s163 + $0x1a8] sm:$0xff] %v12722
        %12787 = vst [vmem:[%s163 + $0x1b0] sm:$0xff] %v12723
        %12788 = vst [vmem:[%s163 + $0x1b8] sm:$0xff] %v12724
        %12789 = vst [vmem:[%s163 + $0x1c0] sm:$0xff] %v12725
        %12790 = vst [vmem:[%s163 + $0x1c8] sm:$0xff] %v12726
        %12791 = vst [vmem:[%s163 + $0x1d0] sm:$0xff] %v12727
        %12792 = vst [vmem:[%s163 + $0x1d8] sm:$0xff] %v12728
        %12793 = vst [vmem:[%s163 + $0x1e0] sm:$0xff] %v12729
        %12794 = vst [vmem:[%s163 + $0x1e8] sm:$0xff] %v12730
        %12795 = vst [vmem:[%s163 + $0x1f0] sm:$0xff] %v12731
        %12796 = vst [vmem:[%s163 + $0x1f8] sm:$0xff] %v12732
        %s12797 = sand.u32 %s93, 1
        %s12798 = scalar_lea.sflag [#allocation3], %s12797
        %s12799 = sand.u32 %s93, 1
        %s12800 = smul.addr %s12799, 512
        %s12801 = scalar_lea.vmem [#allocation2], %s12800
        // Predicated region
        $region33: #{resnet_block_forward.1} parent=31 // pred_check
          %p12802 = pneg %p103
        $region34: #{resnet_block_forward.1} parent=31 // pred_check_branch
          %12804 = sbr.rel (%p12802) target = $region36
        $region35: #{resnet_block_forward.1} parent=31 // pred_region
          %12806 = vsyncadd %s12798, 0
          %s12807 = smul.addr %s17, 64
          %s12808 = smul.addr %s12807, 8
          %s12809 = scalar_lea.hbm %s3, %s12808
          %s12810 = sshll.u32 %s12801, 4
          %s12811 = int_to_ptr.vmem [resolvable:$true] %s12810
          %s12812 = sshll.u32 %s12809, 4
          %s12813 = int_to_ptr.hbm [resolvable:$true] %s12812
          %12818 = dma.vmem_to_hbm [thread:$0]  %s12811, 8192, %s12813, %s12798, 256, 256, 16
        $region36: #{resnet_block_forward.1} parent=31 // pred_fallthru
          _
      $region32: #{resnet_block_forward.1} parent=5 // pred_fallthru
        _
      %p12819 = scmp.le.s32.totalorder 2, %s12
      // Predicated region
      $region37: #{resnet_block_forward.1} parent=5 // pred_check
        %p12820 = pneg %p12819
      $region38: #{resnet_block_forward.1} parent=5 // pred_check_branch
        %12822 = sbr.rel (%p12820) target = $region40
      $region39: #{resnet_block_forward.1} parent=5 // pred_region
        %s12823 = ssub.s32 %s12, 2
        // Predicated region
        $region41: #{resnet_block_forward.1} parent=39 // pred_check
          %p12824 = pneg %p109
        $region42: #{resnet_block_forward.1} parent=39 // pred_check_branch
          %12826 = sbr.rel (%p12824) target = $region44
        $region43: #{resnet_block_forward.1} parent=39 // pred_region
          %s12827 = sand.u32 %s94, 1
          %s12828 = scalar_lea.sflag [#allocation3], %s12827
          %s12829 = sand.u32 %s94, 1
          %s12830 = smul.addr %s12829, 512
          %s12831 = scalar_lea.vmem [#allocation2], %s12830
          %12833 = dma.done %s12828, 8192
        $region44: #{resnet_block_forward.1} parent=39 // pred_fallthru
          _
      $region40: #{resnet_block_forward.1} parent=5 // pred_fallthru
        _
    $region6: #{resnet_block_forward.1} parent=1 // loop_footer
      %s16 = sadd.s32 1, %s12
    $region7: #{resnet_block_forward.1} parent=1 // loop_footer_branch
      %11 = sbr.rel target = $region3
    $region8: #{resnet_block_forward.1} parent=1 // loop_exit
      _
    %12834 = vsyncpa [#allocation3], 1
    %s12835 = scalar_lea.sflag [#allocation3], 1
    %12836 = vsyncpa %s12835, 1

</llo_original>
